<compile_context>
chip_gen: v7x
topology: tpu7x:2x2x1
jax: 0.10.0
libtpu: 0.0.40
codegen_flags: <defaults>
</compile_context>

<pallas_src>
import math
import jax
import jax.numpy as jnp
from jax.experimental import pallas as pl
from jax.experimental.pallas import tpu as pltpu

# ----------------------------- model config ---------------------------------
B, T, S = 2, 8, 16            # batch, target length, source length
D, H, DFF = 32, 4, 64         # d_model, heads, feed-forward dim
N_LAYERS = 2
DK = D // H
EPS = 1e-6                    # LayerNorm eps (annotated transformer default)
NEG_INF = -1e9                # masked_fill value
SCALE = 1.0 / math.sqrt(DK)
INV_DM1 = 1.0 / (D - 1)       # unbiased variance divisor folded into a multiply


# ----------------------------- kernel helpers --------------------------------
def _layer_norm(x, scale, bias):
    # torch ref: a_2 * (x - mean) / (std + eps) + b_2  with unbiased std (D-1)
    mean = jnp.mean(x, axis=-1, keepdims=True)
    diff = x - mean
    var = jnp.sum(diff * diff, axis=-1, keepdims=True) * INV_DM1
    inv_std = pl.reciprocal(jnp.sqrt(var) + EPS, approx=False)   # EUP, not VALU div
    return scale * diff * inv_std + bias


def _mha(qkv_q, qkv_kv, w_o, bias):
    """Multi-head attention over batch-flattened rows.

    qkv_q:  (Rq, 3D) fused q/k/v projection of the query stream (q columns used)
    qkv_kv: (Rk, 3D) fused q/k/v projection of the key/value stream (k,v used)
    w_o:    (D, D)   output projection weight
    bias:   (Rq, Rk) additive mask, block-diagonal across the flattened batch
                     (0 = attend, -1e9 = masked / cross-batch)
    Returns the already-projected attention output (Rq, D).
    """
    out = None
    for h in range(H):                                   # static unroll over heads
        qh = qkv_q[:, h * DK:(h + 1) * DK]
        kh = qkv_kv[:, D + h * DK: D + (h + 1) * DK]
        vh = qkv_kv[:, 2 * D + h * DK: 2 * D + (h + 1) * DK]
        s = jax.lax.dot_general(qh, kh, (((1,), (1,)), ((), ())),
                                preferred_element_type=jnp.float32) * SCALE + bias
        s = s - jnp.max(s, axis=-1, keepdims=True)       # numerical stability
        p = jnp.exp(s)
        p = p * pl.reciprocal(jnp.sum(p, axis=-1, keepdims=True), approx=False)
        oh = jnp.dot(p, vh, preferred_element_type=jnp.float32)          # (Rq, DK)
        # accumulate head contribution through its slice of W_o (no lane concat)
        contrib = jnp.dot(oh, w_o[h * DK:(h + 1) * DK, :],
                          preferred_element_type=jnp.float32)            # (Rq, D)
        out = contrib if out is None else out + contrib
    return out


# ------------------------------- kernel --------------------------------------
def decoder_kernel(x_ref, mem_ref, sbias_ref, cbias_ref,
                   w_attn_ref, b_attn_ref, w_out_ref, b_out_ref,
                   w_ff1_ref, b_ff1_ref, w_ff2_ref, b_ff2_ref,
                   ln_ref, out_ref):
    x = x_ref[...]          # (B*T, D)  batch-flattened target stream
    mem = mem_ref[...]      # (B*S, D)  batch-flattened encoder memory
    sbias = sbias_ref[...]  # (B*T, B*T) additive self-attn mask bias
    cbias = cbias_ref[...]  # (B*T, B*S) additive cross-attn mask bias

    for l in range(N_LAYERS):   # static unroll over decoder layers
        # sublayer 0: masked self-attention, pre-norm residual
        xn = _layer_norm(x, ln_ref[3 * l + 0, 0], ln_ref[3 * l + 0, 1])
        qkv = jnp.dot(xn, w_attn_ref[l, 0],
                      preferred_element_type=jnp.float32) + b_attn_ref[l, 0]
        x = x + _mha(qkv, qkv, w_out_ref[l, 0], sbias) + b_out_ref[l, 0]

        # sublayer 1: cross-attention over encoder memory
        xn = _layer_norm(x, ln_ref[3 * l + 1, 0], ln_ref[3 * l + 1, 1])
        w_qkv = w_attn_ref[l, 1]
        b_qkv = b_attn_ref[l, 1]
        q_proj = jnp.dot(xn, w_qkv, preferred_element_type=jnp.float32) + b_qkv
        kv_proj = jnp.dot(mem, w_qkv, preferred_element_type=jnp.float32) + b_qkv
        x = x + _mha(q_proj, kv_proj, w_out_ref[l, 1], cbias) + b_out_ref[l, 1]

        # sublayer 2: position-wise feed-forward (Linear -> ReLU -> Linear)
        xn = _layer_norm(x, ln_ref[3 * l + 2, 0], ln_ref[3 * l + 2, 1])
        h1 = jnp.maximum(
            jnp.dot(xn, w_ff1_ref[l], preferred_element_type=jnp.float32) + b_ff1_ref[l],
            0.0)
        x = x + jnp.dot(h1, w_ff2_ref[l], preferred_element_type=jnp.float32) + b_ff2_ref[l]

    # final LayerNorm of the Decoder
    out_ref[...] = _layer_norm(x, ln_ref[3 * N_LAYERS, 0], ln_ref[3 * N_LAYERS, 1])
    # TODO(synk): dropout inside SublayerConnection is identity (eval mode), omitted.


# ------------------------------ wrapper ---------------------------------------
def _block_diag_bias(mask):
    """mask: (B, Tq, Tk) float {0,1}. Returns (B*Tq, B*Tk) additive bias:
    0 where attention is allowed (same batch element AND mask==1), -1e9 else."""
    b_, tq, tk = mask.shape
    eye = jnp.eye(b_, dtype=mask.dtype)
    big = jnp.einsum('bc,bqk->bqck', eye, mask).reshape(b_ * tq, b_ * tk)
    return (1.0 - big) * NEG_INF


def _pack_params(params):
    (w_self, b_self, w_src, b_src, w_ff1, b_ff1, w_ff2, b_ff2,
     ln_s, ln_b, fln_s, fln_b) = params
    # Fused QKV weights / biases, [self, src] along axis 1.
    w_attn = jnp.stack([
        jnp.concatenate([w_self[:, 0], w_self[:, 1], w_self[:, 2]], axis=-1),
        jnp.concatenate([w_src[:, 0], w_src[:, 1], w_src[:, 2]], axis=-1),
    ], axis=1)                                              # (N, 2, D, 3D)
    b_attn = jnp.stack([
        jnp.concatenate([b_self[:, 0], b_self[:, 1], b_self[:, 2]], axis=-1),
        jnp.concatenate([b_src[:, 0], b_src[:, 1], b_src[:, 2]], axis=-1),
    ], axis=1)                                              # (N, 2, 1, 3D)
    w_out = jnp.stack([w_self[:, 3], w_src[:, 3]], axis=1)  # (N, 2, D, D)
    b_out = jnp.stack([b_self[:, 3], b_src[:, 3]], axis=1)  # (N, 2, 1, D)
    # All LayerNorm params (3 per layer + final) in one array: (3N+1, 2, 1, D)
    ln_all = jnp.concatenate([
        jnp.stack([ln_s.reshape(N_LAYERS * 3, 1, D),
                   ln_b.reshape(N_LAYERS * 3, 1, D)], axis=1),
        jnp.stack([fln_s.reshape(1, 1, D), fln_b.reshape(1, 1, D)], axis=1),
    ], axis=0)
    return (w_attn, b_attn, w_out, b_out, w_ff1, b_ff1, w_ff2, b_ff2, ln_all)


def decoder_forward(x, memory, x_mask, y_mask, params):
    packed = _pack_params(params)
    self_bias = _block_diag_bias(y_mask)     # (B*T, B*T)
    cross_bias = _block_diag_bias(x_mask)    # (B*T, B*S)
    x_flat = x.reshape(B * T, D)
    mem_flat = memory.reshape(B * S, D)

    # Single invocation (no grid): whole arrays land in VMEM; all batch-shared
    # math runs on (B*T, D) slabs.  Total footprint << 1 MiB on any TPU gen.
    out_flat = pl.pallas_call(
        decoder_kernel,
        out_shape=jax.ShapeDtypeStruct((B * T, D), jnp.float32),
    )(x_flat, mem_flat, self_bias, cross_bias, *packed)
    return out_flat.reshape(B, T, D)


# ----------------------- pure-JAX reference (for checking) --------------------
def reference_decoder(x, memory, x_mask, y_mask, params):
    (w_self, b_self, w_src, b_src, w_ff1, b_ff1, w_ff2, b_ff2,
     ln_s, ln_b, fln_s, fln_b) = params

    def ln(z, s, bb):
        mean = jnp.mean(z, -1, keepdims=True)
        diff = z - mean
        std = jnp.sqrt(jnp.sum(diff * diff, -1, keepdims=True) / (D - 1))
        return s * diff / (std + EPS) + bb

    def mha(xq, xkv, w, b, mask):
        q = xq @ w[0] + b[0]
        k = xkv @ w[1] + b[1]
        v = xkv @ w[2] + b[2]
        Tq, Tk = q.shape[0], k.shape[0]
        q = q.reshape(Tq, H, DK).transpose(1, 0, 2)
        k = k.reshape(Tk, H, DK).transpose(1, 0, 2)
        v = v.reshape(Tk, H, DK).transpose(1, 0, 2)
        s = jnp.einsum("hqd,hkd->hqk", q, k) / math.sqrt(DK)
        s = jnp.where(mask[None] > 0.5, s, NEG_INF)
        p = jax.nn.softmax(s, axis=-1)
        o = jnp.einsum("hqk,hkd->hqd", p, v).transpose(1, 0, 2).reshape(Tq, D)
        return o @ w[3] + b[3]

    def one(xb, mb, xm, ym):
        z = xb
        for l in range(N_LAYERS):
            zn = ln(z, ln_s[l, 0], ln_b[l, 0])
            z = z + mha(zn, zn, w_self[l], b_self[l], ym)
            zn = ln(z, ln_s[l, 1], ln_b[l, 1])
            z = z + mha(zn, mb, w_src[l], b_src[l], xm)
            zn = ln(z, ln_s[l, 2], ln_b[l, 2])
            h1 = jnp.maximum(zn @ w_ff1[l] + b_ff1[l], 0.0)
            z = z + h1 @ w_ff2[l] + b_ff2[l]
        return ln(z, fln_s, fln_b)

    return jax.vmap(one)(x, memory, x_mask, y_mask)


# --------------------------------- main ---------------------------------------
if __name__ == "__main__":
    key = jax.random.PRNGKey(0)
    ks = jax.random.split(key, 12)

    def rnd(k, shape, scale=0.05):
        return jax.random.normal(k, shape, dtype=jnp.float32) * scale

    # Deterministic synthetic parameters (shapes implied by DecoderLayer(d_model=32,
    # heads=4, d_ff=64) x N=2).  Linear weights stored as (in, out); x @ W + b.
    params = (
        rnd(ks[0], (N_LAYERS, 4, D, D)),        # self-attn q,k,v,o weights
        rnd(ks[1], (N_LAYERS, 4, 1, D)),        # self-attn biases
        rnd(ks[2], (N_LAYERS, 4, D, D)),        # src-attn q,k,v,o weights
        rnd(ks[3], (N_LAYERS, 4, 1, D)),        # src-attn biases
        rnd(ks[4], (N_LAYERS, D, DFF)),         # FFN W1
        rnd(ks[5], (N_LAYERS, 1, DFF)),         # FFN b1
        rnd(ks[6], (N_LAYERS, DFF, D)),         # FFN W2
        rnd(ks[7], (N_LAYERS, 1, D)),           # FFN b2
        jnp.ones((N_LAYERS, 3, 1, D), jnp.float32),   # sublayer LN scales (a_2 init)
        jnp.zeros((N_LAYERS, 3, 1, D), jnp.float32),  # sublayer LN biases (b_2 init)
        jnp.ones((1, D), jnp.float32),                # final LN scale
        jnp.zeros((1, D), jnp.float32),               # final LN bias
    )

    x = jax.random.normal(ks[8], (B, T, D), jnp.float32)
    memory = jax.random.normal(ks[9], (B, S, D), jnp.float32)

    # y_mask: causal mask for self-attention; x_mask: source padding mask
    y_mask = jnp.broadcast_to(jnp.tril(jnp.ones((T, T), jnp.float32)), (B, T, T))
    src_valid = jnp.ones((B, S), jnp.float32).at[1, S - 3:].set(0.0)
    x_mask = jnp.broadcast_to(src_valid[:, None, :], (B, T, S))

    out = decoder_forward(x, memory, x_mask, y_mask, params)
    out = jax.block_until_ready(out)

    ref = jax.block_until_ready(reference_decoder(x, memory, x_mask, y_mask, params))
    assert out.shape == (B, T, D)
    assert jnp.allclose(out, ref, atol=2e-4, rtol=2e-4), float(jnp.max(jnp.abs(out - ref)))

    print("KERNEL_OK")
</pallas_src>

<mosaic_0001>
module attributes {stable_mosaic.version = 11 : i64} {
  func.func @decoder_kernel(%arg0: memref<16x32xf32, #tpu.memory_space<vmem>>, %arg1: memref<32x32xf32, #tpu.memory_space<vmem>>, %arg2: memref<16x16xf32, #tpu.memory_space<vmem>>, %arg3: memref<16x32xf32, #tpu.memory_space<vmem>>, %arg4: memref<2x2x32x96xf32, #tpu.memory_space<vmem>>, %arg5: memref<2x2x1x96xf32, #tpu.memory_space<vmem>>, %arg6: memref<2x2x32x32xf32, #tpu.memory_space<vmem>>, %arg7: memref<2x2x1x32xf32, #tpu.memory_space<vmem>>, %arg8: memref<2x32x64xf32, #tpu.memory_space<vmem>>, %arg9: memref<2x1x64xf32, #tpu.memory_space<vmem>>, %arg10: memref<2x64x32xf32, #tpu.memory_space<vmem>>, %arg11: memref<2x1x32xf32, #tpu.memory_space<vmem>>, %arg12: memref<7x2x1x32xf32, #tpu.memory_space<vmem>>, %arg13: memref<16x32xf32, #tpu.memory_space<vmem>>) attributes {dimension_semantics = [], scalar_prefetch = 0 : i64, scratch_operands = 0 : i64, tpu.core_type = #tpu.core_type<tc>} {
    %c0 = arith.constant 0 : index
    %c0_0 = arith.constant 0 : index
    %0 = vector.load %arg0[%c0, %c0_0] : memref<16x32xf32, #tpu.memory_space<vmem>>, vector<16x32xf32>
    %c0_1 = arith.constant 0 : index
    %c0_2 = arith.constant 0 : index
    %1 = vector.load %arg1[%c0_1, %c0_2] : memref<32x32xf32, #tpu.memory_space<vmem>>, vector<32x32xf32>
    %c0_3 = arith.constant 0 : index
    %c0_4 = arith.constant 0 : index
    %2 = vector.load %arg2[%c0_3, %c0_4] : memref<16x16xf32, #tpu.memory_space<vmem>>, vector<16x16xf32>
    %c0_5 = arith.constant 0 : index
    %c0_6 = arith.constant 0 : index
    %3 = vector.load %arg3[%c0_5, %c0_6] : memref<16x32xf32, #tpu.memory_space<vmem>>, vector<16x32xf32>
    %c0_7 = arith.constant 0 : index
    %c0_8 = arith.constant 0 : index
    %c0_9 = arith.constant 0 : index
    %c0_10 = arith.constant 0 : index
    %4 = vector.load %arg12[%c0_7, %c0_8, %c0_9, %c0_10] : memref<7x2x1x32xf32, #tpu.memory_space<vmem>>, vector<1x1x1x32xf32>
    %5 = vector.shape_cast %4 : vector<1x1x1x32xf32> to vector<1x32xf32>
    %c0_11 = arith.constant 0 : index
    %c1 = arith.constant 1 : index
    %c0_12 = arith.constant 0 : index
    %c0_13 = arith.constant 0 : index
    %6 = vector.load %arg12[%c0_11, %c1, %c0_12, %c0_13] : memref<7x2x1x32xf32, #tpu.memory_space<vmem>>, vector<1x1x1x32xf32>
    %7 = vector.shape_cast %6 : vector<1x1x1x32xf32> to vector<1x32xf32>
    %cst = arith.constant dense<0.000000e+00> : vector<16xf32>
    %8 = vector.multi_reduction <add>, %0, %cst [1] : vector<16x32xf32> to vector<16xf32>
    %9 = vector.shape_cast %8 : vector<16xf32> to vector<16x1xf32>
    %cst_14 = arith.constant 3.200000e+01 : f32
    %10 = vector.broadcast %cst_14 : f32 to vector<16x1xf32>
    %11 = arith.divf %9, %10 : vector<16x1xf32>
    %12 = vector.broadcast %11 : vector<16x1xf32> to vector<16x32xf32>
    %13 = arith.subf %0, %12 : vector<16x32xf32>
    %14 = arith.mulf %13, %13 : vector<16x32xf32>
    %cst_15 = arith.constant dense<0.000000e+00> : vector<16xf32>
    %15 = vector.multi_reduction <add>, %14, %cst_15 [1] : vector<16x32xf32> to vector<16xf32>
    %16 = vector.shape_cast %15 : vector<16xf32> to vector<16x1xf32>
    %cst_16 = arith.constant 0.0322580636 : f32
    %17 = vector.broadcast %cst_16 : f32 to vector<16x1xf32>
    %18 = arith.mulf %16, %17 : vector<16x1xf32>
    %19 = math.sqrt %18 : vector<16x1xf32>
    %cst_17 = arith.constant 9.99999997E-7 : f32
    %20 = vector.broadcast %cst_17 : f32 to vector<16x1xf32>
    %21 = arith.addf %19, %20 : vector<16x1xf32>
    %22 = tpu.reciprocal %21 : vector<16x1xf32> -> vector<16x1xf32>
    %23 = vector.broadcast %5 : vector<1x32xf32> to vector<16x32xf32>
    %24 = arith.mulf %23, %13 : vector<16x32xf32>
    %25 = vector.broadcast %22 : vector<16x1xf32> to vector<16x32xf32>
    %26 = arith.mulf %24, %25 : vector<16x32xf32>
    %27 = vector.broadcast %7 : vector<1x32xf32> to vector<16x32xf32>
    %28 = arith.addf %26, %27 : vector<16x32xf32>
    %c0_18 = arith.constant 0 : index
    %c0_19 = arith.constant 0 : index
    %c0_20 = arith.constant 0 : index
    %c0_21 = arith.constant 0 : index
    %29 = vector.load %arg4[%c0_18, %c0_19, %c0_20, %c0_21] : memref<2x2x32x96xf32, #tpu.memory_space<vmem>>, vector<1x1x32x96xf32>
    %30 = vector.shape_cast %29 : vector<1x1x32x96xf32> to vector<32x96xf32>
    %cst_22 = arith.constant dense<0.000000e+00> : vector<16x96xf32>
    %31 = tpu.matmul %28, %30, %cst_22 {dimension_numbers = #tpu.dot_dimension_numbers<[1], [0], [0], [1], [0, 0, 1, 1], [], []>} : vector<16x32xf32>, vector<32x96xf32>, vector<16x96xf32> -> vector<16x96xf32>
    %c0_23 = arith.constant 0 : index
    %c0_24 = arith.constant 0 : index
    %c0_25 = arith.constant 0 : index
    %c0_26 = arith.constant 0 : index
    %32 = vector.load %arg5[%c0_23, %c0_24, %c0_25, %c0_26] : memref<2x2x1x96xf32, #tpu.memory_space<vmem>>, vector<1x1x1x96xf32>
    %33 = vector.shape_cast %32 : vector<1x1x1x96xf32> to vector<1x96xf32>
    %34 = vector.broadcast %33 : vector<1x96xf32> to vector<16x96xf32>
    %35 = arith.addf %31, %34 : vector<16x96xf32>
    %c0_27 = arith.constant 0 : index
    %c0_28 = arith.constant 0 : index
    %c0_29 = arith.constant 0 : index
    %c0_30 = arith.constant 0 : index
    %36 = vector.load %arg6[%c0_27, %c0_28, %c0_29, %c0_30] : memref<2x2x32x32xf32, #tpu.memory_space<vmem>>, vector<1x1x32x32xf32>
    %37 = vector.shape_cast %36 : vector<1x1x32x32xf32> to vector<32x32xf32>
    %38 = vector.extract_strided_slice %35 {offsets = [0, 0], sizes = [16, 8], strides = [1, 1]} : vector<16x96xf32> to vector<16x8xf32>
    %39 = vector.extract_strided_slice %35 {offsets = [0, 32], sizes = [16, 8], strides = [1, 1]} : vector<16x96xf32> to vector<16x8xf32>
    %40 = vector.extract_strided_slice %35 {offsets = [0, 64], sizes = [16, 8], strides = [1, 1]} : vector<16x96xf32> to vector<16x8xf32>
    %cst_31 = arith.constant dense<0.000000e+00> : vector<16x16xf32>
    %41 = tpu.matmul %38, %39, %cst_31 {dimension_numbers = #tpu.dot_dimension_numbers<[1], [1], [0], [0], [0, 0, 1, 0], [], []>} : vector<16x8xf32>, vector<16x8xf32>, vector<16x16xf32> -> vector<16x16xf32>
    %cst_32 = arith.constant 0.353553385 : f32
    %42 = vector.broadcast %cst_32 : f32 to vector<16x16xf32>
    %43 = arith.mulf %41, %42 : vector<16x16xf32>
    %44 = arith.addf %43, %2 : vector<16x16xf32>
    %cst_33 = arith.constant dense<0xFF800000> : vector<16xf32>
    %45 = vector.multi_reduction <maximumf>, %44, %cst_33 [1] : vector<16x16xf32> to vector<16xf32>
    %46 = vector.shape_cast %45 : vector<16xf32> to vector<16x1xf32>
    %47 = vector.broadcast %46 : vector<16x1xf32> to vector<16x16xf32>
    %48 = arith.subf %44, %47 : vector<16x16xf32>
    %49 = math.exp %48 : vector<16x16xf32>
    %cst_34 = arith.constant dense<0.000000e+00> : vector<16xf32>
    %50 = vector.multi_reduction <add>, %49, %cst_34 [1] : vector<16x16xf32> to vector<16xf32>
    %51 = vector.shape_cast %50 : vector<16xf32> to vector<16x1xf32>
    %52 = tpu.reciprocal %51 : vector<16x1xf32> -> vector<16x1xf32>
    %53 = vector.broadcast %52 : vector<16x1xf32> to vector<16x16xf32>
    %54 = arith.mulf %49, %53 : vector<16x16xf32>
    %cst_35 = arith.constant dense<0.000000e+00> : vector<16x8xf32>
    %55 = tpu.matmul %54, %40, %cst_35 {dimension_numbers = #tpu.dot_dimension_numbers<[1], [0], [0], [1], [0, 0, 1, 1], [], []>} : vector<16x16xf32>, vector<16x8xf32>, vector<16x8xf32> -> vector<16x8xf32>
    %56 = vector.extract_strided_slice %37 {offsets = [0, 0], sizes = [8, 32], strides = [1, 1]} : vector<32x32xf32> to vector<8x32xf32>
    %cst_36 = arith.constant dense<0.000000e+00> : vector<16x32xf32>
    %57 = tpu.matmul %55, %56, %cst_36 {dimension_numbers = #tpu.dot_dimension_numbers<[1], [0], [0], [1], [0, 0, 1, 1], [], []>} : vector<16x8xf32>, vector<8x32xf32>, vector<16x32xf32> -> vector<16x32xf32>
    %58 = vector.extract_strided_slice %35 {offsets = [0, 8], sizes = [16, 8], strides = [1, 1]} : vector<16x96xf32> to vector<16x8xf32>
    %59 = vector.extract_strided_slice %35 {offsets = [0, 40], sizes = [16, 8], strides = [1, 1]} : vector<16x96xf32> to vector<16x8xf32>
    %60 = vector.extract_strided_slice %35 {offsets = [0, 72], sizes = [16, 8], strides = [1, 1]} : vector<16x96xf32> to vector<16x8xf32>
    %cst_37 = arith.constant dense<0.000000e+00> : vector<16x16xf32>
    %61 = tpu.matmul %58, %59, %cst_37 {dimension_numbers = #tpu.dot_dimension_numbers<[1], [1], [0], [0], [0, 0, 1, 0], [], []>} : vector<16x8xf32>, vector<16x8xf32>, vector<16x16xf32> -> vector<16x16xf32>
    %cst_38 = arith.constant 0.353553385 : f32
    %62 = vector.broadcast %cst_38 : f32 to vector<16x16xf32>
    %63 = arith.mulf %61, %62 : vector<16x16xf32>
    %64 = arith.addf %63, %2 : vector<16x16xf32>
    %cst_39 = arith.constant dense<0xFF800000> : vector<16xf32>
    %65 = vector.multi_reduction <maximumf>, %64, %cst_39 [1] : vector<16x16xf32> to vector<16xf32>
    %66 = vector.shape_cast %65 : vector<16xf32> to vector<16x1xf32>
    %67 = vector.broadcast %66 : vector<16x1xf32> to vector<16x16xf32>
    %68 = arith.subf %64, %67 : vector<16x16xf32>
    %69 = math.exp %68 : vector<16x16xf32>
    %cst_40 = arith.constant dense<0.000000e+00> : vector<16xf32>
    %70 = vector.multi_reduction <add>, %69, %cst_40 [1] : vector<16x16xf32> to vector<16xf32>
    %71 = vector.shape_cast %70 : vector<16xf32> to vector<16x1xf32>
    %72 = tpu.reciprocal %71 : vector<16x1xf32> -> vector<16x1xf32>
    %73 = vector.broadcast %72 : vector<16x1xf32> to vector<16x16xf32>
    %74 = arith.mulf %69, %73 : vector<16x16xf32>
    %cst_41 = arith.constant dense<0.000000e+00> : vector<16x8xf32>
    %75 = tpu.matmul %74, %60, %cst_41 {dimension_numbers = #tpu.dot_dimension_numbers<[1], [0], [0], [1], [0, 0, 1, 1], [], []>} : vector<16x16xf32>, vector<16x8xf32>, vector<16x8xf32> -> vector<16x8xf32>
    %76 = vector.extract_strided_slice %37 {offsets = [8, 0], sizes = [8, 32], strides = [1, 1]} : vector<32x32xf32> to vector<8x32xf32>
    %cst_42 = arith.constant dense<0.000000e+00> : vector<16x32xf32>
    %77 = tpu.matmul %75, %76, %cst_42 {dimension_numbers = #tpu.dot_dimension_numbers<[1], [0], [0], [1], [0, 0, 1, 1], [], []>} : vector<16x8xf32>, vector<8x32xf32>, vector<16x32xf32> -> vector<16x32xf32>
    %78 = arith.addf %57, %77 : vector<16x32xf32>
    %79 = vector.extract_strided_slice %35 {offsets = [0, 16], sizes = [16, 8], strides = [1, 1]} : vector<16x96xf32> to vector<16x8xf32>
    %80 = vector.extract_strided_slice %35 {offsets = [0, 48], sizes = [16, 8], strides = [1, 1]} : vector<16x96xf32> to vector<16x8xf32>
    %81 = vector.extract_strided_slice %35 {offsets = [0, 80], sizes = [16, 8], strides = [1, 1]} : vector<16x96xf32> to vector<16x8xf32>
    %cst_43 = arith.constant dense<0.000000e+00> : vector<16x16xf32>
    %82 = tpu.matmul %79, %80, %cst_43 {dimension_numbers = #tpu.dot_dimension_numbers<[1], [1], [0], [0], [0, 0, 1, 0], [], []>} : vector<16x8xf32>, vector<16x8xf32>, vector<16x16xf32> -> vector<16x16xf32>
    %cst_44 = arith.constant 0.353553385 : f32
    %83 = vector.broadcast %cst_44 : f32 to vector<16x16xf32>
    %84 = arith.mulf %82, %83 : vector<16x16xf32>
    %85 = arith.addf %84, %2 : vector<16x16xf32>
    %cst_45 = arith.constant dense<0xFF800000> : vector<16xf32>
    %86 = vector.multi_reduction <maximumf>, %85, %cst_45 [1] : vector<16x16xf32> to vector<16xf32>
    %87 = vector.shape_cast %86 : vector<16xf32> to vector<16x1xf32>
    %88 = vector.broadcast %87 : vector<16x1xf32> to vector<16x16xf32>
    %89 = arith.subf %85, %88 : vector<16x16xf32>
    %90 = math.exp %89 : vector<16x16xf32>
    %cst_46 = arith.constant dense<0.000000e+00> : vector<16xf32>
    %91 = vector.multi_reduction <add>, %90, %cst_46 [1] : vector<16x16xf32> to vector<16xf32>
    %92 = vector.shape_cast %91 : vector<16xf32> to vector<16x1xf32>
    %93 = tpu.reciprocal %92 : vector<16x1xf32> -> vector<16x1xf32>
    %94 = vector.broadcast %93 : vector<16x1xf32> to vector<16x16xf32>
    %95 = arith.mulf %90, %94 : vector<16x16xf32>
    %cst_47 = arith.constant dense<0.000000e+00> : vector<16x8xf32>
    %96 = tpu.matmul %95, %81, %cst_47 {dimension_numbers = #tpu.dot_dimension_numbers<[1], [0], [0], [1], [0, 0, 1, 1], [], []>} : vector<16x16xf32>, vector<16x8xf32>, vector<16x8xf32> -> vector<16x8xf32>
    %97 = vector.extract_strided_slice %37 {offsets = [16, 0], sizes = [8, 32], strides = [1, 1]} : vector<32x32xf32> to vector<8x32xf32>
    %cst_48 = arith.constant dense<0.000000e+00> : vector<16x32xf32>
    %98 = tpu.matmul %96, %97, %cst_48 {dimension_numbers = #tpu.dot_dimension_numbers<[1], [0], [0], [1], [0, 0, 1, 1], [], []>} : vector<16x8xf32>, vector<8x32xf32>, vector<16x32xf32> -> vector<16x32xf32>
    %99 = arith.addf %78, %98 : vector<16x32xf32>
    %100 = vector.extract_strided_slice %35 {offsets = [0, 24], sizes = [16, 8], strides = [1, 1]} : vector<16x96xf32> to vector<16x8xf32>
    %101 = vector.extract_strided_slice %35 {offsets = [0, 56], sizes = [16, 8], strides = [1, 1]} : vector<16x96xf32> to vector<16x8xf32>
    %102 = vector.extract_strided_slice %35 {offsets = [0, 88], sizes = [16, 8], strides = [1, 1]} : vector<16x96xf32> to vector<16x8xf32>
    %cst_49 = arith.constant dense<0.000000e+00> : vector<16x16xf32>
    %103 = tpu.matmul %100, %101, %cst_49 {dimension_numbers = #tpu.dot_dimension_numbers<[1], [1], [0], [0], [0, 0, 1, 0], [], []>} : vector<16x8xf32>, vector<16x8xf32>, vector<16x16xf32> -> vector<16x16xf32>
    %cst_50 = arith.constant 0.353553385 : f32
    %104 = vector.broadcast %cst_50 : f32 to vector<16x16xf32>
    %105 = arith.mulf %103, %104 : vector<16x16xf32>
    %106 = arith.addf %105, %2 : vector<16x16xf32>
    %cst_51 = arith.constant dense<0xFF800000> : vector<16xf32>
    %107 = vector.multi_reduction <maximumf>, %106, %cst_51 [1] : vector<16x16xf32> to vector<16xf32>
    %108 = vector.shape_cast %107 : vector<16xf32> to vector<16x1xf32>
    %109 = vector.broadcast %108 : vector<16x1xf32> to vector<16x16xf32>
    %110 = arith.subf %106, %109 : vector<16x16xf32>
    %111 = math.exp %110 : vector<16x16xf32>
    %cst_52 = arith.constant dense<0.000000e+00> : vector<16xf32>
    %112 = vector.multi_reduction <add>, %111, %cst_52 [1] : vector<16x16xf32> to vector<16xf32>
    %113 = vector.shape_cast %112 : vector<16xf32> to vector<16x1xf32>
    %114 = tpu.reciprocal %113 : vector<16x1xf32> -> vector<16x1xf32>
    %115 = vector.broadcast %114 : vector<16x1xf32> to vector<16x16xf32>
    %116 = arith.mulf %111, %115 : vector<16x16xf32>
    %cst_53 = arith.constant dense<0.000000e+00> : vector<16x8xf32>
    %117 = tpu.matmul %116, %102, %cst_53 {dimension_numbers = #tpu.dot_dimension_numbers<[1], [0], [0], [1], [0, 0, 1, 1], [], []>} : vector<16x16xf32>, vector<16x8xf32>, vector<16x8xf32> -> vector<16x8xf32>
    %118 = vector.extract_strided_slice %37 {offsets = [24, 0], sizes = [8, 32], strides = [1, 1]} : vector<32x32xf32> to vector<8x32xf32>
    %cst_54 = arith.constant dense<0.000000e+00> : vector<16x32xf32>
    %119 = tpu.matmul %117, %118, %cst_54 {dimension_numbers = #tpu.dot_dimension_numbers<[1], [0], [0], [1], [0, 0, 1, 1], [], []>} : vector<16x8xf32>, vector<8x32xf32>, vector<16x32xf32> -> vector<16x32xf32>
    %120 = arith.addf %99, %119 : vector<16x32xf32>
    %121 = arith.addf %0, %120 : vector<16x32xf32>
    %c0_55 = arith.constant 0 : index
    %c0_56 = arith.constant 0 : index
    %c0_57 = arith.constant 0 : index
    %c0_58 = arith.constant 0 : index
    %122 = vector.load %arg7[%c0_55, %c0_56, %c0_57, %c0_58] : memref<2x2x1x32xf32, #tpu.memory_space<vmem>>, vector<1x1x1x32xf32>
    %123 = vector.shape_cast %122 : vector<1x1x1x32xf32> to vector<1x32xf32>
    %124 = vector.broadcast %123 : vector<1x32xf32> to vector<16x32xf32>
    %125 = arith.addf %121, %124 : vector<16x32xf32>
    %c1_59 = arith.constant 1 : index
    %c0_60 = arith.constant 0 : index
    %c0_61 = arith.constant 0 : index
    %c0_62 = arith.constant 0 : index
    %126 = vector.load %arg12[%c1_59, %c0_60, %c0_61, %c0_62] : memref<7x2x1x32xf32, #tpu.memory_space<vmem>>, vector<1x1x1x32xf32>
    %127 = vector.shape_cast %126 : vector<1x1x1x32xf32> to vector<1x32xf32>
    %c1_63 = arith.constant 1 : index
    %c1_64 = arith.constant 1 : index
    %c0_65 = arith.constant 0 : index
    %c0_66 = arith.constant 0 : index
    %128 = vector.load %arg12[%c1_63, %c1_64, %c0_65, %c0_66] : memref<7x2x1x32xf32, #tpu.memory_space<vmem>>, vector<1x1x1x32xf32>
    %129 = vector.shape_cast %128 : vector<1x1x1x32xf32> to vector<1x32xf32>
    %cst_67 = arith.constant dense<0.000000e+00> : vector<16xf32>
    %130 = vector.multi_reduction <add>, %125, %cst_67 [1] : vector<16x32xf32> to vector<16xf32>
    %131 = vector.shape_cast %130 : vector<16xf32> to vector<16x1xf32>
    %cst_68 = arith.constant 3.200000e+01 : f32
    %132 = vector.broadcast %cst_68 : f32 to vector<16x1xf32>
    %133 = arith.divf %131, %132 : vector<16x1xf32>
    %134 = vector.broadcast %133 : vector<16x1xf32> to vector<16x32xf32>
    %135 = arith.subf %125, %134 : vector<16x32xf32>
    %136 = arith.mulf %135, %135 : vector<16x32xf32>
    %cst_69 = arith.constant dense<0.000000e+00> : vector<16xf32>
    %137 = vector.multi_reduction <add>, %136, %cst_69 [1] : vector<16x32xf32> to vector<16xf32>
    %138 = vector.shape_cast %137 : vector<16xf32> to vector<16x1xf32>
    %cst_70 = arith.constant 0.0322580636 : f32
    %139 = vector.broadcast %cst_70 : f32 to vector<16x1xf32>
    %140 = arith.mulf %138, %139 : vector<16x1xf32>
    %141 = math.sqrt %140 : vector<16x1xf32>
    %cst_71 = arith.constant 9.99999997E-7 : f32
    %142 = vector.broadcast %cst_71 : f32 to vector<16x1xf32>
    %143 = arith.addf %141, %142 : vector<16x1xf32>
    %144 = tpu.reciprocal %143 : vector<16x1xf32> -> vector<16x1xf32>
    %145 = vector.broadcast %127 : vector<1x32xf32> to vector<16x32xf32>
    %146 = arith.mulf %145, %135 : vector<16x32xf32>
    %147 = vector.broadcast %144 : vector<16x1xf32> to vector<16x32xf32>
    %148 = arith.mulf %146, %147 : vector<16x32xf32>
    %149 = vector.broadcast %129 : vector<1x32xf32> to vector<16x32xf32>
    %150 = arith.addf %148, %149 : vector<16x32xf32>
    %c0_72 = arith.constant 0 : index
    %c1_73 = arith.constant 1 : index
    %c0_74 = arith.constant 0 : index
    %c0_75 = arith.constant 0 : index
    %151 = vector.load %arg4[%c0_72, %c1_73, %c0_74, %c0_75] : memref<2x2x32x96xf32, #tpu.memory_space<vmem>>, vector<1x1x32x96xf32>
    %152 = vector.shape_cast %151 : vector<1x1x32x96xf32> to vector<32x96xf32>
    %c0_76 = arith.constant 0 : index
    %c1_77 = arith.constant 1 : index
    %c0_78 = arith.constant 0 : index
    %c0_79 = arith.constant 0 : index
    %153 = vector.load %arg5[%c0_76, %c1_77, %c0_78, %c0_79] : memref<2x2x1x96xf32, #tpu.memory_space<vmem>>, vector<1x1x1x96xf32>
    %154 = vector.shape_cast %153 : vector<1x1x1x96xf32> to vector<1x96xf32>
    %cst_80 = arith.constant dense<0.000000e+00> : vector<16x96xf32>
    %155 = tpu.matmul %150, %152, %cst_80 {dimension_numbers = #tpu.dot_dimension_numbers<[1], [0], [0], [1], [0, 0, 1, 1], [], []>} : vector<16x32xf32>, vector<32x96xf32>, vector<16x96xf32> -> vector<16x96xf32>
    %156 = vector.broadcast %154 : vector<1x96xf32> to vector<16x96xf32>
    %157 = arith.addf %155, %156 : vector<16x96xf32>
    %cst_81 = arith.constant dense<0.000000e+00> : vector<32x96xf32>
    %158 = tpu.matmul %1, %152, %cst_81 {dimension_numbers = #tpu.dot_dimension_numbers<[1], [0], [0], [1], [0, 0, 1, 1], [], []>} : vector<32x32xf32>, vector<32x96xf32>, vector<32x96xf32> -> vector<32x96xf32>
    %159 = vector.broadcast %154 : vector<1x96xf32> to vector<32x96xf32>
    %160 = arith.addf %158, %159 : vector<32x96xf32>
    %c0_82 = arith.constant 0 : index
    %c1_83 = arith.constant 1 : index
    %c0_84 = arith.constant 0 : index
    %c0_85 = arith.constant 0 : index
    %161 = vector.load %arg6[%c0_82, %c1_83, %c0_84, %c0_85] : memref<2x2x32x32xf32, #tpu.memory_space<vmem>>, vector<1x1x32x32xf32>
    %162 = vector.shape_cast %161 : vector<1x1x32x32xf32> to vector<32x32xf32>
    %163 = vector.extract_strided_slice %157 {offsets = [0, 0], sizes = [16, 8], strides = [1, 1]} : vector<16x96xf32> to vector<16x8xf32>
    %164 = vector.extract_strided_slice %160 {offsets = [0, 32], sizes = [32, 8], strides = [1, 1]} : vector<32x96xf32> to vector<32x8xf32>
    %165 = vector.extract_strided_slice %160 {offsets = [0, 64], sizes = [32, 8], strides = [1, 1]} : vector<32x96xf32> to vector<32x8xf32>
    %cst_86 = arith.constant dense<0.000000e+00> : vector<16x32xf32>
    %166 = tpu.matmul %163, %164, %cst_86 {dimension_numbers = #tpu.dot_dimension_numbers<[1], [1], [0], [0], [0, 0, 1, 0], [], []>} : vector<16x8xf32>, vector<32x8xf32>, vector<16x32xf32> -> vector<16x32xf32>
    %cst_87 = arith.constant 0.353553385 : f32
    %167 = vector.broadcast %cst_87 : f32 to vector<16x32xf32>
    %168 = arith.mulf %166, %167 : vector<16x32xf32>
    %169 = arith.addf %168, %3 : vector<16x32xf32>
    %cst_88 = arith.constant dense<0xFF800000> : vector<16xf32>
    %170 = vector.multi_reduction <maximumf>, %169, %cst_88 [1] : vector<16x32xf32> to vector<16xf32>
    %171 = vector.shape_cast %170 : vector<16xf32> to vector<16x1xf32>
    %172 = vector.broadcast %171 : vector<16x1xf32> to vector<16x32xf32>
    %173 = arith.subf %169, %172 : vector<16x32xf32>
    %174 = math.exp %173 : vector<16x32xf32>
    %cst_89 = arith.constant dense<0.000000e+00> : vector<16xf32>
    %175 = vector.multi_reduction <add>, %174, %cst_89 [1] : vector<16x32xf32> to vector<16xf32>
    %176 = vector.shape_cast %175 : vector<16xf32> to vector<16x1xf32>
    %177 = tpu.reciprocal %176 : vector<16x1xf32> -> vector<16x1xf32>
    %178 = vector.broadcast %177 : vector<16x1xf32> to vector<16x32xf32>
    %179 = arith.mulf %174, %178 : vector<16x32xf32>
    %cst_90 = arith.constant dense<0.000000e+00> : vector<16x8xf32>
    %180 = tpu.matmul %179, %165, %cst_90 {dimension_numbers = #tpu.dot_dimension_numbers<[1], [0], [0], [1], [0, 0, 1, 1], [], []>} : vector<16x32xf32>, vector<32x8xf32>, vector<16x8xf32> -> vector<16x8xf32>
    %181 = vector.extract_strided_slice %162 {offsets = [0, 0], sizes = [8, 32], strides = [1, 1]} : vector<32x32xf32> to vector<8x32xf32>
    %cst_91 = arith.constant dense<0.000000e+00> : vector<16x32xf32>
    %182 = tpu.matmul %180, %181, %cst_91 {dimension_numbers = #tpu.dot_dimension_numbers<[1], [0], [0], [1], [0, 0, 1, 1], [], []>} : vector<16x8xf32>, vector<8x32xf32>, vector<16x32xf32> -> vector<16x32xf32>
    %183 = vector.extract_strided_slice %157 {offsets = [0, 8], sizes = [16, 8], strides = [1, 1]} : vector<16x96xf32> to vector<16x8xf32>
    %184 = vector.extract_strided_slice %160 {offsets = [0, 40], sizes = [32, 8], strides = [1, 1]} : vector<32x96xf32> to vector<32x8xf32>
    %185 = vector.extract_strided_slice %160 {offsets = [0, 72], sizes = [32, 8], strides = [1, 1]} : vector<32x96xf32> to vector<32x8xf32>
    %cst_92 = arith.constant dense<0.000000e+00> : vector<16x32xf32>
    %186 = tpu.matmul %183, %184, %cst_92 {dimension_numbers = #tpu.dot_dimension_numbers<[1], [1], [0], [0], [0, 0, 1, 0], [], []>} : vector<16x8xf32>, vector<32x8xf32>, vector<16x32xf32> -> vector<16x32xf32>
    %cst_93 = arith.constant 0.353553385 : f32
    %187 = vector.broadcast %cst_93 : f32 to vector<16x32xf32>
    %188 = arith.mulf %186, %187 : vector<16x32xf32>
    %189 = arith.addf %188, %3 : vector<16x32xf32>
    %cst_94 = arith.constant dense<0xFF800000> : vector<16xf32>
    %190 = vector.multi_reduction <maximumf>, %189, %cst_94 [1] : vector<16x32xf32> to vector<16xf32>
    %191 = vector.shape_cast %190 : vector<16xf32> to vector<16x1xf32>
    %192 = vector.broadcast %191 : vector<16x1xf32> to vector<16x32xf32>
    %193 = arith.subf %189, %192 : vector<16x32xf32>
    %194 = math.exp %193 : vector<16x32xf32>
    %cst_95 = arith.constant dense<0.000000e+00> : vector<16xf32>
    %195 = vector.multi_reduction <add>, %194, %cst_95 [1] : vector<16x32xf32> to vector<16xf32>
    %196 = vector.shape_cast %195 : vector<16xf32> to vector<16x1xf32>
    %197 = tpu.reciprocal %196 : vector<16x1xf32> -> vector<16x1xf32>
    %198 = vector.broadcast %197 : vector<16x1xf32> to vector<16x32xf32>
    %199 = arith.mulf %194, %198 : vector<16x32xf32>
    %cst_96 = arith.constant dense<0.000000e+00> : vector<16x8xf32>
    %200 = tpu.matmul %199, %185, %cst_96 {dimension_numbers = #tpu.dot_dimension_numbers<[1], [0], [0], [1], [0, 0, 1, 1], [], []>} : vector<16x32xf32>, vector<32x8xf32>, vector<16x8xf32> -> vector<16x8xf32>
    %201 = vector.extract_strided_slice %162 {offsets = [8, 0], sizes = [8, 32], strides = [1, 1]} : vector<32x32xf32> to vector<8x32xf32>
    %cst_97 = arith.constant dense<0.000000e+00> : vector<16x32xf32>
    %202 = tpu.matmul %200, %201, %cst_97 {dimension_numbers = #tpu.dot_dimension_numbers<[1], [0], [0], [1], [0, 0, 1, 1], [], []>} : vector<16x8xf32>, vector<8x32xf32>, vector<16x32xf32> -> vector<16x32xf32>
    %203 = arith.addf %182, %202 : vector<16x32xf32>
    %204 = vector.extract_strided_slice %157 {offsets = [0, 16], sizes = [16, 8], strides = [1, 1]} : vector<16x96xf32> to vector<16x8xf32>
    %205 = vector.extract_strided_slice %160 {offsets = [0, 48], sizes = [32, 8], strides = [1, 1]} : vector<32x96xf32> to vector<32x8xf32>
    %206 = vector.extract_strided_slice %160 {offsets = [0, 80], sizes = [32, 8], strides = [1, 1]} : vector<32x96xf32> to vector<32x8xf32>
    %cst_98 = arith.constant dense<0.000000e+00> : vector<16x32xf32>
    %207 = tpu.matmul %204, %205, %cst_98 {dimension_numbers = #tpu.dot_dimension_numbers<[1], [1], [0], [0], [0, 0, 1, 0], [], []>} : vector<16x8xf32>, vector<32x8xf32>, vector<16x32xf32> -> vector<16x32xf32>
    %cst_99 = arith.constant 0.353553385 : f32
    %208 = vector.broadcast %cst_99 : f32 to vector<16x32xf32>
    %209 = arith.mulf %207, %208 : vector<16x32xf32>
    %210 = arith.addf %209, %3 : vector<16x32xf32>
    %cst_100 = arith.constant dense<0xFF800000> : vector<16xf32>
    %211 = vector.multi_reduction <maximumf>, %210, %cst_100 [1] : vector<16x32xf32> to vector<16xf32>
    %212 = vector.shape_cast %211 : vector<16xf32> to vector<16x1xf32>
    %213 = vector.broadcast %212 : vector<16x1xf32> to vector<16x32xf32>
    %214 = arith.subf %210, %213 : vector<16x32xf32>
    %215 = math.exp %214 : vector<16x32xf32>
    %cst_101 = arith.constant dense<0.000000e+00> : vector<16xf32>
    %216 = vector.multi_reduction <add>, %215, %cst_101 [1] : vector<16x32xf32> to vector<16xf32>
    %217 = vector.shape_cast %216 : vector<16xf32> to vector<16x1xf32>
    %218 = tpu.reciprocal %217 : vector<16x1xf32> -> vector<16x1xf32>
    %219 = vector.broadcast %218 : vector<16x1xf32> to vector<16x32xf32>
    %220 = arith.mulf %215, %219 : vector<16x32xf32>
    %cst_102 = arith.constant dense<0.000000e+00> : vector<16x8xf32>
    %221 = tpu.matmul %220, %206, %cst_102 {dimension_numbers = #tpu.dot_dimension_numbers<[1], [0], [0], [1], [0, 0, 1, 1], [], []>} : vector<16x32xf32>, vector<32x8xf32>, vector<16x8xf32> -> vector<16x8xf32>
    %222 = vector.extract_strided_slice %162 {offsets = [16, 0], sizes = [8, 32], strides = [1, 1]} : vector<32x32xf32> to vector<8x32xf32>
    %cst_103 = arith.constant dense<0.000000e+00> : vector<16x32xf32>
    %223 = tpu.matmul %221, %222, %cst_103 {dimension_numbers = #tpu.dot_dimension_numbers<[1], [0], [0], [1], [0, 0, 1, 1], [], []>} : vector<16x8xf32>, vector<8x32xf32>, vector<16x32xf32> -> vector<16x32xf32>
    %224 = arith.addf %203, %223 : vector<16x32xf32>
    %225 = vector.extract_strided_slice %157 {offsets = [0, 24], sizes = [16, 8], strides = [1, 1]} : vector<16x96xf32> to vector<16x8xf32>
    %226 = vector.extract_strided_slice %160 {offsets = [0, 56], sizes = [32, 8], strides = [1, 1]} : vector<32x96xf32> to vector<32x8xf32>
    %227 = vector.extract_strided_slice %160 {offsets = [0, 88], sizes = [32, 8], strides = [1, 1]} : vector<32x96xf32> to vector<32x8xf32>
    %cst_104 = arith.constant dense<0.000000e+00> : vector<16x32xf32>
    %228 = tpu.matmul %225, %226, %cst_104 {dimension_numbers = #tpu.dot_dimension_numbers<[1], [1], [0], [0], [0, 0, 1, 0], [], []>} : vector<16x8xf32>, vector<32x8xf32>, vector<16x32xf32> -> vector<16x32xf32>
    %cst_105 = arith.constant 0.353553385 : f32
    %229 = vector.broadcast %cst_105 : f32 to vector<16x32xf32>
    %230 = arith.mulf %228, %229 : vector<16x32xf32>
    %231 = arith.addf %230, %3 : vector<16x32xf32>
    %cst_106 = arith.constant dense<0xFF800000> : vector<16xf32>
    %232 = vector.multi_reduction <maximumf>, %231, %cst_106 [1] : vector<16x32xf32> to vector<16xf32>
    %233 = vector.shape_cast %232 : vector<16xf32> to vector<16x1xf32>
    %234 = vector.broadcast %233 : vector<16x1xf32> to vector<16x32xf32>
    %235 = arith.subf %231, %234 : vector<16x32xf32>
    %236 = math.exp %235 : vector<16x32xf32>
    %cst_107 = arith.constant dense<0.000000e+00> : vector<16xf32>
    %237 = vector.multi_reduction <add>, %236, %cst_107 [1] : vector<16x32xf32> to vector<16xf32>
    %238 = vector.shape_cast %237 : vector<16xf32> to vector<16x1xf32>
    %239 = tpu.reciprocal %238 : vector<16x1xf32> -> vector<16x1xf32>
    %240 = vector.broadcast %239 : vector<16x1xf32> to vector<16x32xf32>
    %241 = arith.mulf %236, %240 : vector<16x32xf32>
    %cst_108 = arith.constant dense<0.000000e+00> : vector<16x8xf32>
    %242 = tpu.matmul %241, %227, %cst_108 {dimension_numbers = #tpu.dot_dimension_numbers<[1], [0], [0], [1], [0, 0, 1, 1], [], []>} : vector<16x32xf32>, vector<32x8xf32>, vector<16x8xf32> -> vector<16x8xf32>
    %243 = vector.extract_strided_slice %162 {offsets = [24, 0], sizes = [8, 32], strides = [1, 1]} : vector<32x32xf32> to vector<8x32xf32>
    %cst_109 = arith.constant dense<0.000000e+00> : vector<16x32xf32>
    %244 = tpu.matmul %242, %243, %cst_109 {dimension_numbers = #tpu.dot_dimension_numbers<[1], [0], [0], [1], [0, 0, 1, 1], [], []>} : vector<16x8xf32>, vector<8x32xf32>, vector<16x32xf32> -> vector<16x32xf32>
    %245 = arith.addf %224, %244 : vector<16x32xf32>
    %246 = arith.addf %125, %245 : vector<16x32xf32>
    %c0_110 = arith.constant 0 : index
    %c1_111 = arith.constant 1 : index
    %c0_112 = arith.constant 0 : index
    %c0_113 = arith.constant 0 : index
    %247 = vector.load %arg7[%c0_110, %c1_111, %c0_112, %c0_113] : memref<2x2x1x32xf32, #tpu.memory_space<vmem>>, vector<1x1x1x32xf32>
    %248 = vector.shape_cast %247 : vector<1x1x1x32xf32> to vector<1x32xf32>
    %249 = vector.broadcast %248 : vector<1x32xf32> to vector<16x32xf32>
    %250 = arith.addf %246, %249 : vector<16x32xf32>
    %c2 = arith.constant 2 : index
    %c0_114 = arith.constant 0 : index
    %c0_115 = arith.constant 0 : index
    %c0_116 = arith.constant 0 : index
    %251 = vector.load %arg12[%c2, %c0_114, %c0_115, %c0_116] : memref<7x2x1x32xf32, #tpu.memory_space<vmem>>, vector<1x1x1x32xf32>
    %252 = vector.shape_cast %251 : vector<1x1x1x32xf32> to vector<1x32xf32>
    %c2_117 = arith.constant 2 : index
    %c1_118 = arith.constant 1 : index
    %c0_119 = arith.constant 0 : index
    %c0_120 = arith.constant 0 : index
    %253 = vector.load %arg12[%c2_117, %c1_118, %c0_119, %c0_120] : memref<7x2x1x32xf32, #tpu.memory_space<vmem>>, vector<1x1x1x32xf32>
    %254 = vector.shape_cast %253 : vector<1x1x1x32xf32> to vector<1x32xf32>
    %cst_121 = arith.constant dense<0.000000e+00> : vector<16xf32>
    %255 = vector.multi_reduction <add>, %250, %cst_121 [1] : vector<16x32xf32> to vector<16xf32>
    %256 = vector.shape_cast %255 : vector<16xf32> to vector<16x1xf32>
    %cst_122 = arith.constant 3.200000e+01 : f32
    %257 = vector.broadcast %cst_122 : f32 to vector<16x1xf32>
    %258 = arith.divf %256, %257 : vector<16x1xf32>
    %259 = vector.broadcast %258 : vector<16x1xf32> to vector<16x32xf32>
    %260 = arith.subf %250, %259 : vector<16x32xf32>
    %261 = arith.mulf %260, %260 : vector<16x32xf32>
    %cst_123 = arith.constant dense<0.000000e+00> : vector<16xf32>
    %262 = vector.multi_reduction <add>, %261, %cst_123 [1] : vector<16x32xf32> to vector<16xf32>
    %263 = vector.shape_cast %262 : vector<16xf32> to vector<16x1xf32>
    %cst_124 = arith.constant 0.0322580636 : f32
    %264 = vector.broadcast %cst_124 : f32 to vector<16x1xf32>
    %265 = arith.mulf %263, %264 : vector<16x1xf32>
    %266 = math.sqrt %265 : vector<16x1xf32>
    %cst_125 = arith.constant 9.99999997E-7 : f32
    %267 = vector.broadcast %cst_125 : f32 to vector<16x1xf32>
    %268 = arith.addf %266, %267 : vector<16x1xf32>
    %269 = tpu.reciprocal %268 : vector<16x1xf32> -> vector<16x1xf32>
    %270 = vector.broadcast %252 : vector<1x32xf32> to vector<16x32xf32>
    %271 = arith.mulf %270, %260 : vector<16x32xf32>
    %272 = vector.broadcast %269 : vector<16x1xf32> to vector<16x32xf32>
    %273 = arith.mulf %271, %272 : vector<16x32xf32>
    %274 = vector.broadcast %254 : vector<1x32xf32> to vector<16x32xf32>
    %275 = arith.addf %273, %274 : vector<16x32xf32>
    %c0_126 = arith.constant 0 : index
    %c0_127 = arith.constant 0 : index
    %c0_128 = arith.constant 0 : index
    %276 = vector.load %arg8[%c0_126, %c0_127, %c0_128] : memref<2x32x64xf32, #tpu.memory_space<vmem>>, vector<1x32x64xf32>
    %277 = vector.shape_cast %276 : vector<1x32x64xf32> to vector<32x64xf32>
    %cst_129 = arith.constant dense<0.000000e+00> : vector<16x64xf32>
    %278 = tpu.matmul %275, %277, %cst_129 {dimension_numbers = #tpu.dot_dimension_numbers<[1], [0], [0], [1], [0, 0, 1, 1], [], []>} : vector<16x32xf32>, vector<32x64xf32>, vector<16x64xf32> -> vector<16x64xf32>
    %c0_130 = arith.constant 0 : index
    %c0_131 = arith.constant 0 : index
    %c0_132 = arith.constant 0 : index
    %279 = vector.load %arg9[%c0_130, %c0_131, %c0_132] : memref<2x1x64xf32, #tpu.memory_space<vmem>>, vector<1x1x64xf32>
    %280 = vector.shape_cast %279 : vector<1x1x64xf32> to vector<1x64xf32>
    %281 = vector.broadcast %280 : vector<1x64xf32> to vector<16x64xf32>
    %282 = arith.addf %278, %281 : vector<16x64xf32>
    %cst_133 = arith.constant 0.000000e+00 : f32
    %283 = vector.broadcast %cst_133 : f32 to vector<16x64xf32>
    %284 = arith.maximumf %282, %283 : vector<16x64xf32>
    %c0_134 = arith.constant 0 : index
    %c0_135 = arith.constant 0 : index
    %c0_136 = arith.constant 0 : index
    %285 = vector.load %arg10[%c0_134, %c0_135, %c0_136] : memref<2x64x32xf32, #tpu.memory_space<vmem>>, vector<1x64x32xf32>
    %286 = vector.shape_cast %285 : vector<1x64x32xf32> to vector<64x32xf32>
    %cst_137 = arith.constant dense<0.000000e+00> : vector<16x32xf32>
    %287 = tpu.matmul %284, %286, %cst_137 {dimension_numbers = #tpu.dot_dimension_numbers<[1], [0], [0], [1], [0, 0, 1, 1], [], []>} : vector<16x64xf32>, vector<64x32xf32>, vector<16x32xf32> -> vector<16x32xf32>
    %288 = arith.addf %250, %287 : vector<16x32xf32>
    %c0_138 = arith.constant 0 : index
    %c0_139 = arith.constant 0 : index
    %c0_140 = arith.constant 0 : index
    %289 = vector.load %arg11[%c0_138, %c0_139, %c0_140] : memref<2x1x32xf32, #tpu.memory_space<vmem>>, vector<1x1x32xf32>
    %290 = vector.shape_cast %289 : vector<1x1x32xf32> to vector<1x32xf32>
    %291 = vector.broadcast %290 : vector<1x32xf32> to vector<16x32xf32>
    %292 = arith.addf %288, %291 : vector<16x32xf32>
    %c3 = arith.constant 3 : index
    %c0_141 = arith.constant 0 : index
    %c0_142 = arith.constant 0 : index
    %c0_143 = arith.constant 0 : index
    %293 = vector.load %arg12[%c3, %c0_141, %c0_142, %c0_143] : memref<7x2x1x32xf32, #tpu.memory_space<vmem>>, vector<1x1x1x32xf32>
    %294 = vector.shape_cast %293 : vector<1x1x1x32xf32> to vector<1x32xf32>
    %c3_144 = arith.constant 3 : index
    %c1_145 = arith.constant 1 : index
    %c0_146 = arith.constant 0 : index
    %c0_147 = arith.constant 0 : index
    %295 = vector.load %arg12[%c3_144, %c1_145, %c0_146, %c0_147] : memref<7x2x1x32xf32, #tpu.memory_space<vmem>>, vector<1x1x1x32xf32>
    %296 = vector.shape_cast %295 : vector<1x1x1x32xf32> to vector<1x32xf32>
    %cst_148 = arith.constant dense<0.000000e+00> : vector<16xf32>
    %297 = vector.multi_reduction <add>, %292, %cst_148 [1] : vector<16x32xf32> to vector<16xf32>
    %298 = vector.shape_cast %297 : vector<16xf32> to vector<16x1xf32>
    %cst_149 = arith.constant 3.200000e+01 : f32
    %299 = vector.broadcast %cst_149 : f32 to vector<16x1xf32>
    %300 = arith.divf %298, %299 : vector<16x1xf32>
    %301 = vector.broadcast %300 : vector<16x1xf32> to vector<16x32xf32>
    %302 = arith.subf %292, %301 : vector<16x32xf32>
    %303 = arith.mulf %302, %302 : vector<16x32xf32>
    %cst_150 = arith.constant dense<0.000000e+00> : vector<16xf32>
    %304 = vector.multi_reduction <add>, %303, %cst_150 [1] : vector<16x32xf32> to vector<16xf32>
    %305 = vector.shape_cast %304 : vector<16xf32> to vector<16x1xf32>
    %cst_151 = arith.constant 0.0322580636 : f32
    %306 = vector.broadcast %cst_151 : f32 to vector<16x1xf32>
    %307 = arith.mulf %305, %306 : vector<16x1xf32>
    %308 = math.sqrt %307 : vector<16x1xf32>
    %cst_152 = arith.constant 9.99999997E-7 : f32
    %309 = vector.broadcast %cst_152 : f32 to vector<16x1xf32>
    %310 = arith.addf %308, %309 : vector<16x1xf32>
    %311 = tpu.reciprocal %310 : vector<16x1xf32> -> vector<16x1xf32>
    %312 = vector.broadcast %294 : vector<1x32xf32> to vector<16x32xf32>
    %313 = arith.mulf %312, %302 : vector<16x32xf32>
    %314 = vector.broadcast %311 : vector<16x1xf32> to vector<16x32xf32>
    %315 = arith.mulf %313, %314 : vector<16x32xf32>
    %316 = vector.broadcast %296 : vector<1x32xf32> to vector<16x32xf32>
    %317 = arith.addf %315, %316 : vector<16x32xf32>
    %c1_153 = arith.constant 1 : index
    %c0_154 = arith.constant 0 : index
    %c0_155 = arith.constant 0 : index
    %c0_156 = arith.constant 0 : index
    %318 = vector.load %arg4[%c1_153, %c0_154, %c0_155, %c0_156] : memref<2x2x32x96xf32, #tpu.memory_space<vmem>>, vector<1x1x32x96xf32>
    %319 = vector.shape_cast %318 : vector<1x1x32x96xf32> to vector<32x96xf32>
    %cst_157 = arith.constant dense<0.000000e+00> : vector<16x96xf32>
    %320 = tpu.matmul %317, %319, %cst_157 {dimension_numbers = #tpu.dot_dimension_numbers<[1], [0], [0], [1], [0, 0, 1, 1], [], []>} : vector<16x32xf32>, vector<32x96xf32>, vector<16x96xf32> -> vector<16x96xf32>
    %c1_158 = arith.constant 1 : index
    %c0_159 = arith.constant 0 : index
    %c0_160 = arith.constant 0 : index
    %c0_161 = arith.constant 0 : index
    %321 = vector.load %arg5[%c1_158, %c0_159, %c0_160, %c0_161] : memref<2x2x1x96xf32, #tpu.memory_space<vmem>>, vector<1x1x1x96xf32>
    %322 = vector.shape_cast %321 : vector<1x1x1x96xf32> to vector<1x96xf32>
    %323 = vector.broadcast %322 : vector<1x96xf32> to vector<16x96xf32>
    %324 = arith.addf %320, %323 : vector<16x96xf32>
    %c1_162 = arith.constant 1 : index
    %c0_163 = arith.constant 0 : index
    %c0_164 = arith.constant 0 : index
    %c0_165 = arith.constant 0 : index
    %325 = vector.load %arg6[%c1_162, %c0_163, %c0_164, %c0_165] : memref<2x2x32x32xf32, #tpu.memory_space<vmem>>, vector<1x1x32x32xf32>
    %326 = vector.shape_cast %325 : vector<1x1x32x32xf32> to vector<32x32xf32>
    %327 = vector.extract_strided_slice %324 {offsets = [0, 0], sizes = [16, 8], strides = [1, 1]} : vector<16x96xf32> to vector<16x8xf32>
    %328 = vector.extract_strided_slice %324 {offsets = [0, 32], sizes = [16, 8], strides = [1, 1]} : vector<16x96xf32> to vector<16x8xf32>
    %329 = vector.extract_strided_slice %324 {offsets = [0, 64], sizes = [16, 8], strides = [1, 1]} : vector<16x96xf32> to vector<16x8xf32>
    %cst_166 = arith.constant dense<0.000000e+00> : vector<16x16xf32>
    %330 = tpu.matmul %327, %328, %cst_166 {dimension_numbers = #tpu.dot_dimension_numbers<[1], [1], [0], [0], [0, 0, 1, 0], [], []>} : vector<16x8xf32>, vector<16x8xf32>, vector<16x16xf32> -> vector<16x16xf32>
    %cst_167 = arith.constant 0.353553385 : f32
    %331 = vector.broadcast %cst_167 : f32 to vector<16x16xf32>
    %332 = arith.mulf %330, %331 : vector<16x16xf32>
    %333 = arith.addf %332, %2 : vector<16x16xf32>
    %cst_168 = arith.constant dense<0xFF800000> : vector<16xf32>
    %334 = vector.multi_reduction <maximumf>, %333, %cst_168 [1] : vector<16x16xf32> to vector<16xf32>
    %335 = vector.shape_cast %334 : vector<16xf32> to vector<16x1xf32>
    %336 = vector.broadcast %335 : vector<16x1xf32> to vector<16x16xf32>
    %337 = arith.subf %333, %336 : vector<16x16xf32>
    %338 = math.exp %337 : vector<16x16xf32>
    %cst_169 = arith.constant dense<0.000000e+00> : vector<16xf32>
    %339 = vector.multi_reduction <add>, %338, %cst_169 [1] : vector<16x16xf32> to vector<16xf32>
    %340 = vector.shape_cast %339 : vector<16xf32> to vector<16x1xf32>
    %341 = tpu.reciprocal %340 : vector<16x1xf32> -> vector<16x1xf32>
    %342 = vector.broadcast %341 : vector<16x1xf32> to vector<16x16xf32>
    %343 = arith.mulf %338, %342 : vector<16x16xf32>
    %cst_170 = arith.constant dense<0.000000e+00> : vector<16x8xf32>
    %344 = tpu.matmul %343, %329, %cst_170 {dimension_numbers = #tpu.dot_dimension_numbers<[1], [0], [0], [1], [0, 0, 1, 1], [], []>} : vector<16x16xf32>, vector<16x8xf32>, vector<16x8xf32> -> vector<16x8xf32>
    %345 = vector.extract_strided_slice %326 {offsets = [0, 0], sizes = [8, 32], strides = [1, 1]} : vector<32x32xf32> to vector<8x32xf32>
    %cst_171 = arith.constant dense<0.000000e+00> : vector<16x32xf32>
    %346 = tpu.matmul %344, %345, %cst_171 {dimension_numbers = #tpu.dot_dimension_numbers<[1], [0], [0], [1], [0, 0, 1, 1], [], []>} : vector<16x8xf32>, vector<8x32xf32>, vector<16x32xf32> -> vector<16x32xf32>
    %347 = vector.extract_strided_slice %324 {offsets = [0, 8], sizes = [16, 8], strides = [1, 1]} : vector<16x96xf32> to vector<16x8xf32>
    %348 = vector.extract_strided_slice %324 {offsets = [0, 40], sizes = [16, 8], strides = [1, 1]} : vector<16x96xf32> to vector<16x8xf32>
    %349 = vector.extract_strided_slice %324 {offsets = [0, 72], sizes = [16, 8], strides = [1, 1]} : vector<16x96xf32> to vector<16x8xf32>
    %cst_172 = arith.constant dense<0.000000e+00> : vector<16x16xf32>
    %350 = tpu.matmul %347, %348, %cst_172 {dimension_numbers = #tpu.dot_dimension_numbers<[1], [1], [0], [0], [0, 0, 1, 0], [], []>} : vector<16x8xf32>, vector<16x8xf32>, vector<16x16xf32> -> vector<16x16xf32>
    %cst_173 = arith.constant 0.353553385 : f32
    %351 = vector.broadcast %cst_173 : f32 to vector<16x16xf32>
    %352 = arith.mulf %350, %351 : vector<16x16xf32>
    %353 = arith.addf %352, %2 : vector<16x16xf32>
    %cst_174 = arith.constant dense<0xFF800000> : vector<16xf32>
    %354 = vector.multi_reduction <maximumf>, %353, %cst_174 [1] : vector<16x16xf32> to vector<16xf32>
    %355 = vector.shape_cast %354 : vector<16xf32> to vector<16x1xf32>
    %356 = vector.broadcast %355 : vector<16x1xf32> to vector<16x16xf32>
    %357 = arith.subf %353, %356 : vector<16x16xf32>
    %358 = math.exp %357 : vector<16x16xf32>
    %cst_175 = arith.constant dense<0.000000e+00> : vector<16xf32>
    %359 = vector.multi_reduction <add>, %358, %cst_175 [1] : vector<16x16xf32> to vector<16xf32>
    %360 = vector.shape_cast %359 : vector<16xf32> to vector<16x1xf32>
    %361 = tpu.reciprocal %360 : vector<16x1xf32> -> vector<16x1xf32>
    %362 = vector.broadcast %361 : vector<16x1xf32> to vector<16x16xf32>
    %363 = arith.mulf %358, %362 : vector<16x16xf32>
    %cst_176 = arith.constant dense<0.000000e+00> : vector<16x8xf32>
    %364 = tpu.matmul %363, %349, %cst_176 {dimension_numbers = #tpu.dot_dimension_numbers<[1], [0], [0], [1], [0, 0, 1, 1], [], []>} : vector<16x16xf32>, vector<16x8xf32>, vector<16x8xf32> -> vector<16x8xf32>
    %365 = vector.extract_strided_slice %326 {offsets = [8, 0], sizes = [8, 32], strides = [1, 1]} : vector<32x32xf32> to vector<8x32xf32>
    %cst_177 = arith.constant dense<0.000000e+00> : vector<16x32xf32>
    %366 = tpu.matmul %364, %365, %cst_177 {dimension_numbers = #tpu.dot_dimension_numbers<[1], [0], [0], [1], [0, 0, 1, 1], [], []>} : vector<16x8xf32>, vector<8x32xf32>, vector<16x32xf32> -> vector<16x32xf32>
    %367 = arith.addf %346, %366 : vector<16x32xf32>
    %368 = vector.extract_strided_slice %324 {offsets = [0, 16], sizes = [16, 8], strides = [1, 1]} : vector<16x96xf32> to vector<16x8xf32>
    %369 = vector.extract_strided_slice %324 {offsets = [0, 48], sizes = [16, 8], strides = [1, 1]} : vector<16x96xf32> to vector<16x8xf32>
    %370 = vector.extract_strided_slice %324 {offsets = [0, 80], sizes = [16, 8], strides = [1, 1]} : vector<16x96xf32> to vector<16x8xf32>
    %cst_178 = arith.constant dense<0.000000e+00> : vector<16x16xf32>
    %371 = tpu.matmul %368, %369, %cst_178 {dimension_numbers = #tpu.dot_dimension_numbers<[1], [1], [0], [0], [0, 0, 1, 0], [], []>} : vector<16x8xf32>, vector<16x8xf32>, vector<16x16xf32> -> vector<16x16xf32>
    %cst_179 = arith.constant 0.353553385 : f32
    %372 = vector.broadcast %cst_179 : f32 to vector<16x16xf32>
    %373 = arith.mulf %371, %372 : vector<16x16xf32>
    %374 = arith.addf %373, %2 : vector<16x16xf32>
    %cst_180 = arith.constant dense<0xFF800000> : vector<16xf32>
    %375 = vector.multi_reduction <maximumf>, %374, %cst_180 [1] : vector<16x16xf32> to vector<16xf32>
    %376 = vector.shape_cast %375 : vector<16xf32> to vector<16x1xf32>
    %377 = vector.broadcast %376 : vector<16x1xf32> to vector<16x16xf32>
    %378 = arith.subf %374, %377 : vector<16x16xf32>
    %379 = math.exp %378 : vector<16x16xf32>
    %cst_181 = arith.constant dense<0.000000e+00> : vector<16xf32>
    %380 = vector.multi_reduction <add>, %379, %cst_181 [1] : vector<16x16xf32> to vector<16xf32>
    %381 = vector.shape_cast %380 : vector<16xf32> to vector<16x1xf32>
    %382 = tpu.reciprocal %381 : vector<16x1xf32> -> vector<16x1xf32>
    %383 = vector.broadcast %382 : vector<16x1xf32> to vector<16x16xf32>
    %384 = arith.mulf %379, %383 : vector<16x16xf32>
    %cst_182 = arith.constant dense<0.000000e+00> : vector<16x8xf32>
    %385 = tpu.matmul %384, %370, %cst_182 {dimension_numbers = #tpu.dot_dimension_numbers<[1], [0], [0], [1], [0, 0, 1, 1], [], []>} : vector<16x16xf32>, vector<16x8xf32>, vector<16x8xf32> -> vector<16x8xf32>
    %386 = vector.extract_strided_slice %326 {offsets = [16, 0], sizes = [8, 32], strides = [1, 1]} : vector<32x32xf32> to vector<8x32xf32>
    %cst_183 = arith.constant dense<0.000000e+00> : vector<16x32xf32>
    %387 = tpu.matmul %385, %386, %cst_183 {dimension_numbers = #tpu.dot_dimension_numbers<[1], [0], [0], [1], [0, 0, 1, 1], [], []>} : vector<16x8xf32>, vector<8x32xf32>, vector<16x32xf32> -> vector<16x32xf32>
    %388 = arith.addf %367, %387 : vector<16x32xf32>
    %389 = vector.extract_strided_slice %324 {offsets = [0, 24], sizes = [16, 8], strides = [1, 1]} : vector<16x96xf32> to vector<16x8xf32>
    %390 = vector.extract_strided_slice %324 {offsets = [0, 56], sizes = [16, 8], strides = [1, 1]} : vector<16x96xf32> to vector<16x8xf32>
    %391 = vector.extract_strided_slice %324 {offsets = [0, 88], sizes = [16, 8], strides = [1, 1]} : vector<16x96xf32> to vector<16x8xf32>
    %cst_184 = arith.constant dense<0.000000e+00> : vector<16x16xf32>
    %392 = tpu.matmul %389, %390, %cst_184 {dimension_numbers = #tpu.dot_dimension_numbers<[1], [1], [0], [0], [0, 0, 1, 0], [], []>} : vector<16x8xf32>, vector<16x8xf32>, vector<16x16xf32> -> vector<16x16xf32>
    %cst_185 = arith.constant 0.353553385 : f32
    %393 = vector.broadcast %cst_185 : f32 to vector<16x16xf32>
    %394 = arith.mulf %392, %393 : vector<16x16xf32>
    %395 = arith.addf %394, %2 : vector<16x16xf32>
    %cst_186 = arith.constant dense<0xFF800000> : vector<16xf32>
    %396 = vector.multi_reduction <maximumf>, %395, %cst_186 [1] : vector<16x16xf32> to vector<16xf32>
    %397 = vector.shape_cast %396 : vector<16xf32> to vector<16x1xf32>
    %398 = vector.broadcast %397 : vector<16x1xf32> to vector<16x16xf32>
    %399 = arith.subf %395, %398 : vector<16x16xf32>
    %400 = math.exp %399 : vector<16x16xf32>
    %cst_187 = arith.constant dense<0.000000e+00> : vector<16xf32>
    %401 = vector.multi_reduction <add>, %400, %cst_187 [1] : vector<16x16xf32> to vector<16xf32>
    %402 = vector.shape_cast %401 : vector<16xf32> to vector<16x1xf32>
    %403 = tpu.reciprocal %402 : vector<16x1xf32> -> vector<16x1xf32>
    %404 = vector.broadcast %403 : vector<16x1xf32> to vector<16x16xf32>
    %405 = arith.mulf %400, %404 : vector<16x16xf32>
    %cst_188 = arith.constant dense<0.000000e+00> : vector<16x8xf32>
    %406 = tpu.matmul %405, %391, %cst_188 {dimension_numbers = #tpu.dot_dimension_numbers<[1], [0], [0], [1], [0, 0, 1, 1], [], []>} : vector<16x16xf32>, vector<16x8xf32>, vector<16x8xf32> -> vector<16x8xf32>
    %407 = vector.extract_strided_slice %326 {offsets = [24, 0], sizes = [8, 32], strides = [1, 1]} : vector<32x32xf32> to vector<8x32xf32>
    %cst_189 = arith.constant dense<0.000000e+00> : vector<16x32xf32>
    %408 = tpu.matmul %406, %407, %cst_189 {dimension_numbers = #tpu.dot_dimension_numbers<[1], [0], [0], [1], [0, 0, 1, 1], [], []>} : vector<16x8xf32>, vector<8x32xf32>, vector<16x32xf32> -> vector<16x32xf32>
    %409 = arith.addf %388, %408 : vector<16x32xf32>
    %410 = arith.addf %292, %409 : vector<16x32xf32>
    %c1_190 = arith.constant 1 : index
    %c0_191 = arith.constant 0 : index
    %c0_192 = arith.constant 0 : index
    %c0_193 = arith.constant 0 : index
    %411 = vector.load %arg7[%c1_190, %c0_191, %c0_192, %c0_193] : memref<2x2x1x32xf32, #tpu.memory_space<vmem>>, vector<1x1x1x32xf32>
    %412 = vector.shape_cast %411 : vector<1x1x1x32xf32> to vector<1x32xf32>
    %413 = vector.broadcast %412 : vector<1x32xf32> to vector<16x32xf32>
    %414 = arith.addf %410, %413 : vector<16x32xf32>
    %c4 = arith.constant 4 : index
    %c0_194 = arith.constant 0 : index
    %c0_195 = arith.constant 0 : index
    %c0_196 = arith.constant 0 : index
    %415 = vector.load %arg12[%c4, %c0_194, %c0_195, %c0_196] : memref<7x2x1x32xf32, #tpu.memory_space<vmem>>, vector<1x1x1x32xf32>
    %416 = vector.shape_cast %415 : vector<1x1x1x32xf32> to vector<1x32xf32>
    %c4_197 = arith.constant 4 : index
    %c1_198 = arith.constant 1 : index
    %c0_199 = arith.constant 0 : index
    %c0_200 = arith.constant 0 : index
    %417 = vector.load %arg12[%c4_197, %c1_198, %c0_199, %c0_200] : memref<7x2x1x32xf32, #tpu.memory_space<vmem>>, vector<1x1x1x32xf32>
    %418 = vector.shape_cast %417 : vector<1x1x1x32xf32> to vector<1x32xf32>
    %cst_201 = arith.constant dense<0.000000e+00> : vector<16xf32>
    %419 = vector.multi_reduction <add>, %414, %cst_201 [1] : vector<16x32xf32> to vector<16xf32>
    %420 = vector.shape_cast %419 : vector<16xf32> to vector<16x1xf32>
    %cst_202 = arith.constant 3.200000e+01 : f32
    %421 = vector.broadcast %cst_202 : f32 to vector<16x1xf32>
    %422 = arith.divf %420, %421 : vector<16x1xf32>
    %423 = vector.broadcast %422 : vector<16x1xf32> to vector<16x32xf32>
    %424 = arith.subf %414, %423 : vector<16x32xf32>
    %425 = arith.mulf %424, %424 : vector<16x32xf32>
    %cst_203 = arith.constant dense<0.000000e+00> : vector<16xf32>
    %426 = vector.multi_reduction <add>, %425, %cst_203 [1] : vector<16x32xf32> to vector<16xf32>
    %427 = vector.shape_cast %426 : vector<16xf32> to vector<16x1xf32>
    %cst_204 = arith.constant 0.0322580636 : f32
    %428 = vector.broadcast %cst_204 : f32 to vector<16x1xf32>
    %429 = arith.mulf %427, %428 : vector<16x1xf32>
    %430 = math.sqrt %429 : vector<16x1xf32>
    %cst_205 = arith.constant 9.99999997E-7 : f32
    %431 = vector.broadcast %cst_205 : f32 to vector<16x1xf32>
    %432 = arith.addf %430, %431 : vector<16x1xf32>
    %433 = tpu.reciprocal %432 : vector<16x1xf32> -> vector<16x1xf32>
    %434 = vector.broadcast %416 : vector<1x32xf32> to vector<16x32xf32>
    %435 = arith.mulf %434, %424 : vector<16x32xf32>
    %436 = vector.broadcast %433 : vector<16x1xf32> to vector<16x32xf32>
    %437 = arith.mulf %435, %436 : vector<16x32xf32>
    %438 = vector.broadcast %418 : vector<1x32xf32> to vector<16x32xf32>
    %439 = arith.addf %437, %438 : vector<16x32xf32>
    %c1_206 = arith.constant 1 : index
    %c1_207 = arith.constant 1 : index
    %c0_208 = arith.constant 0 : index
    %c0_209 = arith.constant 0 : index
    %440 = vector.load %arg4[%c1_206, %c1_207, %c0_208, %c0_209] : memref<2x2x32x96xf32, #tpu.memory_space<vmem>>, vector<1x1x32x96xf32>
    %441 = vector.shape_cast %440 : vector<1x1x32x96xf32> to vector<32x96xf32>
    %c1_210 = arith.constant 1 : index
    %c1_211 = arith.constant 1 : index
    %c0_212 = arith.constant 0 : index
    %c0_213 = arith.constant 0 : index
    %442 = vector.load %arg5[%c1_210, %c1_211, %c0_212, %c0_213] : memref<2x2x1x96xf32, #tpu.memory_space<vmem>>, vector<1x1x1x96xf32>
    %443 = vector.shape_cast %442 : vector<1x1x1x96xf32> to vector<1x96xf32>
    %cst_214 = arith.constant dense<0.000000e+00> : vector<16x96xf32>
    %444 = tpu.matmul %439, %441, %cst_214 {dimension_numbers = #tpu.dot_dimension_numbers<[1], [0], [0], [1], [0, 0, 1, 1], [], []>} : vector<16x32xf32>, vector<32x96xf32>, vector<16x96xf32> -> vector<16x96xf32>
    %445 = vector.broadcast %443 : vector<1x96xf32> to vector<16x96xf32>
    %446 = arith.addf %444, %445 : vector<16x96xf32>
    %cst_215 = arith.constant dense<0.000000e+00> : vector<32x96xf32>
    %447 = tpu.matmul %1, %441, %cst_215 {dimension_numbers = #tpu.dot_dimension_numbers<[1], [0], [0], [1], [0, 0, 1, 1], [], []>} : vector<32x32xf32>, vector<32x96xf32>, vector<32x96xf32> -> vector<32x96xf32>
    %448 = vector.broadcast %443 : vector<1x96xf32> to vector<32x96xf32>
    %449 = arith.addf %447, %448 : vector<32x96xf32>
    %c1_216 = arith.constant 1 : index
    %c1_217 = arith.constant 1 : index
    %c0_218 = arith.constant 0 : index
    %c0_219 = arith.constant 0 : index
    %450 = vector.load %arg6[%c1_216, %c1_217, %c0_218, %c0_219] : memref<2x2x32x32xf32, #tpu.memory_space<vmem>>, vector<1x1x32x32xf32>
    %451 = vector.shape_cast %450 : vector<1x1x32x32xf32> to vector<32x32xf32>
    %452 = vector.extract_strided_slice %446 {offsets = [0, 0], sizes = [16, 8], strides = [1, 1]} : vector<16x96xf32> to vector<16x8xf32>
    %453 = vector.extract_strided_slice %449 {offsets = [0, 32], sizes = [32, 8], strides = [1, 1]} : vector<32x96xf32> to vector<32x8xf32>
    %454 = vector.extract_strided_slice %449 {offsets = [0, 64], sizes = [32, 8], strides = [1, 1]} : vector<32x96xf32> to vector<32x8xf32>
    %cst_220 = arith.constant dense<0.000000e+00> : vector<16x32xf32>
    %455 = tpu.matmul %452, %453, %cst_220 {dimension_numbers = #tpu.dot_dimension_numbers<[1], [1], [0], [0], [0, 0, 1, 0], [], []>} : vector<16x8xf32>, vector<32x8xf32>, vector<16x32xf32> -> vector<16x32xf32>
    %cst_221 = arith.constant 0.353553385 : f32
    %456 = vector.broadcast %cst_221 : f32 to vector<16x32xf32>
    %457 = arith.mulf %455, %456 : vector<16x32xf32>
    %458 = arith.addf %457, %3 : vector<16x32xf32>
    %cst_222 = arith.constant dense<0xFF800000> : vector<16xf32>
    %459 = vector.multi_reduction <maximumf>, %458, %cst_222 [1] : vector<16x32xf32> to vector<16xf32>
    %460 = vector.shape_cast %459 : vector<16xf32> to vector<16x1xf32>
    %461 = vector.broadcast %460 : vector<16x1xf32> to vector<16x32xf32>
    %462 = arith.subf %458, %461 : vector<16x32xf32>
    %463 = math.exp %462 : vector<16x32xf32>
    %cst_223 = arith.constant dense<0.000000e+00> : vector<16xf32>
    %464 = vector.multi_reduction <add>, %463, %cst_223 [1] : vector<16x32xf32> to vector<16xf32>
    %465 = vector.shape_cast %464 : vector<16xf32> to vector<16x1xf32>
    %466 = tpu.reciprocal %465 : vector<16x1xf32> -> vector<16x1xf32>
    %467 = vector.broadcast %466 : vector<16x1xf32> to vector<16x32xf32>
    %468 = arith.mulf %463, %467 : vector<16x32xf32>
    %cst_224 = arith.constant dense<0.000000e+00> : vector<16x8xf32>
    %469 = tpu.matmul %468, %454, %cst_224 {dimension_numbers = #tpu.dot_dimension_numbers<[1], [0], [0], [1], [0, 0, 1, 1], [], []>} : vector<16x32xf32>, vector<32x8xf32>, vector<16x8xf32> -> vector<16x8xf32>
    %470 = vector.extract_strided_slice %451 {offsets = [0, 0], sizes = [8, 32], strides = [1, 1]} : vector<32x32xf32> to vector<8x32xf32>
    %cst_225 = arith.constant dense<0.000000e+00> : vector<16x32xf32>
    %471 = tpu.matmul %469, %470, %cst_225 {dimension_numbers = #tpu.dot_dimension_numbers<[1], [0], [0], [1], [0, 0, 1, 1], [], []>} : vector<16x8xf32>, vector<8x32xf32>, vector<16x32xf32> -> vector<16x32xf32>
    %472 = vector.extract_strided_slice %446 {offsets = [0, 8], sizes = [16, 8], strides = [1, 1]} : vector<16x96xf32> to vector<16x8xf32>
    %473 = vector.extract_strided_slice %449 {offsets = [0, 40], sizes = [32, 8], strides = [1, 1]} : vector<32x96xf32> to vector<32x8xf32>
    %474 = vector.extract_strided_slice %449 {offsets = [0, 72], sizes = [32, 8], strides = [1, 1]} : vector<32x96xf32> to vector<32x8xf32>
    %cst_226 = arith.constant dense<0.000000e+00> : vector<16x32xf32>
    %475 = tpu.matmul %472, %473, %cst_226 {dimension_numbers = #tpu.dot_dimension_numbers<[1], [1], [0], [0], [0, 0, 1, 0], [], []>} : vector<16x8xf32>, vector<32x8xf32>, vector<16x32xf32> -> vector<16x32xf32>
    %cst_227 = arith.constant 0.353553385 : f32
    %476 = vector.broadcast %cst_227 : f32 to vector<16x32xf32>
    %477 = arith.mulf %475, %476 : vector<16x32xf32>
    %478 = arith.addf %477, %3 : vector<16x32xf32>
    %cst_228 = arith.constant dense<0xFF800000> : vector<16xf32>
    %479 = vector.multi_reduction <maximumf>, %478, %cst_228 [1] : vector<16x32xf32> to vector<16xf32>
    %480 = vector.shape_cast %479 : vector<16xf32> to vector<16x1xf32>
    %481 = vector.broadcast %480 : vector<16x1xf32> to vector<16x32xf32>
    %482 = arith.subf %478, %481 : vector<16x32xf32>
    %483 = math.exp %482 : vector<16x32xf32>
    %cst_229 = arith.constant dense<0.000000e+00> : vector<16xf32>
    %484 = vector.multi_reduction <add>, %483, %cst_229 [1] : vector<16x32xf32> to vector<16xf32>
    %485 = vector.shape_cast %484 : vector<16xf32> to vector<16x1xf32>
    %486 = tpu.reciprocal %485 : vector<16x1xf32> -> vector<16x1xf32>
    %487 = vector.broadcast %486 : vector<16x1xf32> to vector<16x32xf32>
    %488 = arith.mulf %483, %487 : vector<16x32xf32>
    %cst_230 = arith.constant dense<0.000000e+00> : vector<16x8xf32>
    %489 = tpu.matmul %488, %474, %cst_230 {dimension_numbers = #tpu.dot_dimension_numbers<[1], [0], [0], [1], [0, 0, 1, 1], [], []>} : vector<16x32xf32>, vector<32x8xf32>, vector<16x8xf32> -> vector<16x8xf32>
    %490 = vector.extract_strided_slice %451 {offsets = [8, 0], sizes = [8, 32], strides = [1, 1]} : vector<32x32xf32> to vector<8x32xf32>
    %cst_231 = arith.constant dense<0.000000e+00> : vector<16x32xf32>
    %491 = tpu.matmul %489, %490, %cst_231 {dimension_numbers = #tpu.dot_dimension_numbers<[1], [0], [0], [1], [0, 0, 1, 1], [], []>} : vector<16x8xf32>, vector<8x32xf32>, vector<16x32xf32> -> vector<16x32xf32>
    %492 = arith.addf %471, %491 : vector<16x32xf32>
    %493 = vector.extract_strided_slice %446 {offsets = [0, 16], sizes = [16, 8], strides = [1, 1]} : vector<16x96xf32> to vector<16x8xf32>
    %494 = vector.extract_strided_slice %449 {offsets = [0, 48], sizes = [32, 8], strides = [1, 1]} : vector<32x96xf32> to vector<32x8xf32>
    %495 = vector.extract_strided_slice %449 {offsets = [0, 80], sizes = [32, 8], strides = [1, 1]} : vector<32x96xf32> to vector<32x8xf32>
    %cst_232 = arith.constant dense<0.000000e+00> : vector<16x32xf32>
    %496 = tpu.matmul %493, %494, %cst_232 {dimension_numbers = #tpu.dot_dimension_numbers<[1], [1], [0], [0], [0, 0, 1, 0], [], []>} : vector<16x8xf32>, vector<32x8xf32>, vector<16x32xf32> -> vector<16x32xf32>
    %cst_233 = arith.constant 0.353553385 : f32
    %497 = vector.broadcast %cst_233 : f32 to vector<16x32xf32>
    %498 = arith.mulf %496, %497 : vector<16x32xf32>
    %499 = arith.addf %498, %3 : vector<16x32xf32>
    %cst_234 = arith.constant dense<0xFF800000> : vector<16xf32>
    %500 = vector.multi_reduction <maximumf>, %499, %cst_234 [1] : vector<16x32xf32> to vector<16xf32>
    %501 = vector.shape_cast %500 : vector<16xf32> to vector<16x1xf32>
    %502 = vector.broadcast %501 : vector<16x1xf32> to vector<16x32xf32>
    %503 = arith.subf %499, %502 : vector<16x32xf32>
    %504 = math.exp %503 : vector<16x32xf32>
    %cst_235 = arith.constant dense<0.000000e+00> : vector<16xf32>
    %505 = vector.multi_reduction <add>, %504, %cst_235 [1] : vector<16x32xf32> to vector<16xf32>
    %506 = vector.shape_cast %505 : vector<16xf32> to vector<16x1xf32>
    %507 = tpu.reciprocal %506 : vector<16x1xf32> -> vector<16x1xf32>
    %508 = vector.broadcast %507 : vector<16x1xf32> to vector<16x32xf32>
    %509 = arith.mulf %504, %508 : vector<16x32xf32>
    %cst_236 = arith.constant dense<0.000000e+00> : vector<16x8xf32>
    %510 = tpu.matmul %509, %495, %cst_236 {dimension_numbers = #tpu.dot_dimension_numbers<[1], [0], [0], [1], [0, 0, 1, 1], [], []>} : vector<16x32xf32>, vector<32x8xf32>, vector<16x8xf32> -> vector<16x8xf32>
    %511 = vector.extract_strided_slice %451 {offsets = [16, 0], sizes = [8, 32], strides = [1, 1]} : vector<32x32xf32> to vector<8x32xf32>
    %cst_237 = arith.constant dense<0.000000e+00> : vector<16x32xf32>
    %512 = tpu.matmul %510, %511, %cst_237 {dimension_numbers = #tpu.dot_dimension_numbers<[1], [0], [0], [1], [0, 0, 1, 1], [], []>} : vector<16x8xf32>, vector<8x32xf32>, vector<16x32xf32> -> vector<16x32xf32>
    %513 = arith.addf %492, %512 : vector<16x32xf32>
    %514 = vector.extract_strided_slice %446 {offsets = [0, 24], sizes = [16, 8], strides = [1, 1]} : vector<16x96xf32> to vector<16x8xf32>
    %515 = vector.extract_strided_slice %449 {offsets = [0, 56], sizes = [32, 8], strides = [1, 1]} : vector<32x96xf32> to vector<32x8xf32>
    %516 = vector.extract_strided_slice %449 {offsets = [0, 88], sizes = [32, 8], strides = [1, 1]} : vector<32x96xf32> to vector<32x8xf32>
    %cst_238 = arith.constant dense<0.000000e+00> : vector<16x32xf32>
    %517 = tpu.matmul %514, %515, %cst_238 {dimension_numbers = #tpu.dot_dimension_numbers<[1], [1], [0], [0], [0, 0, 1, 0], [], []>} : vector<16x8xf32>, vector<32x8xf32>, vector<16x32xf32> -> vector<16x32xf32>
    %cst_239 = arith.constant 0.353553385 : f32
    %518 = vector.broadcast %cst_239 : f32 to vector<16x32xf32>
    %519 = arith.mulf %517, %518 : vector<16x32xf32>
    %520 = arith.addf %519, %3 : vector<16x32xf32>
    %cst_240 = arith.constant dense<0xFF800000> : vector<16xf32>
    %521 = vector.multi_reduction <maximumf>, %520, %cst_240 [1] : vector<16x32xf32> to vector<16xf32>
    %522 = vector.shape_cast %521 : vector<16xf32> to vector<16x1xf32>
    %523 = vector.broadcast %522 : vector<16x1xf32> to vector<16x32xf32>
    %524 = arith.subf %520, %523 : vector<16x32xf32>
    %525 = math.exp %524 : vector<16x32xf32>
    %cst_241 = arith.constant dense<0.000000e+00> : vector<16xf32>
    %526 = vector.multi_reduction <add>, %525, %cst_241 [1] : vector<16x32xf32> to vector<16xf32>
    %527 = vector.shape_cast %526 : vector<16xf32> to vector<16x1xf32>
    %528 = tpu.reciprocal %527 : vector<16x1xf32> -> vector<16x1xf32>
    %529 = vector.broadcast %528 : vector<16x1xf32> to vector<16x32xf32>
    %530 = arith.mulf %525, %529 : vector<16x32xf32>
    %cst_242 = arith.constant dense<0.000000e+00> : vector<16x8xf32>
    %531 = tpu.matmul %530, %516, %cst_242 {dimension_numbers = #tpu.dot_dimension_numbers<[1], [0], [0], [1], [0, 0, 1, 1], [], []>} : vector<16x32xf32>, vector<32x8xf32>, vector<16x8xf32> -> vector<16x8xf32>
    %532 = vector.extract_strided_slice %451 {offsets = [24, 0], sizes = [8, 32], strides = [1, 1]} : vector<32x32xf32> to vector<8x32xf32>
    %cst_243 = arith.constant dense<0.000000e+00> : vector<16x32xf32>
    %533 = tpu.matmul %531, %532, %cst_243 {dimension_numbers = #tpu.dot_dimension_numbers<[1], [0], [0], [1], [0, 0, 1, 1], [], []>} : vector<16x8xf32>, vector<8x32xf32>, vector<16x32xf32> -> vector<16x32xf32>
    %534 = arith.addf %513, %533 : vector<16x32xf32>
    %535 = arith.addf %414, %534 : vector<16x32xf32>
    %c1_244 = arith.constant 1 : index
    %c1_245 = arith.constant 1 : index
    %c0_246 = arith.constant 0 : index
    %c0_247 = arith.constant 0 : index
    %536 = vector.load %arg7[%c1_244, %c1_245, %c0_246, %c0_247] : memref<2x2x1x32xf32, #tpu.memory_space<vmem>>, vector<1x1x1x32xf32>
    %537 = vector.shape_cast %536 : vector<1x1x1x32xf32> to vector<1x32xf32>
    %538 = vector.broadcast %537 : vector<1x32xf32> to vector<16x32xf32>
    %539 = arith.addf %535, %538 : vector<16x32xf32>
    %c5 = arith.constant 5 : index
    %c0_248 = arith.constant 0 : index
    %c0_249 = arith.constant 0 : index
    %c0_250 = arith.constant 0 : index
    %540 = vector.load %arg12[%c5, %c0_248, %c0_249, %c0_250] : memref<7x2x1x32xf32, #tpu.memory_space<vmem>>, vector<1x1x1x32xf32>
    %541 = vector.shape_cast %540 : vector<1x1x1x32xf32> to vector<1x32xf32>
    %c5_251 = arith.constant 5 : index
    %c1_252 = arith.constant 1 : index
    %c0_253 = arith.constant 0 : index
    %c0_254 = arith.constant 0 : index
    %542 = vector.load %arg12[%c5_251, %c1_252, %c0_253, %c0_254] : memref<7x2x1x32xf32, #tpu.memory_space<vmem>>, vector<1x1x1x32xf32>
    %543 = vector.shape_cast %542 : vector<1x1x1x32xf32> to vector<1x32xf32>
    %cst_255 = arith.constant dense<0.000000e+00> : vector<16xf32>
    %544 = vector.multi_reduction <add>, %539, %cst_255 [1] : vector<16x32xf32> to vector<16xf32>
    %545 = vector.shape_cast %544 : vector<16xf32> to vector<16x1xf32>
    %cst_256 = arith.constant 3.200000e+01 : f32
    %546 = vector.broadcast %cst_256 : f32 to vector<16x1xf32>
    %547 = arith.divf %545, %546 : vector<16x1xf32>
    %548 = vector.broadcast %547 : vector<16x1xf32> to vector<16x32xf32>
    %549 = arith.subf %539, %548 : vector<16x32xf32>
    %550 = arith.mulf %549, %549 : vector<16x32xf32>
    %cst_257 = arith.constant dense<0.000000e+00> : vector<16xf32>
    %551 = vector.multi_reduction <add>, %550, %cst_257 [1] : vector<16x32xf32> to vector<16xf32>
    %552 = vector.shape_cast %551 : vector<16xf32> to vector<16x1xf32>
    %cst_258 = arith.constant 0.0322580636 : f32
    %553 = vector.broadcast %cst_258 : f32 to vector<16x1xf32>
    %554 = arith.mulf %552, %553 : vector<16x1xf32>
    %555 = math.sqrt %554 : vector<16x1xf32>
    %cst_259 = arith.constant 9.99999997E-7 : f32
    %556 = vector.broadcast %cst_259 : f32 to vector<16x1xf32>
    %557 = arith.addf %555, %556 : vector<16x1xf32>
    %558 = tpu.reciprocal %557 : vector<16x1xf32> -> vector<16x1xf32>
    %559 = vector.broadcast %541 : vector<1x32xf32> to vector<16x32xf32>
    %560 = arith.mulf %559, %549 : vector<16x32xf32>
    %561 = vector.broadcast %558 : vector<16x1xf32> to vector<16x32xf32>
    %562 = arith.mulf %560, %561 : vector<16x32xf32>
    %563 = vector.broadcast %543 : vector<1x32xf32> to vector<16x32xf32>
    %564 = arith.addf %562, %563 : vector<16x32xf32>
    %c1_260 = arith.constant 1 : index
    %c0_261 = arith.constant 0 : index
    %c0_262 = arith.constant 0 : index
    %565 = vector.load %arg8[%c1_260, %c0_261, %c0_262] : memref<2x32x64xf32, #tpu.memory_space<vmem>>, vector<1x32x64xf32>
    %566 = vector.shape_cast %565 : vector<1x32x64xf32> to vector<32x64xf32>
    %cst_263 = arith.constant dense<0.000000e+00> : vector<16x64xf32>
    %567 = tpu.matmul %564, %566, %cst_263 {dimension_numbers = #tpu.dot_dimension_numbers<[1], [0], [0], [1], [0, 0, 1, 1], [], []>} : vector<16x32xf32>, vector<32x64xf32>, vector<16x64xf32> -> vector<16x64xf32>
    %c1_264 = arith.constant 1 : index
    %c0_265 = arith.constant 0 : index
    %c0_266 = arith.constant 0 : index
    %568 = vector.load %arg9[%c1_264, %c0_265, %c0_266] : memref<2x1x64xf32, #tpu.memory_space<vmem>>, vector<1x1x64xf32>
    %569 = vector.shape_cast %568 : vector<1x1x64xf32> to vector<1x64xf32>
    %570 = vector.broadcast %569 : vector<1x64xf32> to vector<16x64xf32>
    %571 = arith.addf %567, %570 : vector<16x64xf32>
    %cst_267 = arith.constant 0.000000e+00 : f32
    %572 = vector.broadcast %cst_267 : f32 to vector<16x64xf32>
    %573 = arith.maximumf %571, %572 : vector<16x64xf32>
    %c1_268 = arith.constant 1 : index
    %c0_269 = arith.constant 0 : index
    %c0_270 = arith.constant 0 : index
    %574 = vector.load %arg10[%c1_268, %c0_269, %c0_270] : memref<2x64x32xf32, #tpu.memory_space<vmem>>, vector<1x64x32xf32>
    %575 = vector.shape_cast %574 : vector<1x64x32xf32> to vector<64x32xf32>
    %cst_271 = arith.constant dense<0.000000e+00> : vector<16x32xf32>
    %576 = tpu.matmul %573, %575, %cst_271 {dimension_numbers = #tpu.dot_dimension_numbers<[1], [0], [0], [1], [0, 0, 1, 1], [], []>} : vector<16x64xf32>, vector<64x32xf32>, vector<16x32xf32> -> vector<16x32xf32>
    %577 = arith.addf %539, %576 : vector<16x32xf32>
    %c1_272 = arith.constant 1 : index
    %c0_273 = arith.constant 0 : index
    %c0_274 = arith.constant 0 : index
    %578 = vector.load %arg11[%c1_272, %c0_273, %c0_274] : memref<2x1x32xf32, #tpu.memory_space<vmem>>, vector<1x1x32xf32>
    %579 = vector.shape_cast %578 : vector<1x1x32xf32> to vector<1x32xf32>
    %580 = vector.broadcast %579 : vector<1x32xf32> to vector<16x32xf32>
    %581 = arith.addf %577, %580 : vector<16x32xf32>
    %c6 = arith.constant 6 : index
    %c0_275 = arith.constant 0 : index
    %c0_276 = arith.constant 0 : index
    %c0_277 = arith.constant 0 : index
    %582 = vector.load %arg12[%c6, %c0_275, %c0_276, %c0_277] : memref<7x2x1x32xf32, #tpu.memory_space<vmem>>, vector<1x1x1x32xf32>
    %583 = vector.shape_cast %582 : vector<1x1x1x32xf32> to vector<1x32xf32>
    %c6_278 = arith.constant 6 : index
    %c1_279 = arith.constant 1 : index
    %c0_280 = arith.constant 0 : index
    %c0_281 = arith.constant 0 : index
    %584 = vector.load %arg12[%c6_278, %c1_279, %c0_280, %c0_281] : memref<7x2x1x32xf32, #tpu.memory_space<vmem>>, vector<1x1x1x32xf32>
    %585 = vector.shape_cast %584 : vector<1x1x1x32xf32> to vector<1x32xf32>
    %cst_282 = arith.constant dense<0.000000e+00> : vector<16xf32>
    %586 = vector.multi_reduction <add>, %581, %cst_282 [1] : vector<16x32xf32> to vector<16xf32>
    %587 = vector.shape_cast %586 : vector<16xf32> to vector<16x1xf32>
    %cst_283 = arith.constant 3.200000e+01 : f32
    %588 = vector.broadcast %cst_283 : f32 to vector<16x1xf32>
    %589 = arith.divf %587, %588 : vector<16x1xf32>
    %590 = vector.broadcast %589 : vector<16x1xf32> to vector<16x32xf32>
    %591 = arith.subf %581, %590 : vector<16x32xf32>
    %592 = arith.mulf %591, %591 : vector<16x32xf32>
    %cst_284 = arith.constant dense<0.000000e+00> : vector<16xf32>
    %593 = vector.multi_reduction <add>, %592, %cst_284 [1] : vector<16x32xf32> to vector<16xf32>
    %594 = vector.shape_cast %593 : vector<16xf32> to vector<16x1xf32>
    %cst_285 = arith.constant 0.0322580636 : f32
    %595 = vector.broadcast %cst_285 : f32 to vector<16x1xf32>
    %596 = arith.mulf %594, %595 : vector<16x1xf32>
    %597 = math.sqrt %596 : vector<16x1xf32>
    %cst_286 = arith.constant 9.99999997E-7 : f32
    %598 = vector.broadcast %cst_286 : f32 to vector<16x1xf32>
    %599 = arith.addf %597, %598 : vector<16x1xf32>
    %600 = tpu.reciprocal %599 : vector<16x1xf32> -> vector<16x1xf32>
    %601 = vector.broadcast %583 : vector<1x32xf32> to vector<16x32xf32>
    %602 = arith.mulf %601, %591 : vector<16x32xf32>
    %603 = vector.broadcast %600 : vector<16x1xf32> to vector<16x32xf32>
    %604 = arith.mulf %602, %603 : vector<16x32xf32>
    %605 = vector.broadcast %585 : vector<1x32xf32> to vector<16x32xf32>
    %606 = arith.addf %604, %605 : vector<16x32xf32>
    %c0_287 = arith.constant 0 : index
    %c0_288 = arith.constant 0 : index
    %607 = vector.load %arg13[%c0_287, %c0_288] : memref<16x32xf32, #tpu.memory_space<vmem>>, vector<16x32xf32>
    tpu.vector_store %arg13[%c0_287, %c0_288], %606 {strides = array<i32>} : memref<16x32xf32, #tpu.memory_space<vmem>>, vector<16x32xf32>,
    return
  }
}

</mosaic_0001>

<llo_original>
// kernel: tpu_custom_call.1
$region0: #{tpu_custom_call.1}
  #allocation0 [shape = 'u32[]', space=smem, size = 0x4, offset = 0x4, fixed_abs, tag = 'smem constant byte address 0x4 - core index']
  #allocation1 [shape = 'u32[144,128]{1,0:T(1,128)}', space=vmem, size = 0x12000, scoped, tag = 'internal scratch']
  %s0 = inlined_call_operand.hbm [shape: f32[16,32], index: 0, kind: input, shape index: {}]
  %s1 = inlined_call_operand.hbm [shape: f32[32,32], index: 1, kind: input, shape index: {}]
  %s2 = inlined_call_operand.hbm [shape: f32[16,16], index: 2, kind: input, shape index: {}]
  %s3 = inlined_call_operand.hbm [shape: f32[16,32], index: 3, kind: input, shape index: {}]
  %s4 = inlined_call_operand.vmem [shape: f32[2,2,32,96], index: 4, kind: input, shape index: {}]
  %s5 = inlined_call_operand.vmem [shape: f32[2,2,1,96], index: 5, kind: input, shape index: {}]
  %s6 = inlined_call_operand.hbm [shape: f32[2,2,32,32], index: 6, kind: input, shape index: {}]
  %s7 = inlined_call_operand.vmem [shape: f32[2,2,1,32], index: 7, kind: input, shape index: {}]
  %s8 = inlined_call_operand.vmem [shape: f32[2,32,64], index: 8, kind: input, shape index: {}]
  %s9 = inlined_call_operand.vmem [shape: f32[2,1,64], index: 9, kind: input, shape index: {}]
  %s10 = inlined_call_operand.vmem [shape: f32[2,64,32], index: 10, kind: input, shape index: {}]
  %s11 = inlined_call_operand.vmem [shape: f32[2,1,32], index: 11, kind: input, shape index: {}]
  %s12 = inlined_call_operand.vmem [shape: f32[7,2,1,32], index: 12, kind: input, shape index: {}]
  %s13 = inlined_call_operand.hbm [shape: f32[16,32], index: 13, kind: output, shape index: {}]
  %s14 = sld [smem:[#allocation0]]
  $region82: #{tpu_custom_call.1} parent=0
    _
  %s16 = ssub.s32 1, %s14
  %s17 = scalar_select 0, %s16, %s14
  $region1: #{tpu_custom_call.1} parent=0
    #allocation2 [shape = 'u8[8192]{0}', space=vmem, size = 0x2000, scoped, tag = 'input window, operand 0, single buffered']
    #allocation3 [shape = 's32[1]{0}', space=sflag, size = 0x4, scoped, tag = 'scoped memory for tpu_custom_call.1']
    #allocation4 [shape = 's32[1]{0}', space=sflag, size = 0x4, scoped, tag = 'scoped memory for tpu_custom_call.1']
    #allocation5 [shape = 'u8[16384]{0}', space=vmem, size = 0x4000, scoped, tag = 'input window, operand 1, single buffered']
    #allocation6 [shape = 's32[1]{0}', space=sflag, size = 0x4, scoped, tag = 'scoped memory for tpu_custom_call.1']
    #allocation7 [shape = 'u8[8192]{0}', space=vmem, size = 0x2000, scoped, tag = 'input window, operand 2, single buffered']
    #allocation8 [shape = 'u8[8192]{0}', space=vmem, size = 0x2000, scoped, tag = 'input window, operand 3, single buffered']
    #allocation9 [shape = 's32[1]{0}', space=sflag, size = 0x4, scoped, tag = 'scoped memory for tpu_custom_call.1']
    #allocation10 [shape = 'u8[65536]{0}', space=vmem, size = 0x10000, scoped, tag = 'input window, operand 6, single buffered']
    #allocation11 [shape = 'u8[8192]{0}', space=vmem, size = 0x2000, scoped, tag = 'output window, operand 0, single buffered']
    %18 = vsyncpa [#allocation3], 0
    %19 = vsyncpa [#allocation6], 0
    %20 = vsyncpa [#allocation9], 0
    %21 = vsyncpa [#allocation4], 0
    // Predicated region
    $region2: #{tpu_custom_call.1} parent=1 // pred_check
      _
    $region3: #{tpu_custom_call.1} parent=1 // pred_check_branch
      %23 = sbr.rel (0) target = $region5
    $region4: #{tpu_custom_call.1} parent=1 // pred_region
      %s25 = ssub.s32 256, 256
      %26 = vsyncadd [#allocation3], %s25
      %s27 = sshll.u32 [#allocation2], 4
      %s28 = int_to_ptr.vmem [resolvable:$true] %s27
      %33 = dma.hbm_to_vmem [thread:$0]  %s0, 256, %s28, [#allocation3], 128, 128, 8
    $region5: #{tpu_custom_call.1} parent=1 // pred_fallthru
      _
    // Predicated region
    $region6: #{tpu_custom_call.1} parent=1 // pred_check
      _
    $region7: #{tpu_custom_call.1} parent=1 // pred_check_branch
      %35 = sbr.rel (0) target = $region9
    $region8: #{tpu_custom_call.1} parent=1 // pred_region
      %s37 = ssub.s32 512, 512
      %38 = vsyncadd [#allocation6], %s37
      %s39 = sshll.u32 [#allocation5], 4
      %s40 = int_to_ptr.vmem [resolvable:$true] %s39
      %45 = dma.hbm_to_vmem [thread:$0]  %s1, 512, %s40, [#allocation6], 128, 128, 8
    $region9: #{tpu_custom_call.1} parent=1 // pred_fallthru
      _
    // Predicated region
    $region10: #{tpu_custom_call.1} parent=1 // pred_check
      _
    $region11: #{tpu_custom_call.1} parent=1 // pred_check_branch
      %47 = sbr.rel (0) target = $region13
    $region12: #{tpu_custom_call.1} parent=1 // pred_region
      %s49 = ssub.s32 256, 256
      %50 = vsyncadd [#allocation6], %s49
      %s51 = sshll.u32 [#allocation7], 4
      %s52 = int_to_ptr.vmem [resolvable:$true] %s51
      %57 = dma.hbm_to_vmem [thread:$0]  %s2, 256, %s52, [#allocation6], 128, 128, 8
    $region13: #{tpu_custom_call.1} parent=1 // pred_fallthru
      _
    // Predicated region
    $region14: #{tpu_custom_call.1} parent=1 // pred_check
      _
    $region15: #{tpu_custom_call.1} parent=1 // pred_check_branch
      %59 = sbr.rel (0) target = $region17
    $region16: #{tpu_custom_call.1} parent=1 // pred_region
      %s61 = ssub.s32 256, 256
      %62 = vsyncadd [#allocation9], %s61
      %s63 = sshll.u32 [#allocation8], 4
      %s64 = int_to_ptr.vmem [resolvable:$true] %s63
      %69 = dma.hbm_to_vmem [thread:$0]  %s3, 256, %s64, [#allocation9], 128, 128, 8
    $region17: #{tpu_custom_call.1} parent=1 // pred_fallthru
      _
    // Predicated region
    $region18: #{tpu_custom_call.1} parent=1 // pred_check
      _
    $region19: #{tpu_custom_call.1} parent=1 // pred_check_branch
      %71 = sbr.rel (0) target = $region21
    $region20: #{tpu_custom_call.1} parent=1 // pred_region
      _
    $region21: #{tpu_custom_call.1} parent=1 // pred_fallthru
      _
    // Predicated region
    $region22: #{tpu_custom_call.1} parent=1 // pred_check
      _
    $region23: #{tpu_custom_call.1} parent=1 // pred_check_branch
      %73 = sbr.rel (0) target = $region25
    $region24: #{tpu_custom_call.1} parent=1 // pred_region
      _
    $region25: #{tpu_custom_call.1} parent=1 // pred_fallthru
      _
    // Predicated region
    $region26: #{tpu_custom_call.1} parent=1 // pred_check
      _
    $region27: #{tpu_custom_call.1} parent=1 // pred_check_branch
      %75 = sbr.rel (0) target = $region29
    $region28: #{tpu_custom_call.1} parent=1 // pred_region
      %s77 = ssub.s32 2048, 2048
      %78 = vsyncadd [#allocation9], %s77
      %s79 = sshll.u32 [#allocation10], 4
      %s80 = int_to_ptr.vmem [resolvable:$true] %s79
      %85 = dma.hbm_to_vmem [thread:$0]  %s6, 2048, %s80, [#allocation9], 128, 128, 8
    $region29: #{tpu_custom_call.1} parent=1 // pred_fallthru
      _
    // Predicated region
    $region30: #{tpu_custom_call.1} parent=1 // pred_check
      _
    $region31: #{tpu_custom_call.1} parent=1 // pred_check_branch
      %87 = sbr.rel (0) target = $region33
    $region32: #{tpu_custom_call.1} parent=1 // pred_region
      _
    $region33: #{tpu_custom_call.1} parent=1 // pred_fallthru
      _
    // Predicated region
    $region34: #{tpu_custom_call.1} parent=1 // pred_check
      _
    $region35: #{tpu_custom_call.1} parent=1 // pred_check_branch
      %89 = sbr.rel (0) target = $region37
    $region36: #{tpu_custom_call.1} parent=1 // pred_region
      _
    $region37: #{tpu_custom_call.1} parent=1 // pred_fallthru
      _
    // Predicated region
    $region38: #{tpu_custom_call.1} parent=1 // pred_check
      _
    $region39: #{tpu_custom_call.1} parent=1 // pred_check_branch
      %91 = sbr.rel (0) target = $region41
    $region40: #{tpu_custom_call.1} parent=1 // pred_region
      _
    $region41: #{tpu_custom_call.1} parent=1 // pred_fallthru
      _
    // Predicated region
    $region42: #{tpu_custom_call.1} parent=1 // pred_check
      _
    $region43: #{tpu_custom_call.1} parent=1 // pred_check_branch
      %93 = sbr.rel (0) target = $region45
    $region44: #{tpu_custom_call.1} parent=1 // pred_region
      _
    $region45: #{tpu_custom_call.1} parent=1 // pred_fallthru
      _
    // Predicated region
    $region46: #{tpu_custom_call.1} parent=1 // pred_check
      _
    $region47: #{tpu_custom_call.1} parent=1 // pred_check_branch
      %95 = sbr.rel (0) target = $region49
    $region48: #{tpu_custom_call.1} parent=1 // pred_region
      _
    $region49: #{tpu_custom_call.1} parent=1 // pred_fallthru
      _
    // Predicated region
    $region50: #{tpu_custom_call.1} parent=1 // pred_check
      _
    $region51: #{tpu_custom_call.1} parent=1 // pred_check_branch
      %97 = sbr.rel (0) target = $region53
    $region52: #{tpu_custom_call.1} parent=1 // pred_region
      _
    $region53: #{tpu_custom_call.1} parent=1 // pred_fallthru
      _
    // Predicated region
    $region54: #{tpu_custom_call.1} parent=1 // pred_check
      _
    $region55: #{tpu_custom_call.1} parent=1 // pred_check_branch
      %99 = sbr.rel (0) target = $region57
    $region56: #{tpu_custom_call.1} parent=1 // pred_region
      %100 = dma.done [#allocation3], 256
    $region57: #{tpu_custom_call.1} parent=1 // pred_fallthru
      _
    // Predicated region
    $region58: #{tpu_custom_call.1} parent=1 // pred_check
      _
    $region59: #{tpu_custom_call.1} parent=1 // pred_check_branch
      %102 = sbr.rel (0) target = $region61
    $region60: #{tpu_custom_call.1} parent=1 // pred_region
      %103 = dma.done [#allocation6], 512
    $region61: #{tpu_custom_call.1} parent=1 // pred_fallthru
      _
    // Predicated region
    $region62: #{tpu_custom_call.1} parent=1 // pred_check
      _
    $region63: #{tpu_custom_call.1} parent=1 // pred_check_branch
      %105 = sbr.rel (0) target = $region65
    $region64: #{tpu_custom_call.1} parent=1 // pred_region
      %106 = dma.done [#allocation6], 256
    $region65: #{tpu_custom_call.1} parent=1 // pred_fallthru
      _
    // Predicated region
    $region66: #{tpu_custom_call.1} parent=1 // pred_check
      _
    $region67: #{tpu_custom_call.1} parent=1 // pred_check_branch
      %108 = sbr.rel (0) target = $region69
    $region68: #{tpu_custom_call.1} parent=1 // pred_region
      %109 = dma.done [#allocation9], 256
    $region69: #{tpu_custom_call.1} parent=1 // pred_fallthru
      _
    // Predicated region
    $region70: #{tpu_custom_call.1} parent=1 // pred_check
      _
    $region71: #{tpu_custom_call.1} parent=1 // pred_check_branch
      %111 = sbr.rel (0) target = $region73
    $region72: #{tpu_custom_call.1} parent=1 // pred_region
      %112 = dma.done [#allocation9], 2048
    $region73: #{tpu_custom_call.1} parent=1 // pred_fallthru
      _
    %v113 = vld [vmem:[#allocation2] sm:$0xff]
    %v114 = vld [vmem:[#allocation2 + $0x8] sm:$0xff]
    %v115 = vld [vmem:[#allocation5] sm:$0xff]
    %v116 = vld [vmem:[#allocation5 + $0x8] sm:$0xff]
    %v117 = vld [vmem:[#allocation5 + $0x10] sm:$0xff]
    %v118 = vld [vmem:[#allocation5 + $0x18] sm:$0xff]
    %v119 = vld [vmem:[#allocation7] sm:$0xff]
    %v120 = vld [vmem:[#allocation7 + $0x8] sm:$0xff]
    %v121 = vld [vmem:[#allocation8] sm:$0xff]
    %v122 = vld [vmem:[#allocation8 + $0x8] sm:$0xff]
    %v123 = vld [vmem:[%s12] sm:$0x1]
    %s124 = scalar_lea.vmem %s12, 1
    %v125 = vld [vmem:[%s124] sm:$0x1]
    %vm126 = vcmask 261120
    %v127 = vsel %vm126, %v113, 0.0
    %128 = vadd.xlane.f32.xlu0 %v127
    %v129 = vpop.xlane.xlu0 %128
    %v130 = vsel %vm126, %v114, 0.0
    %131 = vadd.xlane.f32.xlu0 %v130
    %v132 = vpop.xlane.xlu0 %131
    %v133 = vrcp.pop 32.0
    %v134 = vmul.f32 %v129, %v133
    %v135 = vmul.f32 %v132, %v133
    %v136 = vsub.f32 %v113, %v134
    %v137 = vsub.f32 %v114, %v135
    %v138 = vmul.f32 %v136, %v136
    %v139 = vmul.f32 %v137, %v137
    %v140 = vsel %vm126, %v138, 0.0
    %141 = vadd.xlane.f32.xlu0 %v140
    %v142 = vpop.xlane.xlu0 %141
    %v143 = vsel %vm126, %v139, 0.0
    %144 = vadd.xlane.f32.xlu0 %v143
    %v145 = vpop.xlane.xlu0 %144
    %v146 = vmul.f32 %v142, 0.032258064
    %v147 = vmul.f32 %v145, 0.032258064
    %v148 = vrsqrt.pop %v146
    %v149 = vmul.f32 %v146, %v148
    %vm150 = vcmp.eq.f32.partialorder %v146, inf
    %v151 = vsel %vm150, %v146, %v149
    %vm152 = vcmp.eq.f32.partialorder %v146, 0.0
    %v153 = vand.u32 %v146, 2147483648
    %v154 = vsel %vm152, %v153, %v151
    %v155 = vrsqrt.pop %v147
    %v156 = vmul.f32 %v147, %v155
    %vm157 = vcmp.eq.f32.partialorder %v147, inf
    %v158 = vsel %vm157, %v147, %v156
    %vm159 = vcmp.eq.f32.partialorder %v147, 0.0
    %v160 = vand.u32 %v147, 2147483648
    %v161 = vsel %vm159, %v160, %v158
    %v162 = vadd.f32 %v154, 1e-06
    %v163 = vadd.f32 %v161, 1e-06
    %v164 = vrcp.pop %v162
    %v165 = vrcp.pop %v163
    %v167 = vlaneseq
    %v168 = vshrl.u32 %v167, 7
    %v169 = vsub.s32 0, %v168
    %v170 = vrot.slane %v123, %v169
    %v172 = vmul.f32 %v170, %v136
    %v173 = vmul.f32 %v170, %v137
    %v174 = vmul.f32 %v172, %v164
    %v175 = vmul.f32 %v173, %v165
    %v177 = vlaneseq
    %v178 = vshrl.u32 %v177, 7
    %v179 = vsub.s32 0, %v178
    %v180 = vrot.slane %v125, %v179
    %v182 = vadd.f32 %v174, %v180
    %v183 = vadd.f32 %v175, %v180
    %v184 = vld [vmem:[%s4] sm:$0xff]
    %v185 = vld [vmem:[%s4 + $0x8] sm:$0xff]
    %v186 = vld [vmem:[%s4 + $0x10] sm:$0xff]
    %v187 = vld [vmem:[%s4 + $0x18] sm:$0xff]
    %v188 = vld [vmem:[%s5] sm:$0x1]
    %v190 = vlaneseq
    %v191 = vshrl.u32 %v190, 7
    %v192 = vsub.s32 0, %v191
    %v193 = vrot.slane %v188, %v192
    %v196 = vsel %vm126, %v182, 0
    %v199 = vsel %vm126, %v183, 0
    %201 = vmatprep.subr.mxu0 0.0
    %202 = vmatpush1.msra.mxu0 %v184
    %203 = vmatprep.subr.mxu0 0.0
    %204 = vmatpush1.msra.mxu0 %v185
    %205 = vmatprep.subr.mxu0 0.0
    %206 = vmatpush1.msra.mxu0 %v186
    %207 = vmatprep.subr.mxu0 0.0
    %208 = vmatpush1.msra.mxu0 %v187
    %209 = vmatprep.subr.mxu0 0.0
    %210 = vmatpush1.msra.mxu0 0.0
    %211 = vmatprep.subr.mxu0 0.0
    %212 = vmatpush1.msra.mxu0 0.0
    %213 = vmatprep.subr.mxu0 0.0
    %214 = vmatpush1.msra.mxu0 0.0
    %215 = vmatprep.subr.mxu0 0.0
    %216 = vmatpush1.msra.mxu0 0.0
    %217 = vmatprep.subr.mxu0 0.0
    %218 = vmatpush1.msra.mxu0 0.0
    %219 = vmatprep.subr.mxu0 0.0
    %220 = vmatpush1.msra.mxu0 0.0
    %221 = vmatprep.subr.mxu0 0.0
    %222 = vmatpush1.msra.mxu0 0.0
    %223 = vmatprep.subr.mxu0 0.0
    %224 = vmatpush1.msra.mxu0 0.0
    %225 = vmatprep.subr.mxu0 0.0
    %226 = vmatpush1.msra.mxu0 0.0
    %227 = vmatprep.subr.mxu0 0.0
    %228 = vmatpush1.msra.mxu0 0.0
    %229 = vmatprep.subr.mxu0 0.0
    %230 = vmatpush1.msra.mxu0 0.0
    %231 = vmatprep.subr.mxu0 0.0
    %232 = vmatpush1.msra.mxu0 0.0
    %233 = vmatprep.subr.mxu0 0.0
    %234 = vmatpush1.msra.mxu0 0.0
    %235 = vmatprep.subr.mxu0 0.0
    %236 = vmatpush1.msra.mxu0 0.0
    %237 = vmatprep.subr.mxu0 0.0
    %238 = vmatpush1.msra.mxu0 0.0
    %239 = vmatprep.subr.mxu0 0.0
    %240 = vmatpush1.msra.mxu0 0.0
    %241 = vmatprep.subr.mxu0 0.0
    %242 = vmatpush1.msra.mxu0 0.0
    %243 = vmatprep.subr.mxu0 0.0
    %244 = vmatpush1.msra.mxu0 0.0
    %245 = vmatprep.subr.mxu0 0.0
    %246 = vmatpush1.msra.mxu0 0.0
    %247 = vmatprep.subr.mxu0 0.0
    %248 = vmatpush1.msra.mxu0 0.0
    %249 = vmatprep.subr.mxu0 0.0
    %250 = vmatpush1.msra.mxu0 0.0
    %251 = vmatprep.subr.mxu0 0.0
    %252 = vmatpush1.msra.mxu0 0.0
    %253 = vmatprep.subr.mxu0 0.0
    %254 = vmatpush1.msra.mxu0 0.0
    %255 = vmatprep.subr.mxu0 0.0
    %256 = vmatpush1.msra.mxu0 0.0
    %257 = vmatprep.subr.mxu0 0.0
    %258 = vmatpush1.msra.mxu0 0.0
    %259 = vmatprep.subr.mxu0 0.0
    %260 = vmatpush1.msra.mxu0 0.0
    %261 = vmatprep.subr.mxu0 0.0
    %262 = vmatpush1.msra.mxu0 0.0
    %263 = vmatprep.subr.mxu0 0.0
    %264 = vmatpush1.msra.mxu0 0.0
    %265 = vmatprep.mubr.f32.mxu0 0.0
    %266 = vmatmul.mubr.f32.gmra.mrb[0].mxu0 %v196
    %v267 = vpop.f32.mrb[0].mxu0
    %v268 = vadd.f32 %v193, %v267
    %v269 = vpop.f32.mrb[0].mxu0
    %270 = vmatprep.mubr.f32.mxu0 0.0
    %271 = vmatmul.mubr.f32.gmra.mrb[0].mxu0 %v199
    %v272 = vpop.f32.mrb[0].mxu0
    %v273 = vadd.f32 %v193, %v272
    %v274 = vpop.f32.mrb[0].mxu0
    %275 = vdwg.mxu0
    %v276 = vld [vmem:[#allocation10] sm:$0xff]
    %v277 = vld [vmem:[#allocation10 + $0x8] sm:$0xff]
    %v278 = vld [vmem:[#allocation10 + $0x10] sm:$0xff]
    %v279 = vld [vmem:[#allocation10 + $0x18] sm:$0xff]
    %282 = vrot.lane.b32.xlu0 %v268, 96
    %v283 = vpop.permute.xlu0 %282
    %284 = vrot.lane.b32.xlu0 %v273, 96
    %v285 = vpop.permute.xlu0 %284
    %vm286 = vcmask 64512
    %v287 = vsel %vm286, %v268, 0
    %v289 = vsel %vm286, %v273, 0
    %v291 = vsel %vm286, %v283, 0
    %v293 = vsel %vm286, %v285, 0
    %295 = vmatprep.subr.mxu0 0.0
    %296 = vmatpush1.xpose.msra.mxu0 %v291
    %297 = vmatprep.subr.mxu0 0.0
    %298 = vmatpush1.xpose.msra.mxu0 %v293
    %299 = vmatprep.subr.mxu0 0.0
    %300 = vmatpush1.xpose.msra.mxu0 0.0
    %301 = vmatprep.subr.mxu0 0.0
    %302 = vmatpush1.xpose.msra.mxu0 0.0
    %303 = vmatprep.subr.mxu0 0.0
    %304 = vmatpush1.xpose.msra.mxu0 0.0
    %305 = vmatprep.subr.mxu0 0.0
    %306 = vmatpush1.xpose.msra.mxu0 0.0
    %307 = vmatprep.subr.mxu0 0.0
    %308 = vmatpush1.xpose.msra.mxu0 0.0
    %309 = vmatprep.subr.mxu0 0.0
    %310 = vmatpush1.xpose.msra.mxu0 0.0
    %311 = vmatprep.subr.mxu0 0.0
    %312 = vmatpush1.xpose.msra.mxu0 0.0
    %313 = vmatprep.subr.mxu0 0.0
    %314 = vmatpush1.xpose.msra.mxu0 0.0
    %315 = vmatprep.subr.mxu0 0.0
    %316 = vmatpush1.xpose.msra.mxu0 0.0
    %317 = vmatprep.subr.mxu0 0.0
    %318 = vmatpush1.xpose.msra.mxu0 0.0
    %319 = vmatprep.subr.mxu0 0.0
    %320 = vmatpush1.xpose.msra.mxu0 0.0
    %321 = vmatprep.subr.mxu0 0.0
    %322 = vmatpush1.xpose.msra.mxu0 0.0
    %323 = vmatprep.subr.mxu0 0.0
    %324 = vmatpush1.xpose.msra.mxu0 0.0
    %325 = vmatprep.subr.mxu0 0.0
    %326 = vmatpush1.xpose.msra.mxu0 0.0
    %327 = vmatprep.subr.mxu0 0.0
    %328 = vmatpush1.xpose.msra.mxu0 0.0
    %329 = vmatprep.subr.mxu0 0.0
    %330 = vmatpush1.xpose.msra.mxu0 0.0
    %331 = vmatprep.subr.mxu0 0.0
    %332 = vmatpush1.xpose.msra.mxu0 0.0
    %333 = vmatprep.subr.mxu0 0.0
    %334 = vmatpush1.xpose.msra.mxu0 0.0
    %335 = vmatprep.subr.mxu0 0.0
    %336 = vmatpush1.xpose.msra.mxu0 0.0
    %337 = vmatprep.subr.mxu0 0.0
    %338 = vmatpush1.xpose.msra.mxu0 0.0
    %339 = vmatprep.subr.mxu0 0.0
    %340 = vmatpush1.xpose.msra.mxu0 0.0
    %341 = vmatprep.subr.mxu0 0.0
    %342 = vmatpush1.xpose.msra.mxu0 0.0
    %343 = vmatprep.subr.mxu0 0.0
    %344 = vmatpush1.xpose.msra.mxu0 0.0
    %345 = vmatprep.subr.mxu0 0.0
    %346 = vmatpush1.xpose.msra.mxu0 0.0
    %347 = vmatprep.subr.mxu0 0.0
    %348 = vmatpush1.xpose.msra.mxu0 0.0
    %349 = vmatprep.subr.mxu0 0.0
    %350 = vmatpush1.xpose.msra.mxu0 0.0
    %351 = vmatprep.subr.mxu0 0.0
    %352 = vmatpush1.xpose.msra.mxu0 0.0
    %353 = vmatprep.subr.mxu0 0.0
    %354 = vmatpush1.xpose.msra.mxu0 0.0
    %355 = vmatprep.subr.mxu0 0.0
    %356 = vmatpush1.xpose.msra.mxu0 0.0
    %357 = vmatprep.subr.mxu0 0.0
    %358 = vmatpush1.xpose.msra.mxu0 0.0
    %359 = vmatprep.mubr.f32.mxu0 0.0
    %360 = vmatmul.mubr.f32.gmra.mrb[0].mxu0 %v287
    %v361 = vpop.f32.mrb[0].mxu0
    %v362 = vadd.f32 0.0, %v361
    %v363 = vpop.f32.mrb[0].mxu0
    %364 = vmatprep.mubr.f32.mxu0 0.0
    %365 = vmatmul.mubr.f32.gmra.mrb[0].mxu0 %v289
    %v366 = vpop.f32.mrb[0].mxu0
    %v367 = vadd.f32 0.0, %v366
    %v368 = vpop.f32.mrb[0].mxu0
    %369 = vdwg.mxu0
    %v370 = vmul.f32 %v362, 0.35355338
    %v371 = vmul.f32 %v367, 0.35355338
    %v372 = vadd.f32 %v370, %v119
    %v373 = vadd.f32 %v371, %v120
    %vm374 = vcmask 130048
    %v375 = vsel %vm374, %v372, -inf
    %376 = vmax.xlane.f32.xlu0 %v375
    %v377 = vpop.xlane.xlu0 %376
    %v378 = vsel %vm374, %v373, -inf
    %379 = vmax.xlane.f32.xlu0 %v378
    %v380 = vpop.xlane.xlu0 %379
    %v381 = vsub.f32 %v372, %v377
    %v382 = vsub.f32 %v373, %v380
    %v383 = vmul.f32 %v381, 1.442695
    %v384 = vpow.pop %v383
    %v385 = vmul.f32 %v382, 1.442695
    %v386 = vpow.pop %v385
    %v387 = vsel %vm374, %v384, 0.0
    %388 = vadd.xlane.f32.xlu0 %v387
    %v389 = vpop.xlane.xlu0 %388
    %v390 = vsel %vm374, %v386, 0.0
    %391 = vadd.xlane.f32.xlu0 %v390
    %v392 = vpop.xlane.xlu0 %391
    %v393 = vrcp.pop %v389
    %v394 = vrcp.pop %v392
    %v395 = vmul.f32 %v384, %v393
    %v396 = vmul.f32 %v386, %v394
    %397 = vrot.lane.b32.xlu0 %v268, 64
    %v398 = vpop.permute.xlu0 %397
    %399 = vrot.lane.b32.xlu0 %v273, 64
    %v400 = vpop.permute.xlu0 %399
    %v404 = vsel %vm374, %v395, 0
    %v407 = vsel %vm374, %v396, 0
    %409 = vmatprep.subr.mxu0 0.0
    %410 = vmatpush1.msra.mxu0 %v398
    %411 = vmatprep.subr.mxu0 0.0
    %412 = vmatpush1.msra.mxu0 %v400
    %413 = vmatprep.subr.mxu0 0.0
    %414 = vmatpush1.msra.mxu0 0.0
    %415 = vmatprep.subr.mxu0 0.0
    %416 = vmatpush1.msra.mxu0 0.0
    %417 = vmatprep.subr.mxu0 0.0
    %418 = vmatpush1.msra.mxu0 0.0
    %419 = vmatprep.subr.mxu0 0.0
    %420 = vmatpush1.msra.mxu0 0.0
    %421 = vmatprep.subr.mxu0 0.0
    %422 = vmatpush1.msra.mxu0 0.0
    %423 = vmatprep.subr.mxu0 0.0
    %424 = vmatpush1.msra.mxu0 0.0
    %425 = vmatprep.subr.mxu0 0.0
    %426 = vmatpush1.msra.mxu0 0.0
    %427 = vmatprep.subr.mxu0 0.0
    %428 = vmatpush1.msra.mxu0 0.0
    %429 = vmatprep.subr.mxu0 0.0
    %430 = vmatpush1.msra.mxu0 0.0
    %431 = vmatprep.subr.mxu0 0.0
    %432 = vmatpush1.msra.mxu0 0.0
    %433 = vmatprep.subr.mxu0 0.0
    %434 = vmatpush1.msra.mxu0 0.0
    %435 = vmatprep.subr.mxu0 0.0
    %436 = vmatpush1.msra.mxu0 0.0
    %437 = vmatprep.subr.mxu0 0.0
    %438 = vmatpush1.msra.mxu0 0.0
    %439 = vmatprep.subr.mxu0 0.0
    %440 = vmatpush1.msra.mxu0 0.0
    %441 = vmatprep.subr.mxu0 0.0
    %442 = vmatpush1.msra.mxu0 0.0
    %443 = vmatprep.subr.mxu0 0.0
    %444 = vmatpush1.msra.mxu0 0.0
    %445 = vmatprep.subr.mxu0 0.0
    %446 = vmatpush1.msra.mxu0 0.0
    %447 = vmatprep.subr.mxu0 0.0
    %448 = vmatpush1.msra.mxu0 0.0
    %449 = vmatprep.subr.mxu0 0.0
    %450 = vmatpush1.msra.mxu0 0.0
    %451 = vmatprep.subr.mxu0 0.0
    %452 = vmatpush1.msra.mxu0 0.0
    %453 = vmatprep.subr.mxu0 0.0
    %454 = vmatpush1.msra.mxu0 0.0
    %455 = vmatprep.subr.mxu0 0.0
    %456 = vmatpush1.msra.mxu0 0.0
    %457 = vmatprep.subr.mxu0 0.0
    %458 = vmatpush1.msra.mxu0 0.0
    %459 = vmatprep.subr.mxu0 0.0
    %460 = vmatpush1.msra.mxu0 0.0
    %461 = vmatprep.subr.mxu0 0.0
    %462 = vmatpush1.msra.mxu0 0.0
    %463 = vmatprep.subr.mxu0 0.0
    %464 = vmatpush1.msra.mxu0 0.0
    %465 = vmatprep.subr.mxu0 0.0
    %466 = vmatpush1.msra.mxu0 0.0
    %467 = vmatprep.subr.mxu0 0.0
    %468 = vmatpush1.msra.mxu0 0.0
    %469 = vmatprep.subr.mxu0 0.0
    %470 = vmatpush1.msra.mxu0 0.0
    %471 = vmatprep.subr.mxu0 0.0
    %472 = vmatpush1.msra.mxu0 0.0
    %473 = vmatprep.mubr.f32.mxu0 0.0
    %474 = vmatmul.mubr.f32.gmra.mrb[0].mxu0 %v404
    %v475 = vpop.f32.mrb[0].mxu0
    %v476 = vadd.f32 0.0, %v475
    %v477 = vpop.f32.mrb[0].mxu0
    %478 = vmatprep.mubr.f32.mxu0 0.0
    %479 = vmatmul.mubr.f32.gmra.mrb[0].mxu0 %v407
    %v480 = vpop.f32.mrb[0].mxu0
    %v481 = vadd.f32 0.0, %v480
    %v482 = vpop.f32.mrb[0].mxu0
    %483 = vdwg.mxu0
    %484 = vrot.lane.b32.xlu0 %v268, 120
    %v485 = vpop.permute.xlu0 %484
    %486 = vrot.lane.b32.xlu0 %v273, 120
    %v487 = vpop.permute.xlu0 %486
    %488 = vrot.lane.b32.xlu0 %v268, 88
    %v489 = vpop.permute.xlu0 %488
    %490 = vrot.lane.b32.xlu0 %v273, 88
    %v491 = vpop.permute.xlu0 %490
    %v492 = vsel %vm286, %v485, 0
    %v494 = vsel %vm286, %v487, 0
    %v496 = vsel %vm286, %v489, 0
    %v498 = vsel %vm286, %v491, 0
    %500 = vmatprep.subr.mxu0 0.0
    %501 = vmatpush1.xpose.msra.mxu0 %v496
    %502 = vmatprep.subr.mxu0 0.0
    %503 = vmatpush1.xpose.msra.mxu0 %v498
    %504 = vmatprep.subr.mxu0 0.0
    %505 = vmatpush1.xpose.msra.mxu0 0.0
    %506 = vmatprep.subr.mxu0 0.0
    %507 = vmatpush1.xpose.msra.mxu0 0.0
    %508 = vmatprep.subr.mxu0 0.0
    %509 = vmatpush1.xpose.msra.mxu0 0.0
    %510 = vmatprep.subr.mxu0 0.0
    %511 = vmatpush1.xpose.msra.mxu0 0.0
    %512 = vmatprep.subr.mxu0 0.0
    %513 = vmatpush1.xpose.msra.mxu0 0.0
    %514 = vmatprep.subr.mxu0 0.0
    %515 = vmatpush1.xpose.msra.mxu0 0.0
    %516 = vmatprep.subr.mxu0 0.0
    %517 = vmatpush1.xpose.msra.mxu0 0.0
    %518 = vmatprep.subr.mxu0 0.0
    %519 = vmatpush1.xpose.msra.mxu0 0.0
    %520 = vmatprep.subr.mxu0 0.0
    %521 = vmatpush1.xpose.msra.mxu0 0.0
    %522 = vmatprep.subr.mxu0 0.0
    %523 = vmatpush1.xpose.msra.mxu0 0.0
    %524 = vmatprep.subr.mxu0 0.0
    %525 = vmatpush1.xpose.msra.mxu0 0.0
    %526 = vmatprep.subr.mxu0 0.0
    %527 = vmatpush1.xpose.msra.mxu0 0.0
    %528 = vmatprep.subr.mxu0 0.0
    %529 = vmatpush1.xpose.msra.mxu0 0.0
    %530 = vmatprep.subr.mxu0 0.0
    %531 = vmatpush1.xpose.msra.mxu0 0.0
    %532 = vmatprep.subr.mxu0 0.0
    %533 = vmatpush1.xpose.msra.mxu0 0.0
    %534 = vmatprep.subr.mxu0 0.0
    %535 = vmatpush1.xpose.msra.mxu0 0.0
    %536 = vmatprep.subr.mxu0 0.0
    %537 = vmatpush1.xpose.msra.mxu0 0.0
    %538 = vmatprep.subr.mxu0 0.0
    %539 = vmatpush1.xpose.msra.mxu0 0.0
    %540 = vmatprep.subr.mxu0 0.0
    %541 = vmatpush1.xpose.msra.mxu0 0.0
    %542 = vmatprep.subr.mxu0 0.0
    %543 = vmatpush1.xpose.msra.mxu0 0.0
    %544 = vmatprep.subr.mxu0 0.0
    %545 = vmatpush1.xpose.msra.mxu0 0.0
    %546 = vmatprep.subr.mxu0 0.0
    %547 = vmatpush1.xpose.msra.mxu0 0.0
    %548 = vmatprep.subr.mxu0 0.0
    %549 = vmatpush1.xpose.msra.mxu0 0.0
    %550 = vmatprep.subr.mxu0 0.0
    %551 = vmatpush1.xpose.msra.mxu0 0.0
    %552 = vmatprep.subr.mxu0 0.0
    %553 = vmatpush1.xpose.msra.mxu0 0.0
    %554 = vmatprep.subr.mxu0 0.0
    %555 = vmatpush1.xpose.msra.mxu0 0.0
    %556 = vmatprep.subr.mxu0 0.0
    %557 = vmatpush1.xpose.msra.mxu0 0.0
    %558 = vmatprep.subr.mxu0 0.0
    %559 = vmatpush1.xpose.msra.mxu0 0.0
    %560 = vmatprep.subr.mxu0 0.0
    %561 = vmatpush1.xpose.msra.mxu0 0.0
    %562 = vmatprep.subr.mxu0 0.0
    %563 = vmatpush1.xpose.msra.mxu0 0.0
    %564 = vmatprep.mubr.f32.mxu0 0.0
    %565 = vmatmul.mubr.f32.gmra.mrb[0].mxu0 %v492
    %v566 = vpop.f32.mrb[0].mxu0
    %v567 = vadd.f32 0.0, %v566
    %v568 = vpop.f32.mrb[0].mxu0
    %569 = vmatprep.mubr.f32.mxu0 0.0
    %570 = vmatmul.mubr.f32.gmra.mrb[0].mxu0 %v494
    %v571 = vpop.f32.mrb[0].mxu0
    %v572 = vadd.f32 0.0, %v571
    %v573 = vpop.f32.mrb[0].mxu0
    %574 = vdwg.mxu0
    %v575 = vmul.f32 %v567, 0.35355338
    %v576 = vmul.f32 %v572, 0.35355338
    %v577 = vadd.f32 %v575, %v119
    %v578 = vadd.f32 %v576, %v120
    %v579 = vsel %vm374, %v577, -inf
    %580 = vmax.xlane.f32.xlu0 %v579
    %v581 = vpop.xlane.xlu0 %580
    %v582 = vsel %vm374, %v578, -inf
    %583 = vmax.xlane.f32.xlu0 %v582
    %v584 = vpop.xlane.xlu0 %583
    %v585 = vsub.f32 %v577, %v581
    %v586 = vsub.f32 %v578, %v584
    %v587 = vmul.f32 %v585, 1.442695
    %v588 = vpow.pop %v587
    %v589 = vmul.f32 %v586, 1.442695
    %v590 = vpow.pop %v589
    %v591 = vsel %vm374, %v588, 0.0
    %592 = vadd.xlane.f32.xlu0 %v591
    %v593 = vpop.xlane.xlu0 %592
    %v594 = vsel %vm374, %v590, 0.0
    %595 = vadd.xlane.f32.xlu0 %v594
    %v596 = vpop.xlane.xlu0 %595
    %v597 = vrcp.pop %v593
    %v598 = vrcp.pop %v596
    %v599 = vmul.f32 %v588, %v597
    %v600 = vmul.f32 %v590, %v598
    %601 = vrot.lane.b32.xlu0 %v268, 56
    %v602 = vpop.permute.xlu0 %601
    %603 = vrot.lane.b32.xlu0 %v273, 56
    %v604 = vpop.permute.xlu0 %603
    %v608 = vsel %vm374, %v599, 0
    %v611 = vsel %vm374, %v600, 0
    %613 = vmatprep.subr.mxu0 0.0
    %614 = vmatpush1.msra.mxu0 %v602
    %615 = vmatprep.subr.mxu0 0.0
    %616 = vmatpush1.msra.mxu0 %v604
    %617 = vmatprep.subr.mxu0 0.0
    %618 = vmatpush1.msra.mxu0 0.0
    %619 = vmatprep.subr.mxu0 0.0
    %620 = vmatpush1.msra.mxu0 0.0
    %621 = vmatprep.subr.mxu0 0.0
    %622 = vmatpush1.msra.mxu0 0.0
    %623 = vmatprep.subr.mxu0 0.0
    %624 = vmatpush1.msra.mxu0 0.0
    %625 = vmatprep.subr.mxu0 0.0
    %626 = vmatpush1.msra.mxu0 0.0
    %627 = vmatprep.subr.mxu0 0.0
    %628 = vmatpush1.msra.mxu0 0.0
    %629 = vmatprep.subr.mxu0 0.0
    %630 = vmatpush1.msra.mxu0 0.0
    %631 = vmatprep.subr.mxu0 0.0
    %632 = vmatpush1.msra.mxu0 0.0
    %633 = vmatprep.subr.mxu0 0.0
    %634 = vmatpush1.msra.mxu0 0.0
    %635 = vmatprep.subr.mxu0 0.0
    %636 = vmatpush1.msra.mxu0 0.0
    %637 = vmatprep.subr.mxu0 0.0
    %638 = vmatpush1.msra.mxu0 0.0
    %639 = vmatprep.subr.mxu0 0.0
    %640 = vmatpush1.msra.mxu0 0.0
    %641 = vmatprep.subr.mxu0 0.0
    %642 = vmatpush1.msra.mxu0 0.0
    %643 = vmatprep.subr.mxu0 0.0
    %644 = vmatpush1.msra.mxu0 0.0
    %645 = vmatprep.subr.mxu0 0.0
    %646 = vmatpush1.msra.mxu0 0.0
    %647 = vmatprep.subr.mxu0 0.0
    %648 = vmatpush1.msra.mxu0 0.0
    %649 = vmatprep.subr.mxu0 0.0
    %650 = vmatpush1.msra.mxu0 0.0
    %651 = vmatprep.subr.mxu0 0.0
    %652 = vmatpush1.msra.mxu0 0.0
    %653 = vmatprep.subr.mxu0 0.0
    %654 = vmatpush1.msra.mxu0 0.0
    %655 = vmatprep.subr.mxu0 0.0
    %656 = vmatpush1.msra.mxu0 0.0
    %657 = vmatprep.subr.mxu0 0.0
    %658 = vmatpush1.msra.mxu0 0.0
    %659 = vmatprep.subr.mxu0 0.0
    %660 = vmatpush1.msra.mxu0 0.0
    %661 = vmatprep.subr.mxu0 0.0
    %662 = vmatpush1.msra.mxu0 0.0
    %663 = vmatprep.subr.mxu0 0.0
    %664 = vmatpush1.msra.mxu0 0.0
    %665 = vmatprep.subr.mxu0 0.0
    %666 = vmatpush1.msra.mxu0 0.0
    %667 = vmatprep.subr.mxu0 0.0
    %668 = vmatpush1.msra.mxu0 0.0
    %669 = vmatprep.subr.mxu0 0.0
    %670 = vmatpush1.msra.mxu0 0.0
    %671 = vmatprep.subr.mxu0 0.0
    %672 = vmatpush1.msra.mxu0 0.0
    %673 = vmatprep.subr.mxu0 0.0
    %674 = vmatpush1.msra.mxu0 0.0
    %675 = vmatprep.subr.mxu0 0.0
    %676 = vmatpush1.msra.mxu0 0.0
    %677 = vmatprep.mubr.f32.mxu0 0.0
    %678 = vmatmul.mubr.f32.gmra.mrb[0].mxu0 %v608
    %v679 = vpop.f32.mrb[0].mxu0
    %v680 = vadd.f32 0.0, %v679
    %v681 = vpop.f32.mrb[0].mxu0
    %682 = vmatprep.mubr.f32.mxu0 0.0
    %683 = vmatmul.mubr.f32.gmra.mrb[0].mxu0 %v611
    %v684 = vpop.f32.mrb[0].mxu0
    %v685 = vadd.f32 0.0, %v684
    %v686 = vpop.f32.mrb[0].mxu0
    %687 = vdwg.mxu0
    %v689 = vsel %vm286, %v680, 0
    %v692 = vsel %vm286, %v685, 0
    %694 = vmatprep.subr.mxu0 0.0
    %695 = vmatpush1.msra.mxu0 %v277
    %696 = vmatprep.subr.mxu0 0.0
    %697 = vmatpush1.msra.mxu0 0.0
    %698 = vmatprep.subr.mxu0 0.0
    %699 = vmatpush1.msra.mxu0 0.0
    %700 = vmatprep.subr.mxu0 0.0
    %701 = vmatpush1.msra.mxu0 0.0
    %702 = vmatprep.subr.mxu0 0.0
    %703 = vmatpush1.msra.mxu0 0.0
    %704 = vmatprep.subr.mxu0 0.0
    %705 = vmatpush1.msra.mxu0 0.0
    %706 = vmatprep.subr.mxu0 0.0
    %707 = vmatpush1.msra.mxu0 0.0
    %708 = vmatprep.subr.mxu0 0.0
    %709 = vmatpush1.msra.mxu0 0.0
    %710 = vmatprep.subr.mxu0 0.0
    %711 = vmatpush1.msra.mxu0 0.0
    %712 = vmatprep.subr.mxu0 0.0
    %713 = vmatpush1.msra.mxu0 0.0
    %714 = vmatprep.subr.mxu0 0.0
    %715 = vmatpush1.msra.mxu0 0.0
    %716 = vmatprep.subr.mxu0 0.0
    %717 = vmatpush1.msra.mxu0 0.0
    %718 = vmatprep.subr.mxu0 0.0
    %719 = vmatpush1.msra.mxu0 0.0
    %720 = vmatprep.subr.mxu0 0.0
    %721 = vmatpush1.msra.mxu0 0.0
    %722 = vmatprep.subr.mxu0 0.0
    %723 = vmatpush1.msra.mxu0 0.0
    %724 = vmatprep.subr.mxu0 0.0
    %725 = vmatpush1.msra.mxu0 0.0
    %726 = vmatprep.subr.mxu0 0.0
    %727 = vmatpush1.msra.mxu0 0.0
    %728 = vmatprep.subr.mxu0 0.0
    %729 = vmatpush1.msra.mxu0 0.0
    %730 = vmatprep.subr.mxu0 0.0
    %731 = vmatpush1.msra.mxu0 0.0
    %732 = vmatprep.subr.mxu0 0.0
    %733 = vmatpush1.msra.mxu0 0.0
    %734 = vmatprep.subr.mxu0 0.0
    %735 = vmatpush1.msra.mxu0 0.0
    %736 = vmatprep.subr.mxu0 0.0
    %737 = vmatpush1.msra.mxu0 0.0
    %738 = vmatprep.subr.mxu0 0.0
    %739 = vmatpush1.msra.mxu0 0.0
    %740 = vmatprep.subr.mxu0 0.0
    %741 = vmatpush1.msra.mxu0 0.0
    %742 = vmatprep.subr.mxu0 0.0
    %743 = vmatpush1.msra.mxu0 0.0
    %744 = vmatprep.subr.mxu0 0.0
    %745 = vmatpush1.msra.mxu0 0.0
    %746 = vmatprep.subr.mxu0 0.0
    %747 = vmatpush1.msra.mxu0 0.0
    %748 = vmatprep.subr.mxu0 0.0
    %749 = vmatpush1.msra.mxu0 0.0
    %750 = vmatprep.subr.mxu0 0.0
    %751 = vmatpush1.msra.mxu0 0.0
    %752 = vmatprep.subr.mxu0 0.0
    %753 = vmatpush1.msra.mxu0 0.0
    %754 = vmatprep.subr.mxu0 0.0
    %755 = vmatpush1.msra.mxu0 0.0
    %756 = vmatprep.subr.mxu0 0.0
    %757 = vmatpush1.msra.mxu0 0.0
    %758 = vmatprep.mubr.f32.mxu0 0.0
    %759 = vmatmul.mubr.f32.gmra.mrb[0].mxu0 %v689
    %v760 = vpop.f32.mrb[0].mxu0
    %v761 = vadd.f32 0.0, %v760
    %v762 = vpop.f32.mrb[0].mxu0
    %763 = vmatprep.mubr.f32.mxu0 0.0
    %764 = vmatmul.mubr.f32.gmra.mrb[0].mxu0 %v692
    %v765 = vpop.f32.mrb[0].mxu0
    %v766 = vadd.f32 0.0, %v765
    %v767 = vpop.f32.mrb[0].mxu0
    %768 = vdwg.mxu0
    %v770 = vsel %vm286, %v476, 0
    %v773 = vsel %vm286, %v481, 0
    %775 = vmatprep.subr.mxu0 0.0
    %776 = vmatpush1.msra.mxu0 %v276
    %777 = vmatprep.subr.mxu0 0.0
    %778 = vmatpush1.msra.mxu0 0.0
    %779 = vmatprep.subr.mxu0 0.0
    %780 = vmatpush1.msra.mxu0 0.0
    %781 = vmatprep.subr.mxu0 0.0
    %782 = vmatpush1.msra.mxu0 0.0
    %783 = vmatprep.subr.mxu0 0.0
    %784 = vmatpush1.msra.mxu0 0.0
    %785 = vmatprep.subr.mxu0 0.0
    %786 = vmatpush1.msra.mxu0 0.0
    %787 = vmatprep.subr.mxu0 0.0
    %788 = vmatpush1.msra.mxu0 0.0
    %789 = vmatprep.subr.mxu0 0.0
    %790 = vmatpush1.msra.mxu0 0.0
    %791 = vmatprep.subr.mxu0 0.0
    %792 = vmatpush1.msra.mxu0 0.0
    %793 = vmatprep.subr.mxu0 0.0
    %794 = vmatpush1.msra.mxu0 0.0
    %795 = vmatprep.subr.mxu0 0.0
    %796 = vmatpush1.msra.mxu0 0.0
    %797 = vmatprep.subr.mxu0 0.0
    %798 = vmatpush1.msra.mxu0 0.0
    %799 = vmatprep.subr.mxu0 0.0
    %800 = vmatpush1.msra.mxu0 0.0
    %801 = vmatprep.subr.mxu0 0.0
    %802 = vmatpush1.msra.mxu0 0.0
    %803 = vmatprep.subr.mxu0 0.0
    %804 = vmatpush1.msra.mxu0 0.0
    %805 = vmatprep.subr.mxu0 0.0
    %806 = vmatpush1.msra.mxu0 0.0
    %807 = vmatprep.subr.mxu0 0.0
    %808 = vmatpush1.msra.mxu0 0.0
    %809 = vmatprep.subr.mxu0 0.0
    %810 = vmatpush1.msra.mxu0 0.0
    %811 = vmatprep.subr.mxu0 0.0
    %812 = vmatpush1.msra.mxu0 0.0
    %813 = vmatprep.subr.mxu0 0.0
    %814 = vmatpush1.msra.mxu0 0.0
    %815 = vmatprep.subr.mxu0 0.0
    %816 = vmatpush1.msra.mxu0 0.0
    %817 = vmatprep.subr.mxu0 0.0
    %818 = vmatpush1.msra.mxu0 0.0
    %819 = vmatprep.subr.mxu0 0.0
    %820 = vmatpush1.msra.mxu0 0.0
    %821 = vmatprep.subr.mxu0 0.0
    %822 = vmatpush1.msra.mxu0 0.0
    %823 = vmatprep.subr.mxu0 0.0
    %824 = vmatpush1.msra.mxu0 0.0
    %825 = vmatprep.subr.mxu0 0.0
    %826 = vmatpush1.msra.mxu0 0.0
    %827 = vmatprep.subr.mxu0 0.0
    %828 = vmatpush1.msra.mxu0 0.0
    %829 = vmatprep.subr.mxu0 0.0
    %830 = vmatpush1.msra.mxu0 0.0
    %831 = vmatprep.subr.mxu0 0.0
    %832 = vmatpush1.msra.mxu0 0.0
    %833 = vmatprep.subr.mxu0 0.0
    %834 = vmatpush1.msra.mxu0 0.0
    %835 = vmatprep.subr.mxu0 0.0
    %836 = vmatpush1.msra.mxu0 0.0
    %837 = vmatprep.subr.mxu0 0.0
    %838 = vmatpush1.msra.mxu0 0.0
    %839 = vmatprep.mubr.f32.mxu0 0.0
    %840 = vmatmul.mubr.f32.gmra.mrb[0].mxu0 %v770
    %v841 = vpop.f32.mrb[0].mxu0
    %v842 = vadd.f32 %v761, %v841
    %v843 = vpop.f32.mrb[0].mxu0
    %844 = vmatprep.mubr.f32.mxu0 0.0
    %845 = vmatmul.mubr.f32.gmra.mrb[0].mxu0 %v773
    %v846 = vpop.f32.mrb[0].mxu0
    %v847 = vadd.f32 %v766, %v846
    %v848 = vpop.f32.mrb[0].mxu0
    %849 = vdwg.mxu0
    %850 = vrot.lane.b32.xlu0 %v268, 112
    %v851 = vpop.permute.xlu0 %850
    %852 = vrot.lane.b32.xlu0 %v273, 112
    %v853 = vpop.permute.xlu0 %852
    %854 = vrot.lane.b32.xlu0 %v268, 80
    %v855 = vpop.permute.xlu0 %854
    %856 = vrot.lane.b32.xlu0 %v273, 80
    %v857 = vpop.permute.xlu0 %856
    %v858 = vsel %vm286, %v851, 0
    %v860 = vsel %vm286, %v853, 0
    %v862 = vsel %vm286, %v855, 0
    %v864 = vsel %vm286, %v857, 0
    %866 = vmatprep.subr.mxu0 0.0
    %867 = vmatpush1.xpose.msra.mxu0 %v862
    %868 = vmatprep.subr.mxu0 0.0
    %869 = vmatpush1.xpose.msra.mxu0 %v864
    %870 = vmatprep.subr.mxu0 0.0
    %871 = vmatpush1.xpose.msra.mxu0 0.0
    %872 = vmatprep.subr.mxu0 0.0
    %873 = vmatpush1.xpose.msra.mxu0 0.0
    %874 = vmatprep.subr.mxu0 0.0
    %875 = vmatpush1.xpose.msra.mxu0 0.0
    %876 = vmatprep.subr.mxu0 0.0
    %877 = vmatpush1.xpose.msra.mxu0 0.0
    %878 = vmatprep.subr.mxu0 0.0
    %879 = vmatpush1.xpose.msra.mxu0 0.0
    %880 = vmatprep.subr.mxu0 0.0
    %881 = vmatpush1.xpose.msra.mxu0 0.0
    %882 = vmatprep.subr.mxu0 0.0
    %883 = vmatpush1.xpose.msra.mxu0 0.0
    %884 = vmatprep.subr.mxu0 0.0
    %885 = vmatpush1.xpose.msra.mxu0 0.0
    %886 = vmatprep.subr.mxu0 0.0
    %887 = vmatpush1.xpose.msra.mxu0 0.0
    %888 = vmatprep.subr.mxu0 0.0
    %889 = vmatpush1.xpose.msra.mxu0 0.0
    %890 = vmatprep.subr.mxu0 0.0
    %891 = vmatpush1.xpose.msra.mxu0 0.0
    %892 = vmatprep.subr.mxu0 0.0
    %893 = vmatpush1.xpose.msra.mxu0 0.0
    %894 = vmatprep.subr.mxu0 0.0
    %895 = vmatpush1.xpose.msra.mxu0 0.0
    %896 = vmatprep.subr.mxu0 0.0
    %897 = vmatpush1.xpose.msra.mxu0 0.0
    %898 = vmatprep.subr.mxu0 0.0
    %899 = vmatpush1.xpose.msra.mxu0 0.0
    %900 = vmatprep.subr.mxu0 0.0
    %901 = vmatpush1.xpose.msra.mxu0 0.0
    %902 = vmatprep.subr.mxu0 0.0
    %903 = vmatpush1.xpose.msra.mxu0 0.0
    %904 = vmatprep.subr.mxu0 0.0
    %905 = vmatpush1.xpose.msra.mxu0 0.0
    %906 = vmatprep.subr.mxu0 0.0
    %907 = vmatpush1.xpose.msra.mxu0 0.0
    %908 = vmatprep.subr.mxu0 0.0
    %909 = vmatpush1.xpose.msra.mxu0 0.0
    %910 = vmatprep.subr.mxu0 0.0
    %911 = vmatpush1.xpose.msra.mxu0 0.0
    %912 = vmatprep.subr.mxu0 0.0
    %913 = vmatpush1.xpose.msra.mxu0 0.0
    %914 = vmatprep.subr.mxu0 0.0
    %915 = vmatpush1.xpose.msra.mxu0 0.0
    %916 = vmatprep.subr.mxu0 0.0
    %917 = vmatpush1.xpose.msra.mxu0 0.0
    %918 = vmatprep.subr.mxu0 0.0
    %919 = vmatpush1.xpose.msra.mxu0 0.0
    %920 = vmatprep.subr.mxu0 0.0
    %921 = vmatpush1.xpose.msra.mxu0 0.0
    %922 = vmatprep.subr.mxu0 0.0
    %923 = vmatpush1.xpose.msra.mxu0 0.0
    %924 = vmatprep.subr.mxu0 0.0
    %925 = vmatpush1.xpose.msra.mxu0 0.0
    %926 = vmatprep.subr.mxu0 0.0
    %927 = vmatpush1.xpose.msra.mxu0 0.0
    %928 = vmatprep.subr.mxu0 0.0
    %929 = vmatpush1.xpose.msra.mxu0 0.0
    %930 = vmatprep.mubr.f32.mxu0 0.0
    %931 = vmatmul.mubr.f32.gmra.mrb[0].mxu0 %v858
    %v932 = vpop.f32.mrb[0].mxu0
    %v933 = vadd.f32 0.0, %v932
    %v934 = vpop.f32.mrb[0].mxu0
    %935 = vmatprep.mubr.f32.mxu0 0.0
    %936 = vmatmul.mubr.f32.gmra.mrb[0].mxu0 %v860
    %v937 = vpop.f32.mrb[0].mxu0
    %v938 = vadd.f32 0.0, %v937
    %v939 = vpop.f32.mrb[0].mxu0
    %940 = vdwg.mxu0
    %v941 = vmul.f32 %v933, 0.35355338
    %v942 = vmul.f32 %v938, 0.35355338
    %v943 = vadd.f32 %v941, %v119
    %v944 = vadd.f32 %v942, %v120
    %v945 = vsel %vm374, %v943, -inf
    %946 = vmax.xlane.f32.xlu0 %v945
    %v947 = vpop.xlane.xlu0 %946
    %v948 = vsel %vm374, %v944, -inf
    %949 = vmax.xlane.f32.xlu0 %v948
    %v950 = vpop.xlane.xlu0 %949
    %v951 = vsub.f32 %v943, %v947
    %v952 = vsub.f32 %v944, %v950
    %v953 = vmul.f32 %v951, 1.442695
    %v954 = vpow.pop %v953
    %v955 = vmul.f32 %v952, 1.442695
    %v956 = vpow.pop %v955
    %v957 = vsel %vm374, %v954, 0.0
    %958 = vadd.xlane.f32.xlu0 %v957
    %v959 = vpop.xlane.xlu0 %958
    %v960 = vsel %vm374, %v956, 0.0
    %961 = vadd.xlane.f32.xlu0 %v960
    %v962 = vpop.xlane.xlu0 %961
    %v963 = vrcp.pop %v959
    %v964 = vrcp.pop %v962
    %v965 = vmul.f32 %v954, %v963
    %v966 = vmul.f32 %v956, %v964
    %967 = vrot.lane.b32.xlu0 %v268, 48
    %v968 = vpop.permute.xlu0 %967
    %969 = vrot.lane.b32.xlu0 %v273, 48
    %v970 = vpop.permute.xlu0 %969
    %v974 = vsel %vm374, %v965, 0
    %v977 = vsel %vm374, %v966, 0
    %979 = vmatprep.subr.mxu0 0.0
    %980 = vmatpush1.msra.mxu0 %v968
    %981 = vmatprep.subr.mxu0 0.0
    %982 = vmatpush1.msra.mxu0 %v970
    %983 = vmatprep.subr.mxu0 0.0
    %984 = vmatpush1.msra.mxu0 0.0
    %985 = vmatprep.subr.mxu0 0.0
    %986 = vmatpush1.msra.mxu0 0.0
    %987 = vmatprep.subr.mxu0 0.0
    %988 = vmatpush1.msra.mxu0 0.0
    %989 = vmatprep.subr.mxu0 0.0
    %990 = vmatpush1.msra.mxu0 0.0
    %991 = vmatprep.subr.mxu0 0.0
    %992 = vmatpush1.msra.mxu0 0.0
    %993 = vmatprep.subr.mxu0 0.0
    %994 = vmatpush1.msra.mxu0 0.0
    %995 = vmatprep.subr.mxu0 0.0
    %996 = vmatpush1.msra.mxu0 0.0
    %997 = vmatprep.subr.mxu0 0.0
    %998 = vmatpush1.msra.mxu0 0.0
    %999 = vmatprep.subr.mxu0 0.0
    %1000 = vmatpush1.msra.mxu0 0.0
    %1001 = vmatprep.subr.mxu0 0.0
    %1002 = vmatpush1.msra.mxu0 0.0
    %1003 = vmatprep.subr.mxu0 0.0
    %1004 = vmatpush1.msra.mxu0 0.0
    %1005 = vmatprep.subr.mxu0 0.0
    %1006 = vmatpush1.msra.mxu0 0.0
    %1007 = vmatprep.subr.mxu0 0.0
    %1008 = vmatpush1.msra.mxu0 0.0
    %1009 = vmatprep.subr.mxu0 0.0
    %1010 = vmatpush1.msra.mxu0 0.0
    %1011 = vmatprep.subr.mxu0 0.0
    %1012 = vmatpush1.msra.mxu0 0.0
    %1013 = vmatprep.subr.mxu0 0.0
    %1014 = vmatpush1.msra.mxu0 0.0
    %1015 = vmatprep.subr.mxu0 0.0
    %1016 = vmatpush1.msra.mxu0 0.0
    %1017 = vmatprep.subr.mxu0 0.0
    %1018 = vmatpush1.msra.mxu0 0.0
    %1019 = vmatprep.subr.mxu0 0.0
    %1020 = vmatpush1.msra.mxu0 0.0
    %1021 = vmatprep.subr.mxu0 0.0
    %1022 = vmatpush1.msra.mxu0 0.0
    %1023 = vmatprep.subr.mxu0 0.0
    %1024 = vmatpush1.msra.mxu0 0.0
    %1025 = vmatprep.subr.mxu0 0.0
    %1026 = vmatpush1.msra.mxu0 0.0
    %1027 = vmatprep.subr.mxu0 0.0
    %1028 = vmatpush1.msra.mxu0 0.0
    %1029 = vmatprep.subr.mxu0 0.0
    %1030 = vmatpush1.msra.mxu0 0.0
    %1031 = vmatprep.subr.mxu0 0.0
    %1032 = vmatpush1.msra.mxu0 0.0
    %1033 = vmatprep.subr.mxu0 0.0
    %1034 = vmatpush1.msra.mxu0 0.0
    %1035 = vmatprep.subr.mxu0 0.0
    %1036 = vmatpush1.msra.mxu0 0.0
    %1037 = vmatprep.subr.mxu0 0.0
    %1038 = vmatpush1.msra.mxu0 0.0
    %1039 = vmatprep.subr.mxu0 0.0
    %1040 = vmatpush1.msra.mxu0 0.0
    %1041 = vmatprep.subr.mxu0 0.0
    %1042 = vmatpush1.msra.mxu0 0.0
    %1043 = vmatprep.mubr.f32.mxu0 0.0
    %1044 = vmatmul.mubr.f32.gmra.mrb[0].mxu0 %v974
    %v1045 = vpop.f32.mrb[0].mxu0
    %v1046 = vadd.f32 0.0, %v1045
    %v1047 = vpop.f32.mrb[0].mxu0
    %1048 = vmatprep.mubr.f32.mxu0 0.0
    %1049 = vmatmul.mubr.f32.gmra.mrb[0].mxu0 %v977
    %v1050 = vpop.f32.mrb[0].mxu0
    %v1051 = vadd.f32 0.0, %v1050
    %v1052 = vpop.f32.mrb[0].mxu0
    %1053 = vdwg.mxu0
    %v1055 = vsel %vm286, %v1046, 0
    %v1058 = vsel %vm286, %v1051, 0
    %1060 = vmatprep.subr.mxu0 0.0
    %1061 = vmatpush1.msra.mxu0 %v278
    %1062 = vmatprep.subr.mxu0 0.0
    %1063 = vmatpush1.msra.mxu0 0.0
    %1064 = vmatprep.subr.mxu0 0.0
    %1065 = vmatpush1.msra.mxu0 0.0
    %1066 = vmatprep.subr.mxu0 0.0
    %1067 = vmatpush1.msra.mxu0 0.0
    %1068 = vmatprep.subr.mxu0 0.0
    %1069 = vmatpush1.msra.mxu0 0.0
    %1070 = vmatprep.subr.mxu0 0.0
    %1071 = vmatpush1.msra.mxu0 0.0
    %1072 = vmatprep.subr.mxu0 0.0
    %1073 = vmatpush1.msra.mxu0 0.0
    %1074 = vmatprep.subr.mxu0 0.0
    %1075 = vmatpush1.msra.mxu0 0.0
    %1076 = vmatprep.subr.mxu0 0.0
    %1077 = vmatpush1.msra.mxu0 0.0
    %1078 = vmatprep.subr.mxu0 0.0
    %1079 = vmatpush1.msra.mxu0 0.0
    %1080 = vmatprep.subr.mxu0 0.0
    %1081 = vmatpush1.msra.mxu0 0.0
    %1082 = vmatprep.subr.mxu0 0.0
    %1083 = vmatpush1.msra.mxu0 0.0
    %1084 = vmatprep.subr.mxu0 0.0
    %1085 = vmatpush1.msra.mxu0 0.0
    %1086 = vmatprep.subr.mxu0 0.0
    %1087 = vmatpush1.msra.mxu0 0.0
    %1088 = vmatprep.subr.mxu0 0.0
    %1089 = vmatpush1.msra.mxu0 0.0
    %1090 = vmatprep.subr.mxu0 0.0
    %1091 = vmatpush1.msra.mxu0 0.0
    %1092 = vmatprep.subr.mxu0 0.0
    %1093 = vmatpush1.msra.mxu0 0.0
    %1094 = vmatprep.subr.mxu0 0.0
    %1095 = vmatpush1.msra.mxu0 0.0
    %1096 = vmatprep.subr.mxu0 0.0
    %1097 = vmatpush1.msra.mxu0 0.0
    %1098 = vmatprep.subr.mxu0 0.0
    %1099 = vmatpush1.msra.mxu0 0.0
    %1100 = vmatprep.subr.mxu0 0.0
    %1101 = vmatpush1.msra.mxu0 0.0
    %1102 = vmatprep.subr.mxu0 0.0
    %1103 = vmatpush1.msra.mxu0 0.0
    %1104 = vmatprep.subr.mxu0 0.0
    %1105 = vmatpush1.msra.mxu0 0.0
    %1106 = vmatprep.subr.mxu0 0.0
    %1107 = vmatpush1.msra.mxu0 0.0
    %1108 = vmatprep.subr.mxu0 0.0
    %1109 = vmatpush1.msra.mxu0 0.0
    %1110 = vmatprep.subr.mxu0 0.0
    %1111 = vmatpush1.msra.mxu0 0.0
    %1112 = vmatprep.subr.mxu0 0.0
    %1113 = vmatpush1.msra.mxu0 0.0
    %1114 = vmatprep.subr.mxu0 0.0
    %1115 = vmatpush1.msra.mxu0 0.0
    %1116 = vmatprep.subr.mxu0 0.0
    %1117 = vmatpush1.msra.mxu0 0.0
    %1118 = vmatprep.subr.mxu0 0.0
    %1119 = vmatpush1.msra.mxu0 0.0
    %1120 = vmatprep.subr.mxu0 0.0
    %1121 = vmatpush1.msra.mxu0 0.0
    %1122 = vmatprep.subr.mxu0 0.0
    %1123 = vmatpush1.msra.mxu0 0.0
    %1124 = vmatprep.mubr.f32.mxu0 0.0
    %1125 = vmatmul.mubr.f32.gmra.mrb[0].mxu0 %v1055
    %v1126 = vpop.f32.mrb[0].mxu0
    %v1127 = vadd.f32 0.0, %v1126
    %v1128 = vpop.f32.mrb[0].mxu0
    %1129 = vmatprep.mubr.f32.mxu0 0.0
    %1130 = vmatmul.mubr.f32.gmra.mrb[0].mxu0 %v1058
    %v1131 = vpop.f32.mrb[0].mxu0
    %v1132 = vadd.f32 0.0, %v1131
    %v1133 = vpop.f32.mrb[0].mxu0
    %1134 = vdwg.mxu0
    %v1135 = vadd.f32 %v842, %v1127
    %v1136 = vadd.f32 %v847, %v1132
    %1137 = vrot.lane.b32.xlu0 %v268, 104
    %v1138 = vpop.permute.xlu0 %1137
    %1139 = vrot.lane.b32.xlu0 %v273, 104
    %v1140 = vpop.permute.xlu0 %1139
    %1141 = vrot.lane.b32.xlu0 %v268, 72
    %v1142 = vpop.permute.xlu0 %1141
    %1143 = vrot.lane.b32.xlu0 %v273, 72
    %v1144 = vpop.permute.xlu0 %1143
    %v1145 = vsel %vm286, %v1138, 0
    %v1147 = vsel %vm286, %v1140, 0
    %v1149 = vsel %vm286, %v1142, 0
    %v1151 = vsel %vm286, %v1144, 0
    %1153 = vmatprep.subr.mxu0 0.0
    %1154 = vmatpush1.xpose.msra.mxu0 %v1149
    %1155 = vmatprep.subr.mxu0 0.0
    %1156 = vmatpush1.xpose.msra.mxu0 %v1151
    %1157 = vmatprep.subr.mxu0 0.0
    %1158 = vmatpush1.xpose.msra.mxu0 0.0
    %1159 = vmatprep.subr.mxu0 0.0
    %1160 = vmatpush1.xpose.msra.mxu0 0.0
    %1161 = vmatprep.subr.mxu0 0.0
    %1162 = vmatpush1.xpose.msra.mxu0 0.0
    %1163 = vmatprep.subr.mxu0 0.0
    %1164 = vmatpush1.xpose.msra.mxu0 0.0
    %1165 = vmatprep.subr.mxu0 0.0
    %1166 = vmatpush1.xpose.msra.mxu0 0.0
    %1167 = vmatprep.subr.mxu0 0.0
    %1168 = vmatpush1.xpose.msra.mxu0 0.0
    %1169 = vmatprep.subr.mxu0 0.0
    %1170 = vmatpush1.xpose.msra.mxu0 0.0
    %1171 = vmatprep.subr.mxu0 0.0
    %1172 = vmatpush1.xpose.msra.mxu0 0.0
    %1173 = vmatprep.subr.mxu0 0.0
    %1174 = vmatpush1.xpose.msra.mxu0 0.0
    %1175 = vmatprep.subr.mxu0 0.0
    %1176 = vmatpush1.xpose.msra.mxu0 0.0
    %1177 = vmatprep.subr.mxu0 0.0
    %1178 = vmatpush1.xpose.msra.mxu0 0.0
    %1179 = vmatprep.subr.mxu0 0.0
    %1180 = vmatpush1.xpose.msra.mxu0 0.0
    %1181 = vmatprep.subr.mxu0 0.0
    %1182 = vmatpush1.xpose.msra.mxu0 0.0
    %1183 = vmatprep.subr.mxu0 0.0
    %1184 = vmatpush1.xpose.msra.mxu0 0.0
    %1185 = vmatprep.subr.mxu0 0.0
    %1186 = vmatpush1.xpose.msra.mxu0 0.0
    %1187 = vmatprep.subr.mxu0 0.0
    %1188 = vmatpush1.xpose.msra.mxu0 0.0
    %1189 = vmatprep.subr.mxu0 0.0
    %1190 = vmatpush1.xpose.msra.mxu0 0.0
    %1191 = vmatprep.subr.mxu0 0.0
    %1192 = vmatpush1.xpose.msra.mxu0 0.0
    %1193 = vmatprep.subr.mxu0 0.0
    %1194 = vmatpush1.xpose.msra.mxu0 0.0
    %1195 = vmatprep.subr.mxu0 0.0
    %1196 = vmatpush1.xpose.msra.mxu0 0.0
    %1197 = vmatprep.subr.mxu0 0.0
    %1198 = vmatpush1.xpose.msra.mxu0 0.0
    %1199 = vmatprep.subr.mxu0 0.0
    %1200 = vmatpush1.xpose.msra.mxu0 0.0
    %1201 = vmatprep.subr.mxu0 0.0
    %1202 = vmatpush1.xpose.msra.mxu0 0.0
    %1203 = vmatprep.subr.mxu0 0.0
    %1204 = vmatpush1.xpose.msra.mxu0 0.0
    %1205 = vmatprep.subr.mxu0 0.0
    %1206 = vmatpush1.xpose.msra.mxu0 0.0
    %1207 = vmatprep.subr.mxu0 0.0
    %1208 = vmatpush1.xpose.msra.mxu0 0.0
    %1209 = vmatprep.subr.mxu0 0.0
    %1210 = vmatpush1.xpose.msra.mxu0 0.0
    %1211 = vmatprep.subr.mxu0 0.0
    %1212 = vmatpush1.xpose.msra.mxu0 0.0
    %1213 = vmatprep.subr.mxu0 0.0
    %1214 = vmatpush1.xpose.msra.mxu0 0.0
    %1215 = vmatprep.subr.mxu0 0.0
    %1216 = vmatpush1.xpose.msra.mxu0 0.0
    %1217 = vmatprep.mubr.f32.mxu0 0.0
    %1218 = vmatmul.mubr.f32.gmra.mrb[0].mxu0 %v1145
    %v1219 = vpop.f32.mrb[0].mxu0
    %v1220 = vadd.f32 0.0, %v1219
    %v1221 = vpop.f32.mrb[0].mxu0
    %1222 = vmatprep.mubr.f32.mxu0 0.0
    %1223 = vmatmul.mubr.f32.gmra.mrb[0].mxu0 %v1147
    %v1224 = vpop.f32.mrb[0].mxu0
    %v1225 = vadd.f32 0.0, %v1224
    %v1226 = vpop.f32.mrb[0].mxu0
    %1227 = vdwg.mxu0
    %v1228 = vmul.f32 %v1220, 0.35355338
    %v1229 = vmul.f32 %v1225, 0.35355338
    %v1230 = vadd.f32 %v1228, %v119
    %v1231 = vadd.f32 %v1229, %v120
    %v1232 = vsel %vm374, %v1230, -inf
    %1233 = vmax.xlane.f32.xlu0 %v1232
    %v1234 = vpop.xlane.xlu0 %1233
    %v1235 = vsel %vm374, %v1231, -inf
    %1236 = vmax.xlane.f32.xlu0 %v1235
    %v1237 = vpop.xlane.xlu0 %1236
    %v1238 = vsub.f32 %v1230, %v1234
    %v1239 = vsub.f32 %v1231, %v1237
    %v1240 = vmul.f32 %v1238, 1.442695
    %v1241 = vpow.pop %v1240
    %v1242 = vmul.f32 %v1239, 1.442695
    %v1243 = vpow.pop %v1242
    %v1244 = vsel %vm374, %v1241, 0.0
    %1245 = vadd.xlane.f32.xlu0 %v1244
    %v1246 = vpop.xlane.xlu0 %1245
    %v1247 = vsel %vm374, %v1243, 0.0
    %1248 = vadd.xlane.f32.xlu0 %v1247
    %v1249 = vpop.xlane.xlu0 %1248
    %v1250 = vrcp.pop %v1246
    %v1251 = vrcp.pop %v1249
    %v1252 = vmul.f32 %v1241, %v1250
    %v1253 = vmul.f32 %v1243, %v1251
    %1254 = vrot.lane.b32.xlu0 %v268, 40
    %v1255 = vpop.permute.xlu0 %1254
    %1256 = vrot.lane.b32.xlu0 %v273, 40
    %v1257 = vpop.permute.xlu0 %1256
    %v1261 = vsel %vm374, %v1252, 0
    %v1264 = vsel %vm374, %v1253, 0
    %1266 = vmatprep.subr.mxu0 0.0
    %1267 = vmatpush1.msra.mxu0 %v1255
    %1268 = vmatprep.subr.mxu0 0.0
    %1269 = vmatpush1.msra.mxu0 %v1257
    %1270 = vmatprep.subr.mxu0 0.0
    %1271 = vmatpush1.msra.mxu0 0.0
    %1272 = vmatprep.subr.mxu0 0.0
    %1273 = vmatpush1.msra.mxu0 0.0
    %1274 = vmatprep.subr.mxu0 0.0
    %1275 = vmatpush1.msra.mxu0 0.0
    %1276 = vmatprep.subr.mxu0 0.0
    %1277 = vmatpush1.msra.mxu0 0.0
    %1278 = vmatprep.subr.mxu0 0.0
    %1279 = vmatpush1.msra.mxu0 0.0
    %1280 = vmatprep.subr.mxu0 0.0
    %1281 = vmatpush1.msra.mxu0 0.0
    %1282 = vmatprep.subr.mxu0 0.0
    %1283 = vmatpush1.msra.mxu0 0.0
    %1284 = vmatprep.subr.mxu0 0.0
    %1285 = vmatpush1.msra.mxu0 0.0
    %1286 = vmatprep.subr.mxu0 0.0
    %1287 = vmatpush1.msra.mxu0 0.0
    %1288 = vmatprep.subr.mxu0 0.0
    %1289 = vmatpush1.msra.mxu0 0.0
    %1290 = vmatprep.subr.mxu0 0.0
    %1291 = vmatpush1.msra.mxu0 0.0
    %1292 = vmatprep.subr.mxu0 0.0
    %1293 = vmatpush1.msra.mxu0 0.0
    %1294 = vmatprep.subr.mxu0 0.0
    %1295 = vmatpush1.msra.mxu0 0.0
    %1296 = vmatprep.subr.mxu0 0.0
    %1297 = vmatpush1.msra.mxu0 0.0
    %1298 = vmatprep.subr.mxu0 0.0
    %1299 = vmatpush1.msra.mxu0 0.0
    %1300 = vmatprep.subr.mxu0 0.0
    %1301 = vmatpush1.msra.mxu0 0.0
    %1302 = vmatprep.subr.mxu0 0.0
    %1303 = vmatpush1.msra.mxu0 0.0
    %1304 = vmatprep.subr.mxu0 0.0
    %1305 = vmatpush1.msra.mxu0 0.0
    %1306 = vmatprep.subr.mxu0 0.0
    %1307 = vmatpush1.msra.mxu0 0.0
    %1308 = vmatprep.subr.mxu0 0.0
    %1309 = vmatpush1.msra.mxu0 0.0
    %1310 = vmatprep.subr.mxu0 0.0
    %1311 = vmatpush1.msra.mxu0 0.0
    %1312 = vmatprep.subr.mxu0 0.0
    %1313 = vmatpush1.msra.mxu0 0.0
    %1314 = vmatprep.subr.mxu0 0.0
    %1315 = vmatpush1.msra.mxu0 0.0
    %1316 = vmatprep.subr.mxu0 0.0
    %1317 = vmatpush1.msra.mxu0 0.0
    %1318 = vmatprep.subr.mxu0 0.0
    %1319 = vmatpush1.msra.mxu0 0.0
    %1320 = vmatprep.subr.mxu0 0.0
    %1321 = vmatpush1.msra.mxu0 0.0
    %1322 = vmatprep.subr.mxu0 0.0
    %1323 = vmatpush1.msra.mxu0 0.0
    %1324 = vmatprep.subr.mxu0 0.0
    %1325 = vmatpush1.msra.mxu0 0.0
    %1326 = vmatprep.subr.mxu0 0.0
    %1327 = vmatpush1.msra.mxu0 0.0
    %1328 = vmatprep.subr.mxu0 0.0
    %1329 = vmatpush1.msra.mxu0 0.0
    %1330 = vmatprep.mubr.f32.mxu0 0.0
    %1331 = vmatmul.mubr.f32.gmra.mrb[0].mxu0 %v1261
    %v1332 = vpop.f32.mrb[0].mxu0
    %v1333 = vadd.f32 0.0, %v1332
    %v1334 = vpop.f32.mrb[0].mxu0
    %1335 = vmatprep.mubr.f32.mxu0 0.0
    %1336 = vmatmul.mubr.f32.gmra.mrb[0].mxu0 %v1264
    %v1337 = vpop.f32.mrb[0].mxu0
    %v1338 = vadd.f32 0.0, %v1337
    %v1339 = vpop.f32.mrb[0].mxu0
    %1340 = vdwg.mxu0
    %v1342 = vsel %vm286, %v1333, 0
    %v1345 = vsel %vm286, %v1338, 0
    %1347 = vmatprep.subr.mxu0 0.0
    %1348 = vmatpush1.msra.mxu0 %v279
    %1349 = vmatprep.subr.mxu0 0.0
    %1350 = vmatpush1.msra.mxu0 0.0
    %1351 = vmatprep.subr.mxu0 0.0
    %1352 = vmatpush1.msra.mxu0 0.0
    %1353 = vmatprep.subr.mxu0 0.0
    %1354 = vmatpush1.msra.mxu0 0.0
    %1355 = vmatprep.subr.mxu0 0.0
    %1356 = vmatpush1.msra.mxu0 0.0
    %1357 = vmatprep.subr.mxu0 0.0
    %1358 = vmatpush1.msra.mxu0 0.0
    %1359 = vmatprep.subr.mxu0 0.0
    %1360 = vmatpush1.msra.mxu0 0.0
    %1361 = vmatprep.subr.mxu0 0.0
    %1362 = vmatpush1.msra.mxu0 0.0
    %1363 = vmatprep.subr.mxu0 0.0
    %1364 = vmatpush1.msra.mxu0 0.0
    %1365 = vmatprep.subr.mxu0 0.0
    %1366 = vmatpush1.msra.mxu0 0.0
    %1367 = vmatprep.subr.mxu0 0.0
    %1368 = vmatpush1.msra.mxu0 0.0
    %1369 = vmatprep.subr.mxu0 0.0
    %1370 = vmatpush1.msra.mxu0 0.0
    %1371 = vmatprep.subr.mxu0 0.0
    %1372 = vmatpush1.msra.mxu0 0.0
    %1373 = vmatprep.subr.mxu0 0.0
    %1374 = vmatpush1.msra.mxu0 0.0
    %1375 = vmatprep.subr.mxu0 0.0
    %1376 = vmatpush1.msra.mxu0 0.0
    %1377 = vmatprep.subr.mxu0 0.0
    %1378 = vmatpush1.msra.mxu0 0.0
    %1379 = vmatprep.subr.mxu0 0.0
    %1380 = vmatpush1.msra.mxu0 0.0
    %1381 = vmatprep.subr.mxu0 0.0
    %1382 = vmatpush1.msra.mxu0 0.0
    %1383 = vmatprep.subr.mxu0 0.0
    %1384 = vmatpush1.msra.mxu0 0.0
    %1385 = vmatprep.subr.mxu0 0.0
    %1386 = vmatpush1.msra.mxu0 0.0
    %1387 = vmatprep.subr.mxu0 0.0
    %1388 = vmatpush1.msra.mxu0 0.0
    %1389 = vmatprep.subr.mxu0 0.0
    %1390 = vmatpush1.msra.mxu0 0.0
    %1391 = vmatprep.subr.mxu0 0.0
    %1392 = vmatpush1.msra.mxu0 0.0
    %1393 = vmatprep.subr.mxu0 0.0
    %1394 = vmatpush1.msra.mxu0 0.0
    %1395 = vmatprep.subr.mxu0 0.0
    %1396 = vmatpush1.msra.mxu0 0.0
    %1397 = vmatprep.subr.mxu0 0.0
    %1398 = vmatpush1.msra.mxu0 0.0
    %1399 = vmatprep.subr.mxu0 0.0
    %1400 = vmatpush1.msra.mxu0 0.0
    %1401 = vmatprep.subr.mxu0 0.0
    %1402 = vmatpush1.msra.mxu0 0.0
    %1403 = vmatprep.subr.mxu0 0.0
    %1404 = vmatpush1.msra.mxu0 0.0
    %1405 = vmatprep.subr.mxu0 0.0
    %1406 = vmatpush1.msra.mxu0 0.0
    %1407 = vmatprep.subr.mxu0 0.0
    %1408 = vmatpush1.msra.mxu0 0.0
    %1409 = vmatprep.subr.mxu0 0.0
    %1410 = vmatpush1.msra.mxu0 0.0
    %1411 = vmatprep.mubr.f32.mxu0 0.0
    %1412 = vmatmul.mubr.f32.gmra.mrb[0].mxu0 %v1342
    %v1413 = vpop.f32.mrb[0].mxu0
    %v1414 = vadd.f32 0.0, %v1413
    %v1415 = vpop.f32.mrb[0].mxu0
    %1416 = vmatprep.mubr.f32.mxu0 0.0
    %1417 = vmatmul.mubr.f32.gmra.mrb[0].mxu0 %v1345
    %v1418 = vpop.f32.mrb[0].mxu0
    %v1419 = vadd.f32 0.0, %v1418
    %v1420 = vpop.f32.mrb[0].mxu0
    %1421 = vdwg.mxu0
    %v1422 = vadd.f32 %v1135, %v1414
    %v1423 = vadd.f32 %v1136, %v1419
    %v1424 = vadd.f32 %v113, %v1422
    %v1425 = vadd.f32 %v114, %v1423
    %v1426 = vld [vmem:[%s7] sm:$0x1]
    %v1428 = vlaneseq
    %v1429 = vshrl.u32 %v1428, 7
    %v1430 = vsub.s32 0, %v1429
    %v1431 = vrot.slane %v1426, %v1430
    %v1433 = vadd.f32 %v1424, %v1431
    %v1434 = vadd.f32 %v1425, %v1431
    %s1435 = scalar_lea.vmem %s12, 2
    %v1436 = vld [vmem:[%s1435] sm:$0x1]
    %s1437 = scalar_lea.vmem %s12, 3
    %v1438 = vld [vmem:[%s1437] sm:$0x1]
    %v1439 = vsel %vm126, %v1433, 0.0
    %1440 = vadd.xlane.f32.xlu0 %v1439
    %v1441 = vpop.xlane.xlu0 %1440
    %v1442 = vsel %vm126, %v1434, 0.0
    %1443 = vadd.xlane.f32.xlu0 %v1442
    %v1444 = vpop.xlane.xlu0 %1443
    %v1445 = vmul.f32 %v1441, %v133
    %v1446 = vmul.f32 %v1444, %v133
    %v1447 = vsub.f32 %v1433, %v1445
    %v1448 = vsub.f32 %v1434, %v1446
    %v1449 = vmul.f32 %v1447, %v1447
    %v1450 = vmul.f32 %v1448, %v1448
    %v1451 = vsel %vm126, %v1449, 0.0
    %1452 = vadd.xlane.f32.xlu0 %v1451
    %v1453 = vpop.xlane.xlu0 %1452
    %v1454 = vsel %vm126, %v1450, 0.0
    %1455 = vadd.xlane.f32.xlu0 %v1454
    %v1456 = vpop.xlane.xlu0 %1455
    %v1457 = vmul.f32 %v1453, 0.032258064
    %v1458 = vmul.f32 %v1456, 0.032258064
    %v1459 = vrsqrt.pop %v1457
    %v1460 = vmul.f32 %v1457, %v1459
    %vm1461 = vcmp.eq.f32.partialorder %v1457, inf
    %v1462 = vsel %vm1461, %v1457, %v1460
    %vm1463 = vcmp.eq.f32.partialorder %v1457, 0.0
    %v1464 = vand.u32 %v1457, 2147483648
    %v1465 = vsel %vm1463, %v1464, %v1462
    %v1466 = vrsqrt.pop %v1458
    %v1467 = vmul.f32 %v1458, %v1466
    %vm1468 = vcmp.eq.f32.partialorder %v1458, inf
    %v1469 = vsel %vm1468, %v1458, %v1467
    %vm1470 = vcmp.eq.f32.partialorder %v1458, 0.0
    %v1471 = vand.u32 %v1458, 2147483648
    %v1472 = vsel %vm1470, %v1471, %v1469
    %v1473 = vadd.f32 %v1465, 1e-06
    %v1474 = vadd.f32 %v1472, 1e-06
    %v1475 = vrcp.pop %v1473
    %v1476 = vrcp.pop %v1474
    %v1478 = vlaneseq
    %v1479 = vshrl.u32 %v1478, 7
    %v1480 = vsub.s32 0, %v1479
    %v1481 = vrot.slane %v1436, %v1480
    %v1483 = vmul.f32 %v1481, %v1447
    %v1484 = vmul.f32 %v1481, %v1448
    %v1485 = vmul.f32 %v1483, %v1475
    %v1486 = vmul.f32 %v1484, %v1476
    %v1488 = vlaneseq
    %v1489 = vshrl.u32 %v1488, 7
    %v1490 = vsub.s32 0, %v1489
    %v1491 = vrot.slane %v1438, %v1490
    %v1493 = vadd.f32 %v1485, %v1491
    %v1494 = vadd.f32 %v1486, %v1491
    %s1495 = scalar_lea.vmem %s4, 32
    %v1496 = vld [vmem:[%s1495] sm:$0xff]
    %v1497 = vld [vmem:[%s1495 + $0x8] sm:$0xff]
    %v1498 = vld [vmem:[%s1495 + $0x10] sm:$0xff]
    %v1499 = vld [vmem:[%s1495 + $0x18] sm:$0xff]
    %s1500 = scalar_lea.vmem %s5, 1
    %v1501 = vld [vmem:[%s1500] sm:$0x1]
    %v1503 = vlaneseq
    %v1504 = vshrl.u32 %v1503, 7
    %v1505 = vsub.s32 0, %v1504
    %v1506 = vrot.slane %v1501, %v1505
    %v1509 = vsel %vm126, %v1493, 0
    %v1512 = vsel %vm126, %v1494, 0
    %1514 = vmatprep.subr.mxu0 0.0
    %1515 = vmatpush1.msra.mxu0 %v1496
    %1516 = vmatprep.subr.mxu0 0.0
    %1517 = vmatpush1.msra.mxu0 %v1497
    %1518 = vmatprep.subr.mxu0 0.0
    %1519 = vmatpush1.msra.mxu0 %v1498
    %1520 = vmatprep.subr.mxu0 0.0
    %1521 = vmatpush1.msra.mxu0 %v1499
    %1522 = vmatprep.subr.mxu0 0.0
    %1523 = vmatpush1.msra.mxu0 0.0
    %1524 = vmatprep.subr.mxu0 0.0
    %1525 = vmatpush1.msra.mxu0 0.0
    %1526 = vmatprep.subr.mxu0 0.0
    %1527 = vmatpush1.msra.mxu0 0.0
    %1528 = vmatprep.subr.mxu0 0.0
    %1529 = vmatpush1.msra.mxu0 0.0
    %1530 = vmatprep.subr.mxu0 0.0
    %1531 = vmatpush1.msra.mxu0 0.0
    %1532 = vmatprep.subr.mxu0 0.0
    %1533 = vmatpush1.msra.mxu0 0.0
    %1534 = vmatprep.subr.mxu0 0.0
    %1535 = vmatpush1.msra.mxu0 0.0
    %1536 = vmatprep.subr.mxu0 0.0
    %1537 = vmatpush1.msra.mxu0 0.0
    %1538 = vmatprep.subr.mxu0 0.0
    %1539 = vmatpush1.msra.mxu0 0.0
    %1540 = vmatprep.subr.mxu0 0.0
    %1541 = vmatpush1.msra.mxu0 0.0
    %1542 = vmatprep.subr.mxu0 0.0
    %1543 = vmatpush1.msra.mxu0 0.0
    %1544 = vmatprep.subr.mxu0 0.0
    %1545 = vmatpush1.msra.mxu0 0.0
    %1546 = vmatprep.subr.mxu0 0.0
    %1547 = vmatpush1.msra.mxu0 0.0
    %1548 = vmatprep.subr.mxu0 0.0
    %1549 = vmatpush1.msra.mxu0 0.0
    %1550 = vmatprep.subr.mxu0 0.0
    %1551 = vmatpush1.msra.mxu0 0.0
    %1552 = vmatprep.subr.mxu0 0.0
    %1553 = vmatpush1.msra.mxu0 0.0
    %1554 = vmatprep.subr.mxu0 0.0
    %1555 = vmatpush1.msra.mxu0 0.0
    %1556 = vmatprep.subr.mxu0 0.0
    %1557 = vmatpush1.msra.mxu0 0.0
    %1558 = vmatprep.subr.mxu0 0.0
    %1559 = vmatpush1.msra.mxu0 0.0
    %1560 = vmatprep.subr.mxu0 0.0
    %1561 = vmatpush1.msra.mxu0 0.0
    %1562 = vmatprep.subr.mxu0 0.0
    %1563 = vmatpush1.msra.mxu0 0.0
    %1564 = vmatprep.subr.mxu0 0.0
    %1565 = vmatpush1.msra.mxu0 0.0
    %1566 = vmatprep.subr.mxu0 0.0
    %1567 = vmatpush1.msra.mxu0 0.0
    %1568 = vmatprep.subr.mxu0 0.0
    %1569 = vmatpush1.msra.mxu0 0.0
    %1570 = vmatprep.subr.mxu0 0.0
    %1571 = vmatpush1.msra.mxu0 0.0
    %1572 = vmatprep.subr.mxu0 0.0
    %1573 = vmatpush1.msra.mxu0 0.0
    %1574 = vmatprep.subr.mxu0 0.0
    %1575 = vmatpush1.msra.mxu0 0.0
    %1576 = vmatprep.subr.mxu0 0.0
    %1577 = vmatpush1.msra.mxu0 0.0
    %1578 = vmatprep.mubr.f32.mxu0 0.0
    %1579 = vmatmul.mubr.f32.gmra.mrb[0].mxu0 %v1509
    %v1580 = vpop.f32.mrb[0].mxu0
    %v1581 = vadd.f32 %v1506, %v1580
    %v1582 = vpop.f32.mrb[0].mxu0
    %1583 = vmatprep.mubr.f32.mxu0 0.0
    %1584 = vmatmul.mubr.f32.gmra.mrb[0].mxu0 %v1512
    %v1585 = vpop.f32.mrb[0].mxu0
    %v1586 = vadd.f32 %v1506, %v1585
    %v1587 = vpop.f32.mrb[0].mxu0
    %1588 = vdwg.mxu0
    %v1590 = vsel %vm126, %v115, 0
    %v1593 = vsel %vm126, %v116, 0
    %v1596 = vsel %vm126, %v117, 0
    %v1599 = vsel %vm126, %v118, 0
    %1601 = vmatprep.subr.mxu0 0.0
    %1602 = vmatpush1.msra.mxu0 %v1496
    %1603 = vmatprep.subr.mxu0 0.0
    %1604 = vmatpush1.msra.mxu0 %v1497
    %1605 = vmatprep.subr.mxu0 0.0
    %1606 = vmatpush1.msra.mxu0 %v1498
    %1607 = vmatprep.subr.mxu0 0.0
    %1608 = vmatpush1.msra.mxu0 %v1499
    %1609 = vmatprep.subr.mxu0 0.0
    %1610 = vmatpush1.msra.mxu0 0.0
    %1611 = vmatprep.subr.mxu0 0.0
    %1612 = vmatpush1.msra.mxu0 0.0
    %1613 = vmatprep.subr.mxu0 0.0
    %1614 = vmatpush1.msra.mxu0 0.0
    %1615 = vmatprep.subr.mxu0 0.0
    %1616 = vmatpush1.msra.mxu0 0.0
    %1617 = vmatprep.subr.mxu0 0.0
    %1618 = vmatpush1.msra.mxu0 0.0
    %1619 = vmatprep.subr.mxu0 0.0
    %1620 = vmatpush1.msra.mxu0 0.0
    %1621 = vmatprep.subr.mxu0 0.0
    %1622 = vmatpush1.msra.mxu0 0.0
    %1623 = vmatprep.subr.mxu0 0.0
    %1624 = vmatpush1.msra.mxu0 0.0
    %1625 = vmatprep.subr.mxu0 0.0
    %1626 = vmatpush1.msra.mxu0 0.0
    %1627 = vmatprep.subr.mxu0 0.0
    %1628 = vmatpush1.msra.mxu0 0.0
    %1629 = vmatprep.subr.mxu0 0.0
    %1630 = vmatpush1.msra.mxu0 0.0
    %1631 = vmatprep.subr.mxu0 0.0
    %1632 = vmatpush1.msra.mxu0 0.0
    %1633 = vmatprep.subr.mxu0 0.0
    %1634 = vmatpush1.msra.mxu0 0.0
    %1635 = vmatprep.subr.mxu0 0.0
    %1636 = vmatpush1.msra.mxu0 0.0
    %1637 = vmatprep.subr.mxu0 0.0
    %1638 = vmatpush1.msra.mxu0 0.0
    %1639 = vmatprep.subr.mxu0 0.0
    %1640 = vmatpush1.msra.mxu0 0.0
    %1641 = vmatprep.subr.mxu0 0.0
    %1642 = vmatpush1.msra.mxu0 0.0
    %1643 = vmatprep.subr.mxu0 0.0
    %1644 = vmatpush1.msra.mxu0 0.0
    %1645 = vmatprep.subr.mxu0 0.0
    %1646 = vmatpush1.msra.mxu0 0.0
    %1647 = vmatprep.subr.mxu0 0.0
    %1648 = vmatpush1.msra.mxu0 0.0
    %1649 = vmatprep.subr.mxu0 0.0
    %1650 = vmatpush1.msra.mxu0 0.0
    %1651 = vmatprep.subr.mxu0 0.0
    %1652 = vmatpush1.msra.mxu0 0.0
    %1653 = vmatprep.subr.mxu0 0.0
    %1654 = vmatpush1.msra.mxu0 0.0
    %1655 = vmatprep.subr.mxu0 0.0
    %1656 = vmatpush1.msra.mxu0 0.0
    %1657 = vmatprep.subr.mxu0 0.0
    %1658 = vmatpush1.msra.mxu0 0.0
    %1659 = vmatprep.subr.mxu0 0.0
    %1660 = vmatpush1.msra.mxu0 0.0
    %1661 = vmatprep.subr.mxu0 0.0
    %1662 = vmatpush1.msra.mxu0 0.0
    %1663 = vmatprep.subr.mxu0 0.0
    %1664 = vmatpush1.msra.mxu0 0.0
    %1665 = vmatprep.mubr.f32.mxu0 0.0
    %1666 = vmatmul.mubr.f32.gmra.mrb[0].mxu0 %v1590
    %v1667 = vpop.f32.mrb[0].mxu0
    %v1668 = vadd.f32 %v1506, %v1667
    %v1669 = vpop.f32.mrb[0].mxu0
    %1670 = vmatprep.mubr.f32.mxu0 0.0
    %1671 = vmatmul.mubr.f32.gmra.mrb[0].mxu0 %v1593
    %v1672 = vpop.f32.mrb[0].mxu0
    %v1673 = vadd.f32 %v1506, %v1672
    %v1674 = vpop.f32.mrb[0].mxu0
    %1675 = vmatprep.mubr.f32.mxu0 0.0
    %1676 = vmatmul.mubr.f32.gmra.mrb[0].mxu0 %v1596
    %v1677 = vpop.f32.mrb[0].mxu0
    %v1678 = vadd.f32 %v1506, %v1677
    %v1679 = vpop.f32.mrb[0].mxu0
    %1680 = vmatprep.mubr.f32.mxu0 0.0
    %1681 = vmatmul.mubr.f32.gmra.mrb[0].mxu0 %v1599
    %v1682 = vpop.f32.mrb[0].mxu0
    %v1683 = vadd.f32 %v1506, %v1682
    %v1684 = vpop.f32.mrb[0].mxu0
    %1685 = vdwg.mxu0
    %s1686 = scalar_lea.vmem [#allocation10], 32
    %v1687 = vld [vmem:[%s1686] sm:$0xff]
    %v1688 = vld [vmem:[%s1686 + $0x8] sm:$0xff]
    %v1689 = vld [vmem:[%s1686 + $0x10] sm:$0xff]
    %v1690 = vld [vmem:[%s1686 + $0x18] sm:$0xff]
    %1695 = vrot.lane.b32.xlu0 %v1668, 96
    %v1696 = vpop.permute.xlu0 %1695
    %1697 = vrot.lane.b32.xlu0 %v1673, 96
    %v1698 = vpop.permute.xlu0 %1697
    %1699 = vrot.lane.b32.xlu0 %v1678, 96
    %v1700 = vpop.permute.xlu0 %1699
    %1701 = vrot.lane.b32.xlu0 %v1683, 96
    %v1702 = vpop.permute.xlu0 %1701
    %v1704 = vsel %vm286, %v1581, 0
    %v1707 = vsel %vm286, %v1586, 0
    %v1709 = vsel %vm286, %v1696, 0
    %v1711 = vsel %vm286, %v1698, 0
    %v1713 = vsel %vm286, %v1700, 0
    %v1715 = vsel %vm286, %v1702, 0
    %1717 = vmatprep.subr.mxu0 0.0
    %1718 = vmatpush1.xpose.msra.mxu0 %v1709
    %1719 = vmatprep.subr.mxu0 0.0
    %1720 = vmatpush1.xpose.msra.mxu0 %v1711
    %1721 = vmatprep.subr.mxu0 0.0
    %1722 = vmatpush1.xpose.msra.mxu0 %v1713
    %1723 = vmatprep.subr.mxu0 0.0
    %1724 = vmatpush1.xpose.msra.mxu0 %v1715
    %1725 = vmatprep.subr.mxu0 0.0
    %1726 = vmatpush1.xpose.msra.mxu0 0.0
    %1727 = vmatprep.subr.mxu0 0.0
    %1728 = vmatpush1.xpose.msra.mxu0 0.0
    %1729 = vmatprep.subr.mxu0 0.0
    %1730 = vmatpush1.xpose.msra.mxu0 0.0
    %1731 = vmatprep.subr.mxu0 0.0
    %1732 = vmatpush1.xpose.msra.mxu0 0.0
    %1733 = vmatprep.subr.mxu0 0.0
    %1734 = vmatpush1.xpose.msra.mxu0 0.0
    %1735 = vmatprep.subr.mxu0 0.0
    %1736 = vmatpush1.xpose.msra.mxu0 0.0
    %1737 = vmatprep.subr.mxu0 0.0
    %1738 = vmatpush1.xpose.msra.mxu0 0.0
    %1739 = vmatprep.subr.mxu0 0.0
    %1740 = vmatpush1.xpose.msra.mxu0 0.0
    %1741 = vmatprep.subr.mxu0 0.0
    %1742 = vmatpush1.xpose.msra.mxu0 0.0
    %1743 = vmatprep.subr.mxu0 0.0
    %1744 = vmatpush1.xpose.msra.mxu0 0.0
    %1745 = vmatprep.subr.mxu0 0.0
    %1746 = vmatpush1.xpose.msra.mxu0 0.0
    %1747 = vmatprep.subr.mxu0 0.0
    %1748 = vmatpush1.xpose.msra.mxu0 0.0
    %1749 = vmatprep.subr.mxu0 0.0
    %1750 = vmatpush1.xpose.msra.mxu0 0.0
    %1751 = vmatprep.subr.mxu0 0.0
    %1752 = vmatpush1.xpose.msra.mxu0 0.0
    %1753 = vmatprep.subr.mxu0 0.0
    %1754 = vmatpush1.xpose.msra.mxu0 0.0
    %1755 = vmatprep.subr.mxu0 0.0
    %1756 = vmatpush1.xpose.msra.mxu0 0.0
    %1757 = vmatprep.subr.mxu0 0.0
    %1758 = vmatpush1.xpose.msra.mxu0 0.0
    %1759 = vmatprep.subr.mxu0 0.0
    %1760 = vmatpush1.xpose.msra.mxu0 0.0
    %1761 = vmatprep.subr.mxu0 0.0
    %1762 = vmatpush1.xpose.msra.mxu0 0.0
    %1763 = vmatprep.subr.mxu0 0.0
    %1764 = vmatpush1.xpose.msra.mxu0 0.0
    %1765 = vmatprep.subr.mxu0 0.0
    %1766 = vmatpush1.xpose.msra.mxu0 0.0
    %1767 = vmatprep.subr.mxu0 0.0
    %1768 = vmatpush1.xpose.msra.mxu0 0.0
    %1769 = vmatprep.subr.mxu0 0.0
    %1770 = vmatpush1.xpose.msra.mxu0 0.0
    %1771 = vmatprep.subr.mxu0 0.0
    %1772 = vmatpush1.xpose.msra.mxu0 0.0
    %1773 = vmatprep.subr.mxu0 0.0
    %1774 = vmatpush1.xpose.msra.mxu0 0.0
    %1775 = vmatprep.subr.mxu0 0.0
    %1776 = vmatpush1.xpose.msra.mxu0 0.0
    %1777 = vmatprep.subr.mxu0 0.0
    %1778 = vmatpush1.xpose.msra.mxu0 0.0
    %1779 = vmatprep.subr.mxu0 0.0
    %1780 = vmatpush1.xpose.msra.mxu0 0.0
    %1781 = vmatprep.mubr.f32.mxu0 0.0
    %1782 = vmatmul.mubr.f32.gmra.mrb[0].mxu0 %v1704
    %v1783 = vpop.f32.mrb[0].mxu0
    %v1784 = vadd.f32 0.0, %v1783
    %v1785 = vpop.f32.mrb[0].mxu0
    %1786 = vmatprep.mubr.f32.mxu0 0.0
    %1787 = vmatmul.mubr.f32.gmra.mrb[0].mxu0 %v1707
    %v1788 = vpop.f32.mrb[0].mxu0
    %v1789 = vadd.f32 0.0, %v1788
    %v1790 = vpop.f32.mrb[0].mxu0
    %1791 = vdwg.mxu0
    %v1792 = vmul.f32 %v1784, 0.35355338
    %v1793 = vmul.f32 %v1789, 0.35355338
    %v1794 = vadd.f32 %v1792, %v121
    %v1795 = vadd.f32 %v1793, %v122
    %v1796 = vsel %vm126, %v1794, -inf
    %1797 = vmax.xlane.f32.xlu0 %v1796
    %v1798 = vpop.xlane.xlu0 %1797
    %v1799 = vsel %vm126, %v1795, -inf
    %1800 = vmax.xlane.f32.xlu0 %v1799
    %v1801 = vpop.xlane.xlu0 %1800
    %v1802 = vsub.f32 %v1794, %v1798
    %v1803 = vsub.f32 %v1795, %v1801
    %v1804 = vmul.f32 %v1802, 1.442695
    %v1805 = vpow.pop %v1804
    %v1806 = vmul.f32 %v1803, 1.442695
    %v1807 = vpow.pop %v1806
    %v1808 = vsel %vm126, %v1805, 0.0
    %1809 = vadd.xlane.f32.xlu0 %v1808
    %v1810 = vpop.xlane.xlu0 %1809
    %v1811 = vsel %vm126, %v1807, 0.0
    %1812 = vadd.xlane.f32.xlu0 %v1811
    %v1813 = vpop.xlane.xlu0 %1812
    %v1814 = vrcp.pop %v1810
    %v1815 = vrcp.pop %v1813
    %v1816 = vmul.f32 %v1805, %v1814
    %v1817 = vmul.f32 %v1807, %v1815
    %1818 = vrot.lane.b32.xlu0 %v1668, 64
    %v1819 = vpop.permute.xlu0 %1818
    %1820 = vrot.lane.b32.xlu0 %v1673, 64
    %v1821 = vpop.permute.xlu0 %1820
    %1822 = vrot.lane.b32.xlu0 %v1678, 64
    %v1823 = vpop.permute.xlu0 %1822
    %1824 = vrot.lane.b32.xlu0 %v1683, 64
    %v1825 = vpop.permute.xlu0 %1824
    %v1831 = vsel %vm126, %v1816, 0
    %v1834 = vsel %vm126, %v1817, 0
    %1836 = vmatprep.subr.mxu0 0.0
    %1837 = vmatpush1.msra.mxu0 %v1819
    %1838 = vmatprep.subr.mxu0 0.0
    %1839 = vmatpush1.msra.mxu0 %v1821
    %1840 = vmatprep.subr.mxu0 0.0
    %1841 = vmatpush1.msra.mxu0 %v1823
    %1842 = vmatprep.subr.mxu0 0.0
    %1843 = vmatpush1.msra.mxu0 %v1825
    %1844 = vmatprep.subr.mxu0 0.0
    %1845 = vmatpush1.msra.mxu0 0.0
    %1846 = vmatprep.subr.mxu0 0.0
    %1847 = vmatpush1.msra.mxu0 0.0
    %1848 = vmatprep.subr.mxu0 0.0
    %1849 = vmatpush1.msra.mxu0 0.0
    %1850 = vmatprep.subr.mxu0 0.0
    %1851 = vmatpush1.msra.mxu0 0.0
    %1852 = vmatprep.subr.mxu0 0.0
    %1853 = vmatpush1.msra.mxu0 0.0
    %1854 = vmatprep.subr.mxu0 0.0
    %1855 = vmatpush1.msra.mxu0 0.0
    %1856 = vmatprep.subr.mxu0 0.0
    %1857 = vmatpush1.msra.mxu0 0.0
    %1858 = vmatprep.subr.mxu0 0.0
    %1859 = vmatpush1.msra.mxu0 0.0
    %1860 = vmatprep.subr.mxu0 0.0
    %1861 = vmatpush1.msra.mxu0 0.0
    %1862 = vmatprep.subr.mxu0 0.0
    %1863 = vmatpush1.msra.mxu0 0.0
    %1864 = vmatprep.subr.mxu0 0.0
    %1865 = vmatpush1.msra.mxu0 0.0
    %1866 = vmatprep.subr.mxu0 0.0
    %1867 = vmatpush1.msra.mxu0 0.0
    %1868 = vmatprep.subr.mxu0 0.0
    %1869 = vmatpush1.msra.mxu0 0.0
    %1870 = vmatprep.subr.mxu0 0.0
    %1871 = vmatpush1.msra.mxu0 0.0
    %1872 = vmatprep.subr.mxu0 0.0
    %1873 = vmatpush1.msra.mxu0 0.0
    %1874 = vmatprep.subr.mxu0 0.0
    %1875 = vmatpush1.msra.mxu0 0.0
    %1876 = vmatprep.subr.mxu0 0.0
    %1877 = vmatpush1.msra.mxu0 0.0
    %1878 = vmatprep.subr.mxu0 0.0
    %1879 = vmatpush1.msra.mxu0 0.0
    %1880 = vmatprep.subr.mxu0 0.0
    %1881 = vmatpush1.msra.mxu0 0.0
    %1882 = vmatprep.subr.mxu0 0.0
    %1883 = vmatpush1.msra.mxu0 0.0
    %1884 = vmatprep.subr.mxu0 0.0
    %1885 = vmatpush1.msra.mxu0 0.0
    %1886 = vmatprep.subr.mxu0 0.0
    %1887 = vmatpush1.msra.mxu0 0.0
    %1888 = vmatprep.subr.mxu0 0.0
    %1889 = vmatpush1.msra.mxu0 0.0
    %1890 = vmatprep.subr.mxu0 0.0
    %1891 = vmatpush1.msra.mxu0 0.0
    %1892 = vmatprep.subr.mxu0 0.0
    %1893 = vmatpush1.msra.mxu0 0.0
    %1894 = vmatprep.subr.mxu0 0.0
    %1895 = vmatpush1.msra.mxu0 0.0
    %1896 = vmatprep.subr.mxu0 0.0
    %1897 = vmatpush1.msra.mxu0 0.0
    %1898 = vmatprep.subr.mxu0 0.0
    %1899 = vmatpush1.msra.mxu0 0.0
    %1900 = vmatprep.mubr.f32.mxu0 0.0
    %1901 = vmatmul.mubr.f32.gmra.mrb[0].mxu0 %v1831
    %v1902 = vpop.f32.mrb[0].mxu0
    %v1903 = vadd.f32 0.0, %v1902
    %v1904 = vpop.f32.mrb[0].mxu0
    %1905 = vmatprep.mubr.f32.mxu0 0.0
    %1906 = vmatmul.mubr.f32.gmra.mrb[0].mxu0 %v1834
    %v1907 = vpop.f32.mrb[0].mxu0
    %v1908 = vadd.f32 0.0, %v1907
    %v1909 = vpop.f32.mrb[0].mxu0
    %1910 = vdwg.mxu0
    %1911 = vrot.lane.b32.xlu0 %v1581, 120
    %v1912 = vpop.permute.xlu0 %1911
    %1913 = vrot.lane.b32.xlu0 %v1586, 120
    %v1914 = vpop.permute.xlu0 %1913
    %1915 = vrot.lane.b32.xlu0 %v1668, 88
    %v1916 = vpop.permute.xlu0 %1915
    %1917 = vrot.lane.b32.xlu0 %v1673, 88
    %v1918 = vpop.permute.xlu0 %1917
    %1919 = vrot.lane.b32.xlu0 %v1678, 88
    %v1920 = vpop.permute.xlu0 %1919
    %1921 = vrot.lane.b32.xlu0 %v1683, 88
    %v1922 = vpop.permute.xlu0 %1921
    %v1923 = vsel %vm286, %v1912, 0
    %v1925 = vsel %vm286, %v1914, 0
    %v1927 = vsel %vm286, %v1916, 0
    %v1929 = vsel %vm286, %v1918, 0
    %v1931 = vsel %vm286, %v1920, 0
    %v1933 = vsel %vm286, %v1922, 0
    %1935 = vmatprep.subr.mxu0 0.0
    %1936 = vmatpush1.xpose.msra.mxu0 %v1927
    %1937 = vmatprep.subr.mxu0 0.0
    %1938 = vmatpush1.xpose.msra.mxu0 %v1929
    %1939 = vmatprep.subr.mxu0 0.0
    %1940 = vmatpush1.xpose.msra.mxu0 %v1931
    %1941 = vmatprep.subr.mxu0 0.0
    %1942 = vmatpush1.xpose.msra.mxu0 %v1933
    %1943 = vmatprep.subr.mxu0 0.0
    %1944 = vmatpush1.xpose.msra.mxu0 0.0
    %1945 = vmatprep.subr.mxu0 0.0
    %1946 = vmatpush1.xpose.msra.mxu0 0.0
    %1947 = vmatprep.subr.mxu0 0.0
    %1948 = vmatpush1.xpose.msra.mxu0 0.0
    %1949 = vmatprep.subr.mxu0 0.0
    %1950 = vmatpush1.xpose.msra.mxu0 0.0
    %1951 = vmatprep.subr.mxu0 0.0
    %1952 = vmatpush1.xpose.msra.mxu0 0.0
    %1953 = vmatprep.subr.mxu0 0.0
    %1954 = vmatpush1.xpose.msra.mxu0 0.0
    %1955 = vmatprep.subr.mxu0 0.0
    %1956 = vmatpush1.xpose.msra.mxu0 0.0
    %1957 = vmatprep.subr.mxu0 0.0
    %1958 = vmatpush1.xpose.msra.mxu0 0.0
    %1959 = vmatprep.subr.mxu0 0.0
    %1960 = vmatpush1.xpose.msra.mxu0 0.0
    %1961 = vmatprep.subr.mxu0 0.0
    %1962 = vmatpush1.xpose.msra.mxu0 0.0
    %1963 = vmatprep.subr.mxu0 0.0
    %1964 = vmatpush1.xpose.msra.mxu0 0.0
    %1965 = vmatprep.subr.mxu0 0.0
    %1966 = vmatpush1.xpose.msra.mxu0 0.0
    %1967 = vmatprep.subr.mxu0 0.0
    %1968 = vmatpush1.xpose.msra.mxu0 0.0
    %1969 = vmatprep.subr.mxu0 0.0
    %1970 = vmatpush1.xpose.msra.mxu0 0.0
    %1971 = vmatprep.subr.mxu0 0.0
    %1972 = vmatpush1.xpose.msra.mxu0 0.0
    %1973 = vmatprep.subr.mxu0 0.0
    %1974 = vmatpush1.xpose.msra.mxu0 0.0
    %1975 = vmatprep.subr.mxu0 0.0
    %1976 = vmatpush1.xpose.msra.mxu0 0.0
    %1977 = vmatprep.subr.mxu0 0.0
    %1978 = vmatpush1.xpose.msra.mxu0 0.0
    %1979 = vmatprep.subr.mxu0 0.0
    %1980 = vmatpush1.xpose.msra.mxu0 0.0
    %1981 = vmatprep.subr.mxu0 0.0
    %1982 = vmatpush1.xpose.msra.mxu0 0.0
    %1983 = vmatprep.subr.mxu0 0.0
    %1984 = vmatpush1.xpose.msra.mxu0 0.0
    %1985 = vmatprep.subr.mxu0 0.0
    %1986 = vmatpush1.xpose.msra.mxu0 0.0
    %1987 = vmatprep.subr.mxu0 0.0
    %1988 = vmatpush1.xpose.msra.mxu0 0.0
    %1989 = vmatprep.subr.mxu0 0.0
    %1990 = vmatpush1.xpose.msra.mxu0 0.0
    %1991 = vmatprep.subr.mxu0 0.0
    %1992 = vmatpush1.xpose.msra.mxu0 0.0
    %1993 = vmatprep.subr.mxu0 0.0
    %1994 = vmatpush1.xpose.msra.mxu0 0.0
    %1995 = vmatprep.subr.mxu0 0.0
    %1996 = vmatpush1.xpose.msra.mxu0 0.0
    %1997 = vmatprep.subr.mxu0 0.0
    %1998 = vmatpush1.xpose.msra.mxu0 0.0
    %1999 = vmatprep.mubr.f32.mxu0 0.0
    %2000 = vmatmul.mubr.f32.gmra.mrb[0].mxu0 %v1923
    %v2001 = vpop.f32.mrb[0].mxu0
    %v2002 = vadd.f32 0.0, %v2001
    %v2003 = vpop.f32.mrb[0].mxu0
    %2004 = vmatprep.mubr.f32.mxu0 0.0
    %2005 = vmatmul.mubr.f32.gmra.mrb[0].mxu0 %v1925
    %v2006 = vpop.f32.mrb[0].mxu0
    %v2007 = vadd.f32 0.0, %v2006
    %v2008 = vpop.f32.mrb[0].mxu0
    %2009 = vdwg.mxu0
    %v2010 = vmul.f32 %v2002, 0.35355338
    %v2011 = vmul.f32 %v2007, 0.35355338
    %v2012 = vadd.f32 %v2010, %v121
    %v2013 = vadd.f32 %v2011, %v122
    %v2014 = vsel %vm126, %v2012, -inf
    %2015 = vmax.xlane.f32.xlu0 %v2014
    %v2016 = vpop.xlane.xlu0 %2015
    %v2017 = vsel %vm126, %v2013, -inf
    %2018 = vmax.xlane.f32.xlu0 %v2017
    %v2019 = vpop.xlane.xlu0 %2018
    %v2020 = vsub.f32 %v2012, %v2016
    %v2021 = vsub.f32 %v2013, %v2019
    %v2022 = vmul.f32 %v2020, 1.442695
    %v2023 = vpow.pop %v2022
    %v2024 = vmul.f32 %v2021, 1.442695
    %v2025 = vpow.pop %v2024
    %v2026 = vsel %vm126, %v2023, 0.0
    %2027 = vadd.xlane.f32.xlu0 %v2026
    %v2028 = vpop.xlane.xlu0 %2027
    %v2029 = vsel %vm126, %v2025, 0.0
    %2030 = vadd.xlane.f32.xlu0 %v2029
    %v2031 = vpop.xlane.xlu0 %2030
    %v2032 = vrcp.pop %v2028
    %v2033 = vrcp.pop %v2031
    %v2034 = vmul.f32 %v2023, %v2032
    %v2035 = vmul.f32 %v2025, %v2033
    %2036 = vrot.lane.b32.xlu0 %v1668, 56
    %v2037 = vpop.permute.xlu0 %2036
    %2038 = vrot.lane.b32.xlu0 %v1673, 56
    %v2039 = vpop.permute.xlu0 %2038
    %2040 = vrot.lane.b32.xlu0 %v1678, 56
    %v2041 = vpop.permute.xlu0 %2040
    %2042 = vrot.lane.b32.xlu0 %v1683, 56
    %v2043 = vpop.permute.xlu0 %2042
    %v2049 = vsel %vm126, %v2034, 0
    %v2052 = vsel %vm126, %v2035, 0
    %2054 = vmatprep.subr.mxu0 0.0
    %2055 = vmatpush1.msra.mxu0 %v2037
    %2056 = vmatprep.subr.mxu0 0.0
    %2057 = vmatpush1.msra.mxu0 %v2039
    %2058 = vmatprep.subr.mxu0 0.0
    %2059 = vmatpush1.msra.mxu0 %v2041
    %2060 = vmatprep.subr.mxu0 0.0
    %2061 = vmatpush1.msra.mxu0 %v2043
    %2062 = vmatprep.subr.mxu0 0.0
    %2063 = vmatpush1.msra.mxu0 0.0
    %2064 = vmatprep.subr.mxu0 0.0
    %2065 = vmatpush1.msra.mxu0 0.0
    %2066 = vmatprep.subr.mxu0 0.0
    %2067 = vmatpush1.msra.mxu0 0.0
    %2068 = vmatprep.subr.mxu0 0.0
    %2069 = vmatpush1.msra.mxu0 0.0
    %2070 = vmatprep.subr.mxu0 0.0
    %2071 = vmatpush1.msra.mxu0 0.0
    %2072 = vmatprep.subr.mxu0 0.0
    %2073 = vmatpush1.msra.mxu0 0.0
    %2074 = vmatprep.subr.mxu0 0.0
    %2075 = vmatpush1.msra.mxu0 0.0
    %2076 = vmatprep.subr.mxu0 0.0
    %2077 = vmatpush1.msra.mxu0 0.0
    %2078 = vmatprep.subr.mxu0 0.0
    %2079 = vmatpush1.msra.mxu0 0.0
    %2080 = vmatprep.subr.mxu0 0.0
    %2081 = vmatpush1.msra.mxu0 0.0
    %2082 = vmatprep.subr.mxu0 0.0
    %2083 = vmatpush1.msra.mxu0 0.0
    %2084 = vmatprep.subr.mxu0 0.0
    %2085 = vmatpush1.msra.mxu0 0.0
    %2086 = vmatprep.subr.mxu0 0.0
    %2087 = vmatpush1.msra.mxu0 0.0
    %2088 = vmatprep.subr.mxu0 0.0
    %2089 = vmatpush1.msra.mxu0 0.0
    %2090 = vmatprep.subr.mxu0 0.0
    %2091 = vmatpush1.msra.mxu0 0.0
    %2092 = vmatprep.subr.mxu0 0.0
    %2093 = vmatpush1.msra.mxu0 0.0
    %2094 = vmatprep.subr.mxu0 0.0
    %2095 = vmatpush1.msra.mxu0 0.0
    %2096 = vmatprep.subr.mxu0 0.0
    %2097 = vmatpush1.msra.mxu0 0.0
    %2098 = vmatprep.subr.mxu0 0.0
    %2099 = vmatpush1.msra.mxu0 0.0
    %2100 = vmatprep.subr.mxu0 0.0
    %2101 = vmatpush1.msra.mxu0 0.0
    %2102 = vmatprep.subr.mxu0 0.0
    %2103 = vmatpush1.msra.mxu0 0.0
    %2104 = vmatprep.subr.mxu0 0.0
    %2105 = vmatpush1.msra.mxu0 0.0
    %2106 = vmatprep.subr.mxu0 0.0
    %2107 = vmatpush1.msra.mxu0 0.0
    %2108 = vmatprep.subr.mxu0 0.0
    %2109 = vmatpush1.msra.mxu0 0.0
    %2110 = vmatprep.subr.mxu0 0.0
    %2111 = vmatpush1.msra.mxu0 0.0
    %2112 = vmatprep.subr.mxu0 0.0
    %2113 = vmatpush1.msra.mxu0 0.0
    %2114 = vmatprep.subr.mxu0 0.0
    %2115 = vmatpush1.msra.mxu0 0.0
    %2116 = vmatprep.subr.mxu0 0.0
    %2117 = vmatpush1.msra.mxu0 0.0
    %2118 = vmatprep.mubr.f32.mxu0 0.0
    %2119 = vmatmul.mubr.f32.gmra.mrb[0].mxu0 %v2049
    %v2120 = vpop.f32.mrb[0].mxu0
    %v2121 = vadd.f32 0.0, %v2120
    %v2122 = vpop.f32.mrb[0].mxu0
    %2123 = vmatprep.mubr.f32.mxu0 0.0
    %2124 = vmatmul.mubr.f32.gmra.mrb[0].mxu0 %v2052
    %v2125 = vpop.f32.mrb[0].mxu0
    %v2126 = vadd.f32 0.0, %v2125
    %v2127 = vpop.f32.mrb[0].mxu0
    %2128 = vdwg.mxu0
    %v2130 = vsel %vm286, %v2121, 0
    %v2133 = vsel %vm286, %v2126, 0
    %2135 = vmatprep.subr.mxu0 0.0
    %2136 = vmatpush1.msra.mxu0 %v1688
    %2137 = vmatprep.subr.mxu0 0.0
    %2138 = vmatpush1.msra.mxu0 0.0
    %2139 = vmatprep.subr.mxu0 0.0
    %2140 = vmatpush1.msra.mxu0 0.0
    %2141 = vmatprep.subr.mxu0 0.0
    %2142 = vmatpush1.msra.mxu0 0.0
    %2143 = vmatprep.subr.mxu0 0.0
    %2144 = vmatpush1.msra.mxu0 0.0
    %2145 = vmatprep.subr.mxu0 0.0
    %2146 = vmatpush1.msra.mxu0 0.0
    %2147 = vmatprep.subr.mxu0 0.0
    %2148 = vmatpush1.msra.mxu0 0.0
    %2149 = vmatprep.subr.mxu0 0.0
    %2150 = vmatpush1.msra.mxu0 0.0
    %2151 = vmatprep.subr.mxu0 0.0
    %2152 = vmatpush1.msra.mxu0 0.0
    %2153 = vmatprep.subr.mxu0 0.0
    %2154 = vmatpush1.msra.mxu0 0.0
    %2155 = vmatprep.subr.mxu0 0.0
    %2156 = vmatpush1.msra.mxu0 0.0
    %2157 = vmatprep.subr.mxu0 0.0
    %2158 = vmatpush1.msra.mxu0 0.0
    %2159 = vmatprep.subr.mxu0 0.0
    %2160 = vmatpush1.msra.mxu0 0.0
    %2161 = vmatprep.subr.mxu0 0.0
    %2162 = vmatpush1.msra.mxu0 0.0
    %2163 = vmatprep.subr.mxu0 0.0
    %2164 = vmatpush1.msra.mxu0 0.0
    %2165 = vmatprep.subr.mxu0 0.0
    %2166 = vmatpush1.msra.mxu0 0.0
    %2167 = vmatprep.subr.mxu0 0.0
    %2168 = vmatpush1.msra.mxu0 0.0
    %2169 = vmatprep.subr.mxu0 0.0
    %2170 = vmatpush1.msra.mxu0 0.0
    %2171 = vmatprep.subr.mxu0 0.0
    %2172 = vmatpush1.msra.mxu0 0.0
    %2173 = vmatprep.subr.mxu0 0.0
    %2174 = vmatpush1.msra.mxu0 0.0
    %2175 = vmatprep.subr.mxu0 0.0
    %2176 = vmatpush1.msra.mxu0 0.0
    %2177 = vmatprep.subr.mxu0 0.0
    %2178 = vmatpush1.msra.mxu0 0.0
    %2179 = vmatprep.subr.mxu0 0.0
    %2180 = vmatpush1.msra.mxu0 0.0
    %2181 = vmatprep.subr.mxu0 0.0
    %2182 = vmatpush1.msra.mxu0 0.0
    %2183 = vmatprep.subr.mxu0 0.0
    %2184 = vmatpush1.msra.mxu0 0.0
    %2185 = vmatprep.subr.mxu0 0.0
    %2186 = vmatpush1.msra.mxu0 0.0
    %2187 = vmatprep.subr.mxu0 0.0
    %2188 = vmatpush1.msra.mxu0 0.0
    %2189 = vmatprep.subr.mxu0 0.0
    %2190 = vmatpush1.msra.mxu0 0.0
    %2191 = vmatprep.subr.mxu0 0.0
    %2192 = vmatpush1.msra.mxu0 0.0
    %2193 = vmatprep.subr.mxu0 0.0
    %2194 = vmatpush1.msra.mxu0 0.0
    %2195 = vmatprep.subr.mxu0 0.0
    %2196 = vmatpush1.msra.mxu0 0.0
    %2197 = vmatprep.subr.mxu0 0.0
    %2198 = vmatpush1.msra.mxu0 0.0
    %2199 = vmatprep.mubr.f32.mxu0 0.0
    %2200 = vmatmul.mubr.f32.gmra.mrb[0].mxu0 %v2130
    %v2201 = vpop.f32.mrb[0].mxu0
    %v2202 = vadd.f32 0.0, %v2201
    %v2203 = vpop.f32.mrb[0].mxu0
    %2204 = vmatprep.mubr.f32.mxu0 0.0
    %2205 = vmatmul.mubr.f32.gmra.mrb[0].mxu0 %v2133
    %v2206 = vpop.f32.mrb[0].mxu0
    %v2207 = vadd.f32 0.0, %v2206
    %v2208 = vpop.f32.mrb[0].mxu0
    %2209 = vdwg.mxu0
    %v2211 = vsel %vm286, %v1903, 0
    %v2214 = vsel %vm286, %v1908, 0
    %2216 = vmatprep.subr.mxu0 0.0
    %2217 = vmatpush1.msra.mxu0 %v1687
    %2218 = vmatprep.subr.mxu0 0.0
    %2219 = vmatpush1.msra.mxu0 0.0
    %2220 = vmatprep.subr.mxu0 0.0
    %2221 = vmatpush1.msra.mxu0 0.0
    %2222 = vmatprep.subr.mxu0 0.0
    %2223 = vmatpush1.msra.mxu0 0.0
    %2224 = vmatprep.subr.mxu0 0.0
    %2225 = vmatpush1.msra.mxu0 0.0
    %2226 = vmatprep.subr.mxu0 0.0
    %2227 = vmatpush1.msra.mxu0 0.0
    %2228 = vmatprep.subr.mxu0 0.0
    %2229 = vmatpush1.msra.mxu0 0.0
    %2230 = vmatprep.subr.mxu0 0.0
    %2231 = vmatpush1.msra.mxu0 0.0
    %2232 = vmatprep.subr.mxu0 0.0
    %2233 = vmatpush1.msra.mxu0 0.0
    %2234 = vmatprep.subr.mxu0 0.0
    %2235 = vmatpush1.msra.mxu0 0.0
    %2236 = vmatprep.subr.mxu0 0.0
    %2237 = vmatpush1.msra.mxu0 0.0
    %2238 = vmatprep.subr.mxu0 0.0
    %2239 = vmatpush1.msra.mxu0 0.0
    %2240 = vmatprep.subr.mxu0 0.0
    %2241 = vmatpush1.msra.mxu0 0.0
    %2242 = vmatprep.subr.mxu0 0.0
    %2243 = vmatpush1.msra.mxu0 0.0
    %2244 = vmatprep.subr.mxu0 0.0
    %2245 = vmatpush1.msra.mxu0 0.0
    %2246 = vmatprep.subr.mxu0 0.0
    %2247 = vmatpush1.msra.mxu0 0.0
    %2248 = vmatprep.subr.mxu0 0.0
    %2249 = vmatpush1.msra.mxu0 0.0
    %2250 = vmatprep.subr.mxu0 0.0
    %2251 = vmatpush1.msra.mxu0 0.0
    %2252 = vmatprep.subr.mxu0 0.0
    %2253 = vmatpush1.msra.mxu0 0.0
    %2254 = vmatprep.subr.mxu0 0.0
    %2255 = vmatpush1.msra.mxu0 0.0
    %2256 = vmatprep.subr.mxu0 0.0
    %2257 = vmatpush1.msra.mxu0 0.0
    %2258 = vmatprep.subr.mxu0 0.0
    %2259 = vmatpush1.msra.mxu0 0.0
    %2260 = vmatprep.subr.mxu0 0.0
    %2261 = vmatpush1.msra.mxu0 0.0
    %2262 = vmatprep.subr.mxu0 0.0
    %2263 = vmatpush1.msra.mxu0 0.0
    %2264 = vmatprep.subr.mxu0 0.0
    %2265 = vmatpush1.msra.mxu0 0.0
    %2266 = vmatprep.subr.mxu0 0.0
    %2267 = vmatpush1.msra.mxu0 0.0
    %2268 = vmatprep.subr.mxu0 0.0
    %2269 = vmatpush1.msra.mxu0 0.0
    %2270 = vmatprep.subr.mxu0 0.0
    %2271 = vmatpush1.msra.mxu0 0.0
    %2272 = vmatprep.subr.mxu0 0.0
    %2273 = vmatpush1.msra.mxu0 0.0
    %2274 = vmatprep.subr.mxu0 0.0
    %2275 = vmatpush1.msra.mxu0 0.0
    %2276 = vmatprep.subr.mxu0 0.0
    %2277 = vmatpush1.msra.mxu0 0.0
    %2278 = vmatprep.subr.mxu0 0.0
    %2279 = vmatpush1.msra.mxu0 0.0
    %2280 = vmatprep.mubr.f32.mxu0 0.0
    %2281 = vmatmul.mubr.f32.gmra.mrb[0].mxu0 %v2211
    %v2282 = vpop.f32.mrb[0].mxu0
    %v2283 = vadd.f32 %v2202, %v2282
    %v2284 = vpop.f32.mrb[0].mxu0
    %2285 = vmatprep.mubr.f32.mxu0 0.0
    %2286 = vmatmul.mubr.f32.gmra.mrb[0].mxu0 %v2214
    %v2287 = vpop.f32.mrb[0].mxu0
    %v2288 = vadd.f32 %v2207, %v2287
    %v2289 = vpop.f32.mrb[0].mxu0
    %2290 = vdwg.mxu0
    %2291 = vrot.lane.b32.xlu0 %v1581, 112
    %v2292 = vpop.permute.xlu0 %2291
    %2293 = vrot.lane.b32.xlu0 %v1586, 112
    %v2294 = vpop.permute.xlu0 %2293
    %2295 = vrot.lane.b32.xlu0 %v1668, 80
    %v2296 = vpop.permute.xlu0 %2295
    %2297 = vrot.lane.b32.xlu0 %v1673, 80
    %v2298 = vpop.permute.xlu0 %2297
    %2299 = vrot.lane.b32.xlu0 %v1678, 80
    %v2300 = vpop.permute.xlu0 %2299
    %2301 = vrot.lane.b32.xlu0 %v1683, 80
    %v2302 = vpop.permute.xlu0 %2301
    %v2303 = vsel %vm286, %v2292, 0
    %v2305 = vsel %vm286, %v2294, 0
    %v2307 = vsel %vm286, %v2296, 0
    %v2309 = vsel %vm286, %v2298, 0
    %v2311 = vsel %vm286, %v2300, 0
    %v2313 = vsel %vm286, %v2302, 0
    %2315 = vmatprep.subr.mxu0 0.0
    %2316 = vmatpush1.xpose.msra.mxu0 %v2307
    %2317 = vmatprep.subr.mxu0 0.0
    %2318 = vmatpush1.xpose.msra.mxu0 %v2309
    %2319 = vmatprep.subr.mxu0 0.0
    %2320 = vmatpush1.xpose.msra.mxu0 %v2311
    %2321 = vmatprep.subr.mxu0 0.0
    %2322 = vmatpush1.xpose.msra.mxu0 %v2313
    %2323 = vmatprep.subr.mxu0 0.0
    %2324 = vmatpush1.xpose.msra.mxu0 0.0
    %2325 = vmatprep.subr.mxu0 0.0
    %2326 = vmatpush1.xpose.msra.mxu0 0.0
    %2327 = vmatprep.subr.mxu0 0.0
    %2328 = vmatpush1.xpose.msra.mxu0 0.0
    %2329 = vmatprep.subr.mxu0 0.0
    %2330 = vmatpush1.xpose.msra.mxu0 0.0
    %2331 = vmatprep.subr.mxu0 0.0
    %2332 = vmatpush1.xpose.msra.mxu0 0.0
    %2333 = vmatprep.subr.mxu0 0.0
    %2334 = vmatpush1.xpose.msra.mxu0 0.0
    %2335 = vmatprep.subr.mxu0 0.0
    %2336 = vmatpush1.xpose.msra.mxu0 0.0
    %2337 = vmatprep.subr.mxu0 0.0
    %2338 = vmatpush1.xpose.msra.mxu0 0.0
    %2339 = vmatprep.subr.mxu0 0.0
    %2340 = vmatpush1.xpose.msra.mxu0 0.0
    %2341 = vmatprep.subr.mxu0 0.0
    %2342 = vmatpush1.xpose.msra.mxu0 0.0
    %2343 = vmatprep.subr.mxu0 0.0
    %2344 = vmatpush1.xpose.msra.mxu0 0.0
    %2345 = vmatprep.subr.mxu0 0.0
    %2346 = vmatpush1.xpose.msra.mxu0 0.0
    %2347 = vmatprep.subr.mxu0 0.0
    %2348 = vmatpush1.xpose.msra.mxu0 0.0
    %2349 = vmatprep.subr.mxu0 0.0
    %2350 = vmatpush1.xpose.msra.mxu0 0.0
    %2351 = vmatprep.subr.mxu0 0.0
    %2352 = vmatpush1.xpose.msra.mxu0 0.0
    %2353 = vmatprep.subr.mxu0 0.0
    %2354 = vmatpush1.xpose.msra.mxu0 0.0
    %2355 = vmatprep.subr.mxu0 0.0
    %2356 = vmatpush1.xpose.msra.mxu0 0.0
    %2357 = vmatprep.subr.mxu0 0.0
    %2358 = vmatpush1.xpose.msra.mxu0 0.0
    %2359 = vmatprep.subr.mxu0 0.0
    %2360 = vmatpush1.xpose.msra.mxu0 0.0
    %2361 = vmatprep.subr.mxu0 0.0
    %2362 = vmatpush1.xpose.msra.mxu0 0.0
    %2363 = vmatprep.subr.mxu0 0.0
    %2364 = vmatpush1.xpose.msra.mxu0 0.0
    %2365 = vmatprep.subr.mxu0 0.0
    %2366 = vmatpush1.xpose.msra.mxu0 0.0
    %2367 = vmatprep.subr.mxu0 0.0
    %2368 = vmatpush1.xpose.msra.mxu0 0.0
    %2369 = vmatprep.subr.mxu0 0.0
    %2370 = vmatpush1.xpose.msra.mxu0 0.0
    %2371 = vmatprep.subr.mxu0 0.0
    %2372 = vmatpush1.xpose.msra.mxu0 0.0
    %2373 = vmatprep.subr.mxu0 0.0
    %2374 = vmatpush1.xpose.msra.mxu0 0.0
    %2375 = vmatprep.subr.mxu0 0.0
    %2376 = vmatpush1.xpose.msra.mxu0 0.0
    %2377 = vmatprep.subr.mxu0 0.0
    %2378 = vmatpush1.xpose.msra.mxu0 0.0
    %2379 = vmatprep.mubr.f32.mxu0 0.0
    %2380 = vmatmul.mubr.f32.gmra.mrb[0].mxu0 %v2303
    %v2381 = vpop.f32.mrb[0].mxu0
    %v2382 = vadd.f32 0.0, %v2381
    %v2383 = vpop.f32.mrb[0].mxu0
    %2384 = vmatprep.mubr.f32.mxu0 0.0
    %2385 = vmatmul.mubr.f32.gmra.mrb[0].mxu0 %v2305
    %v2386 = vpop.f32.mrb[0].mxu0
    %v2387 = vadd.f32 0.0, %v2386
    %v2388 = vpop.f32.mrb[0].mxu0
    %2389 = vdwg.mxu0
    %v2390 = vmul.f32 %v2382, 0.35355338
    %v2391 = vmul.f32 %v2387, 0.35355338
    %v2392 = vadd.f32 %v2390, %v121
    %v2393 = vadd.f32 %v2391, %v122
    %v2394 = vsel %vm126, %v2392, -inf
    %2395 = vmax.xlane.f32.xlu0 %v2394
    %v2396 = vpop.xlane.xlu0 %2395
    %v2397 = vsel %vm126, %v2393, -inf
    %2398 = vmax.xlane.f32.xlu0 %v2397
    %v2399 = vpop.xlane.xlu0 %2398
    %v2400 = vsub.f32 %v2392, %v2396
    %v2401 = vsub.f32 %v2393, %v2399
    %v2402 = vmul.f32 %v2400, 1.442695
    %v2403 = vpow.pop %v2402
    %v2404 = vmul.f32 %v2401, 1.442695
    %v2405 = vpow.pop %v2404
    %v2406 = vsel %vm126, %v2403, 0.0
    %2407 = vadd.xlane.f32.xlu0 %v2406
    %v2408 = vpop.xlane.xlu0 %2407
    %v2409 = vsel %vm126, %v2405, 0.0
    %2410 = vadd.xlane.f32.xlu0 %v2409
    %v2411 = vpop.xlane.xlu0 %2410
    %v2412 = vrcp.pop %v2408
    %v2413 = vrcp.pop %v2411
    %v2414 = vmul.f32 %v2403, %v2412
    %v2415 = vmul.f32 %v2405, %v2413
    %2416 = vrot.lane.b32.xlu0 %v1668, 48
    %v2417 = vpop.permute.xlu0 %2416
    %2418 = vrot.lane.b32.xlu0 %v1673, 48
    %v2419 = vpop.permute.xlu0 %2418
    %2420 = vrot.lane.b32.xlu0 %v1678, 48
    %v2421 = vpop.permute.xlu0 %2420
    %2422 = vrot.lane.b32.xlu0 %v1683, 48
    %v2423 = vpop.permute.xlu0 %2422
    %v2429 = vsel %vm126, %v2414, 0
    %v2432 = vsel %vm126, %v2415, 0
    %2434 = vmatprep.subr.mxu0 0.0
    %2435 = vmatpush1.msra.mxu0 %v2417
    %2436 = vmatprep.subr.mxu0 0.0
    %2437 = vmatpush1.msra.mxu0 %v2419
    %2438 = vmatprep.subr.mxu0 0.0
    %2439 = vmatpush1.msra.mxu0 %v2421
    %2440 = vmatprep.subr.mxu0 0.0
    %2441 = vmatpush1.msra.mxu0 %v2423
    %2442 = vmatprep.subr.mxu0 0.0
    %2443 = vmatpush1.msra.mxu0 0.0
    %2444 = vmatprep.subr.mxu0 0.0
    %2445 = vmatpush1.msra.mxu0 0.0
    %2446 = vmatprep.subr.mxu0 0.0
    %2447 = vmatpush1.msra.mxu0 0.0
    %2448 = vmatprep.subr.mxu0 0.0
    %2449 = vmatpush1.msra.mxu0 0.0
    %2450 = vmatprep.subr.mxu0 0.0
    %2451 = vmatpush1.msra.mxu0 0.0
    %2452 = vmatprep.subr.mxu0 0.0
    %2453 = vmatpush1.msra.mxu0 0.0
    %2454 = vmatprep.subr.mxu0 0.0
    %2455 = vmatpush1.msra.mxu0 0.0
    %2456 = vmatprep.subr.mxu0 0.0
    %2457 = vmatpush1.msra.mxu0 0.0
    %2458 = vmatprep.subr.mxu0 0.0
    %2459 = vmatpush1.msra.mxu0 0.0
    %2460 = vmatprep.subr.mxu0 0.0
    %2461 = vmatpush1.msra.mxu0 0.0
    %2462 = vmatprep.subr.mxu0 0.0
    %2463 = vmatpush1.msra.mxu0 0.0
    %2464 = vmatprep.subr.mxu0 0.0
    %2465 = vmatpush1.msra.mxu0 0.0
    %2466 = vmatprep.subr.mxu0 0.0
    %2467 = vmatpush1.msra.mxu0 0.0
    %2468 = vmatprep.subr.mxu0 0.0
    %2469 = vmatpush1.msra.mxu0 0.0
    %2470 = vmatprep.subr.mxu0 0.0
    %2471 = vmatpush1.msra.mxu0 0.0
    %2472 = vmatprep.subr.mxu0 0.0
    %2473 = vmatpush1.msra.mxu0 0.0
    %2474 = vmatprep.subr.mxu0 0.0
    %2475 = vmatpush1.msra.mxu0 0.0
    %2476 = vmatprep.subr.mxu0 0.0
    %2477 = vmatpush1.msra.mxu0 0.0
    %2478 = vmatprep.subr.mxu0 0.0
    %2479 = vmatpush1.msra.mxu0 0.0
    %2480 = vmatprep.subr.mxu0 0.0
    %2481 = vmatpush1.msra.mxu0 0.0
    %2482 = vmatprep.subr.mxu0 0.0
    %2483 = vmatpush1.msra.mxu0 0.0
    %2484 = vmatprep.subr.mxu0 0.0
    %2485 = vmatpush1.msra.mxu0 0.0
    %2486 = vmatprep.subr.mxu0 0.0
    %2487 = vmatpush1.msra.mxu0 0.0
    %2488 = vmatprep.subr.mxu0 0.0
    %2489 = vmatpush1.msra.mxu0 0.0
    %2490 = vmatprep.subr.mxu0 0.0
    %2491 = vmatpush1.msra.mxu0 0.0
    %2492 = vmatprep.subr.mxu0 0.0
    %2493 = vmatpush1.msra.mxu0 0.0
    %2494 = vmatprep.subr.mxu0 0.0
    %2495 = vmatpush1.msra.mxu0 0.0
    %2496 = vmatprep.subr.mxu0 0.0
    %2497 = vmatpush1.msra.mxu0 0.0
    %2498 = vmatprep.mubr.f32.mxu0 0.0
    %2499 = vmatmul.mubr.f32.gmra.mrb[0].mxu0 %v2429
    %v2500 = vpop.f32.mrb[0].mxu0
    %v2501 = vadd.f32 0.0, %v2500
    %v2502 = vpop.f32.mrb[0].mxu0
    %2503 = vmatprep.mubr.f32.mxu0 0.0
    %2504 = vmatmul.mubr.f32.gmra.mrb[0].mxu0 %v2432
    %v2505 = vpop.f32.mrb[0].mxu0
    %v2506 = vadd.f32 0.0, %v2505
    %v2507 = vpop.f32.mrb[0].mxu0
    %2508 = vdwg.mxu0
    %v2510 = vsel %vm286, %v2501, 0
    %v2513 = vsel %vm286, %v2506, 0
    %2515 = vmatprep.subr.mxu0 0.0
    %2516 = vmatpush1.msra.mxu0 %v1689
    %2517 = vmatprep.subr.mxu0 0.0
    %2518 = vmatpush1.msra.mxu0 0.0
    %2519 = vmatprep.subr.mxu0 0.0
    %2520 = vmatpush1.msra.mxu0 0.0
    %2521 = vmatprep.subr.mxu0 0.0
    %2522 = vmatpush1.msra.mxu0 0.0
    %2523 = vmatprep.subr.mxu0 0.0
    %2524 = vmatpush1.msra.mxu0 0.0
    %2525 = vmatprep.subr.mxu0 0.0
    %2526 = vmatpush1.msra.mxu0 0.0
    %2527 = vmatprep.subr.mxu0 0.0
    %2528 = vmatpush1.msra.mxu0 0.0
    %2529 = vmatprep.subr.mxu0 0.0
    %2530 = vmatpush1.msra.mxu0 0.0
    %2531 = vmatprep.subr.mxu0 0.0
    %2532 = vmatpush1.msra.mxu0 0.0
    %2533 = vmatprep.subr.mxu0 0.0
    %2534 = vmatpush1.msra.mxu0 0.0
    %2535 = vmatprep.subr.mxu0 0.0
    %2536 = vmatpush1.msra.mxu0 0.0
    %2537 = vmatprep.subr.mxu0 0.0
    %2538 = vmatpush1.msra.mxu0 0.0
    %2539 = vmatprep.subr.mxu0 0.0
    %2540 = vmatpush1.msra.mxu0 0.0
    %2541 = vmatprep.subr.mxu0 0.0
    %2542 = vmatpush1.msra.mxu0 0.0
    %2543 = vmatprep.subr.mxu0 0.0
    %2544 = vmatpush1.msra.mxu0 0.0
    %2545 = vmatprep.subr.mxu0 0.0
    %2546 = vmatpush1.msra.mxu0 0.0
    %2547 = vmatprep.subr.mxu0 0.0
    %2548 = vmatpush1.msra.mxu0 0.0
    %2549 = vmatprep.subr.mxu0 0.0
    %2550 = vmatpush1.msra.mxu0 0.0
    %2551 = vmatprep.subr.mxu0 0.0
    %2552 = vmatpush1.msra.mxu0 0.0
    %2553 = vmatprep.subr.mxu0 0.0
    %2554 = vmatpush1.msra.mxu0 0.0
    %2555 = vmatprep.subr.mxu0 0.0
    %2556 = vmatpush1.msra.mxu0 0.0
    %2557 = vmatprep.subr.mxu0 0.0
    %2558 = vmatpush1.msra.mxu0 0.0
    %2559 = vmatprep.subr.mxu0 0.0
    %2560 = vmatpush1.msra.mxu0 0.0
    %2561 = vmatprep.subr.mxu0 0.0
    %2562 = vmatpush1.msra.mxu0 0.0
    %2563 = vmatprep.subr.mxu0 0.0
    %2564 = vmatpush1.msra.mxu0 0.0
    %2565 = vmatprep.subr.mxu0 0.0
    %2566 = vmatpush1.msra.mxu0 0.0
    %2567 = vmatprep.subr.mxu0 0.0
    %2568 = vmatpush1.msra.mxu0 0.0
    %2569 = vmatprep.subr.mxu0 0.0
    %2570 = vmatpush1.msra.mxu0 0.0
    %2571 = vmatprep.subr.mxu0 0.0
    %2572 = vmatpush1.msra.mxu0 0.0
    %2573 = vmatprep.subr.mxu0 0.0
    %2574 = vmatpush1.msra.mxu0 0.0
    %2575 = vmatprep.subr.mxu0 0.0
    %2576 = vmatpush1.msra.mxu0 0.0
    %2577 = vmatprep.subr.mxu0 0.0
    %2578 = vmatpush1.msra.mxu0 0.0
    %2579 = vmatprep.mubr.f32.mxu0 0.0
    %2580 = vmatmul.mubr.f32.gmra.mrb[0].mxu0 %v2510
    %v2581 = vpop.f32.mrb[0].mxu0
    %v2582 = vadd.f32 0.0, %v2581
    %v2583 = vpop.f32.mrb[0].mxu0
    %2584 = vmatprep.mubr.f32.mxu0 0.0
    %2585 = vmatmul.mubr.f32.gmra.mrb[0].mxu0 %v2513
    %v2586 = vpop.f32.mrb[0].mxu0
    %v2587 = vadd.f32 0.0, %v2586
    %v2588 = vpop.f32.mrb[0].mxu0
    %2589 = vdwg.mxu0
    %v2590 = vadd.f32 %v2283, %v2582
    %v2591 = vadd.f32 %v2288, %v2587
    %2592 = vrot.lane.b32.xlu0 %v1581, 104
    %v2593 = vpop.permute.xlu0 %2592
    %2594 = vrot.lane.b32.xlu0 %v1586, 104
    %v2595 = vpop.permute.xlu0 %2594
    %2596 = vrot.lane.b32.xlu0 %v1668, 72
    %v2597 = vpop.permute.xlu0 %2596
    %2598 = vrot.lane.b32.xlu0 %v1673, 72
    %v2599 = vpop.permute.xlu0 %2598
    %2600 = vrot.lane.b32.xlu0 %v1678, 72
    %v2601 = vpop.permute.xlu0 %2600
    %2602 = vrot.lane.b32.xlu0 %v1683, 72
    %v2603 = vpop.permute.xlu0 %2602
    %v2604 = vsel %vm286, %v2593, 0
    %v2606 = vsel %vm286, %v2595, 0
    %v2608 = vsel %vm286, %v2597, 0
    %v2610 = vsel %vm286, %v2599, 0
    %v2612 = vsel %vm286, %v2601, 0
    %v2614 = vsel %vm286, %v2603, 0
    %2616 = vmatprep.subr.mxu0 0.0
    %2617 = vmatpush1.xpose.msra.mxu0 %v2608
    %2618 = vmatprep.subr.mxu0 0.0
    %2619 = vmatpush1.xpose.msra.mxu0 %v2610
    %2620 = vmatprep.subr.mxu0 0.0
    %2621 = vmatpush1.xpose.msra.mxu0 %v2612
    %2622 = vmatprep.subr.mxu0 0.0
    %2623 = vmatpush1.xpose.msra.mxu0 %v2614
    %2624 = vmatprep.subr.mxu0 0.0
    %2625 = vmatpush1.xpose.msra.mxu0 0.0
    %2626 = vmatprep.subr.mxu0 0.0
    %2627 = vmatpush1.xpose.msra.mxu0 0.0
    %2628 = vmatprep.subr.mxu0 0.0
    %2629 = vmatpush1.xpose.msra.mxu0 0.0
    %2630 = vmatprep.subr.mxu0 0.0
    %2631 = vmatpush1.xpose.msra.mxu0 0.0
    %2632 = vmatprep.subr.mxu0 0.0
    %2633 = vmatpush1.xpose.msra.mxu0 0.0
    %2634 = vmatprep.subr.mxu0 0.0
    %2635 = vmatpush1.xpose.msra.mxu0 0.0
    %2636 = vmatprep.subr.mxu0 0.0
    %2637 = vmatpush1.xpose.msra.mxu0 0.0
    %2638 = vmatprep.subr.mxu0 0.0
    %2639 = vmatpush1.xpose.msra.mxu0 0.0
    %2640 = vmatprep.subr.mxu0 0.0
    %2641 = vmatpush1.xpose.msra.mxu0 0.0
    %2642 = vmatprep.subr.mxu0 0.0
    %2643 = vmatpush1.xpose.msra.mxu0 0.0
    %2644 = vmatprep.subr.mxu0 0.0
    %2645 = vmatpush1.xpose.msra.mxu0 0.0
    %2646 = vmatprep.subr.mxu0 0.0
    %2647 = vmatpush1.xpose.msra.mxu0 0.0
    %2648 = vmatprep.subr.mxu0 0.0
    %2649 = vmatpush1.xpose.msra.mxu0 0.0
    %2650 = vmatprep.subr.mxu0 0.0
    %2651 = vmatpush1.xpose.msra.mxu0 0.0
    %2652 = vmatprep.subr.mxu0 0.0
    %2653 = vmatpush1.xpose.msra.mxu0 0.0
    %2654 = vmatprep.subr.mxu0 0.0
    %2655 = vmatpush1.xpose.msra.mxu0 0.0
    %2656 = vmatprep.subr.mxu0 0.0
    %2657 = vmatpush1.xpose.msra.mxu0 0.0
    %2658 = vmatprep.subr.mxu0 0.0
    %2659 = vmatpush1.xpose.msra.mxu0 0.0
    %2660 = vmatprep.subr.mxu0 0.0
    %2661 = vmatpush1.xpose.msra.mxu0 0.0
    %2662 = vmatprep.subr.mxu0 0.0
    %2663 = vmatpush1.xpose.msra.mxu0 0.0
    %2664 = vmatprep.subr.mxu0 0.0
    %2665 = vmatpush1.xpose.msra.mxu0 0.0
    %2666 = vmatprep.subr.mxu0 0.0
    %2667 = vmatpush1.xpose.msra.mxu0 0.0
    %2668 = vmatprep.subr.mxu0 0.0
    %2669 = vmatpush1.xpose.msra.mxu0 0.0
    %2670 = vmatprep.subr.mxu0 0.0
    %2671 = vmatpush1.xpose.msra.mxu0 0.0
    %2672 = vmatprep.subr.mxu0 0.0
    %2673 = vmatpush1.xpose.msra.mxu0 0.0
    %2674 = vmatprep.subr.mxu0 0.0
    %2675 = vmatpush1.xpose.msra.mxu0 0.0
    %2676 = vmatprep.subr.mxu0 0.0
    %2677 = vmatpush1.xpose.msra.mxu0 0.0
    %2678 = vmatprep.subr.mxu0 0.0
    %2679 = vmatpush1.xpose.msra.mxu0 0.0
    %2680 = vmatprep.mubr.f32.mxu0 0.0
    %2681 = vmatmul.mubr.f32.gmra.mrb[0].mxu0 %v2604
    %v2682 = vpop.f32.mrb[0].mxu0
    %v2683 = vadd.f32 0.0, %v2682
    %v2684 = vpop.f32.mrb[0].mxu0
    %2685 = vmatprep.mubr.f32.mxu0 0.0
    %2686 = vmatmul.mubr.f32.gmra.mrb[0].mxu0 %v2606
    %v2687 = vpop.f32.mrb[0].mxu0
    %v2688 = vadd.f32 0.0, %v2687
    %v2689 = vpop.f32.mrb[0].mxu0
    %2690 = vdwg.mxu0
    %v2691 = vmul.f32 %v2683, 0.35355338
    %v2692 = vmul.f32 %v2688, 0.35355338
    %v2693 = vadd.f32 %v2691, %v121
    %v2694 = vadd.f32 %v2692, %v122
    %v2695 = vsel %vm126, %v2693, -inf
    %2696 = vmax.xlane.f32.xlu0 %v2695
    %v2697 = vpop.xlane.xlu0 %2696
    %v2698 = vsel %vm126, %v2694, -inf
    %2699 = vmax.xlane.f32.xlu0 %v2698
    %v2700 = vpop.xlane.xlu0 %2699
    %v2701 = vsub.f32 %v2693, %v2697
    %v2702 = vsub.f32 %v2694, %v2700
    %v2703 = vmul.f32 %v2701, 1.442695
    %v2704 = vpow.pop %v2703
    %v2705 = vmul.f32 %v2702, 1.442695
    %v2706 = vpow.pop %v2705
    %v2707 = vsel %vm126, %v2704, 0.0
    %2708 = vadd.xlane.f32.xlu0 %v2707
    %v2709 = vpop.xlane.xlu0 %2708
    %v2710 = vsel %vm126, %v2706, 0.0
    %2711 = vadd.xlane.f32.xlu0 %v2710
    %v2712 = vpop.xlane.xlu0 %2711
    %v2713 = vrcp.pop %v2709
    %v2714 = vrcp.pop %v2712
    %v2715 = vmul.f32 %v2704, %v2713
    %v2716 = vmul.f32 %v2706, %v2714
    %2717 = vrot.lane.b32.xlu0 %v1668, 40
    %v2718 = vpop.permute.xlu0 %2717
    %2719 = vrot.lane.b32.xlu0 %v1673, 40
    %v2720 = vpop.permute.xlu0 %2719
    %2721 = vrot.lane.b32.xlu0 %v1678, 40
    %v2722 = vpop.permute.xlu0 %2721
    %2723 = vrot.lane.b32.xlu0 %v1683, 40
    %v2724 = vpop.permute.xlu0 %2723
    %v2730 = vsel %vm126, %v2715, 0
    %v2733 = vsel %vm126, %v2716, 0
    %2735 = vmatprep.subr.mxu0 0.0
    %2736 = vmatpush1.msra.mxu0 %v2718
    %2737 = vmatprep.subr.mxu0 0.0
    %2738 = vmatpush1.msra.mxu0 %v2720
    %2739 = vmatprep.subr.mxu0 0.0
    %2740 = vmatpush1.msra.mxu0 %v2722
    %2741 = vmatprep.subr.mxu0 0.0
    %2742 = vmatpush1.msra.mxu0 %v2724
    %2743 = vmatprep.subr.mxu0 0.0
    %2744 = vmatpush1.msra.mxu0 0.0
    %2745 = vmatprep.subr.mxu0 0.0
    %2746 = vmatpush1.msra.mxu0 0.0
    %2747 = vmatprep.subr.mxu0 0.0
    %2748 = vmatpush1.msra.mxu0 0.0
    %2749 = vmatprep.subr.mxu0 0.0
    %2750 = vmatpush1.msra.mxu0 0.0
    %2751 = vmatprep.subr.mxu0 0.0
    %2752 = vmatpush1.msra.mxu0 0.0
    %2753 = vmatprep.subr.mxu0 0.0
    %2754 = vmatpush1.msra.mxu0 0.0
    %2755 = vmatprep.subr.mxu0 0.0
    %2756 = vmatpush1.msra.mxu0 0.0
    %2757 = vmatprep.subr.mxu0 0.0
    %2758 = vmatpush1.msra.mxu0 0.0
    %2759 = vmatprep.subr.mxu0 0.0
    %2760 = vmatpush1.msra.mxu0 0.0
    %2761 = vmatprep.subr.mxu0 0.0
    %2762 = vmatpush1.msra.mxu0 0.0
    %2763 = vmatprep.subr.mxu0 0.0
    %2764 = vmatpush1.msra.mxu0 0.0
    %2765 = vmatprep.subr.mxu0 0.0
    %2766 = vmatpush1.msra.mxu0 0.0
    %2767 = vmatprep.subr.mxu0 0.0
    %2768 = vmatpush1.msra.mxu0 0.0
    %2769 = vmatprep.subr.mxu0 0.0
    %2770 = vmatpush1.msra.mxu0 0.0
    %2771 = vmatprep.subr.mxu0 0.0
    %2772 = vmatpush1.msra.mxu0 0.0
    %2773 = vmatprep.subr.mxu0 0.0
    %2774 = vmatpush1.msra.mxu0 0.0
    %2775 = vmatprep.subr.mxu0 0.0
    %2776 = vmatpush1.msra.mxu0 0.0
    %2777 = vmatprep.subr.mxu0 0.0
    %2778 = vmatpush1.msra.mxu0 0.0
    %2779 = vmatprep.subr.mxu0 0.0
    %2780 = vmatpush1.msra.mxu0 0.0
    %2781 = vmatprep.subr.mxu0 0.0
    %2782 = vmatpush1.msra.mxu0 0.0
    %2783 = vmatprep.subr.mxu0 0.0
    %2784 = vmatpush1.msra.mxu0 0.0
    %2785 = vmatprep.subr.mxu0 0.0
    %2786 = vmatpush1.msra.mxu0 0.0
    %2787 = vmatprep.subr.mxu0 0.0
    %2788 = vmatpush1.msra.mxu0 0.0
    %2789 = vmatprep.subr.mxu0 0.0
    %2790 = vmatpush1.msra.mxu0 0.0
    %2791 = vmatprep.subr.mxu0 0.0
    %2792 = vmatpush1.msra.mxu0 0.0
    %2793 = vmatprep.subr.mxu0 0.0
    %2794 = vmatpush1.msra.mxu0 0.0
    %2795 = vmatprep.subr.mxu0 0.0
    %2796 = vmatpush1.msra.mxu0 0.0
    %2797 = vmatprep.subr.mxu0 0.0
    %2798 = vmatpush1.msra.mxu0 0.0
    %2799 = vmatprep.mubr.f32.mxu0 0.0
    %2800 = vmatmul.mubr.f32.gmra.mrb[0].mxu0 %v2730
    %v2801 = vpop.f32.mrb[0].mxu0
    %v2802 = vadd.f32 0.0, %v2801
    %v2803 = vpop.f32.mrb[0].mxu0
    %2804 = vmatprep.mubr.f32.mxu0 0.0
    %2805 = vmatmul.mubr.f32.gmra.mrb[0].mxu0 %v2733
    %v2806 = vpop.f32.mrb[0].mxu0
    %v2807 = vadd.f32 0.0, %v2806
    %v2808 = vpop.f32.mrb[0].mxu0
    %2809 = vdwg.mxu0
    %v2811 = vsel %vm286, %v2802, 0
    %v2814 = vsel %vm286, %v2807, 0
    %2816 = vmatprep.subr.mxu0 0.0
    %2817 = vmatpush1.msra.mxu0 %v1690
    %2818 = vmatprep.subr.mxu0 0.0
    %2819 = vmatpush1.msra.mxu0 0.0
    %2820 = vmatprep.subr.mxu0 0.0
    %2821 = vmatpush1.msra.mxu0 0.0
    %2822 = vmatprep.subr.mxu0 0.0
    %2823 = vmatpush1.msra.mxu0 0.0
    %2824 = vmatprep.subr.mxu0 0.0
    %2825 = vmatpush1.msra.mxu0 0.0
    %2826 = vmatprep.subr.mxu0 0.0
    %2827 = vmatpush1.msra.mxu0 0.0
    %2828 = vmatprep.subr.mxu0 0.0
    %2829 = vmatpush1.msra.mxu0 0.0
    %2830 = vmatprep.subr.mxu0 0.0
    %2831 = vmatpush1.msra.mxu0 0.0
    %2832 = vmatprep.subr.mxu0 0.0
    %2833 = vmatpush1.msra.mxu0 0.0
    %2834 = vmatprep.subr.mxu0 0.0
    %2835 = vmatpush1.msra.mxu0 0.0
    %2836 = vmatprep.subr.mxu0 0.0
    %2837 = vmatpush1.msra.mxu0 0.0
    %2838 = vmatprep.subr.mxu0 0.0
    %2839 = vmatpush1.msra.mxu0 0.0
    %2840 = vmatprep.subr.mxu0 0.0
    %2841 = vmatpush1.msra.mxu0 0.0
    %2842 = vmatprep.subr.mxu0 0.0
    %2843 = vmatpush1.msra.mxu0 0.0
    %2844 = vmatprep.subr.mxu0 0.0
    %2845 = vmatpush1.msra.mxu0 0.0
    %2846 = vmatprep.subr.mxu0 0.0
    %2847 = vmatpush1.msra.mxu0 0.0
    %2848 = vmatprep.subr.mxu0 0.0
    %2849 = vmatpush1.msra.mxu0 0.0
    %2850 = vmatprep.subr.mxu0 0.0
    %2851 = vmatpush1.msra.mxu0 0.0
    %2852 = vmatprep.subr.mxu0 0.0
    %2853 = vmatpush1.msra.mxu0 0.0
    %2854 = vmatprep.subr.mxu0 0.0
    %2855 = vmatpush1.msra.mxu0 0.0
    %2856 = vmatprep.subr.mxu0 0.0
    %2857 = vmatpush1.msra.mxu0 0.0
    %2858 = vmatprep.subr.mxu0 0.0
    %2859 = vmatpush1.msra.mxu0 0.0
    %2860 = vmatprep.subr.mxu0 0.0
    %2861 = vmatpush1.msra.mxu0 0.0
    %2862 = vmatprep.subr.mxu0 0.0
    %2863 = vmatpush1.msra.mxu0 0.0
    %2864 = vmatprep.subr.mxu0 0.0
    %2865 = vmatpush1.msra.mxu0 0.0
    %2866 = vmatprep.subr.mxu0 0.0
    %2867 = vmatpush1.msra.mxu0 0.0
    %2868 = vmatprep.subr.mxu0 0.0
    %2869 = vmatpush1.msra.mxu0 0.0
    %2870 = vmatprep.subr.mxu0 0.0
    %2871 = vmatpush1.msra.mxu0 0.0
    %2872 = vmatprep.subr.mxu0 0.0
    %2873 = vmatpush1.msra.mxu0 0.0
    %2874 = vmatprep.subr.mxu0 0.0
    %2875 = vmatpush1.msra.mxu0 0.0
    %2876 = vmatprep.subr.mxu0 0.0
    %2877 = vmatpush1.msra.mxu0 0.0
    %2878 = vmatprep.subr.mxu0 0.0
    %2879 = vmatpush1.msra.mxu0 0.0
    %2880 = vmatprep.mubr.f32.mxu0 0.0
    %2881 = vmatmul.mubr.f32.gmra.mrb[0].mxu0 %v2811
    %v2882 = vpop.f32.mrb[0].mxu0
    %v2883 = vadd.f32 0.0, %v2882
    %v2884 = vpop.f32.mrb[0].mxu0
    %2885 = vmatprep.mubr.f32.mxu0 0.0
    %2886 = vmatmul.mubr.f32.gmra.mrb[0].mxu0 %v2814
    %v2887 = vpop.f32.mrb[0].mxu0
    %v2888 = vadd.f32 0.0, %v2887
    %v2889 = vpop.f32.mrb[0].mxu0
    %2890 = vdwg.mxu0
    %v2891 = vadd.f32 %v2590, %v2883
    %v2892 = vadd.f32 %v2591, %v2888
    %v2893 = vadd.f32 %v1433, %v2891
    %v2894 = vadd.f32 %v1434, %v2892
    %s2895 = scalar_lea.vmem %s7, 1
    %v2896 = vld [vmem:[%s2895] sm:$0x1]
    %v2898 = vlaneseq
    %v2899 = vshrl.u32 %v2898, 7
    %v2900 = vsub.s32 0, %v2899
    %v2901 = vrot.slane %v2896, %v2900
    %v2903 = vadd.f32 %v2893, %v2901
    %v2904 = vadd.f32 %v2894, %v2901
    %s2905 = scalar_lea.vmem %s12, 4
    %v2906 = vld [vmem:[%s2905] sm:$0x1]
    %s2907 = scalar_lea.vmem %s12, 5
    %v2908 = vld [vmem:[%s2907] sm:$0x1]
    %v2909 = vsel %vm126, %v2903, 0.0
    %2910 = vadd.xlane.f32.xlu0 %v2909
    %v2911 = vpop.xlane.xlu0 %2910
    %v2912 = vsel %vm126, %v2904, 0.0
    %2913 = vadd.xlane.f32.xlu0 %v2912
    %v2914 = vpop.xlane.xlu0 %2913
    %v2915 = vmul.f32 %v2911, %v133
    %v2916 = vmul.f32 %v2914, %v133
    %v2917 = vsub.f32 %v2903, %v2915
    %v2918 = vsub.f32 %v2904, %v2916
    %v2919 = vmul.f32 %v2917, %v2917
    %v2920 = vmul.f32 %v2918, %v2918
    %v2921 = vsel %vm126, %v2919, 0.0
    %2922 = vadd.xlane.f32.xlu0 %v2921
    %v2923 = vpop.xlane.xlu0 %2922
    %v2924 = vsel %vm126, %v2920, 0.0
    %2925 = vadd.xlane.f32.xlu0 %v2924
    %v2926 = vpop.xlane.xlu0 %2925
    %v2927 = vmul.f32 %v2923, 0.032258064
    %v2928 = vmul.f32 %v2926, 0.032258064
    %v2929 = vrsqrt.pop %v2927
    %v2930 = vmul.f32 %v2927, %v2929
    %vm2931 = vcmp.eq.f32.partialorder %v2927, inf
    %v2932 = vsel %vm2931, %v2927, %v2930
    %vm2933 = vcmp.eq.f32.partialorder %v2927, 0.0
    %v2934 = vand.u32 %v2927, 2147483648
    %v2935 = vsel %vm2933, %v2934, %v2932
    %v2936 = vrsqrt.pop %v2928
    %v2937 = vmul.f32 %v2928, %v2936
    %vm2938 = vcmp.eq.f32.partialorder %v2928, inf
    %v2939 = vsel %vm2938, %v2928, %v2937
    %vm2940 = vcmp.eq.f32.partialorder %v2928, 0.0
    %v2941 = vand.u32 %v2928, 2147483648
    %v2942 = vsel %vm2940, %v2941, %v2939
    %v2943 = vadd.f32 %v2935, 1e-06
    %v2944 = vadd.f32 %v2942, 1e-06
    %v2945 = vrcp.pop %v2943
    %v2946 = vrcp.pop %v2944
    %v2948 = vlaneseq
    %v2949 = vshrl.u32 %v2948, 7
    %v2950 = vsub.s32 0, %v2949
    %v2951 = vrot.slane %v2906, %v2950
    %v2953 = vmul.f32 %v2951, %v2917
    %v2954 = vmul.f32 %v2951, %v2918
    %v2955 = vmul.f32 %v2953, %v2945
    %v2956 = vmul.f32 %v2954, %v2946
    %v2958 = vlaneseq
    %v2959 = vshrl.u32 %v2958, 7
    %v2960 = vsub.s32 0, %v2959
    %v2961 = vrot.slane %v2908, %v2960
    %v2963 = vadd.f32 %v2955, %v2961
    %v2964 = vadd.f32 %v2956, %v2961
    %v2965 = vld [vmem:[%s8] sm:$0xff]
    %v2966 = vld [vmem:[%s8 + $0x8] sm:$0xff]
    %v2967 = vld [vmem:[%s8 + $0x10] sm:$0xff]
    %v2968 = vld [vmem:[%s8 + $0x18] sm:$0xff]
    %v2969 = vld [vmem:[%s9] sm:$0x1]
    %v2971 = vlaneseq
    %v2972 = vshrl.u32 %v2971, 7
    %v2973 = vsub.s32 0, %v2972
    %v2974 = vrot.slane %v2969, %v2973
    %v2977 = vsel %vm126, %v2963, 0
    %v2980 = vsel %vm126, %v2964, 0
    %2982 = vmatprep.subr.mxu0 0.0
    %2983 = vmatpush1.msra.mxu0 %v2965
    %2984 = vmatprep.subr.mxu0 0.0
    %2985 = vmatpush1.msra.mxu0 %v2966
    %2986 = vmatprep.subr.mxu0 0.0
    %2987 = vmatpush1.msra.mxu0 %v2967
    %2988 = vmatprep.subr.mxu0 0.0
    %2989 = vmatpush1.msra.mxu0 %v2968
    %2990 = vmatprep.subr.mxu0 0.0
    %2991 = vmatpush1.msra.mxu0 0.0
    %2992 = vmatprep.subr.mxu0 0.0
    %2993 = vmatpush1.msra.mxu0 0.0
    %2994 = vmatprep.subr.mxu0 0.0
    %2995 = vmatpush1.msra.mxu0 0.0
    %2996 = vmatprep.subr.mxu0 0.0
    %2997 = vmatpush1.msra.mxu0 0.0
    %2998 = vmatprep.subr.mxu0 0.0
    %2999 = vmatpush1.msra.mxu0 0.0
    %3000 = vmatprep.subr.mxu0 0.0
    %3001 = vmatpush1.msra.mxu0 0.0
    %3002 = vmatprep.subr.mxu0 0.0
    %3003 = vmatpush1.msra.mxu0 0.0
    %3004 = vmatprep.subr.mxu0 0.0
    %3005 = vmatpush1.msra.mxu0 0.0
    %3006 = vmatprep.subr.mxu0 0.0
    %3007 = vmatpush1.msra.mxu0 0.0
    %3008 = vmatprep.subr.mxu0 0.0
    %3009 = vmatpush1.msra.mxu0 0.0
    %3010 = vmatprep.subr.mxu0 0.0
    %3011 = vmatpush1.msra.mxu0 0.0
    %3012 = vmatprep.subr.mxu0 0.0
    %3013 = vmatpush1.msra.mxu0 0.0
    %3014 = vmatprep.subr.mxu0 0.0
    %3015 = vmatpush1.msra.mxu0 0.0
    %3016 = vmatprep.subr.mxu0 0.0
    %3017 = vmatpush1.msra.mxu0 0.0
    %3018 = vmatprep.subr.mxu0 0.0
    %3019 = vmatpush1.msra.mxu0 0.0
    %3020 = vmatprep.subr.mxu0 0.0
    %3021 = vmatpush1.msra.mxu0 0.0
    %3022 = vmatprep.subr.mxu0 0.0
    %3023 = vmatpush1.msra.mxu0 0.0
    %3024 = vmatprep.subr.mxu0 0.0
    %3025 = vmatpush1.msra.mxu0 0.0
    %3026 = vmatprep.subr.mxu0 0.0
    %3027 = vmatpush1.msra.mxu0 0.0
    %3028 = vmatprep.subr.mxu0 0.0
    %3029 = vmatpush1.msra.mxu0 0.0
    %3030 = vmatprep.subr.mxu0 0.0
    %3031 = vmatpush1.msra.mxu0 0.0
    %3032 = vmatprep.subr.mxu0 0.0
    %3033 = vmatpush1.msra.mxu0 0.0
    %3034 = vmatprep.subr.mxu0 0.0
    %3035 = vmatpush1.msra.mxu0 0.0
    %3036 = vmatprep.subr.mxu0 0.0
    %3037 = vmatpush1.msra.mxu0 0.0
    %3038 = vmatprep.subr.mxu0 0.0
    %3039 = vmatpush1.msra.mxu0 0.0
    %3040 = vmatprep.subr.mxu0 0.0
    %3041 = vmatpush1.msra.mxu0 0.0
    %3042 = vmatprep.subr.mxu0 0.0
    %3043 = vmatpush1.msra.mxu0 0.0
    %3044 = vmatprep.subr.mxu0 0.0
    %3045 = vmatpush1.msra.mxu0 0.0
    %3046 = vmatprep.mubr.f32.mxu0 0.0
    %3047 = vmatmul.mubr.f32.gmra.mrb[0].mxu0 %v2977
    %v3048 = vpop.f32.mrb[0].mxu0
    %v3049 = vadd.f32 %v2974, %v3048
    %v3050 = vpop.f32.mrb[0].mxu0
    %3051 = vmatprep.mubr.f32.mxu0 0.0
    %3052 = vmatmul.mubr.f32.gmra.mrb[0].mxu0 %v2980
    %v3053 = vpop.f32.mrb[0].mxu0
    %v3054 = vadd.f32 %v2974, %v3053
    %v3055 = vpop.f32.mrb[0].mxu0
    %3056 = vdwg.mxu0
    %v3057 = vmax.f32 %v3049, 0.0
    %v3058 = vmax.f32 %v3054, 0.0
    %v3059 = vld [vmem:[%s10] sm:$0xff]
    %v3060 = vld [vmem:[%s10 + $0x8] sm:$0xff]
    %v3061 = vld [vmem:[%s10 + $0x10] sm:$0xff]
    %v3062 = vld [vmem:[%s10 + $0x18] sm:$0xff]
    %v3063 = vld [vmem:[%s10 + $0x20] sm:$0xff]
    %v3064 = vld [vmem:[%s10 + $0x28] sm:$0xff]
    %v3065 = vld [vmem:[%s10 + $0x30] sm:$0xff]
    %v3066 = vld [vmem:[%s10 + $0x38] sm:$0xff]
    %vm3067 = vcmask 523264
    %v3069 = vsel %vm3067, %v3057, 0
    %v3072 = vsel %vm3067, %v3058, 0
    %3074 = vmatprep.subr.mxu0 0.0
    %3075 = vmatpush1.msra.mxu0 %v3059
    %3076 = vmatprep.subr.mxu0 0.0
    %3077 = vmatpush1.msra.mxu0 %v3060
    %3078 = vmatprep.subr.mxu0 0.0
    %3079 = vmatpush1.msra.mxu0 %v3061
    %3080 = vmatprep.subr.mxu0 0.0
    %3081 = vmatpush1.msra.mxu0 %v3062
    %3082 = vmatprep.subr.mxu0 0.0
    %3083 = vmatpush1.msra.mxu0 %v3063
    %3084 = vmatprep.subr.mxu0 0.0
    %3085 = vmatpush1.msra.mxu0 %v3064
    %3086 = vmatprep.subr.mxu0 0.0
    %3087 = vmatpush1.msra.mxu0 %v3065
    %3088 = vmatprep.subr.mxu0 0.0
    %3089 = vmatpush1.msra.mxu0 %v3066
    %3090 = vmatprep.subr.mxu0 0.0
    %3091 = vmatpush1.msra.mxu0 0.0
    %3092 = vmatprep.subr.mxu0 0.0
    %3093 = vmatpush1.msra.mxu0 0.0
    %3094 = vmatprep.subr.mxu0 0.0
    %3095 = vmatpush1.msra.mxu0 0.0
    %3096 = vmatprep.subr.mxu0 0.0
    %3097 = vmatpush1.msra.mxu0 0.0
    %3098 = vmatprep.subr.mxu0 0.0
    %3099 = vmatpush1.msra.mxu0 0.0
    %3100 = vmatprep.subr.mxu0 0.0
    %3101 = vmatpush1.msra.mxu0 0.0
    %3102 = vmatprep.subr.mxu0 0.0
    %3103 = vmatpush1.msra.mxu0 0.0
    %3104 = vmatprep.subr.mxu0 0.0
    %3105 = vmatpush1.msra.mxu0 0.0
    %3106 = vmatprep.subr.mxu0 0.0
    %3107 = vmatpush1.msra.mxu0 0.0
    %3108 = vmatprep.subr.mxu0 0.0
    %3109 = vmatpush1.msra.mxu0 0.0
    %3110 = vmatprep.subr.mxu0 0.0
    %3111 = vmatpush1.msra.mxu0 0.0
    %3112 = vmatprep.subr.mxu0 0.0
    %3113 = vmatpush1.msra.mxu0 0.0
    %3114 = vmatprep.subr.mxu0 0.0
    %3115 = vmatpush1.msra.mxu0 0.0
    %3116 = vmatprep.subr.mxu0 0.0
    %3117 = vmatpush1.msra.mxu0 0.0
    %3118 = vmatprep.subr.mxu0 0.0
    %3119 = vmatpush1.msra.mxu0 0.0
    %3120 = vmatprep.subr.mxu0 0.0
    %3121 = vmatpush1.msra.mxu0 0.0
    %3122 = vmatprep.subr.mxu0 0.0
    %3123 = vmatpush1.msra.mxu0 0.0
    %3124 = vmatprep.subr.mxu0 0.0
    %3125 = vmatpush1.msra.mxu0 0.0
    %3126 = vmatprep.subr.mxu0 0.0
    %3127 = vmatpush1.msra.mxu0 0.0
    %3128 = vmatprep.subr.mxu0 0.0
    %3129 = vmatpush1.msra.mxu0 0.0
    %3130 = vmatprep.subr.mxu0 0.0
    %3131 = vmatpush1.msra.mxu0 0.0
    %3132 = vmatprep.subr.mxu0 0.0
    %3133 = vmatpush1.msra.mxu0 0.0
    %3134 = vmatprep.subr.mxu0 0.0
    %3135 = vmatpush1.msra.mxu0 0.0
    %3136 = vmatprep.subr.mxu0 0.0
    %3137 = vmatpush1.msra.mxu0 0.0
    %3138 = vmatprep.mubr.f32.mxu0 0.0
    %3139 = vmatmul.mubr.f32.gmra.mrb[0].mxu0 %v3069
    %v3140 = vpop.f32.mrb[0].mxu0
    %v3141 = vadd.f32 0.0, %v3140
    %v3142 = vpop.f32.mrb[0].mxu0
    %3143 = vmatprep.mubr.f32.mxu0 0.0
    %3144 = vmatmul.mubr.f32.gmra.mrb[0].mxu0 %v3072
    %v3145 = vpop.f32.mrb[0].mxu0
    %v3146 = vadd.f32 0.0, %v3145
    %v3147 = vpop.f32.mrb[0].mxu0
    %3148 = vdwg.mxu0
    %v3149 = vadd.f32 %v2903, %v3141
    %v3150 = vadd.f32 %v2904, %v3146
    %v3151 = vld [vmem:[%s11] sm:$0x1]
    %v3153 = vlaneseq
    %v3154 = vshrl.u32 %v3153, 7
    %v3155 = vsub.s32 0, %v3154
    %v3156 = vrot.slane %v3151, %v3155
    %v3158 = vadd.f32 %v3149, %v3156
    %v3159 = vadd.f32 %v3150, %v3156
    %s3160 = scalar_lea.vmem %s12, 6
    %v3161 = vld [vmem:[%s3160] sm:$0x1]
    %s3162 = scalar_lea.vmem %s12, 7
    %v3163 = vld [vmem:[%s3162] sm:$0x1]
    %v3164 = vsel %vm126, %v3158, 0.0
    %3165 = vadd.xlane.f32.xlu0 %v3164
    %v3166 = vpop.xlane.xlu0 %3165
    %v3167 = vsel %vm126, %v3159, 0.0
    %3168 = vadd.xlane.f32.xlu0 %v3167
    %v3169 = vpop.xlane.xlu0 %3168
    %v3170 = vmul.f32 %v3166, %v133
    %v3171 = vmul.f32 %v3169, %v133
    %v3172 = vsub.f32 %v3158, %v3170
    %v3173 = vsub.f32 %v3159, %v3171
    %v3174 = vmul.f32 %v3172, %v3172
    %v3175 = vmul.f32 %v3173, %v3173
    %v3176 = vsel %vm126, %v3174, 0.0
    %3177 = vadd.xlane.f32.xlu0 %v3176
    %v3178 = vpop.xlane.xlu0 %3177
    %v3179 = vsel %vm126, %v3175, 0.0
    %3180 = vadd.xlane.f32.xlu0 %v3179
    %v3181 = vpop.xlane.xlu0 %3180
    %v3182 = vmul.f32 %v3178, 0.032258064
    %v3183 = vmul.f32 %v3181, 0.032258064
    %v3184 = vrsqrt.pop %v3182
    %v3185 = vmul.f32 %v3182, %v3184
    %vm3186 = vcmp.eq.f32.partialorder %v3182, inf
    %v3187 = vsel %vm3186, %v3182, %v3185
    %vm3188 = vcmp.eq.f32.partialorder %v3182, 0.0
    %v3189 = vand.u32 %v3182, 2147483648
    %v3190 = vsel %vm3188, %v3189, %v3187
    %v3191 = vrsqrt.pop %v3183
    %v3192 = vmul.f32 %v3183, %v3191
    %vm3193 = vcmp.eq.f32.partialorder %v3183, inf
    %v3194 = vsel %vm3193, %v3183, %v3192
    %vm3195 = vcmp.eq.f32.partialorder %v3183, 0.0
    %v3196 = vand.u32 %v3183, 2147483648
    %v3197 = vsel %vm3195, %v3196, %v3194
    %v3198 = vadd.f32 %v3190, 1e-06
    %v3199 = vadd.f32 %v3197, 1e-06
    %v3200 = vrcp.pop %v3198
    %v3201 = vrcp.pop %v3199
    %v3203 = vlaneseq
    %v3204 = vshrl.u32 %v3203, 7
    %v3205 = vsub.s32 0, %v3204
    %v3206 = vrot.slane %v3161, %v3205
    %v3208 = vmul.f32 %v3206, %v3172
    %v3209 = vmul.f32 %v3206, %v3173
    %v3210 = vmul.f32 %v3208, %v3200
    %v3211 = vmul.f32 %v3209, %v3201
    %v3213 = vlaneseq
    %v3214 = vshrl.u32 %v3213, 7
    %v3215 = vsub.s32 0, %v3214
    %v3216 = vrot.slane %v3163, %v3215
    %v3218 = vadd.f32 %v3210, %v3216
    %v3219 = vadd.f32 %v3211, %v3216
    %s3220 = scalar_lea.vmem %s4, 64
    %v3221 = vld [vmem:[%s3220] sm:$0xff]
    %v3222 = vld [vmem:[%s3220 + $0x8] sm:$0xff]
    %v3223 = vld [vmem:[%s3220 + $0x10] sm:$0xff]
    %v3224 = vld [vmem:[%s3220 + $0x18] sm:$0xff]
    %s3225 = scalar_lea.vmem %s5, 2
    %v3226 = vld [vmem:[%s3225] sm:$0x1]
    %v3228 = vlaneseq
    %v3229 = vshrl.u32 %v3228, 7
    %v3230 = vsub.s32 0, %v3229
    %v3231 = vrot.slane %v3226, %v3230
    %v3234 = vsel %vm126, %v3218, 0
    %v3237 = vsel %vm126, %v3219, 0
    %3239 = vmatprep.subr.mxu0 0.0
    %3240 = vmatpush1.msra.mxu0 %v3221
    %3241 = vmatprep.subr.mxu0 0.0
    %3242 = vmatpush1.msra.mxu0 %v3222
    %3243 = vmatprep.subr.mxu0 0.0
    %3244 = vmatpush1.msra.mxu0 %v3223
    %3245 = vmatprep.subr.mxu0 0.0
    %3246 = vmatpush1.msra.mxu0 %v3224
    %3247 = vmatprep.subr.mxu0 0.0
    %3248 = vmatpush1.msra.mxu0 0.0
    %3249 = vmatprep.subr.mxu0 0.0
    %3250 = vmatpush1.msra.mxu0 0.0
    %3251 = vmatprep.subr.mxu0 0.0
    %3252 = vmatpush1.msra.mxu0 0.0
    %3253 = vmatprep.subr.mxu0 0.0
    %3254 = vmatpush1.msra.mxu0 0.0
    %3255 = vmatprep.subr.mxu0 0.0
    %3256 = vmatpush1.msra.mxu0 0.0
    %3257 = vmatprep.subr.mxu0 0.0
    %3258 = vmatpush1.msra.mxu0 0.0
    %3259 = vmatprep.subr.mxu0 0.0
    %3260 = vmatpush1.msra.mxu0 0.0
    %3261 = vmatprep.subr.mxu0 0.0
    %3262 = vmatpush1.msra.mxu0 0.0
    %3263 = vmatprep.subr.mxu0 0.0
    %3264 = vmatpush1.msra.mxu0 0.0
    %3265 = vmatprep.subr.mxu0 0.0
    %3266 = vmatpush1.msra.mxu0 0.0
    %3267 = vmatprep.subr.mxu0 0.0
    %3268 = vmatpush1.msra.mxu0 0.0
    %3269 = vmatprep.subr.mxu0 0.0
    %3270 = vmatpush1.msra.mxu0 0.0
    %3271 = vmatprep.subr.mxu0 0.0
    %3272 = vmatpush1.msra.mxu0 0.0
    %3273 = vmatprep.subr.mxu0 0.0
    %3274 = vmatpush1.msra.mxu0 0.0
    %3275 = vmatprep.subr.mxu0 0.0
    %3276 = vmatpush1.msra.mxu0 0.0
    %3277 = vmatprep.subr.mxu0 0.0
    %3278 = vmatpush1.msra.mxu0 0.0
    %3279 = vmatprep.subr.mxu0 0.0
    %3280 = vmatpush1.msra.mxu0 0.0
    %3281 = vmatprep.subr.mxu0 0.0
    %3282 = vmatpush1.msra.mxu0 0.0
    %3283 = vmatprep.subr.mxu0 0.0
    %3284 = vmatpush1.msra.mxu0 0.0
    %3285 = vmatprep.subr.mxu0 0.0
    %3286 = vmatpush1.msra.mxu0 0.0
    %3287 = vmatprep.subr.mxu0 0.0
    %3288 = vmatpush1.msra.mxu0 0.0
    %3289 = vmatprep.subr.mxu0 0.0
    %3290 = vmatpush1.msra.mxu0 0.0
    %3291 = vmatprep.subr.mxu0 0.0
    %3292 = vmatpush1.msra.mxu0 0.0
    %3293 = vmatprep.subr.mxu0 0.0
    %3294 = vmatpush1.msra.mxu0 0.0
    %3295 = vmatprep.subr.mxu0 0.0
    %3296 = vmatpush1.msra.mxu0 0.0
    %3297 = vmatprep.subr.mxu0 0.0
    %3298 = vmatpush1.msra.mxu0 0.0
    %3299 = vmatprep.subr.mxu0 0.0
    %3300 = vmatpush1.msra.mxu0 0.0
    %3301 = vmatprep.subr.mxu0 0.0
    %3302 = vmatpush1.msra.mxu0 0.0
    %3303 = vmatprep.mubr.f32.mxu0 0.0
    %3304 = vmatmul.mubr.f32.gmra.mrb[0].mxu0 %v3234
    %v3305 = vpop.f32.mrb[0].mxu0
    %v3306 = vadd.f32 %v3231, %v3305
    %v3307 = vpop.f32.mrb[0].mxu0
    %3308 = vmatprep.mubr.f32.mxu0 0.0
    %3309 = vmatmul.mubr.f32.gmra.mrb[0].mxu0 %v3237
    %v3310 = vpop.f32.mrb[0].mxu0
    %v3311 = vadd.f32 %v3231, %v3310
    %v3312 = vpop.f32.mrb[0].mxu0
    %3313 = vdwg.mxu0
    %s3314 = scalar_lea.vmem [#allocation10], 64
    %v3315 = vld [vmem:[%s3314] sm:$0xff]
    %v3316 = vld [vmem:[%s3314 + $0x8] sm:$0xff]
    %v3317 = vld [vmem:[%s3314 + $0x10] sm:$0xff]
    %v3318 = vld [vmem:[%s3314 + $0x18] sm:$0xff]
    %3321 = vrot.lane.b32.xlu0 %v3306, 96
    %v3322 = vpop.permute.xlu0 %3321
    %3323 = vrot.lane.b32.xlu0 %v3311, 96
    %v3324 = vpop.permute.xlu0 %3323
    %v3325 = vsel %vm286, %v3306, 0
    %v3327 = vsel %vm286, %v3311, 0
    %v3329 = vsel %vm286, %v3322, 0
    %v3331 = vsel %vm286, %v3324, 0
    %3333 = vmatprep.subr.mxu0 0.0
    %3334 = vmatpush1.xpose.msra.mxu0 %v3329
    %3335 = vmatprep.subr.mxu0 0.0
    %3336 = vmatpush1.xpose.msra.mxu0 %v3331
    %3337 = vmatprep.subr.mxu0 0.0
    %3338 = vmatpush1.xpose.msra.mxu0 0.0
    %3339 = vmatprep.subr.mxu0 0.0
    %3340 = vmatpush1.xpose.msra.mxu0 0.0
    %3341 = vmatprep.subr.mxu0 0.0
    %3342 = vmatpush1.xpose.msra.mxu0 0.0
    %3343 = vmatprep.subr.mxu0 0.0
    %3344 = vmatpush1.xpose.msra.mxu0 0.0
    %3345 = vmatprep.subr.mxu0 0.0
    %3346 = vmatpush1.xpose.msra.mxu0 0.0
    %3347 = vmatprep.subr.mxu0 0.0
    %3348 = vmatpush1.xpose.msra.mxu0 0.0
    %3349 = vmatprep.subr.mxu0 0.0
    %3350 = vmatpush1.xpose.msra.mxu0 0.0
    %3351 = vmatprep.subr.mxu0 0.0
    %3352 = vmatpush1.xpose.msra.mxu0 0.0
    %3353 = vmatprep.subr.mxu0 0.0
    %3354 = vmatpush1.xpose.msra.mxu0 0.0
    %3355 = vmatprep.subr.mxu0 0.0
    %3356 = vmatpush1.xpose.msra.mxu0 0.0
    %3357 = vmatprep.subr.mxu0 0.0
    %3358 = vmatpush1.xpose.msra.mxu0 0.0
    %3359 = vmatprep.subr.mxu0 0.0
    %3360 = vmatpush1.xpose.msra.mxu0 0.0
    %3361 = vmatprep.subr.mxu0 0.0
    %3362 = vmatpush1.xpose.msra.mxu0 0.0
    %3363 = vmatprep.subr.mxu0 0.0
    %3364 = vmatpush1.xpose.msra.mxu0 0.0
    %3365 = vmatprep.subr.mxu0 0.0
    %3366 = vmatpush1.xpose.msra.mxu0 0.0
    %3367 = vmatprep.subr.mxu0 0.0
    %3368 = vmatpush1.xpose.msra.mxu0 0.0
    %3369 = vmatprep.subr.mxu0 0.0
    %3370 = vmatpush1.xpose.msra.mxu0 0.0
    %3371 = vmatprep.subr.mxu0 0.0
    %3372 = vmatpush1.xpose.msra.mxu0 0.0
    %3373 = vmatprep.subr.mxu0 0.0
    %3374 = vmatpush1.xpose.msra.mxu0 0.0
    %3375 = vmatprep.subr.mxu0 0.0
    %3376 = vmatpush1.xpose.msra.mxu0 0.0
    %3377 = vmatprep.subr.mxu0 0.0
    %3378 = vmatpush1.xpose.msra.mxu0 0.0
    %3379 = vmatprep.subr.mxu0 0.0
    %3380 = vmatpush1.xpose.msra.mxu0 0.0
    %3381 = vmatprep.subr.mxu0 0.0
    %3382 = vmatpush1.xpose.msra.mxu0 0.0
    %3383 = vmatprep.subr.mxu0 0.0
    %3384 = vmatpush1.xpose.msra.mxu0 0.0
    %3385 = vmatprep.subr.mxu0 0.0
    %3386 = vmatpush1.xpose.msra.mxu0 0.0
    %3387 = vmatprep.subr.mxu0 0.0
    %3388 = vmatpush1.xpose.msra.mxu0 0.0
    %3389 = vmatprep.subr.mxu0 0.0
    %3390 = vmatpush1.xpose.msra.mxu0 0.0
    %3391 = vmatprep.subr.mxu0 0.0
    %3392 = vmatpush1.xpose.msra.mxu0 0.0
    %3393 = vmatprep.subr.mxu0 0.0
    %3394 = vmatpush1.xpose.msra.mxu0 0.0
    %3395 = vmatprep.subr.mxu0 0.0
    %3396 = vmatpush1.xpose.msra.mxu0 0.0
    %3397 = vmatprep.mubr.f32.mxu0 0.0
    %3398 = vmatmul.mubr.f32.gmra.mrb[0].mxu0 %v3325
    %v3399 = vpop.f32.mrb[0].mxu0
    %v3400 = vadd.f32 0.0, %v3399
    %v3401 = vpop.f32.mrb[0].mxu0
    %3402 = vmatprep.mubr.f32.mxu0 0.0
    %3403 = vmatmul.mubr.f32.gmra.mrb[0].mxu0 %v3327
    %v3404 = vpop.f32.mrb[0].mxu0
    %v3405 = vadd.f32 0.0, %v3404
    %v3406 = vpop.f32.mrb[0].mxu0
    %3407 = vdwg.mxu0
    %v3408 = vmul.f32 %v3400, 0.35355338
    %v3409 = vmul.f32 %v3405, 0.35355338
    %v3410 = vadd.f32 %v3408, %v119
    %v3411 = vadd.f32 %v3409, %v120
    %v3412 = vsel %vm374, %v3410, -inf
    %3413 = vmax.xlane.f32.xlu0 %v3412
    %v3414 = vpop.xlane.xlu0 %3413
    %v3415 = vsel %vm374, %v3411, -inf
    %3416 = vmax.xlane.f32.xlu0 %v3415
    %v3417 = vpop.xlane.xlu0 %3416
    %v3418 = vsub.f32 %v3410, %v3414
    %v3419 = vsub.f32 %v3411, %v3417
    %v3420 = vmul.f32 %v3418, 1.442695
    %v3421 = vpow.pop %v3420
    %v3422 = vmul.f32 %v3419, 1.442695
    %v3423 = vpow.pop %v3422
    %v3424 = vsel %vm374, %v3421, 0.0
    %3425 = vadd.xlane.f32.xlu0 %v3424
    %v3426 = vpop.xlane.xlu0 %3425
    %v3427 = vsel %vm374, %v3423, 0.0
    %3428 = vadd.xlane.f32.xlu0 %v3427
    %v3429 = vpop.xlane.xlu0 %3428
    %v3430 = vrcp.pop %v3426
    %v3431 = vrcp.pop %v3429
    %v3432 = vmul.f32 %v3421, %v3430
    %v3433 = vmul.f32 %v3423, %v3431
    %3434 = vrot.lane.b32.xlu0 %v3306, 64
    %v3435 = vpop.permute.xlu0 %3434
    %3436 = vrot.lane.b32.xlu0 %v3311, 64
    %v3437 = vpop.permute.xlu0 %3436
    %v3441 = vsel %vm374, %v3432, 0
    %v3444 = vsel %vm374, %v3433, 0
    %3446 = vmatprep.subr.mxu0 0.0
    %3447 = vmatpush1.msra.mxu0 %v3435
    %3448 = vmatprep.subr.mxu0 0.0
    %3449 = vmatpush1.msra.mxu0 %v3437
    %3450 = vmatprep.subr.mxu0 0.0
    %3451 = vmatpush1.msra.mxu0 0.0
    %3452 = vmatprep.subr.mxu0 0.0
    %3453 = vmatpush1.msra.mxu0 0.0
    %3454 = vmatprep.subr.mxu0 0.0
    %3455 = vmatpush1.msra.mxu0 0.0
    %3456 = vmatprep.subr.mxu0 0.0
    %3457 = vmatpush1.msra.mxu0 0.0
    %3458 = vmatprep.subr.mxu0 0.0
    %3459 = vmatpush1.msra.mxu0 0.0
    %3460 = vmatprep.subr.mxu0 0.0
    %3461 = vmatpush1.msra.mxu0 0.0
    %3462 = vmatprep.subr.mxu0 0.0
    %3463 = vmatpush1.msra.mxu0 0.0
    %3464 = vmatprep.subr.mxu0 0.0
    %3465 = vmatpush1.msra.mxu0 0.0
    %3466 = vmatprep.subr.mxu0 0.0
    %3467 = vmatpush1.msra.mxu0 0.0
    %3468 = vmatprep.subr.mxu0 0.0
    %3469 = vmatpush1.msra.mxu0 0.0
    %3470 = vmatprep.subr.mxu0 0.0
    %3471 = vmatpush1.msra.mxu0 0.0
    %3472 = vmatprep.subr.mxu0 0.0
    %3473 = vmatpush1.msra.mxu0 0.0
    %3474 = vmatprep.subr.mxu0 0.0
    %3475 = vmatpush1.msra.mxu0 0.0
    %3476 = vmatprep.subr.mxu0 0.0
    %3477 = vmatpush1.msra.mxu0 0.0
    %3478 = vmatprep.subr.mxu0 0.0
    %3479 = vmatpush1.msra.mxu0 0.0
    %3480 = vmatprep.subr.mxu0 0.0
    %3481 = vmatpush1.msra.mxu0 0.0
    %3482 = vmatprep.subr.mxu0 0.0
    %3483 = vmatpush1.msra.mxu0 0.0
    %3484 = vmatprep.subr.mxu0 0.0
    %3485 = vmatpush1.msra.mxu0 0.0
    %3486 = vmatprep.subr.mxu0 0.0
    %3487 = vmatpush1.msra.mxu0 0.0
    %3488 = vmatprep.subr.mxu0 0.0
    %3489 = vmatpush1.msra.mxu0 0.0
    %3490 = vmatprep.subr.mxu0 0.0
    %3491 = vmatpush1.msra.mxu0 0.0
    %3492 = vmatprep.subr.mxu0 0.0
    %3493 = vmatpush1.msra.mxu0 0.0
    %3494 = vmatprep.subr.mxu0 0.0
    %3495 = vmatpush1.msra.mxu0 0.0
    %3496 = vmatprep.subr.mxu0 0.0
    %3497 = vmatpush1.msra.mxu0 0.0
    %3498 = vmatprep.subr.mxu0 0.0
    %3499 = vmatpush1.msra.mxu0 0.0
    %3500 = vmatprep.subr.mxu0 0.0
    %3501 = vmatpush1.msra.mxu0 0.0
    %3502 = vmatprep.subr.mxu0 0.0
    %3503 = vmatpush1.msra.mxu0 0.0
    %3504 = vmatprep.subr.mxu0 0.0
    %3505 = vmatpush1.msra.mxu0 0.0
    %3506 = vmatprep.subr.mxu0 0.0
    %3507 = vmatpush1.msra.mxu0 0.0
    %3508 = vmatprep.subr.mxu0 0.0
    %3509 = vmatpush1.msra.mxu0 0.0
    %3510 = vmatprep.mubr.f32.mxu0 0.0
    %3511 = vmatmul.mubr.f32.gmra.mrb[0].mxu0 %v3441
    %v3512 = vpop.f32.mrb[0].mxu0
    %v3513 = vadd.f32 0.0, %v3512
    %v3514 = vpop.f32.mrb[0].mxu0
    %3515 = vmatprep.mubr.f32.mxu0 0.0
    %3516 = vmatmul.mubr.f32.gmra.mrb[0].mxu0 %v3444
    %v3517 = vpop.f32.mrb[0].mxu0
    %v3518 = vadd.f32 0.0, %v3517
    %v3519 = vpop.f32.mrb[0].mxu0
    %3520 = vdwg.mxu0
    %3521 = vrot.lane.b32.xlu0 %v3306, 120
    %v3522 = vpop.permute.xlu0 %3521
    %3523 = vrot.lane.b32.xlu0 %v3311, 120
    %v3524 = vpop.permute.xlu0 %3523
    %3525 = vrot.lane.b32.xlu0 %v3306, 88
    %v3526 = vpop.permute.xlu0 %3525
    %3527 = vrot.lane.b32.xlu0 %v3311, 88
    %v3528 = vpop.permute.xlu0 %3527
    %v3529 = vsel %vm286, %v3522, 0
    %v3531 = vsel %vm286, %v3524, 0
    %v3533 = vsel %vm286, %v3526, 0
    %v3535 = vsel %vm286, %v3528, 0
    %3537 = vmatprep.subr.mxu0 0.0
    %3538 = vmatpush1.xpose.msra.mxu0 %v3533
    %3539 = vmatprep.subr.mxu0 0.0
    %3540 = vmatpush1.xpose.msra.mxu0 %v3535
    %3541 = vmatprep.subr.mxu0 0.0
    %3542 = vmatpush1.xpose.msra.mxu0 0.0
    %3543 = vmatprep.subr.mxu0 0.0
    %3544 = vmatpush1.xpose.msra.mxu0 0.0
    %3545 = vmatprep.subr.mxu0 0.0
    %3546 = vmatpush1.xpose.msra.mxu0 0.0
    %3547 = vmatprep.subr.mxu0 0.0
    %3548 = vmatpush1.xpose.msra.mxu0 0.0
    %3549 = vmatprep.subr.mxu0 0.0
    %3550 = vmatpush1.xpose.msra.mxu0 0.0
    %3551 = vmatprep.subr.mxu0 0.0
    %3552 = vmatpush1.xpose.msra.mxu0 0.0
    %3553 = vmatprep.subr.mxu0 0.0
    %3554 = vmatpush1.xpose.msra.mxu0 0.0
    %3555 = vmatprep.subr.mxu0 0.0
    %3556 = vmatpush1.xpose.msra.mxu0 0.0
    %3557 = vmatprep.subr.mxu0 0.0
    %3558 = vmatpush1.xpose.msra.mxu0 0.0
    %3559 = vmatprep.subr.mxu0 0.0
    %3560 = vmatpush1.xpose.msra.mxu0 0.0
    %3561 = vmatprep.subr.mxu0 0.0
    %3562 = vmatpush1.xpose.msra.mxu0 0.0
    %3563 = vmatprep.subr.mxu0 0.0
    %3564 = vmatpush1.xpose.msra.mxu0 0.0
    %3565 = vmatprep.subr.mxu0 0.0
    %3566 = vmatpush1.xpose.msra.mxu0 0.0
    %3567 = vmatprep.subr.mxu0 0.0
    %3568 = vmatpush1.xpose.msra.mxu0 0.0
    %3569 = vmatprep.subr.mxu0 0.0
    %3570 = vmatpush1.xpose.msra.mxu0 0.0
    %3571 = vmatprep.subr.mxu0 0.0
    %3572 = vmatpush1.xpose.msra.mxu0 0.0
    %3573 = vmatprep.subr.mxu0 0.0
    %3574 = vmatpush1.xpose.msra.mxu0 0.0
    %3575 = vmatprep.subr.mxu0 0.0
    %3576 = vmatpush1.xpose.msra.mxu0 0.0
    %3577 = vmatprep.subr.mxu0 0.0
    %3578 = vmatpush1.xpose.msra.mxu0 0.0
    %3579 = vmatprep.subr.mxu0 0.0
    %3580 = vmatpush1.xpose.msra.mxu0 0.0
    %3581 = vmatprep.subr.mxu0 0.0
    %3582 = vmatpush1.xpose.msra.mxu0 0.0
    %3583 = vmatprep.subr.mxu0 0.0
    %3584 = vmatpush1.xpose.msra.mxu0 0.0
    %3585 = vmatprep.subr.mxu0 0.0
    %3586 = vmatpush1.xpose.msra.mxu0 0.0
    %3587 = vmatprep.subr.mxu0 0.0
    %3588 = vmatpush1.xpose.msra.mxu0 0.0
    %3589 = vmatprep.subr.mxu0 0.0
    %3590 = vmatpush1.xpose.msra.mxu0 0.0
    %3591 = vmatprep.subr.mxu0 0.0
    %3592 = vmatpush1.xpose.msra.mxu0 0.0
    %3593 = vmatprep.subr.mxu0 0.0
    %3594 = vmatpush1.xpose.msra.mxu0 0.0
    %3595 = vmatprep.subr.mxu0 0.0
    %3596 = vmatpush1.xpose.msra.mxu0 0.0
    %3597 = vmatprep.subr.mxu0 0.0
    %3598 = vmatpush1.xpose.msra.mxu0 0.0
    %3599 = vmatprep.subr.mxu0 0.0
    %3600 = vmatpush1.xpose.msra.mxu0 0.0
    %3601 = vmatprep.mubr.f32.mxu0 0.0
    %3602 = vmatmul.mubr.f32.gmra.mrb[0].mxu0 %v3529
    %v3603 = vpop.f32.mrb[0].mxu0
    %v3604 = vadd.f32 0.0, %v3603
    %v3605 = vpop.f32.mrb[0].mxu0
    %3606 = vmatprep.mubr.f32.mxu0 0.0
    %3607 = vmatmul.mubr.f32.gmra.mrb[0].mxu0 %v3531
    %v3608 = vpop.f32.mrb[0].mxu0
    %v3609 = vadd.f32 0.0, %v3608
    %v3610 = vpop.f32.mrb[0].mxu0
    %3611 = vdwg.mxu0
    %v3612 = vmul.f32 %v3604, 0.35355338
    %v3613 = vmul.f32 %v3609, 0.35355338
    %v3614 = vadd.f32 %v3612, %v119
    %v3615 = vadd.f32 %v3613, %v120
    %v3616 = vsel %vm374, %v3614, -inf
    %3617 = vmax.xlane.f32.xlu0 %v3616
    %v3618 = vpop.xlane.xlu0 %3617
    %v3619 = vsel %vm374, %v3615, -inf
    %3620 = vmax.xlane.f32.xlu0 %v3619
    %v3621 = vpop.xlane.xlu0 %3620
    %v3622 = vsub.f32 %v3614, %v3618
    %v3623 = vsub.f32 %v3615, %v3621
    %v3624 = vmul.f32 %v3622, 1.442695
    %v3625 = vpow.pop %v3624
    %v3626 = vmul.f32 %v3623, 1.442695
    %v3627 = vpow.pop %v3626
    %v3628 = vsel %vm374, %v3625, 0.0
    %3629 = vadd.xlane.f32.xlu0 %v3628
    %v3630 = vpop.xlane.xlu0 %3629
    %v3631 = vsel %vm374, %v3627, 0.0
    %3632 = vadd.xlane.f32.xlu0 %v3631
    %v3633 = vpop.xlane.xlu0 %3632
    %v3634 = vrcp.pop %v3630
    %v3635 = vrcp.pop %v3633
    %v3636 = vmul.f32 %v3625, %v3634
    %v3637 = vmul.f32 %v3627, %v3635
    %3638 = vrot.lane.b32.xlu0 %v3306, 56
    %v3639 = vpop.permute.xlu0 %3638
    %3640 = vrot.lane.b32.xlu0 %v3311, 56
    %v3641 = vpop.permute.xlu0 %3640
    %v3645 = vsel %vm374, %v3636, 0
    %v3648 = vsel %vm374, %v3637, 0
    %3650 = vmatprep.subr.mxu0 0.0
    %3651 = vmatpush1.msra.mxu0 %v3639
    %3652 = vmatprep.subr.mxu0 0.0
    %3653 = vmatpush1.msra.mxu0 %v3641
    %3654 = vmatprep.subr.mxu0 0.0
    %3655 = vmatpush1.msra.mxu0 0.0
    %3656 = vmatprep.subr.mxu0 0.0
    %3657 = vmatpush1.msra.mxu0 0.0
    %3658 = vmatprep.subr.mxu0 0.0
    %3659 = vmatpush1.msra.mxu0 0.0
    %3660 = vmatprep.subr.mxu0 0.0
    %3661 = vmatpush1.msra.mxu0 0.0
    %3662 = vmatprep.subr.mxu0 0.0
    %3663 = vmatpush1.msra.mxu0 0.0
    %3664 = vmatprep.subr.mxu0 0.0
    %3665 = vmatpush1.msra.mxu0 0.0
    %3666 = vmatprep.subr.mxu0 0.0
    %3667 = vmatpush1.msra.mxu0 0.0
    %3668 = vmatprep.subr.mxu0 0.0
    %3669 = vmatpush1.msra.mxu0 0.0
    %3670 = vmatprep.subr.mxu0 0.0
    %3671 = vmatpush1.msra.mxu0 0.0
    %3672 = vmatprep.subr.mxu0 0.0
    %3673 = vmatpush1.msra.mxu0 0.0
    %3674 = vmatprep.subr.mxu0 0.0
    %3675 = vmatpush1.msra.mxu0 0.0
    %3676 = vmatprep.subr.mxu0 0.0
    %3677 = vmatpush1.msra.mxu0 0.0
    %3678 = vmatprep.subr.mxu0 0.0
    %3679 = vmatpush1.msra.mxu0 0.0
    %3680 = vmatprep.subr.mxu0 0.0
    %3681 = vmatpush1.msra.mxu0 0.0
    %3682 = vmatprep.subr.mxu0 0.0
    %3683 = vmatpush1.msra.mxu0 0.0
    %3684 = vmatprep.subr.mxu0 0.0
    %3685 = vmatpush1.msra.mxu0 0.0
    %3686 = vmatprep.subr.mxu0 0.0
    %3687 = vmatpush1.msra.mxu0 0.0
    %3688 = vmatprep.subr.mxu0 0.0
    %3689 = vmatpush1.msra.mxu0 0.0
    %3690 = vmatprep.subr.mxu0 0.0
    %3691 = vmatpush1.msra.mxu0 0.0
    %3692 = vmatprep.subr.mxu0 0.0
    %3693 = vmatpush1.msra.mxu0 0.0
    %3694 = vmatprep.subr.mxu0 0.0
    %3695 = vmatpush1.msra.mxu0 0.0
    %3696 = vmatprep.subr.mxu0 0.0
    %3697 = vmatpush1.msra.mxu0 0.0
    %3698 = vmatprep.subr.mxu0 0.0
    %3699 = vmatpush1.msra.mxu0 0.0
    %3700 = vmatprep.subr.mxu0 0.0
    %3701 = vmatpush1.msra.mxu0 0.0
    %3702 = vmatprep.subr.mxu0 0.0
    %3703 = vmatpush1.msra.mxu0 0.0
    %3704 = vmatprep.subr.mxu0 0.0
    %3705 = vmatpush1.msra.mxu0 0.0
    %3706 = vmatprep.subr.mxu0 0.0
    %3707 = vmatpush1.msra.mxu0 0.0
    %3708 = vmatprep.subr.mxu0 0.0
    %3709 = vmatpush1.msra.mxu0 0.0
    %3710 = vmatprep.subr.mxu0 0.0
    %3711 = vmatpush1.msra.mxu0 0.0
    %3712 = vmatprep.subr.mxu0 0.0
    %3713 = vmatpush1.msra.mxu0 0.0
    %3714 = vmatprep.mubr.f32.mxu0 0.0
    %3715 = vmatmul.mubr.f32.gmra.mrb[0].mxu0 %v3645
    %v3716 = vpop.f32.mrb[0].mxu0
    %v3717 = vadd.f32 0.0, %v3716
    %v3718 = vpop.f32.mrb[0].mxu0
    %3719 = vmatprep.mubr.f32.mxu0 0.0
    %3720 = vmatmul.mubr.f32.gmra.mrb[0].mxu0 %v3648
    %v3721 = vpop.f32.mrb[0].mxu0
    %v3722 = vadd.f32 0.0, %v3721
    %v3723 = vpop.f32.mrb[0].mxu0
    %3724 = vdwg.mxu0
    %v3726 = vsel %vm286, %v3717, 0
    %v3729 = vsel %vm286, %v3722, 0
    %3731 = vmatprep.subr.mxu0 0.0
    %3732 = vmatpush1.msra.mxu0 %v3316
    %3733 = vmatprep.subr.mxu0 0.0
    %3734 = vmatpush1.msra.mxu0 0.0
    %3735 = vmatprep.subr.mxu0 0.0
    %3736 = vmatpush1.msra.mxu0 0.0
    %3737 = vmatprep.subr.mxu0 0.0
    %3738 = vmatpush1.msra.mxu0 0.0
    %3739 = vmatprep.subr.mxu0 0.0
    %3740 = vmatpush1.msra.mxu0 0.0
    %3741 = vmatprep.subr.mxu0 0.0
    %3742 = vmatpush1.msra.mxu0 0.0
    %3743 = vmatprep.subr.mxu0 0.0
    %3744 = vmatpush1.msra.mxu0 0.0
    %3745 = vmatprep.subr.mxu0 0.0
    %3746 = vmatpush1.msra.mxu0 0.0
    %3747 = vmatprep.subr.mxu0 0.0
    %3748 = vmatpush1.msra.mxu0 0.0
    %3749 = vmatprep.subr.mxu0 0.0
    %3750 = vmatpush1.msra.mxu0 0.0
    %3751 = vmatprep.subr.mxu0 0.0
    %3752 = vmatpush1.msra.mxu0 0.0
    %3753 = vmatprep.subr.mxu0 0.0
    %3754 = vmatpush1.msra.mxu0 0.0
    %3755 = vmatprep.subr.mxu0 0.0
    %3756 = vmatpush1.msra.mxu0 0.0
    %3757 = vmatprep.subr.mxu0 0.0
    %3758 = vmatpush1.msra.mxu0 0.0
    %3759 = vmatprep.subr.mxu0 0.0
    %3760 = vmatpush1.msra.mxu0 0.0
    %3761 = vmatprep.subr.mxu0 0.0
    %3762 = vmatpush1.msra.mxu0 0.0
    %3763 = vmatprep.subr.mxu0 0.0
    %3764 = vmatpush1.msra.mxu0 0.0
    %3765 = vmatprep.subr.mxu0 0.0
    %3766 = vmatpush1.msra.mxu0 0.0
    %3767 = vmatprep.subr.mxu0 0.0
    %3768 = vmatpush1.msra.mxu0 0.0
    %3769 = vmatprep.subr.mxu0 0.0
    %3770 = vmatpush1.msra.mxu0 0.0
    %3771 = vmatprep.subr.mxu0 0.0
    %3772 = vmatpush1.msra.mxu0 0.0
    %3773 = vmatprep.subr.mxu0 0.0
    %3774 = vmatpush1.msra.mxu0 0.0
    %3775 = vmatprep.subr.mxu0 0.0
    %3776 = vmatpush1.msra.mxu0 0.0
    %3777 = vmatprep.subr.mxu0 0.0
    %3778 = vmatpush1.msra.mxu0 0.0
    %3779 = vmatprep.subr.mxu0 0.0
    %3780 = vmatpush1.msra.mxu0 0.0
    %3781 = vmatprep.subr.mxu0 0.0
    %3782 = vmatpush1.msra.mxu0 0.0
    %3783 = vmatprep.subr.mxu0 0.0
    %3784 = vmatpush1.msra.mxu0 0.0
    %3785 = vmatprep.subr.mxu0 0.0
    %3786 = vmatpush1.msra.mxu0 0.0
    %3787 = vmatprep.subr.mxu0 0.0
    %3788 = vmatpush1.msra.mxu0 0.0
    %3789 = vmatprep.subr.mxu0 0.0
    %3790 = vmatpush1.msra.mxu0 0.0
    %3791 = vmatprep.subr.mxu0 0.0
    %3792 = vmatpush1.msra.mxu0 0.0
    %3793 = vmatprep.subr.mxu0 0.0
    %3794 = vmatpush1.msra.mxu0 0.0
    %3795 = vmatprep.mubr.f32.mxu0 0.0
    %3796 = vmatmul.mubr.f32.gmra.mrb[0].mxu0 %v3726
    %v3797 = vpop.f32.mrb[0].mxu0
    %v3798 = vadd.f32 0.0, %v3797
    %v3799 = vpop.f32.mrb[0].mxu0
    %3800 = vmatprep.mubr.f32.mxu0 0.0
    %3801 = vmatmul.mubr.f32.gmra.mrb[0].mxu0 %v3729
    %v3802 = vpop.f32.mrb[0].mxu0
    %v3803 = vadd.f32 0.0, %v3802
    %v3804 = vpop.f32.mrb[0].mxu0
    %3805 = vdwg.mxu0
    %v3807 = vsel %vm286, %v3513, 0
    %v3810 = vsel %vm286, %v3518, 0
    %3812 = vmatprep.subr.mxu0 0.0
    %3813 = vmatpush1.msra.mxu0 %v3315
    %3814 = vmatprep.subr.mxu0 0.0
    %3815 = vmatpush1.msra.mxu0 0.0
    %3816 = vmatprep.subr.mxu0 0.0
    %3817 = vmatpush1.msra.mxu0 0.0
    %3818 = vmatprep.subr.mxu0 0.0
    %3819 = vmatpush1.msra.mxu0 0.0
    %3820 = vmatprep.subr.mxu0 0.0
    %3821 = vmatpush1.msra.mxu0 0.0
    %3822 = vmatprep.subr.mxu0 0.0
    %3823 = vmatpush1.msra.mxu0 0.0
    %3824 = vmatprep.subr.mxu0 0.0
    %3825 = vmatpush1.msra.mxu0 0.0
    %3826 = vmatprep.subr.mxu0 0.0
    %3827 = vmatpush1.msra.mxu0 0.0
    %3828 = vmatprep.subr.mxu0 0.0
    %3829 = vmatpush1.msra.mxu0 0.0
    %3830 = vmatprep.subr.mxu0 0.0
    %3831 = vmatpush1.msra.mxu0 0.0
    %3832 = vmatprep.subr.mxu0 0.0
    %3833 = vmatpush1.msra.mxu0 0.0
    %3834 = vmatprep.subr.mxu0 0.0
    %3835 = vmatpush1.msra.mxu0 0.0
    %3836 = vmatprep.subr.mxu0 0.0
    %3837 = vmatpush1.msra.mxu0 0.0
    %3838 = vmatprep.subr.mxu0 0.0
    %3839 = vmatpush1.msra.mxu0 0.0
    %3840 = vmatprep.subr.mxu0 0.0
    %3841 = vmatpush1.msra.mxu0 0.0
    %3842 = vmatprep.subr.mxu0 0.0
    %3843 = vmatpush1.msra.mxu0 0.0
    %3844 = vmatprep.subr.mxu0 0.0
    %3845 = vmatpush1.msra.mxu0 0.0
    %3846 = vmatprep.subr.mxu0 0.0
    %3847 = vmatpush1.msra.mxu0 0.0
    %3848 = vmatprep.subr.mxu0 0.0
    %3849 = vmatpush1.msra.mxu0 0.0
    %3850 = vmatprep.subr.mxu0 0.0
    %3851 = vmatpush1.msra.mxu0 0.0
    %3852 = vmatprep.subr.mxu0 0.0
    %3853 = vmatpush1.msra.mxu0 0.0
    %3854 = vmatprep.subr.mxu0 0.0
    %3855 = vmatpush1.msra.mxu0 0.0
    %3856 = vmatprep.subr.mxu0 0.0
    %3857 = vmatpush1.msra.mxu0 0.0
    %3858 = vmatprep.subr.mxu0 0.0
    %3859 = vmatpush1.msra.mxu0 0.0
    %3860 = vmatprep.subr.mxu0 0.0
    %3861 = vmatpush1.msra.mxu0 0.0
    %3862 = vmatprep.subr.mxu0 0.0
    %3863 = vmatpush1.msra.mxu0 0.0
    %3864 = vmatprep.subr.mxu0 0.0
    %3865 = vmatpush1.msra.mxu0 0.0
    %3866 = vmatprep.subr.mxu0 0.0
    %3867 = vmatpush1.msra.mxu0 0.0
    %3868 = vmatprep.subr.mxu0 0.0
    %3869 = vmatpush1.msra.mxu0 0.0
    %3870 = vmatprep.subr.mxu0 0.0
    %3871 = vmatpush1.msra.mxu0 0.0
    %3872 = vmatprep.subr.mxu0 0.0
    %3873 = vmatpush1.msra.mxu0 0.0
    %3874 = vmatprep.subr.mxu0 0.0
    %3875 = vmatpush1.msra.mxu0 0.0
    %3876 = vmatprep.mubr.f32.mxu0 0.0
    %3877 = vmatmul.mubr.f32.gmra.mrb[0].mxu0 %v3807
    %v3878 = vpop.f32.mrb[0].mxu0
    %v3879 = vadd.f32 %v3798, %v3878
    %v3880 = vpop.f32.mrb[0].mxu0
    %3881 = vmatprep.mubr.f32.mxu0 0.0
    %3882 = vmatmul.mubr.f32.gmra.mrb[0].mxu0 %v3810
    %v3883 = vpop.f32.mrb[0].mxu0
    %v3884 = vadd.f32 %v3803, %v3883
    %v3885 = vpop.f32.mrb[0].mxu0
    %3886 = vdwg.mxu0
    %3887 = vrot.lane.b32.xlu0 %v3306, 112
    %v3888 = vpop.permute.xlu0 %3887
    %3889 = vrot.lane.b32.xlu0 %v3311, 112
    %v3890 = vpop.permute.xlu0 %3889
    %3891 = vrot.lane.b32.xlu0 %v3306, 80
    %v3892 = vpop.permute.xlu0 %3891
    %3893 = vrot.lane.b32.xlu0 %v3311, 80
    %v3894 = vpop.permute.xlu0 %3893
    %v3895 = vsel %vm286, %v3888, 0
    %v3897 = vsel %vm286, %v3890, 0
    %v3899 = vsel %vm286, %v3892, 0
    %v3901 = vsel %vm286, %v3894, 0
    %3903 = vmatprep.subr.mxu0 0.0
    %3904 = vmatpush1.xpose.msra.mxu0 %v3899
    %3905 = vmatprep.subr.mxu0 0.0
    %3906 = vmatpush1.xpose.msra.mxu0 %v3901
    %3907 = vmatprep.subr.mxu0 0.0
    %3908 = vmatpush1.xpose.msra.mxu0 0.0
    %3909 = vmatprep.subr.mxu0 0.0
    %3910 = vmatpush1.xpose.msra.mxu0 0.0
    %3911 = vmatprep.subr.mxu0 0.0
    %3912 = vmatpush1.xpose.msra.mxu0 0.0
    %3913 = vmatprep.subr.mxu0 0.0
    %3914 = vmatpush1.xpose.msra.mxu0 0.0
    %3915 = vmatprep.subr.mxu0 0.0
    %3916 = vmatpush1.xpose.msra.mxu0 0.0
    %3917 = vmatprep.subr.mxu0 0.0
    %3918 = vmatpush1.xpose.msra.mxu0 0.0
    %3919 = vmatprep.subr.mxu0 0.0
    %3920 = vmatpush1.xpose.msra.mxu0 0.0
    %3921 = vmatprep.subr.mxu0 0.0
    %3922 = vmatpush1.xpose.msra.mxu0 0.0
    %3923 = vmatprep.subr.mxu0 0.0
    %3924 = vmatpush1.xpose.msra.mxu0 0.0
    %3925 = vmatprep.subr.mxu0 0.0
    %3926 = vmatpush1.xpose.msra.mxu0 0.0
    %3927 = vmatprep.subr.mxu0 0.0
    %3928 = vmatpush1.xpose.msra.mxu0 0.0
    %3929 = vmatprep.subr.mxu0 0.0
    %3930 = vmatpush1.xpose.msra.mxu0 0.0
    %3931 = vmatprep.subr.mxu0 0.0
    %3932 = vmatpush1.xpose.msra.mxu0 0.0
    %3933 = vmatprep.subr.mxu0 0.0
    %3934 = vmatpush1.xpose.msra.mxu0 0.0
    %3935 = vmatprep.subr.mxu0 0.0
    %3936 = vmatpush1.xpose.msra.mxu0 0.0
    %3937 = vmatprep.subr.mxu0 0.0
    %3938 = vmatpush1.xpose.msra.mxu0 0.0
    %3939 = vmatprep.subr.mxu0 0.0
    %3940 = vmatpush1.xpose.msra.mxu0 0.0
    %3941 = vmatprep.subr.mxu0 0.0
    %3942 = vmatpush1.xpose.msra.mxu0 0.0
    %3943 = vmatprep.subr.mxu0 0.0
    %3944 = vmatpush1.xpose.msra.mxu0 0.0
    %3945 = vmatprep.subr.mxu0 0.0
    %3946 = vmatpush1.xpose.msra.mxu0 0.0
    %3947 = vmatprep.subr.mxu0 0.0
    %3948 = vmatpush1.xpose.msra.mxu0 0.0
    %3949 = vmatprep.subr.mxu0 0.0
    %3950 = vmatpush1.xpose.msra.mxu0 0.0
    %3951 = vmatprep.subr.mxu0 0.0
    %3952 = vmatpush1.xpose.msra.mxu0 0.0
    %3953 = vmatprep.subr.mxu0 0.0
    %3954 = vmatpush1.xpose.msra.mxu0 0.0
    %3955 = vmatprep.subr.mxu0 0.0
    %3956 = vmatpush1.xpose.msra.mxu0 0.0
    %3957 = vmatprep.subr.mxu0 0.0
    %3958 = vmatpush1.xpose.msra.mxu0 0.0
    %3959 = vmatprep.subr.mxu0 0.0
    %3960 = vmatpush1.xpose.msra.mxu0 0.0
    %3961 = vmatprep.subr.mxu0 0.0
    %3962 = vmatpush1.xpose.msra.mxu0 0.0
    %3963 = vmatprep.subr.mxu0 0.0
    %3964 = vmatpush1.xpose.msra.mxu0 0.0
    %3965 = vmatprep.subr.mxu0 0.0
    %3966 = vmatpush1.xpose.msra.mxu0 0.0
    %3967 = vmatprep.mubr.f32.mxu0 0.0
    %3968 = vmatmul.mubr.f32.gmra.mrb[0].mxu0 %v3895
    %v3969 = vpop.f32.mrb[0].mxu0
    %v3970 = vadd.f32 0.0, %v3969
    %v3971 = vpop.f32.mrb[0].mxu0
    %3972 = vmatprep.mubr.f32.mxu0 0.0
    %3973 = vmatmul.mubr.f32.gmra.mrb[0].mxu0 %v3897
    %v3974 = vpop.f32.mrb[0].mxu0
    %v3975 = vadd.f32 0.0, %v3974
    %v3976 = vpop.f32.mrb[0].mxu0
    %3977 = vdwg.mxu0
    %v3978 = vmul.f32 %v3970, 0.35355338
    %v3979 = vmul.f32 %v3975, 0.35355338
    %v3980 = vadd.f32 %v3978, %v119
    %v3981 = vadd.f32 %v3979, %v120
    %v3982 = vsel %vm374, %v3980, -inf
    %3983 = vmax.xlane.f32.xlu0 %v3982
    %v3984 = vpop.xlane.xlu0 %3983
    %v3985 = vsel %vm374, %v3981, -inf
    %3986 = vmax.xlane.f32.xlu0 %v3985
    %v3987 = vpop.xlane.xlu0 %3986
    %v3988 = vsub.f32 %v3980, %v3984
    %v3989 = vsub.f32 %v3981, %v3987
    %v3990 = vmul.f32 %v3988, 1.442695
    %v3991 = vpow.pop %v3990
    %v3992 = vmul.f32 %v3989, 1.442695
    %v3993 = vpow.pop %v3992
    %v3994 = vsel %vm374, %v3991, 0.0
    %3995 = vadd.xlane.f32.xlu0 %v3994
    %v3996 = vpop.xlane.xlu0 %3995
    %v3997 = vsel %vm374, %v3993, 0.0
    %3998 = vadd.xlane.f32.xlu0 %v3997
    %v3999 = vpop.xlane.xlu0 %3998
    %v4000 = vrcp.pop %v3996
    %v4001 = vrcp.pop %v3999
    %v4002 = vmul.f32 %v3991, %v4000
    %v4003 = vmul.f32 %v3993, %v4001
    %4004 = vrot.lane.b32.xlu0 %v3306, 48
    %v4005 = vpop.permute.xlu0 %4004
    %4006 = vrot.lane.b32.xlu0 %v3311, 48
    %v4007 = vpop.permute.xlu0 %4006
    %v4011 = vsel %vm374, %v4002, 0
    %v4014 = vsel %vm374, %v4003, 0
    %4016 = vmatprep.subr.mxu0 0.0
    %4017 = vmatpush1.msra.mxu0 %v4005
    %4018 = vmatprep.subr.mxu0 0.0
    %4019 = vmatpush1.msra.mxu0 %v4007
    %4020 = vmatprep.subr.mxu0 0.0
    %4021 = vmatpush1.msra.mxu0 0.0
    %4022 = vmatprep.subr.mxu0 0.0
    %4023 = vmatpush1.msra.mxu0 0.0
    %4024 = vmatprep.subr.mxu0 0.0
    %4025 = vmatpush1.msra.mxu0 0.0
    %4026 = vmatprep.subr.mxu0 0.0
    %4027 = vmatpush1.msra.mxu0 0.0
    %4028 = vmatprep.subr.mxu0 0.0
    %4029 = vmatpush1.msra.mxu0 0.0
    %4030 = vmatprep.subr.mxu0 0.0
    %4031 = vmatpush1.msra.mxu0 0.0
    %4032 = vmatprep.subr.mxu0 0.0
    %4033 = vmatpush1.msra.mxu0 0.0
    %4034 = vmatprep.subr.mxu0 0.0
    %4035 = vmatpush1.msra.mxu0 0.0
    %4036 = vmatprep.subr.mxu0 0.0
    %4037 = vmatpush1.msra.mxu0 0.0
    %4038 = vmatprep.subr.mxu0 0.0
    %4039 = vmatpush1.msra.mxu0 0.0
    %4040 = vmatprep.subr.mxu0 0.0
    %4041 = vmatpush1.msra.mxu0 0.0
    %4042 = vmatprep.subr.mxu0 0.0
    %4043 = vmatpush1.msra.mxu0 0.0
    %4044 = vmatprep.subr.mxu0 0.0
    %4045 = vmatpush1.msra.mxu0 0.0
    %4046 = vmatprep.subr.mxu0 0.0
    %4047 = vmatpush1.msra.mxu0 0.0
    %4048 = vmatprep.subr.mxu0 0.0
    %4049 = vmatpush1.msra.mxu0 0.0
    %4050 = vmatprep.subr.mxu0 0.0
    %4051 = vmatpush1.msra.mxu0 0.0
    %4052 = vmatprep.subr.mxu0 0.0
    %4053 = vmatpush1.msra.mxu0 0.0
    %4054 = vmatprep.subr.mxu0 0.0
    %4055 = vmatpush1.msra.mxu0 0.0
    %4056 = vmatprep.subr.mxu0 0.0
    %4057 = vmatpush1.msra.mxu0 0.0
    %4058 = vmatprep.subr.mxu0 0.0
    %4059 = vmatpush1.msra.mxu0 0.0
    %4060 = vmatprep.subr.mxu0 0.0
    %4061 = vmatpush1.msra.mxu0 0.0
    %4062 = vmatprep.subr.mxu0 0.0
    %4063 = vmatpush1.msra.mxu0 0.0
    %4064 = vmatprep.subr.mxu0 0.0
    %4065 = vmatpush1.msra.mxu0 0.0
    %4066 = vmatprep.subr.mxu0 0.0
    %4067 = vmatpush1.msra.mxu0 0.0
    %4068 = vmatprep.subr.mxu0 0.0
    %4069 = vmatpush1.msra.mxu0 0.0
    %4070 = vmatprep.subr.mxu0 0.0
    %4071 = vmatpush1.msra.mxu0 0.0
    %4072 = vmatprep.subr.mxu0 0.0
    %4073 = vmatpush1.msra.mxu0 0.0
    %4074 = vmatprep.subr.mxu0 0.0
    %4075 = vmatpush1.msra.mxu0 0.0
    %4076 = vmatprep.subr.mxu0 0.0
    %4077 = vmatpush1.msra.mxu0 0.0
    %4078 = vmatprep.subr.mxu0 0.0
    %4079 = vmatpush1.msra.mxu0 0.0
    %4080 = vmatprep.mubr.f32.mxu0 0.0
    %4081 = vmatmul.mubr.f32.gmra.mrb[0].mxu0 %v4011
    %v4082 = vpop.f32.mrb[0].mxu0
    %v4083 = vadd.f32 0.0, %v4082
    %v4084 = vpop.f32.mrb[0].mxu0
    %4085 = vmatprep.mubr.f32.mxu0 0.0
    %4086 = vmatmul.mubr.f32.gmra.mrb[0].mxu0 %v4014
    %v4087 = vpop.f32.mrb[0].mxu0
    %v4088 = vadd.f32 0.0, %v4087
    %v4089 = vpop.f32.mrb[0].mxu0
    %4090 = vdwg.mxu0
    %v4092 = vsel %vm286, %v4083, 0
    %v4095 = vsel %vm286, %v4088, 0
    %4097 = vmatprep.subr.mxu0 0.0
    %4098 = vmatpush1.msra.mxu0 %v3317
    %4099 = vmatprep.subr.mxu0 0.0
    %4100 = vmatpush1.msra.mxu0 0.0
    %4101 = vmatprep.subr.mxu0 0.0
    %4102 = vmatpush1.msra.mxu0 0.0
    %4103 = vmatprep.subr.mxu0 0.0
    %4104 = vmatpush1.msra.mxu0 0.0
    %4105 = vmatprep.subr.mxu0 0.0
    %4106 = vmatpush1.msra.mxu0 0.0
    %4107 = vmatprep.subr.mxu0 0.0
    %4108 = vmatpush1.msra.mxu0 0.0
    %4109 = vmatprep.subr.mxu0 0.0
    %4110 = vmatpush1.msra.mxu0 0.0
    %4111 = vmatprep.subr.mxu0 0.0
    %4112 = vmatpush1.msra.mxu0 0.0
    %4113 = vmatprep.subr.mxu0 0.0
    %4114 = vmatpush1.msra.mxu0 0.0
    %4115 = vmatprep.subr.mxu0 0.0
    %4116 = vmatpush1.msra.mxu0 0.0
    %4117 = vmatprep.subr.mxu0 0.0
    %4118 = vmatpush1.msra.mxu0 0.0
    %4119 = vmatprep.subr.mxu0 0.0
    %4120 = vmatpush1.msra.mxu0 0.0
    %4121 = vmatprep.subr.mxu0 0.0
    %4122 = vmatpush1.msra.mxu0 0.0
    %4123 = vmatprep.subr.mxu0 0.0
    %4124 = vmatpush1.msra.mxu0 0.0
    %4125 = vmatprep.subr.mxu0 0.0
    %4126 = vmatpush1.msra.mxu0 0.0
    %4127 = vmatprep.subr.mxu0 0.0
    %4128 = vmatpush1.msra.mxu0 0.0
    %4129 = vmatprep.subr.mxu0 0.0
    %4130 = vmatpush1.msra.mxu0 0.0
    %4131 = vmatprep.subr.mxu0 0.0
    %4132 = vmatpush1.msra.mxu0 0.0
    %4133 = vmatprep.subr.mxu0 0.0
    %4134 = vmatpush1.msra.mxu0 0.0
    %4135 = vmatprep.subr.mxu0 0.0
    %4136 = vmatpush1.msra.mxu0 0.0
    %4137 = vmatprep.subr.mxu0 0.0
    %4138 = vmatpush1.msra.mxu0 0.0
    %4139 = vmatprep.subr.mxu0 0.0
    %4140 = vmatpush1.msra.mxu0 0.0
    %4141 = vmatprep.subr.mxu0 0.0
    %4142 = vmatpush1.msra.mxu0 0.0
    %4143 = vmatprep.subr.mxu0 0.0
    %4144 = vmatpush1.msra.mxu0 0.0
    %4145 = vmatprep.subr.mxu0 0.0
    %4146 = vmatpush1.msra.mxu0 0.0
    %4147 = vmatprep.subr.mxu0 0.0
    %4148 = vmatpush1.msra.mxu0 0.0
    %4149 = vmatprep.subr.mxu0 0.0
    %4150 = vmatpush1.msra.mxu0 0.0
    %4151 = vmatprep.subr.mxu0 0.0
    %4152 = vmatpush1.msra.mxu0 0.0
    %4153 = vmatprep.subr.mxu0 0.0
    %4154 = vmatpush1.msra.mxu0 0.0
    %4155 = vmatprep.subr.mxu0 0.0
    %4156 = vmatpush1.msra.mxu0 0.0
    %4157 = vmatprep.subr.mxu0 0.0
    %4158 = vmatpush1.msra.mxu0 0.0
    %4159 = vmatprep.subr.mxu0 0.0
    %4160 = vmatpush1.msra.mxu0 0.0
    %4161 = vmatprep.mubr.f32.mxu0 0.0
    %4162 = vmatmul.mubr.f32.gmra.mrb[0].mxu0 %v4092
    %v4163 = vpop.f32.mrb[0].mxu0
    %v4164 = vadd.f32 0.0, %v4163
    %v4165 = vpop.f32.mrb[0].mxu0
    %4166 = vmatprep.mubr.f32.mxu0 0.0
    %4167 = vmatmul.mubr.f32.gmra.mrb[0].mxu0 %v4095
    %v4168 = vpop.f32.mrb[0].mxu0
    %v4169 = vadd.f32 0.0, %v4168
    %v4170 = vpop.f32.mrb[0].mxu0
    %4171 = vdwg.mxu0
    %v4172 = vadd.f32 %v3879, %v4164
    %v4173 = vadd.f32 %v3884, %v4169
    %4174 = vrot.lane.b32.xlu0 %v3306, 104
    %v4175 = vpop.permute.xlu0 %4174
    %4176 = vrot.lane.b32.xlu0 %v3311, 104
    %v4177 = vpop.permute.xlu0 %4176
    %4178 = vrot.lane.b32.xlu0 %v3306, 72
    %v4179 = vpop.permute.xlu0 %4178
    %4180 = vrot.lane.b32.xlu0 %v3311, 72
    %v4181 = vpop.permute.xlu0 %4180
    %v4182 = vsel %vm286, %v4175, 0
    %v4184 = vsel %vm286, %v4177, 0
    %v4186 = vsel %vm286, %v4179, 0
    %v4188 = vsel %vm286, %v4181, 0
    %4190 = vmatprep.subr.mxu0 0.0
    %4191 = vmatpush1.xpose.msra.mxu0 %v4186
    %4192 = vmatprep.subr.mxu0 0.0
    %4193 = vmatpush1.xpose.msra.mxu0 %v4188
    %4194 = vmatprep.subr.mxu0 0.0
    %4195 = vmatpush1.xpose.msra.mxu0 0.0
    %4196 = vmatprep.subr.mxu0 0.0
    %4197 = vmatpush1.xpose.msra.mxu0 0.0
    %4198 = vmatprep.subr.mxu0 0.0
    %4199 = vmatpush1.xpose.msra.mxu0 0.0
    %4200 = vmatprep.subr.mxu0 0.0
    %4201 = vmatpush1.xpose.msra.mxu0 0.0
    %4202 = vmatprep.subr.mxu0 0.0
    %4203 = vmatpush1.xpose.msra.mxu0 0.0
    %4204 = vmatprep.subr.mxu0 0.0
    %4205 = vmatpush1.xpose.msra.mxu0 0.0
    %4206 = vmatprep.subr.mxu0 0.0
    %4207 = vmatpush1.xpose.msra.mxu0 0.0
    %4208 = vmatprep.subr.mxu0 0.0
    %4209 = vmatpush1.xpose.msra.mxu0 0.0
    %4210 = vmatprep.subr.mxu0 0.0
    %4211 = vmatpush1.xpose.msra.mxu0 0.0
    %4212 = vmatprep.subr.mxu0 0.0
    %4213 = vmatpush1.xpose.msra.mxu0 0.0
    %4214 = vmatprep.subr.mxu0 0.0
    %4215 = vmatpush1.xpose.msra.mxu0 0.0
    %4216 = vmatprep.subr.mxu0 0.0
    %4217 = vmatpush1.xpose.msra.mxu0 0.0
    %4218 = vmatprep.subr.mxu0 0.0
    %4219 = vmatpush1.xpose.msra.mxu0 0.0
    %4220 = vmatprep.subr.mxu0 0.0
    %4221 = vmatpush1.xpose.msra.mxu0 0.0
    %4222 = vmatprep.subr.mxu0 0.0
    %4223 = vmatpush1.xpose.msra.mxu0 0.0
    %4224 = vmatprep.subr.mxu0 0.0
    %4225 = vmatpush1.xpose.msra.mxu0 0.0
    %4226 = vmatprep.subr.mxu0 0.0
    %4227 = vmatpush1.xpose.msra.mxu0 0.0
    %4228 = vmatprep.subr.mxu0 0.0
    %4229 = vmatpush1.xpose.msra.mxu0 0.0
    %4230 = vmatprep.subr.mxu0 0.0
    %4231 = vmatpush1.xpose.msra.mxu0 0.0
    %4232 = vmatprep.subr.mxu0 0.0
    %4233 = vmatpush1.xpose.msra.mxu0 0.0
    %4234 = vmatprep.subr.mxu0 0.0
    %4235 = vmatpush1.xpose.msra.mxu0 0.0
    %4236 = vmatprep.subr.mxu0 0.0
    %4237 = vmatpush1.xpose.msra.mxu0 0.0
    %4238 = vmatprep.subr.mxu0 0.0
    %4239 = vmatpush1.xpose.msra.mxu0 0.0
    %4240 = vmatprep.subr.mxu0 0.0
    %4241 = vmatpush1.xpose.msra.mxu0 0.0
    %4242 = vmatprep.subr.mxu0 0.0
    %4243 = vmatpush1.xpose.msra.mxu0 0.0
    %4244 = vmatprep.subr.mxu0 0.0
    %4245 = vmatpush1.xpose.msra.mxu0 0.0
    %4246 = vmatprep.subr.mxu0 0.0
    %4247 = vmatpush1.xpose.msra.mxu0 0.0
    %4248 = vmatprep.subr.mxu0 0.0
    %4249 = vmatpush1.xpose.msra.mxu0 0.0
    %4250 = vmatprep.subr.mxu0 0.0
    %4251 = vmatpush1.xpose.msra.mxu0 0.0
    %4252 = vmatprep.subr.mxu0 0.0
    %4253 = vmatpush1.xpose.msra.mxu0 0.0
    %4254 = vmatprep.mubr.f32.mxu0 0.0
    %4255 = vmatmul.mubr.f32.gmra.mrb[0].mxu0 %v4182
    %v4256 = vpop.f32.mrb[0].mxu0
    %v4257 = vadd.f32 0.0, %v4256
    %v4258 = vpop.f32.mrb[0].mxu0
    %4259 = vmatprep.mubr.f32.mxu0 0.0
    %4260 = vmatmul.mubr.f32.gmra.mrb[0].mxu0 %v4184
    %v4261 = vpop.f32.mrb[0].mxu0
    %v4262 = vadd.f32 0.0, %v4261
    %v4263 = vpop.f32.mrb[0].mxu0
    %4264 = vdwg.mxu0
    %v4265 = vmul.f32 %v4257, 0.35355338
    %v4266 = vmul.f32 %v4262, 0.35355338
    %v4267 = vadd.f32 %v4265, %v119
    %v4268 = vadd.f32 %v4266, %v120
    %v4269 = vsel %vm374, %v4267, -inf
    %4270 = vmax.xlane.f32.xlu0 %v4269
    %v4271 = vpop.xlane.xlu0 %4270
    %v4272 = vsel %vm374, %v4268, -inf
    %4273 = vmax.xlane.f32.xlu0 %v4272
    %v4274 = vpop.xlane.xlu0 %4273
    %v4275 = vsub.f32 %v4267, %v4271
    %v4276 = vsub.f32 %v4268, %v4274
    %v4277 = vmul.f32 %v4275, 1.442695
    %v4278 = vpow.pop %v4277
    %v4279 = vmul.f32 %v4276, 1.442695
    %v4280 = vpow.pop %v4279
    %v4281 = vsel %vm374, %v4278, 0.0
    %4282 = vadd.xlane.f32.xlu0 %v4281
    %v4283 = vpop.xlane.xlu0 %4282
    %v4284 = vsel %vm374, %v4280, 0.0
    %4285 = vadd.xlane.f32.xlu0 %v4284
    %v4286 = vpop.xlane.xlu0 %4285
    %v4287 = vrcp.pop %v4283
    %v4288 = vrcp.pop %v4286
    %v4289 = vmul.f32 %v4278, %v4287
    %v4290 = vmul.f32 %v4280, %v4288
    %4291 = vrot.lane.b32.xlu0 %v3306, 40
    %v4292 = vpop.permute.xlu0 %4291
    %4293 = vrot.lane.b32.xlu0 %v3311, 40
    %v4294 = vpop.permute.xlu0 %4293
    %v4298 = vsel %vm374, %v4289, 0
    %v4301 = vsel %vm374, %v4290, 0
    %4303 = vmatprep.subr.mxu0 0.0
    %4304 = vmatpush1.msra.mxu0 %v4292
    %4305 = vmatprep.subr.mxu0 0.0
    %4306 = vmatpush1.msra.mxu0 %v4294
    %4307 = vmatprep.subr.mxu0 0.0
    %4308 = vmatpush1.msra.mxu0 0.0
    %4309 = vmatprep.subr.mxu0 0.0
    %4310 = vmatpush1.msra.mxu0 0.0
    %4311 = vmatprep.subr.mxu0 0.0
    %4312 = vmatpush1.msra.mxu0 0.0
    %4313 = vmatprep.subr.mxu0 0.0
    %4314 = vmatpush1.msra.mxu0 0.0
    %4315 = vmatprep.subr.mxu0 0.0
    %4316 = vmatpush1.msra.mxu0 0.0
    %4317 = vmatprep.subr.mxu0 0.0
    %4318 = vmatpush1.msra.mxu0 0.0
    %4319 = vmatprep.subr.mxu0 0.0
    %4320 = vmatpush1.msra.mxu0 0.0
    %4321 = vmatprep.subr.mxu0 0.0
    %4322 = vmatpush1.msra.mxu0 0.0
    %4323 = vmatprep.subr.mxu0 0.0
    %4324 = vmatpush1.msra.mxu0 0.0
    %4325 = vmatprep.subr.mxu0 0.0
    %4326 = vmatpush1.msra.mxu0 0.0
    %4327 = vmatprep.subr.mxu0 0.0
    %4328 = vmatpush1.msra.mxu0 0.0
    %4329 = vmatprep.subr.mxu0 0.0
    %4330 = vmatpush1.msra.mxu0 0.0
    %4331 = vmatprep.subr.mxu0 0.0
    %4332 = vmatpush1.msra.mxu0 0.0
    %4333 = vmatprep.subr.mxu0 0.0
    %4334 = vmatpush1.msra.mxu0 0.0
    %4335 = vmatprep.subr.mxu0 0.0
    %4336 = vmatpush1.msra.mxu0 0.0
    %4337 = vmatprep.subr.mxu0 0.0
    %4338 = vmatpush1.msra.mxu0 0.0
    %4339 = vmatprep.subr.mxu0 0.0
    %4340 = vmatpush1.msra.mxu0 0.0
    %4341 = vmatprep.subr.mxu0 0.0
    %4342 = vmatpush1.msra.mxu0 0.0
    %4343 = vmatprep.subr.mxu0 0.0
    %4344 = vmatpush1.msra.mxu0 0.0
    %4345 = vmatprep.subr.mxu0 0.0
    %4346 = vmatpush1.msra.mxu0 0.0
    %4347 = vmatprep.subr.mxu0 0.0
    %4348 = vmatpush1.msra.mxu0 0.0
    %4349 = vmatprep.subr.mxu0 0.0
    %4350 = vmatpush1.msra.mxu0 0.0
    %4351 = vmatprep.subr.mxu0 0.0
    %4352 = vmatpush1.msra.mxu0 0.0
    %4353 = vmatprep.subr.mxu0 0.0
    %4354 = vmatpush1.msra.mxu0 0.0
    %4355 = vmatprep.subr.mxu0 0.0
    %4356 = vmatpush1.msra.mxu0 0.0
    %4357 = vmatprep.subr.mxu0 0.0
    %4358 = vmatpush1.msra.mxu0 0.0
    %4359 = vmatprep.subr.mxu0 0.0
    %4360 = vmatpush1.msra.mxu0 0.0
    %4361 = vmatprep.subr.mxu0 0.0
    %4362 = vmatpush1.msra.mxu0 0.0
    %4363 = vmatprep.subr.mxu0 0.0
    %4364 = vmatpush1.msra.mxu0 0.0
    %4365 = vmatprep.subr.mxu0 0.0
    %4366 = vmatpush1.msra.mxu0 0.0
    %4367 = vmatprep.mubr.f32.mxu0 0.0
    %4368 = vmatmul.mubr.f32.gmra.mrb[0].mxu0 %v4298
    %v4369 = vpop.f32.mrb[0].mxu0
    %v4370 = vadd.f32 0.0, %v4369
    %v4371 = vpop.f32.mrb[0].mxu0
    %4372 = vmatprep.mubr.f32.mxu0 0.0
    %4373 = vmatmul.mubr.f32.gmra.mrb[0].mxu0 %v4301
    %v4374 = vpop.f32.mrb[0].mxu0
    %v4375 = vadd.f32 0.0, %v4374
    %v4376 = vpop.f32.mrb[0].mxu0
    %4377 = vdwg.mxu0
    %v4379 = vsel %vm286, %v4370, 0
    %v4382 = vsel %vm286, %v4375, 0
    %4384 = vmatprep.subr.mxu0 0.0
    %4385 = vmatpush1.msra.mxu0 %v3318
    %4386 = vmatprep.subr.mxu0 0.0
    %4387 = vmatpush1.msra.mxu0 0.0
    %4388 = vmatprep.subr.mxu0 0.0
    %4389 = vmatpush1.msra.mxu0 0.0
    %4390 = vmatprep.subr.mxu0 0.0
    %4391 = vmatpush1.msra.mxu0 0.0
    %4392 = vmatprep.subr.mxu0 0.0
    %4393 = vmatpush1.msra.mxu0 0.0
    %4394 = vmatprep.subr.mxu0 0.0
    %4395 = vmatpush1.msra.mxu0 0.0
    %4396 = vmatprep.subr.mxu0 0.0
    %4397 = vmatpush1.msra.mxu0 0.0
    %4398 = vmatprep.subr.mxu0 0.0
    %4399 = vmatpush1.msra.mxu0 0.0
    %4400 = vmatprep.subr.mxu0 0.0
    %4401 = vmatpush1.msra.mxu0 0.0
    %4402 = vmatprep.subr.mxu0 0.0
    %4403 = vmatpush1.msra.mxu0 0.0
    %4404 = vmatprep.subr.mxu0 0.0
    %4405 = vmatpush1.msra.mxu0 0.0
    %4406 = vmatprep.subr.mxu0 0.0
    %4407 = vmatpush1.msra.mxu0 0.0
    %4408 = vmatprep.subr.mxu0 0.0
    %4409 = vmatpush1.msra.mxu0 0.0
    %4410 = vmatprep.subr.mxu0 0.0
    %4411 = vmatpush1.msra.mxu0 0.0
    %4412 = vmatprep.subr.mxu0 0.0
    %4413 = vmatpush1.msra.mxu0 0.0
    %4414 = vmatprep.subr.mxu0 0.0
    %4415 = vmatpush1.msra.mxu0 0.0
    %4416 = vmatprep.subr.mxu0 0.0
    %4417 = vmatpush1.msra.mxu0 0.0
    %4418 = vmatprep.subr.mxu0 0.0
    %4419 = vmatpush1.msra.mxu0 0.0
    %4420 = vmatprep.subr.mxu0 0.0
    %4421 = vmatpush1.msra.mxu0 0.0
    %4422 = vmatprep.subr.mxu0 0.0
    %4423 = vmatpush1.msra.mxu0 0.0
    %4424 = vmatprep.subr.mxu0 0.0
    %4425 = vmatpush1.msra.mxu0 0.0
    %4426 = vmatprep.subr.mxu0 0.0
    %4427 = vmatpush1.msra.mxu0 0.0
    %4428 = vmatprep.subr.mxu0 0.0
    %4429 = vmatpush1.msra.mxu0 0.0
    %4430 = vmatprep.subr.mxu0 0.0
    %4431 = vmatpush1.msra.mxu0 0.0
    %4432 = vmatprep.subr.mxu0 0.0
    %4433 = vmatpush1.msra.mxu0 0.0
    %4434 = vmatprep.subr.mxu0 0.0
    %4435 = vmatpush1.msra.mxu0 0.0
    %4436 = vmatprep.subr.mxu0 0.0
    %4437 = vmatpush1.msra.mxu0 0.0
    %4438 = vmatprep.subr.mxu0 0.0
    %4439 = vmatpush1.msra.mxu0 0.0
    %4440 = vmatprep.subr.mxu0 0.0
    %4441 = vmatpush1.msra.mxu0 0.0
    %4442 = vmatprep.subr.mxu0 0.0
    %4443 = vmatpush1.msra.mxu0 0.0
    %4444 = vmatprep.subr.mxu0 0.0
    %4445 = vmatpush1.msra.mxu0 0.0
    %4446 = vmatprep.subr.mxu0 0.0
    %4447 = vmatpush1.msra.mxu0 0.0
    %4448 = vmatprep.mubr.f32.mxu0 0.0
    %4449 = vmatmul.mubr.f32.gmra.mrb[0].mxu0 %v4379
    %v4450 = vpop.f32.mrb[0].mxu0
    %v4451 = vadd.f32 0.0, %v4450
    %v4452 = vpop.f32.mrb[0].mxu0
    %4453 = vmatprep.mubr.f32.mxu0 0.0
    %4454 = vmatmul.mubr.f32.gmra.mrb[0].mxu0 %v4382
    %v4455 = vpop.f32.mrb[0].mxu0
    %v4456 = vadd.f32 0.0, %v4455
    %v4457 = vpop.f32.mrb[0].mxu0
    %4458 = vdwg.mxu0
    %v4459 = vadd.f32 %v4172, %v4451
    %v4460 = vadd.f32 %v4173, %v4456
    %v4461 = vadd.f32 %v3158, %v4459
    %v4462 = vadd.f32 %v3159, %v4460
    %s4463 = scalar_lea.vmem %s7, 2
    %v4464 = vld [vmem:[%s4463] sm:$0x1]
    %v4466 = vlaneseq
    %v4467 = vshrl.u32 %v4466, 7
    %v4468 = vsub.s32 0, %v4467
    %v4469 = vrot.slane %v4464, %v4468
    %v4471 = vadd.f32 %v4461, %v4469
    %v4472 = vadd.f32 %v4462, %v4469
    %s4473 = scalar_lea.vmem %s12, 8
    %v4474 = vld [vmem:[%s4473] sm:$0x1]
    %s4475 = scalar_lea.vmem %s12, 9
    %v4476 = vld [vmem:[%s4475] sm:$0x1]
    %v4477 = vsel %vm126, %v4471, 0.0
    %4478 = vadd.xlane.f32.xlu0 %v4477
    %v4479 = vpop.xlane.xlu0 %4478
    %v4480 = vsel %vm126, %v4472, 0.0
    %4481 = vadd.xlane.f32.xlu0 %v4480
    %v4482 = vpop.xlane.xlu0 %4481
    %v4483 = vmul.f32 %v4479, %v133
    %v4484 = vmul.f32 %v4482, %v133
    %v4485 = vsub.f32 %v4471, %v4483
    %v4486 = vsub.f32 %v4472, %v4484
    %v4487 = vmul.f32 %v4485, %v4485
    %v4488 = vmul.f32 %v4486, %v4486
    %v4489 = vsel %vm126, %v4487, 0.0
    %4490 = vadd.xlane.f32.xlu0 %v4489
    %v4491 = vpop.xlane.xlu0 %4490
    %v4492 = vsel %vm126, %v4488, 0.0
    %4493 = vadd.xlane.f32.xlu0 %v4492
    %v4494 = vpop.xlane.xlu0 %4493
    %v4495 = vmul.f32 %v4491, 0.032258064
    %v4496 = vmul.f32 %v4494, 0.032258064
    %v4497 = vrsqrt.pop %v4495
    %v4498 = vmul.f32 %v4495, %v4497
    %vm4499 = vcmp.eq.f32.partialorder %v4495, inf
    %v4500 = vsel %vm4499, %v4495, %v4498
    %vm4501 = vcmp.eq.f32.partialorder %v4495, 0.0
    %v4502 = vand.u32 %v4495, 2147483648
    %v4503 = vsel %vm4501, %v4502, %v4500
    %v4504 = vrsqrt.pop %v4496
    %v4505 = vmul.f32 %v4496, %v4504
    %vm4506 = vcmp.eq.f32.partialorder %v4496, inf
    %v4507 = vsel %vm4506, %v4496, %v4505
    %vm4508 = vcmp.eq.f32.partialorder %v4496, 0.0
    %v4509 = vand.u32 %v4496, 2147483648
    %v4510 = vsel %vm4508, %v4509, %v4507
    %v4511 = vadd.f32 %v4503, 1e-06
    %v4512 = vadd.f32 %v4510, 1e-06
    %v4513 = vrcp.pop %v4511
    %v4514 = vrcp.pop %v4512
    %v4516 = vlaneseq
    %v4517 = vshrl.u32 %v4516, 7
    %v4518 = vsub.s32 0, %v4517
    %v4519 = vrot.slane %v4474, %v4518
    %v4521 = vmul.f32 %v4519, %v4485
    %v4522 = vmul.f32 %v4519, %v4486
    %v4523 = vmul.f32 %v4521, %v4513
    %v4524 = vmul.f32 %v4522, %v4514
    %v4526 = vlaneseq
    %v4527 = vshrl.u32 %v4526, 7
    %v4528 = vsub.s32 0, %v4527
    %v4529 = vrot.slane %v4476, %v4528
    %v4531 = vadd.f32 %v4523, %v4529
    %v4532 = vadd.f32 %v4524, %v4529
    %s4533 = scalar_lea.vmem %s4, 96
    %v4534 = vld [vmem:[%s4533] sm:$0xff]
    %v4535 = vld [vmem:[%s4533 + $0x8] sm:$0xff]
    %v4536 = vld [vmem:[%s4533 + $0x10] sm:$0xff]
    %v4537 = vld [vmem:[%s4533 + $0x18] sm:$0xff]
    %s4538 = scalar_lea.vmem %s5, 3
    %v4539 = vld [vmem:[%s4538] sm:$0x1]
    %v4541 = vlaneseq
    %v4542 = vshrl.u32 %v4541, 7
    %v4543 = vsub.s32 0, %v4542
    %v4544 = vrot.slane %v4539, %v4543
    %v4547 = vsel %vm126, %v4531, 0
    %v4550 = vsel %vm126, %v4532, 0
    %4552 = vmatprep.subr.mxu0 0.0
    %4553 = vmatpush1.msra.mxu0 %v4534
    %4554 = vmatprep.subr.mxu0 0.0
    %4555 = vmatpush1.msra.mxu0 %v4535
    %4556 = vmatprep.subr.mxu0 0.0
    %4557 = vmatpush1.msra.mxu0 %v4536
    %4558 = vmatprep.subr.mxu0 0.0
    %4559 = vmatpush1.msra.mxu0 %v4537
    %4560 = vmatprep.subr.mxu0 0.0
    %4561 = vmatpush1.msra.mxu0 0.0
    %4562 = vmatprep.subr.mxu0 0.0
    %4563 = vmatpush1.msra.mxu0 0.0
    %4564 = vmatprep.subr.mxu0 0.0
    %4565 = vmatpush1.msra.mxu0 0.0
    %4566 = vmatprep.subr.mxu0 0.0
    %4567 = vmatpush1.msra.mxu0 0.0
    %4568 = vmatprep.subr.mxu0 0.0
    %4569 = vmatpush1.msra.mxu0 0.0
    %4570 = vmatprep.subr.mxu0 0.0
    %4571 = vmatpush1.msra.mxu0 0.0
    %4572 = vmatprep.subr.mxu0 0.0
    %4573 = vmatpush1.msra.mxu0 0.0
    %4574 = vmatprep.subr.mxu0 0.0
    %4575 = vmatpush1.msra.mxu0 0.0
    %4576 = vmatprep.subr.mxu0 0.0
    %4577 = vmatpush1.msra.mxu0 0.0
    %4578 = vmatprep.subr.mxu0 0.0
    %4579 = vmatpush1.msra.mxu0 0.0
    %4580 = vmatprep.subr.mxu0 0.0
    %4581 = vmatpush1.msra.mxu0 0.0
    %4582 = vmatprep.subr.mxu0 0.0
    %4583 = vmatpush1.msra.mxu0 0.0
    %4584 = vmatprep.subr.mxu0 0.0
    %4585 = vmatpush1.msra.mxu0 0.0
    %4586 = vmatprep.subr.mxu0 0.0
    %4587 = vmatpush1.msra.mxu0 0.0
    %4588 = vmatprep.subr.mxu0 0.0
    %4589 = vmatpush1.msra.mxu0 0.0
    %4590 = vmatprep.subr.mxu0 0.0
    %4591 = vmatpush1.msra.mxu0 0.0
    %4592 = vmatprep.subr.mxu0 0.0
    %4593 = vmatpush1.msra.mxu0 0.0
    %4594 = vmatprep.subr.mxu0 0.0
    %4595 = vmatpush1.msra.mxu0 0.0
    %4596 = vmatprep.subr.mxu0 0.0
    %4597 = vmatpush1.msra.mxu0 0.0
    %4598 = vmatprep.subr.mxu0 0.0
    %4599 = vmatpush1.msra.mxu0 0.0
    %4600 = vmatprep.subr.mxu0 0.0
    %4601 = vmatpush1.msra.mxu0 0.0
    %4602 = vmatprep.subr.mxu0 0.0
    %4603 = vmatpush1.msra.mxu0 0.0
    %4604 = vmatprep.subr.mxu0 0.0
    %4605 = vmatpush1.msra.mxu0 0.0
    %4606 = vmatprep.subr.mxu0 0.0
    %4607 = vmatpush1.msra.mxu0 0.0
    %4608 = vmatprep.subr.mxu0 0.0
    %4609 = vmatpush1.msra.mxu0 0.0
    %4610 = vmatprep.subr.mxu0 0.0
    %4611 = vmatpush1.msra.mxu0 0.0
    %4612 = vmatprep.subr.mxu0 0.0
    %4613 = vmatpush1.msra.mxu0 0.0
    %4614 = vmatprep.subr.mxu0 0.0
    %4615 = vmatpush1.msra.mxu0 0.0
    %4616 = vmatprep.mubr.f32.mxu0 0.0
    %4617 = vmatmul.mubr.f32.gmra.mrb[0].mxu0 %v4547
    %v4618 = vpop.f32.mrb[0].mxu0
    %v4619 = vadd.f32 %v4544, %v4618
    %v4620 = vpop.f32.mrb[0].mxu0
    %4621 = vmatprep.mubr.f32.mxu0 0.0
    %4622 = vmatmul.mubr.f32.gmra.mrb[0].mxu0 %v4550
    %v4623 = vpop.f32.mrb[0].mxu0
    %v4624 = vadd.f32 %v4544, %v4623
    %v4625 = vpop.f32.mrb[0].mxu0
    %4626 = vdwg.mxu0
    %4627 = vmatprep.subr.mxu0 0.0
    %4628 = vmatpush1.msra.mxu0 %v4534
    %4629 = vmatprep.subr.mxu0 0.0
    %4630 = vmatpush1.msra.mxu0 %v4535
    %4631 = vmatprep.subr.mxu0 0.0
    %4632 = vmatpush1.msra.mxu0 %v4536
    %4633 = vmatprep.subr.mxu0 0.0
    %4634 = vmatpush1.msra.mxu0 %v4537
    %4635 = vmatprep.subr.mxu0 0.0
    %4636 = vmatpush1.msra.mxu0 0.0
    %4637 = vmatprep.subr.mxu0 0.0
    %4638 = vmatpush1.msra.mxu0 0.0
    %4639 = vmatprep.subr.mxu0 0.0
    %4640 = vmatpush1.msra.mxu0 0.0
    %4641 = vmatprep.subr.mxu0 0.0
    %4642 = vmatpush1.msra.mxu0 0.0
    %4643 = vmatprep.subr.mxu0 0.0
    %4644 = vmatpush1.msra.mxu0 0.0
    %4645 = vmatprep.subr.mxu0 0.0
    %4646 = vmatpush1.msra.mxu0 0.0
    %4647 = vmatprep.subr.mxu0 0.0
    %4648 = vmatpush1.msra.mxu0 0.0
    %4649 = vmatprep.subr.mxu0 0.0
    %4650 = vmatpush1.msra.mxu0 0.0
    %4651 = vmatprep.subr.mxu0 0.0
    %4652 = vmatpush1.msra.mxu0 0.0
    %4653 = vmatprep.subr.mxu0 0.0
    %4654 = vmatpush1.msra.mxu0 0.0
    %4655 = vmatprep.subr.mxu0 0.0
    %4656 = vmatpush1.msra.mxu0 0.0
    %4657 = vmatprep.subr.mxu0 0.0
    %4658 = vmatpush1.msra.mxu0 0.0
    %4659 = vmatprep.subr.mxu0 0.0
    %4660 = vmatpush1.msra.mxu0 0.0
    %4661 = vmatprep.subr.mxu0 0.0
    %4662 = vmatpush1.msra.mxu0 0.0
    %4663 = vmatprep.subr.mxu0 0.0
    %4664 = vmatpush1.msra.mxu0 0.0
    %4665 = vmatprep.subr.mxu0 0.0
    %4666 = vmatpush1.msra.mxu0 0.0
    %4667 = vmatprep.subr.mxu0 0.0
    %4668 = vmatpush1.msra.mxu0 0.0
    %4669 = vmatprep.subr.mxu0 0.0
    %4670 = vmatpush1.msra.mxu0 0.0
    %4671 = vmatprep.subr.mxu0 0.0
    %4672 = vmatpush1.msra.mxu0 0.0
    %4673 = vmatprep.subr.mxu0 0.0
    %4674 = vmatpush1.msra.mxu0 0.0
    %4675 = vmatprep.subr.mxu0 0.0
    %4676 = vmatpush1.msra.mxu0 0.0
    %4677 = vmatprep.subr.mxu0 0.0
    %4678 = vmatpush1.msra.mxu0 0.0
    %4679 = vmatprep.subr.mxu0 0.0
    %4680 = vmatpush1.msra.mxu0 0.0
    %4681 = vmatprep.subr.mxu0 0.0
    %4682 = vmatpush1.msra.mxu0 0.0
    %4683 = vmatprep.subr.mxu0 0.0
    %4684 = vmatpush1.msra.mxu0 0.0
    %4685 = vmatprep.subr.mxu0 0.0
    %4686 = vmatpush1.msra.mxu0 0.0
    %4687 = vmatprep.subr.mxu0 0.0
    %4688 = vmatpush1.msra.mxu0 0.0
    %4689 = vmatprep.subr.mxu0 0.0
    %4690 = vmatpush1.msra.mxu0 0.0
    %4691 = vmatprep.mubr.f32.mxu0 0.0
    %4692 = vmatmul.mubr.f32.gmra.mrb[0].mxu0 %v1590
    %v4693 = vpop.f32.mrb[0].mxu0
    %v4694 = vadd.f32 %v4544, %v4693
    %v4695 = vpop.f32.mrb[0].mxu0
    %4696 = vmatprep.mubr.f32.mxu0 0.0
    %4697 = vmatmul.mubr.f32.gmra.mrb[0].mxu0 %v1593
    %v4698 = vpop.f32.mrb[0].mxu0
    %v4699 = vadd.f32 %v4544, %v4698
    %v4700 = vpop.f32.mrb[0].mxu0
    %4701 = vmatprep.mubr.f32.mxu0 0.0
    %4702 = vmatmul.mubr.f32.gmra.mrb[0].mxu0 %v1596
    %v4703 = vpop.f32.mrb[0].mxu0
    %v4704 = vadd.f32 %v4544, %v4703
    %v4705 = vpop.f32.mrb[0].mxu0
    %4706 = vmatprep.mubr.f32.mxu0 0.0
    %4707 = vmatmul.mubr.f32.gmra.mrb[0].mxu0 %v1599
    %v4708 = vpop.f32.mrb[0].mxu0
    %v4709 = vadd.f32 %v4544, %v4708
    %v4710 = vpop.f32.mrb[0].mxu0
    %4711 = vdwg.mxu0
    %s4712 = scalar_lea.vmem [#allocation10], 96
    %v4713 = vld [vmem:[%s4712] sm:$0xff]
    %v4714 = vld [vmem:[%s4712 + $0x8] sm:$0xff]
    %v4715 = vld [vmem:[%s4712 + $0x10] sm:$0xff]
    %v4716 = vld [vmem:[%s4712 + $0x18] sm:$0xff]
    %4721 = vrot.lane.b32.xlu0 %v4694, 96
    %v4722 = vpop.permute.xlu0 %4721
    %4723 = vrot.lane.b32.xlu0 %v4699, 96
    %v4724 = vpop.permute.xlu0 %4723
    %4725 = vrot.lane.b32.xlu0 %v4704, 96
    %v4726 = vpop.permute.xlu0 %4725
    %4727 = vrot.lane.b32.xlu0 %v4709, 96
    %v4728 = vpop.permute.xlu0 %4727
    %v4730 = vsel %vm286, %v4619, 0
    %v4733 = vsel %vm286, %v4624, 0
    %v4735 = vsel %vm286, %v4722, 0
    %v4737 = vsel %vm286, %v4724, 0
    %v4739 = vsel %vm286, %v4726, 0
    %v4741 = vsel %vm286, %v4728, 0
    %4743 = vmatprep.subr.mxu0 0.0
    %4744 = vmatpush1.xpose.msra.mxu0 %v4735
    %4745 = vmatprep.subr.mxu0 0.0
    %4746 = vmatpush1.xpose.msra.mxu0 %v4737
    %4747 = vmatprep.subr.mxu0 0.0
    %4748 = vmatpush1.xpose.msra.mxu0 %v4739
    %4749 = vmatprep.subr.mxu0 0.0
    %4750 = vmatpush1.xpose.msra.mxu0 %v4741
    %4751 = vmatprep.subr.mxu0 0.0
    %4752 = vmatpush1.xpose.msra.mxu0 0.0
    %4753 = vmatprep.subr.mxu0 0.0
    %4754 = vmatpush1.xpose.msra.mxu0 0.0
    %4755 = vmatprep.subr.mxu0 0.0
    %4756 = vmatpush1.xpose.msra.mxu0 0.0
    %4757 = vmatprep.subr.mxu0 0.0
    %4758 = vmatpush1.xpose.msra.mxu0 0.0
    %4759 = vmatprep.subr.mxu0 0.0
    %4760 = vmatpush1.xpose.msra.mxu0 0.0
    %4761 = vmatprep.subr.mxu0 0.0
    %4762 = vmatpush1.xpose.msra.mxu0 0.0
    %4763 = vmatprep.subr.mxu0 0.0
    %4764 = vmatpush1.xpose.msra.mxu0 0.0
    %4765 = vmatprep.subr.mxu0 0.0
    %4766 = vmatpush1.xpose.msra.mxu0 0.0
    %4767 = vmatprep.subr.mxu0 0.0
    %4768 = vmatpush1.xpose.msra.mxu0 0.0
    %4769 = vmatprep.subr.mxu0 0.0
    %4770 = vmatpush1.xpose.msra.mxu0 0.0
    %4771 = vmatprep.subr.mxu0 0.0
    %4772 = vmatpush1.xpose.msra.mxu0 0.0
    %4773 = vmatprep.subr.mxu0 0.0
    %4774 = vmatpush1.xpose.msra.mxu0 0.0
    %4775 = vmatprep.subr.mxu0 0.0
    %4776 = vmatpush1.xpose.msra.mxu0 0.0
    %4777 = vmatprep.subr.mxu0 0.0
    %4778 = vmatpush1.xpose.msra.mxu0 0.0
    %4779 = vmatprep.subr.mxu0 0.0
    %4780 = vmatpush1.xpose.msra.mxu0 0.0
    %4781 = vmatprep.subr.mxu0 0.0
    %4782 = vmatpush1.xpose.msra.mxu0 0.0
    %4783 = vmatprep.subr.mxu0 0.0
    %4784 = vmatpush1.xpose.msra.mxu0 0.0
    %4785 = vmatprep.subr.mxu0 0.0
    %4786 = vmatpush1.xpose.msra.mxu0 0.0
    %4787 = vmatprep.subr.mxu0 0.0
    %4788 = vmatpush1.xpose.msra.mxu0 0.0
    %4789 = vmatprep.subr.mxu0 0.0
    %4790 = vmatpush1.xpose.msra.mxu0 0.0
    %4791 = vmatprep.subr.mxu0 0.0
    %4792 = vmatpush1.xpose.msra.mxu0 0.0
    %4793 = vmatprep.subr.mxu0 0.0
    %4794 = vmatpush1.xpose.msra.mxu0 0.0
    %4795 = vmatprep.subr.mxu0 0.0
    %4796 = vmatpush1.xpose.msra.mxu0 0.0
    %4797 = vmatprep.subr.mxu0 0.0
    %4798 = vmatpush1.xpose.msra.mxu0 0.0
    %4799 = vmatprep.subr.mxu0 0.0
    %4800 = vmatpush1.xpose.msra.mxu0 0.0
    %4801 = vmatprep.subr.mxu0 0.0
    %4802 = vmatpush1.xpose.msra.mxu0 0.0
    %4803 = vmatprep.subr.mxu0 0.0
    %4804 = vmatpush1.xpose.msra.mxu0 0.0
    %4805 = vmatprep.subr.mxu0 0.0
    %4806 = vmatpush1.xpose.msra.mxu0 0.0
    %4807 = vmatprep.mubr.f32.mxu0 0.0
    %4808 = vmatmul.mubr.f32.gmra.mrb[0].mxu0 %v4730
    %v4809 = vpop.f32.mrb[0].mxu0
    %v4810 = vadd.f32 0.0, %v4809
    %v4811 = vpop.f32.mrb[0].mxu0
    %4812 = vmatprep.mubr.f32.mxu0 0.0
    %4813 = vmatmul.mubr.f32.gmra.mrb[0].mxu0 %v4733
    %v4814 = vpop.f32.mrb[0].mxu0
    %v4815 = vadd.f32 0.0, %v4814
    %v4816 = vpop.f32.mrb[0].mxu0
    %4817 = vdwg.mxu0
    %v4818 = vmul.f32 %v4810, 0.35355338
    %v4819 = vmul.f32 %v4815, 0.35355338
    %v4820 = vadd.f32 %v4818, %v121
    %v4821 = vadd.f32 %v4819, %v122
    %v4822 = vsel %vm126, %v4820, -inf
    %4823 = vmax.xlane.f32.xlu0 %v4822
    %v4824 = vpop.xlane.xlu0 %4823
    %v4825 = vsel %vm126, %v4821, -inf
    %4826 = vmax.xlane.f32.xlu0 %v4825
    %v4827 = vpop.xlane.xlu0 %4826
    %v4828 = vsub.f32 %v4820, %v4824
    %v4829 = vsub.f32 %v4821, %v4827
    %v4830 = vmul.f32 %v4828, 1.442695
    %v4831 = vpow.pop %v4830
    %v4832 = vmul.f32 %v4829, 1.442695
    %v4833 = vpow.pop %v4832
    %v4834 = vsel %vm126, %v4831, 0.0
    %4835 = vadd.xlane.f32.xlu0 %v4834
    %v4836 = vpop.xlane.xlu0 %4835
    %v4837 = vsel %vm126, %v4833, 0.0
    %4838 = vadd.xlane.f32.xlu0 %v4837
    %v4839 = vpop.xlane.xlu0 %4838
    %v4840 = vrcp.pop %v4836
    %v4841 = vrcp.pop %v4839
    %v4842 = vmul.f32 %v4831, %v4840
    %v4843 = vmul.f32 %v4833, %v4841
    %4844 = vrot.lane.b32.xlu0 %v4694, 64
    %v4845 = vpop.permute.xlu0 %4844
    %4846 = vrot.lane.b32.xlu0 %v4699, 64
    %v4847 = vpop.permute.xlu0 %4846
    %4848 = vrot.lane.b32.xlu0 %v4704, 64
    %v4849 = vpop.permute.xlu0 %4848
    %4850 = vrot.lane.b32.xlu0 %v4709, 64
    %v4851 = vpop.permute.xlu0 %4850
    %v4857 = vsel %vm126, %v4842, 0
    %v4860 = vsel %vm126, %v4843, 0
    %4862 = vmatprep.subr.mxu0 0.0
    %4863 = vmatpush1.msra.mxu0 %v4845
    %4864 = vmatprep.subr.mxu0 0.0
    %4865 = vmatpush1.msra.mxu0 %v4847
    %4866 = vmatprep.subr.mxu0 0.0
    %4867 = vmatpush1.msra.mxu0 %v4849
    %4868 = vmatprep.subr.mxu0 0.0
    %4869 = vmatpush1.msra.mxu0 %v4851
    %4870 = vmatprep.subr.mxu0 0.0
    %4871 = vmatpush1.msra.mxu0 0.0
    %4872 = vmatprep.subr.mxu0 0.0
    %4873 = vmatpush1.msra.mxu0 0.0
    %4874 = vmatprep.subr.mxu0 0.0
    %4875 = vmatpush1.msra.mxu0 0.0
    %4876 = vmatprep.subr.mxu0 0.0
    %4877 = vmatpush1.msra.mxu0 0.0
    %4878 = vmatprep.subr.mxu0 0.0
    %4879 = vmatpush1.msra.mxu0 0.0
    %4880 = vmatprep.subr.mxu0 0.0
    %4881 = vmatpush1.msra.mxu0 0.0
    %4882 = vmatprep.subr.mxu0 0.0
    %4883 = vmatpush1.msra.mxu0 0.0
    %4884 = vmatprep.subr.mxu0 0.0
    %4885 = vmatpush1.msra.mxu0 0.0
    %4886 = vmatprep.subr.mxu0 0.0
    %4887 = vmatpush1.msra.mxu0 0.0
    %4888 = vmatprep.subr.mxu0 0.0
    %4889 = vmatpush1.msra.mxu0 0.0
    %4890 = vmatprep.subr.mxu0 0.0
    %4891 = vmatpush1.msra.mxu0 0.0
    %4892 = vmatprep.subr.mxu0 0.0
    %4893 = vmatpush1.msra.mxu0 0.0
    %4894 = vmatprep.subr.mxu0 0.0
    %4895 = vmatpush1.msra.mxu0 0.0
    %4896 = vmatprep.subr.mxu0 0.0
    %4897 = vmatpush1.msra.mxu0 0.0
    %4898 = vmatprep.subr.mxu0 0.0
    %4899 = vmatpush1.msra.mxu0 0.0
    %4900 = vmatprep.subr.mxu0 0.0
    %4901 = vmatpush1.msra.mxu0 0.0
    %4902 = vmatprep.subr.mxu0 0.0
    %4903 = vmatpush1.msra.mxu0 0.0
    %4904 = vmatprep.subr.mxu0 0.0
    %4905 = vmatpush1.msra.mxu0 0.0
    %4906 = vmatprep.subr.mxu0 0.0
    %4907 = vmatpush1.msra.mxu0 0.0
    %4908 = vmatprep.subr.mxu0 0.0
    %4909 = vmatpush1.msra.mxu0 0.0
    %4910 = vmatprep.subr.mxu0 0.0
    %4911 = vmatpush1.msra.mxu0 0.0
    %4912 = vmatprep.subr.mxu0 0.0
    %4913 = vmatpush1.msra.mxu0 0.0
    %4914 = vmatprep.subr.mxu0 0.0
    %4915 = vmatpush1.msra.mxu0 0.0
    %4916 = vmatprep.subr.mxu0 0.0
    %4917 = vmatpush1.msra.mxu0 0.0
    %4918 = vmatprep.subr.mxu0 0.0
    %4919 = vmatpush1.msra.mxu0 0.0
    %4920 = vmatprep.subr.mxu0 0.0
    %4921 = vmatpush1.msra.mxu0 0.0
    %4922 = vmatprep.subr.mxu0 0.0
    %4923 = vmatpush1.msra.mxu0 0.0
    %4924 = vmatprep.subr.mxu0 0.0
    %4925 = vmatpush1.msra.mxu0 0.0
    %4926 = vmatprep.mubr.f32.mxu0 0.0
    %4927 = vmatmul.mubr.f32.gmra.mrb[0].mxu0 %v4857
    %v4928 = vpop.f32.mrb[0].mxu0
    %v4929 = vadd.f32 0.0, %v4928
    %v4930 = vpop.f32.mrb[0].mxu0
    %4931 = vmatprep.mubr.f32.mxu0 0.0
    %4932 = vmatmul.mubr.f32.gmra.mrb[0].mxu0 %v4860
    %v4933 = vpop.f32.mrb[0].mxu0
    %v4934 = vadd.f32 0.0, %v4933
    %v4935 = vpop.f32.mrb[0].mxu0
    %4936 = vdwg.mxu0
    %4937 = vrot.lane.b32.xlu0 %v4619, 120
    %v4938 = vpop.permute.xlu0 %4937
    %4939 = vrot.lane.b32.xlu0 %v4624, 120
    %v4940 = vpop.permute.xlu0 %4939
    %4941 = vrot.lane.b32.xlu0 %v4694, 88
    %v4942 = vpop.permute.xlu0 %4941
    %4943 = vrot.lane.b32.xlu0 %v4699, 88
    %v4944 = vpop.permute.xlu0 %4943
    %4945 = vrot.lane.b32.xlu0 %v4704, 88
    %v4946 = vpop.permute.xlu0 %4945
    %4947 = vrot.lane.b32.xlu0 %v4709, 88
    %v4948 = vpop.permute.xlu0 %4947
    %v4949 = vsel %vm286, %v4938, 0
    %v4951 = vsel %vm286, %v4940, 0
    %v4953 = vsel %vm286, %v4942, 0
    %v4955 = vsel %vm286, %v4944, 0
    %v4957 = vsel %vm286, %v4946, 0
    %v4959 = vsel %vm286, %v4948, 0
    %4961 = vmatprep.subr.mxu0 0.0
    %4962 = vmatpush1.xpose.msra.mxu0 %v4953
    %4963 = vmatprep.subr.mxu0 0.0
    %4964 = vmatpush1.xpose.msra.mxu0 %v4955
    %4965 = vmatprep.subr.mxu0 0.0
    %4966 = vmatpush1.xpose.msra.mxu0 %v4957
    %4967 = vmatprep.subr.mxu0 0.0
    %4968 = vmatpush1.xpose.msra.mxu0 %v4959
    %4969 = vmatprep.subr.mxu0 0.0
    %4970 = vmatpush1.xpose.msra.mxu0 0.0
    %4971 = vmatprep.subr.mxu0 0.0
    %4972 = vmatpush1.xpose.msra.mxu0 0.0
    %4973 = vmatprep.subr.mxu0 0.0
    %4974 = vmatpush1.xpose.msra.mxu0 0.0
    %4975 = vmatprep.subr.mxu0 0.0
    %4976 = vmatpush1.xpose.msra.mxu0 0.0
    %4977 = vmatprep.subr.mxu0 0.0
    %4978 = vmatpush1.xpose.msra.mxu0 0.0
    %4979 = vmatprep.subr.mxu0 0.0
    %4980 = vmatpush1.xpose.msra.mxu0 0.0
    %4981 = vmatprep.subr.mxu0 0.0
    %4982 = vmatpush1.xpose.msra.mxu0 0.0
    %4983 = vmatprep.subr.mxu0 0.0
    %4984 = vmatpush1.xpose.msra.mxu0 0.0
    %4985 = vmatprep.subr.mxu0 0.0
    %4986 = vmatpush1.xpose.msra.mxu0 0.0
    %4987 = vmatprep.subr.mxu0 0.0
    %4988 = vmatpush1.xpose.msra.mxu0 0.0
    %4989 = vmatprep.subr.mxu0 0.0
    %4990 = vmatpush1.xpose.msra.mxu0 0.0
    %4991 = vmatprep.subr.mxu0 0.0
    %4992 = vmatpush1.xpose.msra.mxu0 0.0
    %4993 = vmatprep.subr.mxu0 0.0
    %4994 = vmatpush1.xpose.msra.mxu0 0.0
    %4995 = vmatprep.subr.mxu0 0.0
    %4996 = vmatpush1.xpose.msra.mxu0 0.0
    %4997 = vmatprep.subr.mxu0 0.0
    %4998 = vmatpush1.xpose.msra.mxu0 0.0
    %4999 = vmatprep.subr.mxu0 0.0
    %5000 = vmatpush1.xpose.msra.mxu0 0.0
    %5001 = vmatprep.subr.mxu0 0.0
    %5002 = vmatpush1.xpose.msra.mxu0 0.0
    %5003 = vmatprep.subr.mxu0 0.0
    %5004 = vmatpush1.xpose.msra.mxu0 0.0
    %5005 = vmatprep.subr.mxu0 0.0
    %5006 = vmatpush1.xpose.msra.mxu0 0.0
    %5007 = vmatprep.subr.mxu0 0.0
    %5008 = vmatpush1.xpose.msra.mxu0 0.0
    %5009 = vmatprep.subr.mxu0 0.0
    %5010 = vmatpush1.xpose.msra.mxu0 0.0
    %5011 = vmatprep.subr.mxu0 0.0
    %5012 = vmatpush1.xpose.msra.mxu0 0.0
    %5013 = vmatprep.subr.mxu0 0.0
    %5014 = vmatpush1.xpose.msra.mxu0 0.0
    %5015 = vmatprep.subr.mxu0 0.0
    %5016 = vmatpush1.xpose.msra.mxu0 0.0
    %5017 = vmatprep.subr.mxu0 0.0
    %5018 = vmatpush1.xpose.msra.mxu0 0.0
    %5019 = vmatprep.subr.mxu0 0.0
    %5020 = vmatpush1.xpose.msra.mxu0 0.0
    %5021 = vmatprep.subr.mxu0 0.0
    %5022 = vmatpush1.xpose.msra.mxu0 0.0
    %5023 = vmatprep.subr.mxu0 0.0
    %5024 = vmatpush1.xpose.msra.mxu0 0.0
    %5025 = vmatprep.mubr.f32.mxu0 0.0
    %5026 = vmatmul.mubr.f32.gmra.mrb[0].mxu0 %v4949
    %v5027 = vpop.f32.mrb[0].mxu0
    %v5028 = vadd.f32 0.0, %v5027
    %v5029 = vpop.f32.mrb[0].mxu0
    %5030 = vmatprep.mubr.f32.mxu0 0.0
    %5031 = vmatmul.mubr.f32.gmra.mrb[0].mxu0 %v4951
    %v5032 = vpop.f32.mrb[0].mxu0
    %v5033 = vadd.f32 0.0, %v5032
    %v5034 = vpop.f32.mrb[0].mxu0
    %5035 = vdwg.mxu0
    %v5036 = vmul.f32 %v5028, 0.35355338
    %v5037 = vmul.f32 %v5033, 0.35355338
    %v5038 = vadd.f32 %v5036, %v121
    %v5039 = vadd.f32 %v5037, %v122
    %v5040 = vsel %vm126, %v5038, -inf
    %5041 = vmax.xlane.f32.xlu0 %v5040
    %v5042 = vpop.xlane.xlu0 %5041
    %v5043 = vsel %vm126, %v5039, -inf
    %5044 = vmax.xlane.f32.xlu0 %v5043
    %v5045 = vpop.xlane.xlu0 %5044
    %v5046 = vsub.f32 %v5038, %v5042
    %v5047 = vsub.f32 %v5039, %v5045
    %v5048 = vmul.f32 %v5046, 1.442695
    %v5049 = vpow.pop %v5048
    %v5050 = vmul.f32 %v5047, 1.442695
    %v5051 = vpow.pop %v5050
    %v5052 = vsel %vm126, %v5049, 0.0
    %5053 = vadd.xlane.f32.xlu0 %v5052
    %v5054 = vpop.xlane.xlu0 %5053
    %v5055 = vsel %vm126, %v5051, 0.0
    %5056 = vadd.xlane.f32.xlu0 %v5055
    %v5057 = vpop.xlane.xlu0 %5056
    %v5058 = vrcp.pop %v5054
    %v5059 = vrcp.pop %v5057
    %v5060 = vmul.f32 %v5049, %v5058
    %v5061 = vmul.f32 %v5051, %v5059
    %5062 = vrot.lane.b32.xlu0 %v4694, 56
    %v5063 = vpop.permute.xlu0 %5062
    %5064 = vrot.lane.b32.xlu0 %v4699, 56
    %v5065 = vpop.permute.xlu0 %5064
    %5066 = vrot.lane.b32.xlu0 %v4704, 56
    %v5067 = vpop.permute.xlu0 %5066
    %5068 = vrot.lane.b32.xlu0 %v4709, 56
    %v5069 = vpop.permute.xlu0 %5068
    %v5075 = vsel %vm126, %v5060, 0
    %v5078 = vsel %vm126, %v5061, 0
    %5080 = vmatprep.subr.mxu0 0.0
    %5081 = vmatpush1.msra.mxu0 %v5063
    %5082 = vmatprep.subr.mxu0 0.0
    %5083 = vmatpush1.msra.mxu0 %v5065
    %5084 = vmatprep.subr.mxu0 0.0
    %5085 = vmatpush1.msra.mxu0 %v5067
    %5086 = vmatprep.subr.mxu0 0.0
    %5087 = vmatpush1.msra.mxu0 %v5069
    %5088 = vmatprep.subr.mxu0 0.0
    %5089 = vmatpush1.msra.mxu0 0.0
    %5090 = vmatprep.subr.mxu0 0.0
    %5091 = vmatpush1.msra.mxu0 0.0
    %5092 = vmatprep.subr.mxu0 0.0
    %5093 = vmatpush1.msra.mxu0 0.0
    %5094 = vmatprep.subr.mxu0 0.0
    %5095 = vmatpush1.msra.mxu0 0.0
    %5096 = vmatprep.subr.mxu0 0.0
    %5097 = vmatpush1.msra.mxu0 0.0
    %5098 = vmatprep.subr.mxu0 0.0
    %5099 = vmatpush1.msra.mxu0 0.0
    %5100 = vmatprep.subr.mxu0 0.0
    %5101 = vmatpush1.msra.mxu0 0.0
    %5102 = vmatprep.subr.mxu0 0.0
    %5103 = vmatpush1.msra.mxu0 0.0
    %5104 = vmatprep.subr.mxu0 0.0
    %5105 = vmatpush1.msra.mxu0 0.0
    %5106 = vmatprep.subr.mxu0 0.0
    %5107 = vmatpush1.msra.mxu0 0.0
    %5108 = vmatprep.subr.mxu0 0.0
    %5109 = vmatpush1.msra.mxu0 0.0
    %5110 = vmatprep.subr.mxu0 0.0
    %5111 = vmatpush1.msra.mxu0 0.0
    %5112 = vmatprep.subr.mxu0 0.0
    %5113 = vmatpush1.msra.mxu0 0.0
    %5114 = vmatprep.subr.mxu0 0.0
    %5115 = vmatpush1.msra.mxu0 0.0
    %5116 = vmatprep.subr.mxu0 0.0
    %5117 = vmatpush1.msra.mxu0 0.0
    %5118 = vmatprep.subr.mxu0 0.0
    %5119 = vmatpush1.msra.mxu0 0.0
    %5120 = vmatprep.subr.mxu0 0.0
    %5121 = vmatpush1.msra.mxu0 0.0
    %5122 = vmatprep.subr.mxu0 0.0
    %5123 = vmatpush1.msra.mxu0 0.0
    %5124 = vmatprep.subr.mxu0 0.0
    %5125 = vmatpush1.msra.mxu0 0.0
    %5126 = vmatprep.subr.mxu0 0.0
    %5127 = vmatpush1.msra.mxu0 0.0
    %5128 = vmatprep.subr.mxu0 0.0
    %5129 = vmatpush1.msra.mxu0 0.0
    %5130 = vmatprep.subr.mxu0 0.0
    %5131 = vmatpush1.msra.mxu0 0.0
    %5132 = vmatprep.subr.mxu0 0.0
    %5133 = vmatpush1.msra.mxu0 0.0
    %5134 = vmatprep.subr.mxu0 0.0
    %5135 = vmatpush1.msra.mxu0 0.0
    %5136 = vmatprep.subr.mxu0 0.0
    %5137 = vmatpush1.msra.mxu0 0.0
    %5138 = vmatprep.subr.mxu0 0.0
    %5139 = vmatpush1.msra.mxu0 0.0
    %5140 = vmatprep.subr.mxu0 0.0
    %5141 = vmatpush1.msra.mxu0 0.0
    %5142 = vmatprep.subr.mxu0 0.0
    %5143 = vmatpush1.msra.mxu0 0.0
    %5144 = vmatprep.mubr.f32.mxu0 0.0
    %5145 = vmatmul.mubr.f32.gmra.mrb[0].mxu0 %v5075
    %v5146 = vpop.f32.mrb[0].mxu0
    %v5147 = vadd.f32 0.0, %v5146
    %v5148 = vpop.f32.mrb[0].mxu0
    %5149 = vmatprep.mubr.f32.mxu0 0.0
    %5150 = vmatmul.mubr.f32.gmra.mrb[0].mxu0 %v5078
    %v5151 = vpop.f32.mrb[0].mxu0
    %v5152 = vadd.f32 0.0, %v5151
    %v5153 = vpop.f32.mrb[0].mxu0
    %5154 = vdwg.mxu0
    %v5156 = vsel %vm286, %v5147, 0
    %v5159 = vsel %vm286, %v5152, 0
    %5161 = vmatprep.subr.mxu0 0.0
    %5162 = vmatpush1.msra.mxu0 %v4714
    %5163 = vmatprep.subr.mxu0 0.0
    %5164 = vmatpush1.msra.mxu0 0.0
    %5165 = vmatprep.subr.mxu0 0.0
    %5166 = vmatpush1.msra.mxu0 0.0
    %5167 = vmatprep.subr.mxu0 0.0
    %5168 = vmatpush1.msra.mxu0 0.0
    %5169 = vmatprep.subr.mxu0 0.0
    %5170 = vmatpush1.msra.mxu0 0.0
    %5171 = vmatprep.subr.mxu0 0.0
    %5172 = vmatpush1.msra.mxu0 0.0
    %5173 = vmatprep.subr.mxu0 0.0
    %5174 = vmatpush1.msra.mxu0 0.0
    %5175 = vmatprep.subr.mxu0 0.0
    %5176 = vmatpush1.msra.mxu0 0.0
    %5177 = vmatprep.subr.mxu0 0.0
    %5178 = vmatpush1.msra.mxu0 0.0
    %5179 = vmatprep.subr.mxu0 0.0
    %5180 = vmatpush1.msra.mxu0 0.0
    %5181 = vmatprep.subr.mxu0 0.0
    %5182 = vmatpush1.msra.mxu0 0.0
    %5183 = vmatprep.subr.mxu0 0.0
    %5184 = vmatpush1.msra.mxu0 0.0
    %5185 = vmatprep.subr.mxu0 0.0
    %5186 = vmatpush1.msra.mxu0 0.0
    %5187 = vmatprep.subr.mxu0 0.0
    %5188 = vmatpush1.msra.mxu0 0.0
    %5189 = vmatprep.subr.mxu0 0.0
    %5190 = vmatpush1.msra.mxu0 0.0
    %5191 = vmatprep.subr.mxu0 0.0
    %5192 = vmatpush1.msra.mxu0 0.0
    %5193 = vmatprep.subr.mxu0 0.0
    %5194 = vmatpush1.msra.mxu0 0.0
    %5195 = vmatprep.subr.mxu0 0.0
    %5196 = vmatpush1.msra.mxu0 0.0
    %5197 = vmatprep.subr.mxu0 0.0
    %5198 = vmatpush1.msra.mxu0 0.0
    %5199 = vmatprep.subr.mxu0 0.0
    %5200 = vmatpush1.msra.mxu0 0.0
    %5201 = vmatprep.subr.mxu0 0.0
    %5202 = vmatpush1.msra.mxu0 0.0
    %5203 = vmatprep.subr.mxu0 0.0
    %5204 = vmatpush1.msra.mxu0 0.0
    %5205 = vmatprep.subr.mxu0 0.0
    %5206 = vmatpush1.msra.mxu0 0.0
    %5207 = vmatprep.subr.mxu0 0.0
    %5208 = vmatpush1.msra.mxu0 0.0
    %5209 = vmatprep.subr.mxu0 0.0
    %5210 = vmatpush1.msra.mxu0 0.0
    %5211 = vmatprep.subr.mxu0 0.0
    %5212 = vmatpush1.msra.mxu0 0.0
    %5213 = vmatprep.subr.mxu0 0.0
    %5214 = vmatpush1.msra.mxu0 0.0
    %5215 = vmatprep.subr.mxu0 0.0
    %5216 = vmatpush1.msra.mxu0 0.0
    %5217 = vmatprep.subr.mxu0 0.0
    %5218 = vmatpush1.msra.mxu0 0.0
    %5219 = vmatprep.subr.mxu0 0.0
    %5220 = vmatpush1.msra.mxu0 0.0
    %5221 = vmatprep.subr.mxu0 0.0
    %5222 = vmatpush1.msra.mxu0 0.0
    %5223 = vmatprep.subr.mxu0 0.0
    %5224 = vmatpush1.msra.mxu0 0.0
    %5225 = vmatprep.mubr.f32.mxu0 0.0
    %5226 = vmatmul.mubr.f32.gmra.mrb[0].mxu0 %v5156
    %v5227 = vpop.f32.mrb[0].mxu0
    %v5228 = vadd.f32 0.0, %v5227
    %v5229 = vpop.f32.mrb[0].mxu0
    %5230 = vmatprep.mubr.f32.mxu0 0.0
    %5231 = vmatmul.mubr.f32.gmra.mrb[0].mxu0 %v5159
    %v5232 = vpop.f32.mrb[0].mxu0
    %v5233 = vadd.f32 0.0, %v5232
    %v5234 = vpop.f32.mrb[0].mxu0
    %5235 = vdwg.mxu0
    %v5237 = vsel %vm286, %v4929, 0
    %v5240 = vsel %vm286, %v4934, 0
    %5242 = vmatprep.subr.mxu0 0.0
    %5243 = vmatpush1.msra.mxu0 %v4713
    %5244 = vmatprep.subr.mxu0 0.0
    %5245 = vmatpush1.msra.mxu0 0.0
    %5246 = vmatprep.subr.mxu0 0.0
    %5247 = vmatpush1.msra.mxu0 0.0
    %5248 = vmatprep.subr.mxu0 0.0
    %5249 = vmatpush1.msra.mxu0 0.0
    %5250 = vmatprep.subr.mxu0 0.0
    %5251 = vmatpush1.msra.mxu0 0.0
    %5252 = vmatprep.subr.mxu0 0.0
    %5253 = vmatpush1.msra.mxu0 0.0
    %5254 = vmatprep.subr.mxu0 0.0
    %5255 = vmatpush1.msra.mxu0 0.0
    %5256 = vmatprep.subr.mxu0 0.0
    %5257 = vmatpush1.msra.mxu0 0.0
    %5258 = vmatprep.subr.mxu0 0.0
    %5259 = vmatpush1.msra.mxu0 0.0
    %5260 = vmatprep.subr.mxu0 0.0
    %5261 = vmatpush1.msra.mxu0 0.0
    %5262 = vmatprep.subr.mxu0 0.0
    %5263 = vmatpush1.msra.mxu0 0.0
    %5264 = vmatprep.subr.mxu0 0.0
    %5265 = vmatpush1.msra.mxu0 0.0
    %5266 = vmatprep.subr.mxu0 0.0
    %5267 = vmatpush1.msra.mxu0 0.0
    %5268 = vmatprep.subr.mxu0 0.0
    %5269 = vmatpush1.msra.mxu0 0.0
    %5270 = vmatprep.subr.mxu0 0.0
    %5271 = vmatpush1.msra.mxu0 0.0
    %5272 = vmatprep.subr.mxu0 0.0
    %5273 = vmatpush1.msra.mxu0 0.0
    %5274 = vmatprep.subr.mxu0 0.0
    %5275 = vmatpush1.msra.mxu0 0.0
    %5276 = vmatprep.subr.mxu0 0.0
    %5277 = vmatpush1.msra.mxu0 0.0
    %5278 = vmatprep.subr.mxu0 0.0
    %5279 = vmatpush1.msra.mxu0 0.0
    %5280 = vmatprep.subr.mxu0 0.0
    %5281 = vmatpush1.msra.mxu0 0.0
    %5282 = vmatprep.subr.mxu0 0.0
    %5283 = vmatpush1.msra.mxu0 0.0
    %5284 = vmatprep.subr.mxu0 0.0
    %5285 = vmatpush1.msra.mxu0 0.0
    %5286 = vmatprep.subr.mxu0 0.0
    %5287 = vmatpush1.msra.mxu0 0.0
    %5288 = vmatprep.subr.mxu0 0.0
    %5289 = vmatpush1.msra.mxu0 0.0
    %5290 = vmatprep.subr.mxu0 0.0
    %5291 = vmatpush1.msra.mxu0 0.0
    %5292 = vmatprep.subr.mxu0 0.0
    %5293 = vmatpush1.msra.mxu0 0.0
    %5294 = vmatprep.subr.mxu0 0.0
    %5295 = vmatpush1.msra.mxu0 0.0
    %5296 = vmatprep.subr.mxu0 0.0
    %5297 = vmatpush1.msra.mxu0 0.0
    %5298 = vmatprep.subr.mxu0 0.0
    %5299 = vmatpush1.msra.mxu0 0.0
    %5300 = vmatprep.subr.mxu0 0.0
    %5301 = vmatpush1.msra.mxu0 0.0
    %5302 = vmatprep.subr.mxu0 0.0
    %5303 = vmatpush1.msra.mxu0 0.0
    %5304 = vmatprep.subr.mxu0 0.0
    %5305 = vmatpush1.msra.mxu0 0.0
    %5306 = vmatprep.mubr.f32.mxu0 0.0
    %5307 = vmatmul.mubr.f32.gmra.mrb[0].mxu0 %v5237
    %v5308 = vpop.f32.mrb[0].mxu0
    %v5309 = vadd.f32 %v5228, %v5308
    %v5310 = vpop.f32.mrb[0].mxu0
    %5311 = vmatprep.mubr.f32.mxu0 0.0
    %5312 = vmatmul.mubr.f32.gmra.mrb[0].mxu0 %v5240
    %v5313 = vpop.f32.mrb[0].mxu0
    %v5314 = vadd.f32 %v5233, %v5313
    %v5315 = vpop.f32.mrb[0].mxu0
    %5316 = vdwg.mxu0
    %5317 = vrot.lane.b32.xlu0 %v4619, 112
    %v5318 = vpop.permute.xlu0 %5317
    %5319 = vrot.lane.b32.xlu0 %v4624, 112
    %v5320 = vpop.permute.xlu0 %5319
    %5321 = vrot.lane.b32.xlu0 %v4694, 80
    %v5322 = vpop.permute.xlu0 %5321
    %5323 = vrot.lane.b32.xlu0 %v4699, 80
    %v5324 = vpop.permute.xlu0 %5323
    %5325 = vrot.lane.b32.xlu0 %v4704, 80
    %v5326 = vpop.permute.xlu0 %5325
    %5327 = vrot.lane.b32.xlu0 %v4709, 80
    %v5328 = vpop.permute.xlu0 %5327
    %v5329 = vsel %vm286, %v5318, 0
    %v5331 = vsel %vm286, %v5320, 0
    %v5333 = vsel %vm286, %v5322, 0
    %v5335 = vsel %vm286, %v5324, 0
    %v5337 = vsel %vm286, %v5326, 0
    %v5339 = vsel %vm286, %v5328, 0
    %5341 = vmatprep.subr.mxu0 0.0
    %5342 = vmatpush1.xpose.msra.mxu0 %v5333
    %5343 = vmatprep.subr.mxu0 0.0
    %5344 = vmatpush1.xpose.msra.mxu0 %v5335
    %5345 = vmatprep.subr.mxu0 0.0
    %5346 = vmatpush1.xpose.msra.mxu0 %v5337
    %5347 = vmatprep.subr.mxu0 0.0
    %5348 = vmatpush1.xpose.msra.mxu0 %v5339
    %5349 = vmatprep.subr.mxu0 0.0
    %5350 = vmatpush1.xpose.msra.mxu0 0.0
    %5351 = vmatprep.subr.mxu0 0.0
    %5352 = vmatpush1.xpose.msra.mxu0 0.0
    %5353 = vmatprep.subr.mxu0 0.0
    %5354 = vmatpush1.xpose.msra.mxu0 0.0
    %5355 = vmatprep.subr.mxu0 0.0
    %5356 = vmatpush1.xpose.msra.mxu0 0.0
    %5357 = vmatprep.subr.mxu0 0.0
    %5358 = vmatpush1.xpose.msra.mxu0 0.0
    %5359 = vmatprep.subr.mxu0 0.0
    %5360 = vmatpush1.xpose.msra.mxu0 0.0
    %5361 = vmatprep.subr.mxu0 0.0
    %5362 = vmatpush1.xpose.msra.mxu0 0.0
    %5363 = vmatprep.subr.mxu0 0.0
    %5364 = vmatpush1.xpose.msra.mxu0 0.0
    %5365 = vmatprep.subr.mxu0 0.0
    %5366 = vmatpush1.xpose.msra.mxu0 0.0
    %5367 = vmatprep.subr.mxu0 0.0
    %5368 = vmatpush1.xpose.msra.mxu0 0.0
    %5369 = vmatprep.subr.mxu0 0.0
    %5370 = vmatpush1.xpose.msra.mxu0 0.0
    %5371 = vmatprep.subr.mxu0 0.0
    %5372 = vmatpush1.xpose.msra.mxu0 0.0
    %5373 = vmatprep.subr.mxu0 0.0
    %5374 = vmatpush1.xpose.msra.mxu0 0.0
    %5375 = vmatprep.subr.mxu0 0.0
    %5376 = vmatpush1.xpose.msra.mxu0 0.0
    %5377 = vmatprep.subr.mxu0 0.0
    %5378 = vmatpush1.xpose.msra.mxu0 0.0
    %5379 = vmatprep.subr.mxu0 0.0
    %5380 = vmatpush1.xpose.msra.mxu0 0.0
    %5381 = vmatprep.subr.mxu0 0.0
    %5382 = vmatpush1.xpose.msra.mxu0 0.0
    %5383 = vmatprep.subr.mxu0 0.0
    %5384 = vmatpush1.xpose.msra.mxu0 0.0
    %5385 = vmatprep.subr.mxu0 0.0
    %5386 = vmatpush1.xpose.msra.mxu0 0.0
    %5387 = vmatprep.subr.mxu0 0.0
    %5388 = vmatpush1.xpose.msra.mxu0 0.0
    %5389 = vmatprep.subr.mxu0 0.0
    %5390 = vmatpush1.xpose.msra.mxu0 0.0
    %5391 = vmatprep.subr.mxu0 0.0
    %5392 = vmatpush1.xpose.msra.mxu0 0.0
    %5393 = vmatprep.subr.mxu0 0.0
    %5394 = vmatpush1.xpose.msra.mxu0 0.0
    %5395 = vmatprep.subr.mxu0 0.0
    %5396 = vmatpush1.xpose.msra.mxu0 0.0
    %5397 = vmatprep.subr.mxu0 0.0
    %5398 = vmatpush1.xpose.msra.mxu0 0.0
    %5399 = vmatprep.subr.mxu0 0.0
    %5400 = vmatpush1.xpose.msra.mxu0 0.0
    %5401 = vmatprep.subr.mxu0 0.0
    %5402 = vmatpush1.xpose.msra.mxu0 0.0
    %5403 = vmatprep.subr.mxu0 0.0
    %5404 = vmatpush1.xpose.msra.mxu0 0.0
    %5405 = vmatprep.mubr.f32.mxu0 0.0
    %5406 = vmatmul.mubr.f32.gmra.mrb[0].mxu0 %v5329
    %v5407 = vpop.f32.mrb[0].mxu0
    %v5408 = vadd.f32 0.0, %v5407
    %v5409 = vpop.f32.mrb[0].mxu0
    %5410 = vmatprep.mubr.f32.mxu0 0.0
    %5411 = vmatmul.mubr.f32.gmra.mrb[0].mxu0 %v5331
    %v5412 = vpop.f32.mrb[0].mxu0
    %v5413 = vadd.f32 0.0, %v5412
    %v5414 = vpop.f32.mrb[0].mxu0
    %5415 = vdwg.mxu0
    %v5416 = vmul.f32 %v5408, 0.35355338
    %v5417 = vmul.f32 %v5413, 0.35355338
    %v5418 = vadd.f32 %v5416, %v121
    %v5419 = vadd.f32 %v5417, %v122
    %v5420 = vsel %vm126, %v5418, -inf
    %5421 = vmax.xlane.f32.xlu0 %v5420
    %v5422 = vpop.xlane.xlu0 %5421
    %v5423 = vsel %vm126, %v5419, -inf
    %5424 = vmax.xlane.f32.xlu0 %v5423
    %v5425 = vpop.xlane.xlu0 %5424
    %v5426 = vsub.f32 %v5418, %v5422
    %v5427 = vsub.f32 %v5419, %v5425
    %v5428 = vmul.f32 %v5426, 1.442695
    %v5429 = vpow.pop %v5428
    %v5430 = vmul.f32 %v5427, 1.442695
    %v5431 = vpow.pop %v5430
    %v5432 = vsel %vm126, %v5429, 0.0
    %5433 = vadd.xlane.f32.xlu0 %v5432
    %v5434 = vpop.xlane.xlu0 %5433
    %v5435 = vsel %vm126, %v5431, 0.0
    %5436 = vadd.xlane.f32.xlu0 %v5435
    %v5437 = vpop.xlane.xlu0 %5436
    %v5438 = vrcp.pop %v5434
    %v5439 = vrcp.pop %v5437
    %v5440 = vmul.f32 %v5429, %v5438
    %v5441 = vmul.f32 %v5431, %v5439
    %5442 = vrot.lane.b32.xlu0 %v4694, 48
    %v5443 = vpop.permute.xlu0 %5442
    %5444 = vrot.lane.b32.xlu0 %v4699, 48
    %v5445 = vpop.permute.xlu0 %5444
    %5446 = vrot.lane.b32.xlu0 %v4704, 48
    %v5447 = vpop.permute.xlu0 %5446
    %5448 = vrot.lane.b32.xlu0 %v4709, 48
    %v5449 = vpop.permute.xlu0 %5448
    %v5455 = vsel %vm126, %v5440, 0
    %v5458 = vsel %vm126, %v5441, 0
    %5460 = vmatprep.subr.mxu0 0.0
    %5461 = vmatpush1.msra.mxu0 %v5443
    %5462 = vmatprep.subr.mxu0 0.0
    %5463 = vmatpush1.msra.mxu0 %v5445
    %5464 = vmatprep.subr.mxu0 0.0
    %5465 = vmatpush1.msra.mxu0 %v5447
    %5466 = vmatprep.subr.mxu0 0.0
    %5467 = vmatpush1.msra.mxu0 %v5449
    %5468 = vmatprep.subr.mxu0 0.0
    %5469 = vmatpush1.msra.mxu0 0.0
    %5470 = vmatprep.subr.mxu0 0.0
    %5471 = vmatpush1.msra.mxu0 0.0
    %5472 = vmatprep.subr.mxu0 0.0
    %5473 = vmatpush1.msra.mxu0 0.0
    %5474 = vmatprep.subr.mxu0 0.0
    %5475 = vmatpush1.msra.mxu0 0.0
    %5476 = vmatprep.subr.mxu0 0.0
    %5477 = vmatpush1.msra.mxu0 0.0
    %5478 = vmatprep.subr.mxu0 0.0
    %5479 = vmatpush1.msra.mxu0 0.0
    %5480 = vmatprep.subr.mxu0 0.0
    %5481 = vmatpush1.msra.mxu0 0.0
    %5482 = vmatprep.subr.mxu0 0.0
    %5483 = vmatpush1.msra.mxu0 0.0
    %5484 = vmatprep.subr.mxu0 0.0
    %5485 = vmatpush1.msra.mxu0 0.0
    %5486 = vmatprep.subr.mxu0 0.0
    %5487 = vmatpush1.msra.mxu0 0.0
    %5488 = vmatprep.subr.mxu0 0.0
    %5489 = vmatpush1.msra.mxu0 0.0
    %5490 = vmatprep.subr.mxu0 0.0
    %5491 = vmatpush1.msra.mxu0 0.0
    %5492 = vmatprep.subr.mxu0 0.0
    %5493 = vmatpush1.msra.mxu0 0.0
    %5494 = vmatprep.subr.mxu0 0.0
    %5495 = vmatpush1.msra.mxu0 0.0
    %5496 = vmatprep.subr.mxu0 0.0
    %5497 = vmatpush1.msra.mxu0 0.0
    %5498 = vmatprep.subr.mxu0 0.0
    %5499 = vmatpush1.msra.mxu0 0.0
    %5500 = vmatprep.subr.mxu0 0.0
    %5501 = vmatpush1.msra.mxu0 0.0
    %5502 = vmatprep.subr.mxu0 0.0
    %5503 = vmatpush1.msra.mxu0 0.0
    %5504 = vmatprep.subr.mxu0 0.0
    %5505 = vmatpush1.msra.mxu0 0.0
    %5506 = vmatprep.subr.mxu0 0.0
    %5507 = vmatpush1.msra.mxu0 0.0
    %5508 = vmatprep.subr.mxu0 0.0
    %5509 = vmatpush1.msra.mxu0 0.0
    %5510 = vmatprep.subr.mxu0 0.0
    %5511 = vmatpush1.msra.mxu0 0.0
    %5512 = vmatprep.subr.mxu0 0.0
    %5513 = vmatpush1.msra.mxu0 0.0
    %5514 = vmatprep.subr.mxu0 0.0
    %5515 = vmatpush1.msra.mxu0 0.0
    %5516 = vmatprep.subr.mxu0 0.0
    %5517 = vmatpush1.msra.mxu0 0.0
    %5518 = vmatprep.subr.mxu0 0.0
    %5519 = vmatpush1.msra.mxu0 0.0
    %5520 = vmatprep.subr.mxu0 0.0
    %5521 = vmatpush1.msra.mxu0 0.0
    %5522 = vmatprep.subr.mxu0 0.0
    %5523 = vmatpush1.msra.mxu0 0.0
    %5524 = vmatprep.mubr.f32.mxu0 0.0
    %5525 = vmatmul.mubr.f32.gmra.mrb[0].mxu0 %v5455
    %v5526 = vpop.f32.mrb[0].mxu0
    %v5527 = vadd.f32 0.0, %v5526
    %v5528 = vpop.f32.mrb[0].mxu0
    %5529 = vmatprep.mubr.f32.mxu0 0.0
    %5530 = vmatmul.mubr.f32.gmra.mrb[0].mxu0 %v5458
    %v5531 = vpop.f32.mrb[0].mxu0
    %v5532 = vadd.f32 0.0, %v5531
    %v5533 = vpop.f32.mrb[0].mxu0
    %5534 = vdwg.mxu0
    %v5536 = vsel %vm286, %v5527, 0
    %v5539 = vsel %vm286, %v5532, 0
    %5541 = vmatprep.subr.mxu0 0.0
    %5542 = vmatpush1.msra.mxu0 %v4715
    %5543 = vmatprep.subr.mxu0 0.0
    %5544 = vmatpush1.msra.mxu0 0.0
    %5545 = vmatprep.subr.mxu0 0.0
    %5546 = vmatpush1.msra.mxu0 0.0
    %5547 = vmatprep.subr.mxu0 0.0
    %5548 = vmatpush1.msra.mxu0 0.0
    %5549 = vmatprep.subr.mxu0 0.0
    %5550 = vmatpush1.msra.mxu0 0.0
    %5551 = vmatprep.subr.mxu0 0.0
    %5552 = vmatpush1.msra.mxu0 0.0
    %5553 = vmatprep.subr.mxu0 0.0
    %5554 = vmatpush1.msra.mxu0 0.0
    %5555 = vmatprep.subr.mxu0 0.0
    %5556 = vmatpush1.msra.mxu0 0.0
    %5557 = vmatprep.subr.mxu0 0.0
    %5558 = vmatpush1.msra.mxu0 0.0
    %5559 = vmatprep.subr.mxu0 0.0
    %5560 = vmatpush1.msra.mxu0 0.0
    %5561 = vmatprep.subr.mxu0 0.0
    %5562 = vmatpush1.msra.mxu0 0.0
    %5563 = vmatprep.subr.mxu0 0.0
    %5564 = vmatpush1.msra.mxu0 0.0
    %5565 = vmatprep.subr.mxu0 0.0
    %5566 = vmatpush1.msra.mxu0 0.0
    %5567 = vmatprep.subr.mxu0 0.0
    %5568 = vmatpush1.msra.mxu0 0.0
    %5569 = vmatprep.subr.mxu0 0.0
    %5570 = vmatpush1.msra.mxu0 0.0
    %5571 = vmatprep.subr.mxu0 0.0
    %5572 = vmatpush1.msra.mxu0 0.0
    %5573 = vmatprep.subr.mxu0 0.0
    %5574 = vmatpush1.msra.mxu0 0.0
    %5575 = vmatprep.subr.mxu0 0.0
    %5576 = vmatpush1.msra.mxu0 0.0
    %5577 = vmatprep.subr.mxu0 0.0
    %5578 = vmatpush1.msra.mxu0 0.0
    %5579 = vmatprep.subr.mxu0 0.0
    %5580 = vmatpush1.msra.mxu0 0.0
    %5581 = vmatprep.subr.mxu0 0.0
    %5582 = vmatpush1.msra.mxu0 0.0
    %5583 = vmatprep.subr.mxu0 0.0
    %5584 = vmatpush1.msra.mxu0 0.0
    %5585 = vmatprep.subr.mxu0 0.0
    %5586 = vmatpush1.msra.mxu0 0.0
    %5587 = vmatprep.subr.mxu0 0.0
    %5588 = vmatpush1.msra.mxu0 0.0
    %5589 = vmatprep.subr.mxu0 0.0
    %5590 = vmatpush1.msra.mxu0 0.0
    %5591 = vmatprep.subr.mxu0 0.0
    %5592 = vmatpush1.msra.mxu0 0.0
    %5593 = vmatprep.subr.mxu0 0.0
    %5594 = vmatpush1.msra.mxu0 0.0
    %5595 = vmatprep.subr.mxu0 0.0
    %5596 = vmatpush1.msra.mxu0 0.0
    %5597 = vmatprep.subr.mxu0 0.0
    %5598 = vmatpush1.msra.mxu0 0.0
    %5599 = vmatprep.subr.mxu0 0.0
    %5600 = vmatpush1.msra.mxu0 0.0
    %5601 = vmatprep.subr.mxu0 0.0
    %5602 = vmatpush1.msra.mxu0 0.0
    %5603 = vmatprep.subr.mxu0 0.0
    %5604 = vmatpush1.msra.mxu0 0.0
    %5605 = vmatprep.mubr.f32.mxu0 0.0
    %5606 = vmatmul.mubr.f32.gmra.mrb[0].mxu0 %v5536
    %v5607 = vpop.f32.mrb[0].mxu0
    %v5608 = vadd.f32 0.0, %v5607
    %v5609 = vpop.f32.mrb[0].mxu0
    %5610 = vmatprep.mubr.f32.mxu0 0.0
    %5611 = vmatmul.mubr.f32.gmra.mrb[0].mxu0 %v5539
    %v5612 = vpop.f32.mrb[0].mxu0
    %v5613 = vadd.f32 0.0, %v5612
    %v5614 = vpop.f32.mrb[0].mxu0
    %5615 = vdwg.mxu0
    %v5616 = vadd.f32 %v5309, %v5608
    %v5617 = vadd.f32 %v5314, %v5613
    %5618 = vrot.lane.b32.xlu0 %v4619, 104
    %v5619 = vpop.permute.xlu0 %5618
    %5620 = vrot.lane.b32.xlu0 %v4624, 104
    %v5621 = vpop.permute.xlu0 %5620
    %5622 = vrot.lane.b32.xlu0 %v4694, 72
    %v5623 = vpop.permute.xlu0 %5622
    %5624 = vrot.lane.b32.xlu0 %v4699, 72
    %v5625 = vpop.permute.xlu0 %5624
    %5626 = vrot.lane.b32.xlu0 %v4704, 72
    %v5627 = vpop.permute.xlu0 %5626
    %5628 = vrot.lane.b32.xlu0 %v4709, 72
    %v5629 = vpop.permute.xlu0 %5628
    %v5630 = vsel %vm286, %v5619, 0
    %v5632 = vsel %vm286, %v5621, 0
    %v5634 = vsel %vm286, %v5623, 0
    %v5636 = vsel %vm286, %v5625, 0
    %v5638 = vsel %vm286, %v5627, 0
    %v5640 = vsel %vm286, %v5629, 0
    %5642 = vmatprep.subr.mxu0 0.0
    %5643 = vmatpush1.xpose.msra.mxu0 %v5634
    %5644 = vmatprep.subr.mxu0 0.0
    %5645 = vmatpush1.xpose.msra.mxu0 %v5636
    %5646 = vmatprep.subr.mxu0 0.0
    %5647 = vmatpush1.xpose.msra.mxu0 %v5638
    %5648 = vmatprep.subr.mxu0 0.0
    %5649 = vmatpush1.xpose.msra.mxu0 %v5640
    %5650 = vmatprep.subr.mxu0 0.0
    %5651 = vmatpush1.xpose.msra.mxu0 0.0
    %5652 = vmatprep.subr.mxu0 0.0
    %5653 = vmatpush1.xpose.msra.mxu0 0.0
    %5654 = vmatprep.subr.mxu0 0.0
    %5655 = vmatpush1.xpose.msra.mxu0 0.0
    %5656 = vmatprep.subr.mxu0 0.0
    %5657 = vmatpush1.xpose.msra.mxu0 0.0
    %5658 = vmatprep.subr.mxu0 0.0
    %5659 = vmatpush1.xpose.msra.mxu0 0.0
    %5660 = vmatprep.subr.mxu0 0.0
    %5661 = vmatpush1.xpose.msra.mxu0 0.0
    %5662 = vmatprep.subr.mxu0 0.0
    %5663 = vmatpush1.xpose.msra.mxu0 0.0
    %5664 = vmatprep.subr.mxu0 0.0
    %5665 = vmatpush1.xpose.msra.mxu0 0.0
    %5666 = vmatprep.subr.mxu0 0.0
    %5667 = vmatpush1.xpose.msra.mxu0 0.0
    %5668 = vmatprep.subr.mxu0 0.0
    %5669 = vmatpush1.xpose.msra.mxu0 0.0
    %5670 = vmatprep.subr.mxu0 0.0
    %5671 = vmatpush1.xpose.msra.mxu0 0.0
    %5672 = vmatprep.subr.mxu0 0.0
    %5673 = vmatpush1.xpose.msra.mxu0 0.0
    %5674 = vmatprep.subr.mxu0 0.0
    %5675 = vmatpush1.xpose.msra.mxu0 0.0
    %5676 = vmatprep.subr.mxu0 0.0
    %5677 = vmatpush1.xpose.msra.mxu0 0.0
    %5678 = vmatprep.subr.mxu0 0.0
    %5679 = vmatpush1.xpose.msra.mxu0 0.0
    %5680 = vmatprep.subr.mxu0 0.0
    %5681 = vmatpush1.xpose.msra.mxu0 0.0
    %5682 = vmatprep.subr.mxu0 0.0
    %5683 = vmatpush1.xpose.msra.mxu0 0.0
    %5684 = vmatprep.subr.mxu0 0.0
    %5685 = vmatpush1.xpose.msra.mxu0 0.0
    %5686 = vmatprep.subr.mxu0 0.0
    %5687 = vmatpush1.xpose.msra.mxu0 0.0
    %5688 = vmatprep.subr.mxu0 0.0
    %5689 = vmatpush1.xpose.msra.mxu0 0.0
    %5690 = vmatprep.subr.mxu0 0.0
    %5691 = vmatpush1.xpose.msra.mxu0 0.0
    %5692 = vmatprep.subr.mxu0 0.0
    %5693 = vmatpush1.xpose.msra.mxu0 0.0
    %5694 = vmatprep.subr.mxu0 0.0
    %5695 = vmatpush1.xpose.msra.mxu0 0.0
    %5696 = vmatprep.subr.mxu0 0.0
    %5697 = vmatpush1.xpose.msra.mxu0 0.0
    %5698 = vmatprep.subr.mxu0 0.0
    %5699 = vmatpush1.xpose.msra.mxu0 0.0
    %5700 = vmatprep.subr.mxu0 0.0
    %5701 = vmatpush1.xpose.msra.mxu0 0.0
    %5702 = vmatprep.subr.mxu0 0.0
    %5703 = vmatpush1.xpose.msra.mxu0 0.0
    %5704 = vmatprep.subr.mxu0 0.0
    %5705 = vmatpush1.xpose.msra.mxu0 0.0
    %5706 = vmatprep.mubr.f32.mxu0 0.0
    %5707 = vmatmul.mubr.f32.gmra.mrb[0].mxu0 %v5630
    %v5708 = vpop.f32.mrb[0].mxu0
    %v5709 = vadd.f32 0.0, %v5708
    %v5710 = vpop.f32.mrb[0].mxu0
    %5711 = vmatprep.mubr.f32.mxu0 0.0
    %5712 = vmatmul.mubr.f32.gmra.mrb[0].mxu0 %v5632
    %v5713 = vpop.f32.mrb[0].mxu0
    %v5714 = vadd.f32 0.0, %v5713
    %v5715 = vpop.f32.mrb[0].mxu0
    %5716 = vdwg.mxu0
    %v5717 = vmul.f32 %v5709, 0.35355338
    %v5718 = vmul.f32 %v5714, 0.35355338
    %v5719 = vadd.f32 %v5717, %v121
    %v5720 = vadd.f32 %v5718, %v122
    %v5721 = vsel %vm126, %v5719, -inf
    %5722 = vmax.xlane.f32.xlu0 %v5721
    %v5723 = vpop.xlane.xlu0 %5722
    %v5724 = vsel %vm126, %v5720, -inf
    %5725 = vmax.xlane.f32.xlu0 %v5724
    %v5726 = vpop.xlane.xlu0 %5725
    %v5727 = vsub.f32 %v5719, %v5723
    %v5728 = vsub.f32 %v5720, %v5726
    %v5729 = vmul.f32 %v5727, 1.442695
    %v5730 = vpow.pop %v5729
    %v5731 = vmul.f32 %v5728, 1.442695
    %v5732 = vpow.pop %v5731
    %v5733 = vsel %vm126, %v5730, 0.0
    %5734 = vadd.xlane.f32.xlu0 %v5733
    %v5735 = vpop.xlane.xlu0 %5734
    %v5736 = vsel %vm126, %v5732, 0.0
    %5737 = vadd.xlane.f32.xlu0 %v5736
    %v5738 = vpop.xlane.xlu0 %5737
    %v5739 = vrcp.pop %v5735
    %v5740 = vrcp.pop %v5738
    %v5741 = vmul.f32 %v5730, %v5739
    %v5742 = vmul.f32 %v5732, %v5740
    %5743 = vrot.lane.b32.xlu0 %v4694, 40
    %v5744 = vpop.permute.xlu0 %5743
    %5745 = vrot.lane.b32.xlu0 %v4699, 40
    %v5746 = vpop.permute.xlu0 %5745
    %5747 = vrot.lane.b32.xlu0 %v4704, 40
    %v5748 = vpop.permute.xlu0 %5747
    %5749 = vrot.lane.b32.xlu0 %v4709, 40
    %v5750 = vpop.permute.xlu0 %5749
    %v5756 = vsel %vm126, %v5741, 0
    %v5759 = vsel %vm126, %v5742, 0
    %5761 = vmatprep.subr.mxu0 0.0
    %5762 = vmatpush1.msra.mxu0 %v5744
    %5763 = vmatprep.subr.mxu0 0.0
    %5764 = vmatpush1.msra.mxu0 %v5746
    %5765 = vmatprep.subr.mxu0 0.0
    %5766 = vmatpush1.msra.mxu0 %v5748
    %5767 = vmatprep.subr.mxu0 0.0
    %5768 = vmatpush1.msra.mxu0 %v5750
    %5769 = vmatprep.subr.mxu0 0.0
    %5770 = vmatpush1.msra.mxu0 0.0
    %5771 = vmatprep.subr.mxu0 0.0
    %5772 = vmatpush1.msra.mxu0 0.0
    %5773 = vmatprep.subr.mxu0 0.0
    %5774 = vmatpush1.msra.mxu0 0.0
    %5775 = vmatprep.subr.mxu0 0.0
    %5776 = vmatpush1.msra.mxu0 0.0
    %5777 = vmatprep.subr.mxu0 0.0
    %5778 = vmatpush1.msra.mxu0 0.0
    %5779 = vmatprep.subr.mxu0 0.0
    %5780 = vmatpush1.msra.mxu0 0.0
    %5781 = vmatprep.subr.mxu0 0.0
    %5782 = vmatpush1.msra.mxu0 0.0
    %5783 = vmatprep.subr.mxu0 0.0
    %5784 = vmatpush1.msra.mxu0 0.0
    %5785 = vmatprep.subr.mxu0 0.0
    %5786 = vmatpush1.msra.mxu0 0.0
    %5787 = vmatprep.subr.mxu0 0.0
    %5788 = vmatpush1.msra.mxu0 0.0
    %5789 = vmatprep.subr.mxu0 0.0
    %5790 = vmatpush1.msra.mxu0 0.0
    %5791 = vmatprep.subr.mxu0 0.0
    %5792 = vmatpush1.msra.mxu0 0.0
    %5793 = vmatprep.subr.mxu0 0.0
    %5794 = vmatpush1.msra.mxu0 0.0
    %5795 = vmatprep.subr.mxu0 0.0
    %5796 = vmatpush1.msra.mxu0 0.0
    %5797 = vmatprep.subr.mxu0 0.0
    %5798 = vmatpush1.msra.mxu0 0.0
    %5799 = vmatprep.subr.mxu0 0.0
    %5800 = vmatpush1.msra.mxu0 0.0
    %5801 = vmatprep.subr.mxu0 0.0
    %5802 = vmatpush1.msra.mxu0 0.0
    %5803 = vmatprep.subr.mxu0 0.0
    %5804 = vmatpush1.msra.mxu0 0.0
    %5805 = vmatprep.subr.mxu0 0.0
    %5806 = vmatpush1.msra.mxu0 0.0
    %5807 = vmatprep.subr.mxu0 0.0
    %5808 = vmatpush1.msra.mxu0 0.0
    %5809 = vmatprep.subr.mxu0 0.0
    %5810 = vmatpush1.msra.mxu0 0.0
    %5811 = vmatprep.subr.mxu0 0.0
    %5812 = vmatpush1.msra.mxu0 0.0
    %5813 = vmatprep.subr.mxu0 0.0
    %5814 = vmatpush1.msra.mxu0 0.0
    %5815 = vmatprep.subr.mxu0 0.0
    %5816 = vmatpush1.msra.mxu0 0.0
    %5817 = vmatprep.subr.mxu0 0.0
    %5818 = vmatpush1.msra.mxu0 0.0
    %5819 = vmatprep.subr.mxu0 0.0
    %5820 = vmatpush1.msra.mxu0 0.0
    %5821 = vmatprep.subr.mxu0 0.0
    %5822 = vmatpush1.msra.mxu0 0.0
    %5823 = vmatprep.subr.mxu0 0.0
    %5824 = vmatpush1.msra.mxu0 0.0
    %5825 = vmatprep.mubr.f32.mxu0 0.0
    %5826 = vmatmul.mubr.f32.gmra.mrb[0].mxu0 %v5756
    %v5827 = vpop.f32.mrb[0].mxu0
    %v5828 = vadd.f32 0.0, %v5827
    %v5829 = vpop.f32.mrb[0].mxu0
    %5830 = vmatprep.mubr.f32.mxu0 0.0
    %5831 = vmatmul.mubr.f32.gmra.mrb[0].mxu0 %v5759
    %v5832 = vpop.f32.mrb[0].mxu0
    %v5833 = vadd.f32 0.0, %v5832
    %v5834 = vpop.f32.mrb[0].mxu0
    %5835 = vdwg.mxu0
    %v5837 = vsel %vm286, %v5828, 0
    %v5840 = vsel %vm286, %v5833, 0
    %5842 = vmatprep.subr.mxu0 0.0
    %5843 = vmatpush1.msra.mxu0 %v4716
    %5844 = vmatprep.subr.mxu0 0.0
    %5845 = vmatpush1.msra.mxu0 0.0
    %5846 = vmatprep.subr.mxu0 0.0
    %5847 = vmatpush1.msra.mxu0 0.0
    %5848 = vmatprep.subr.mxu0 0.0
    %5849 = vmatpush1.msra.mxu0 0.0
    %5850 = vmatprep.subr.mxu0 0.0
    %5851 = vmatpush1.msra.mxu0 0.0
    %5852 = vmatprep.subr.mxu0 0.0
    %5853 = vmatpush1.msra.mxu0 0.0
    %5854 = vmatprep.subr.mxu0 0.0
    %5855 = vmatpush1.msra.mxu0 0.0
    %5856 = vmatprep.subr.mxu0 0.0
    %5857 = vmatpush1.msra.mxu0 0.0
    %5858 = vmatprep.subr.mxu0 0.0
    %5859 = vmatpush1.msra.mxu0 0.0
    %5860 = vmatprep.subr.mxu0 0.0
    %5861 = vmatpush1.msra.mxu0 0.0
    %5862 = vmatprep.subr.mxu0 0.0
    %5863 = vmatpush1.msra.mxu0 0.0
    %5864 = vmatprep.subr.mxu0 0.0
    %5865 = vmatpush1.msra.mxu0 0.0
    %5866 = vmatprep.subr.mxu0 0.0
    %5867 = vmatpush1.msra.mxu0 0.0
    %5868 = vmatprep.subr.mxu0 0.0
    %5869 = vmatpush1.msra.mxu0 0.0
    %5870 = vmatprep.subr.mxu0 0.0
    %5871 = vmatpush1.msra.mxu0 0.0
    %5872 = vmatprep.subr.mxu0 0.0
    %5873 = vmatpush1.msra.mxu0 0.0
    %5874 = vmatprep.subr.mxu0 0.0
    %5875 = vmatpush1.msra.mxu0 0.0
    %5876 = vmatprep.subr.mxu0 0.0
    %5877 = vmatpush1.msra.mxu0 0.0
    %5878 = vmatprep.subr.mxu0 0.0
    %5879 = vmatpush1.msra.mxu0 0.0
    %5880 = vmatprep.subr.mxu0 0.0
    %5881 = vmatpush1.msra.mxu0 0.0
    %5882 = vmatprep.subr.mxu0 0.0
    %5883 = vmatpush1.msra.mxu0 0.0
    %5884 = vmatprep.subr.mxu0 0.0
    %5885 = vmatpush1.msra.mxu0 0.0
    %5886 = vmatprep.subr.mxu0 0.0
    %5887 = vmatpush1.msra.mxu0 0.0
    %5888 = vmatprep.subr.mxu0 0.0
    %5889 = vmatpush1.msra.mxu0 0.0
    %5890 = vmatprep.subr.mxu0 0.0
    %5891 = vmatpush1.msra.mxu0 0.0
    %5892 = vmatprep.subr.mxu0 0.0
    %5893 = vmatpush1.msra.mxu0 0.0
    %5894 = vmatprep.subr.mxu0 0.0
    %5895 = vmatpush1.msra.mxu0 0.0
    %5896 = vmatprep.subr.mxu0 0.0
    %5897 = vmatpush1.msra.mxu0 0.0
    %5898 = vmatprep.subr.mxu0 0.0
    %5899 = vmatpush1.msra.mxu0 0.0
    %5900 = vmatprep.subr.mxu0 0.0
    %5901 = vmatpush1.msra.mxu0 0.0
    %5902 = vmatprep.subr.mxu0 0.0
    %5903 = vmatpush1.msra.mxu0 0.0
    %5904 = vmatprep.subr.mxu0 0.0
    %5905 = vmatpush1.msra.mxu0 0.0
    %5906 = vmatprep.mubr.f32.mxu0 0.0
    %5907 = vmatmul.mubr.f32.gmra.mrb[0].mxu0 %v5837
    %v5908 = vpop.f32.mrb[0].mxu0
    %v5909 = vadd.f32 0.0, %v5908
    %v5910 = vpop.f32.mrb[0].mxu0
    %5911 = vmatprep.mubr.f32.mxu0 0.0
    %5912 = vmatmul.mubr.f32.gmra.mrb[0].mxu0 %v5840
    %v5913 = vpop.f32.mrb[0].mxu0
    %v5914 = vadd.f32 0.0, %v5913
    %v5915 = vpop.f32.mrb[0].mxu0
    %5916 = vdwg.mxu0
    %v5917 = vadd.f32 %v5616, %v5909
    %v5918 = vadd.f32 %v5617, %v5914
    %v5919 = vadd.f32 %v4471, %v5917
    %v5920 = vadd.f32 %v4472, %v5918
    %s5921 = scalar_lea.vmem %s7, 3
    %v5922 = vld [vmem:[%s5921] sm:$0x1]
    %v5924 = vlaneseq
    %v5925 = vshrl.u32 %v5924, 7
    %v5926 = vsub.s32 0, %v5925
    %v5927 = vrot.slane %v5922, %v5926
    %v5929 = vadd.f32 %v5919, %v5927
    %v5930 = vadd.f32 %v5920, %v5927
    %s5931 = scalar_lea.vmem %s12, 10
    %v5932 = vld [vmem:[%s5931] sm:$0x1]
    %s5933 = scalar_lea.vmem %s12, 11
    %v5934 = vld [vmem:[%s5933] sm:$0x1]
    %v5935 = vsel %vm126, %v5929, 0.0
    %5936 = vadd.xlane.f32.xlu0 %v5935
    %v5937 = vpop.xlane.xlu0 %5936
    %v5938 = vsel %vm126, %v5930, 0.0
    %5939 = vadd.xlane.f32.xlu0 %v5938
    %v5940 = vpop.xlane.xlu0 %5939
    %v5941 = vmul.f32 %v5937, %v133
    %v5942 = vmul.f32 %v5940, %v133
    %v5943 = vsub.f32 %v5929, %v5941
    %v5944 = vsub.f32 %v5930, %v5942
    %v5945 = vmul.f32 %v5943, %v5943
    %v5946 = vmul.f32 %v5944, %v5944
    %v5947 = vsel %vm126, %v5945, 0.0
    %5948 = vadd.xlane.f32.xlu0 %v5947
    %v5949 = vpop.xlane.xlu0 %5948
    %v5950 = vsel %vm126, %v5946, 0.0
    %5951 = vadd.xlane.f32.xlu0 %v5950
    %v5952 = vpop.xlane.xlu0 %5951
    %v5953 = vmul.f32 %v5949, 0.032258064
    %v5954 = vmul.f32 %v5952, 0.032258064
    %v5955 = vrsqrt.pop %v5953
    %v5956 = vmul.f32 %v5953, %v5955
    %vm5957 = vcmp.eq.f32.partialorder %v5953, inf
    %v5958 = vsel %vm5957, %v5953, %v5956
    %vm5959 = vcmp.eq.f32.partialorder %v5953, 0.0
    %v5960 = vand.u32 %v5953, 2147483648
    %v5961 = vsel %vm5959, %v5960, %v5958
    %v5962 = vrsqrt.pop %v5954
    %v5963 = vmul.f32 %v5954, %v5962
    %vm5964 = vcmp.eq.f32.partialorder %v5954, inf
    %v5965 = vsel %vm5964, %v5954, %v5963
    %vm5966 = vcmp.eq.f32.partialorder %v5954, 0.0
    %v5967 = vand.u32 %v5954, 2147483648
    %v5968 = vsel %vm5966, %v5967, %v5965
    %v5969 = vadd.f32 %v5961, 1e-06
    %v5970 = vadd.f32 %v5968, 1e-06
    %v5971 = vrcp.pop %v5969
    %v5972 = vrcp.pop %v5970
    %v5974 = vlaneseq
    %v5975 = vshrl.u32 %v5974, 7
    %v5976 = vsub.s32 0, %v5975
    %v5977 = vrot.slane %v5932, %v5976
    %v5979 = vmul.f32 %v5977, %v5943
    %v5980 = vmul.f32 %v5977, %v5944
    %v5981 = vmul.f32 %v5979, %v5971
    %v5982 = vmul.f32 %v5980, %v5972
    %v5984 = vlaneseq
    %v5985 = vshrl.u32 %v5984, 7
    %v5986 = vsub.s32 0, %v5985
    %v5987 = vrot.slane %v5934, %v5986
    %v5989 = vadd.f32 %v5981, %v5987
    %v5990 = vadd.f32 %v5982, %v5987
    %s5991 = scalar_lea.vmem %s8, 32
    %v5992 = vld [vmem:[%s5991] sm:$0xff]
    %v5993 = vld [vmem:[%s5991 + $0x8] sm:$0xff]
    %v5994 = vld [vmem:[%s5991 + $0x10] sm:$0xff]
    %v5995 = vld [vmem:[%s5991 + $0x18] sm:$0xff]
    %s5996 = scalar_lea.vmem %s9, 1
    %v5997 = vld [vmem:[%s5996] sm:$0x1]
    %v5999 = vlaneseq
    %v6000 = vshrl.u32 %v5999, 7
    %v6001 = vsub.s32 0, %v6000
    %v6002 = vrot.slane %v5997, %v6001
    %v6005 = vsel %vm126, %v5989, 0
    %v6008 = vsel %vm126, %v5990, 0
    %6010 = vmatprep.subr.mxu0 0.0
    %6011 = vmatpush1.msra.mxu0 %v5992
    %6012 = vmatprep.subr.mxu0 0.0
    %6013 = vmatpush1.msra.mxu0 %v5993
    %6014 = vmatprep.subr.mxu0 0.0
    %6015 = vmatpush1.msra.mxu0 %v5994
    %6016 = vmatprep.subr.mxu0 0.0
    %6017 = vmatpush1.msra.mxu0 %v5995
    %6018 = vmatprep.subr.mxu0 0.0
    %6019 = vmatpush1.msra.mxu0 0.0
    %6020 = vmatprep.subr.mxu0 0.0
    %6021 = vmatpush1.msra.mxu0 0.0
    %6022 = vmatprep.subr.mxu0 0.0
    %6023 = vmatpush1.msra.mxu0 0.0
    %6024 = vmatprep.subr.mxu0 0.0
    %6025 = vmatpush1.msra.mxu0 0.0
    %6026 = vmatprep.subr.mxu0 0.0
    %6027 = vmatpush1.msra.mxu0 0.0
    %6028 = vmatprep.subr.mxu0 0.0
    %6029 = vmatpush1.msra.mxu0 0.0
    %6030 = vmatprep.subr.mxu0 0.0
    %6031 = vmatpush1.msra.mxu0 0.0
    %6032 = vmatprep.subr.mxu0 0.0
    %6033 = vmatpush1.msra.mxu0 0.0
    %6034 = vmatprep.subr.mxu0 0.0
    %6035 = vmatpush1.msra.mxu0 0.0
    %6036 = vmatprep.subr.mxu0 0.0
    %6037 = vmatpush1.msra.mxu0 0.0
    %6038 = vmatprep.subr.mxu0 0.0
    %6039 = vmatpush1.msra.mxu0 0.0
    %6040 = vmatprep.subr.mxu0 0.0
    %6041 = vmatpush1.msra.mxu0 0.0
    %6042 = vmatprep.subr.mxu0 0.0
    %6043 = vmatpush1.msra.mxu0 0.0
    %6044 = vmatprep.subr.mxu0 0.0
    %6045 = vmatpush1.msra.mxu0 0.0
    %6046 = vmatprep.subr.mxu0 0.0
    %6047 = vmatpush1.msra.mxu0 0.0
    %6048 = vmatprep.subr.mxu0 0.0
    %6049 = vmatpush1.msra.mxu0 0.0
    %6050 = vmatprep.subr.mxu0 0.0
    %6051 = vmatpush1.msra.mxu0 0.0
    %6052 = vmatprep.subr.mxu0 0.0
    %6053 = vmatpush1.msra.mxu0 0.0
    %6054 = vmatprep.subr.mxu0 0.0
    %6055 = vmatpush1.msra.mxu0 0.0
    %6056 = vmatprep.subr.mxu0 0.0
    %6057 = vmatpush1.msra.mxu0 0.0
    %6058 = vmatprep.subr.mxu0 0.0
    %6059 = vmatpush1.msra.mxu0 0.0
    %6060 = vmatprep.subr.mxu0 0.0
    %6061 = vmatpush1.msra.mxu0 0.0
    %6062 = vmatprep.subr.mxu0 0.0
    %6063 = vmatpush1.msra.mxu0 0.0
    %6064 = vmatprep.subr.mxu0 0.0
    %6065 = vmatpush1.msra.mxu0 0.0
    %6066 = vmatprep.subr.mxu0 0.0
    %6067 = vmatpush1.msra.mxu0 0.0
    %6068 = vmatprep.subr.mxu0 0.0
    %6069 = vmatpush1.msra.mxu0 0.0
    %6070 = vmatprep.subr.mxu0 0.0
    %6071 = vmatpush1.msra.mxu0 0.0
    %6072 = vmatprep.subr.mxu0 0.0
    %6073 = vmatpush1.msra.mxu0 0.0
    %6074 = vmatprep.mubr.f32.mxu0 0.0
    %6075 = vmatmul.mubr.f32.gmra.mrb[0].mxu0 %v6005
    %v6076 = vpop.f32.mrb[0].mxu0
    %v6077 = vadd.f32 %v6002, %v6076
    %v6078 = vpop.f32.mrb[0].mxu0
    %6079 = vmatprep.mubr.f32.mxu0 0.0
    %6080 = vmatmul.mubr.f32.gmra.mrb[0].mxu0 %v6008
    %v6081 = vpop.f32.mrb[0].mxu0
    %v6082 = vadd.f32 %v6002, %v6081
    %v6083 = vpop.f32.mrb[0].mxu0
    %6084 = vdwg.mxu0
    %v6085 = vmax.f32 %v6077, 0.0
    %v6086 = vmax.f32 %v6082, 0.0
    %s6087 = scalar_lea.vmem %s10, 64
    %v6088 = vld [vmem:[%s6087] sm:$0xff]
    %v6089 = vld [vmem:[%s6087 + $0x8] sm:$0xff]
    %v6090 = vld [vmem:[%s6087 + $0x10] sm:$0xff]
    %v6091 = vld [vmem:[%s6087 + $0x18] sm:$0xff]
    %v6092 = vld [vmem:[%s6087 + $0x20] sm:$0xff]
    %v6093 = vld [vmem:[%s6087 + $0x28] sm:$0xff]
    %v6094 = vld [vmem:[%s6087 + $0x30] sm:$0xff]
    %v6095 = vld [vmem:[%s6087 + $0x38] sm:$0xff]
    %v6097 = vsel %vm3067, %v6085, 0
    %v6100 = vsel %vm3067, %v6086, 0
    %6102 = vmatprep.subr.mxu0 0.0
    %6103 = vmatpush1.msra.mxu0 %v6088
    %6104 = vmatprep.subr.mxu0 0.0
    %6105 = vmatpush1.msra.mxu0 %v6089
    %6106 = vmatprep.subr.mxu0 0.0
    %6107 = vmatpush1.msra.mxu0 %v6090
    %6108 = vmatprep.subr.mxu0 0.0
    %6109 = vmatpush1.msra.mxu0 %v6091
    %6110 = vmatprep.subr.mxu0 0.0
    %6111 = vmatpush1.msra.mxu0 %v6092
    %6112 = vmatprep.subr.mxu0 0.0
    %6113 = vmatpush1.msra.mxu0 %v6093
    %6114 = vmatprep.subr.mxu0 0.0
    %6115 = vmatpush1.msra.mxu0 %v6094
    %6116 = vmatprep.subr.mxu0 0.0
    %6117 = vmatpush1.msra.mxu0 %v6095
    %6118 = vmatprep.subr.mxu0 0.0
    %6119 = vmatpush1.msra.mxu0 0.0
    %6120 = vmatprep.subr.mxu0 0.0
    %6121 = vmatpush1.msra.mxu0 0.0
    %6122 = vmatprep.subr.mxu0 0.0
    %6123 = vmatpush1.msra.mxu0 0.0
    %6124 = vmatprep.subr.mxu0 0.0
    %6125 = vmatpush1.msra.mxu0 0.0
    %6126 = vmatprep.subr.mxu0 0.0
    %6127 = vmatpush1.msra.mxu0 0.0
    %6128 = vmatprep.subr.mxu0 0.0
    %6129 = vmatpush1.msra.mxu0 0.0
    %6130 = vmatprep.subr.mxu0 0.0
    %6131 = vmatpush1.msra.mxu0 0.0
    %6132 = vmatprep.subr.mxu0 0.0
    %6133 = vmatpush1.msra.mxu0 0.0
    %6134 = vmatprep.subr.mxu0 0.0
    %6135 = vmatpush1.msra.mxu0 0.0
    %6136 = vmatprep.subr.mxu0 0.0
    %6137 = vmatpush1.msra.mxu0 0.0
    %6138 = vmatprep.subr.mxu0 0.0
    %6139 = vmatpush1.msra.mxu0 0.0
    %6140 = vmatprep.subr.mxu0 0.0
    %6141 = vmatpush1.msra.mxu0 0.0
    %6142 = vmatprep.subr.mxu0 0.0
    %6143 = vmatpush1.msra.mxu0 0.0
    %6144 = vmatprep.subr.mxu0 0.0
    %6145 = vmatpush1.msra.mxu0 0.0
    %6146 = vmatprep.subr.mxu0 0.0
    %6147 = vmatpush1.msra.mxu0 0.0
    %6148 = vmatprep.subr.mxu0 0.0
    %6149 = vmatpush1.msra.mxu0 0.0
    %6150 = vmatprep.subr.mxu0 0.0
    %6151 = vmatpush1.msra.mxu0 0.0
    %6152 = vmatprep.subr.mxu0 0.0
    %6153 = vmatpush1.msra.mxu0 0.0
    %6154 = vmatprep.subr.mxu0 0.0
    %6155 = vmatpush1.msra.mxu0 0.0
    %6156 = vmatprep.subr.mxu0 0.0
    %6157 = vmatpush1.msra.mxu0 0.0
    %6158 = vmatprep.subr.mxu0 0.0
    %6159 = vmatpush1.msra.mxu0 0.0
    %6160 = vmatprep.subr.mxu0 0.0
    %6161 = vmatpush1.msra.mxu0 0.0
    %6162 = vmatprep.subr.mxu0 0.0
    %6163 = vmatpush1.msra.mxu0 0.0
    %6164 = vmatprep.subr.mxu0 0.0
    %6165 = vmatpush1.msra.mxu0 0.0
    %6166 = vmatprep.mubr.f32.mxu0 0.0
    %6167 = vmatmul.mubr.f32.gmra.mrb[0].mxu0 %v6097
    %v6168 = vpop.f32.mrb[0].mxu0
    %v6169 = vadd.f32 0.0, %v6168
    %v6170 = vpop.f32.mrb[0].mxu0
    %6171 = vmatprep.mubr.f32.mxu0 0.0
    %6172 = vmatmul.mubr.f32.gmra.mrb[0].mxu0 %v6100
    %v6173 = vpop.f32.mrb[0].mxu0
    %v6174 = vadd.f32 0.0, %v6173
    %v6175 = vpop.f32.mrb[0].mxu0
    %6176 = vdwg.mxu0
    %v6177 = vadd.f32 %v5929, %v6169
    %v6178 = vadd.f32 %v5930, %v6174
    %s6179 = scalar_lea.vmem %s11, 1
    %v6180 = vld [vmem:[%s6179] sm:$0x1]
    %v6182 = vlaneseq
    %v6183 = vshrl.u32 %v6182, 7
    %v6184 = vsub.s32 0, %v6183
    %v6185 = vrot.slane %v6180, %v6184
    %v6187 = vadd.f32 %v6177, %v6185
    %v6188 = vadd.f32 %v6178, %v6185
    %s6189 = scalar_lea.vmem %s12, 12
    %v6190 = vld [vmem:[%s6189] sm:$0x1]
    %s6191 = scalar_lea.vmem %s12, 13
    %v6192 = vld [vmem:[%s6191] sm:$0x1]
    %v6193 = vsel %vm126, %v6187, 0.0
    %6194 = vadd.xlane.f32.xlu0 %v6193
    %v6195 = vpop.xlane.xlu0 %6194
    %v6196 = vsel %vm126, %v6188, 0.0
    %6197 = vadd.xlane.f32.xlu0 %v6196
    %v6198 = vpop.xlane.xlu0 %6197
    %v6199 = vmul.f32 %v6195, %v133
    %v6200 = vmul.f32 %v6198, %v133
    %v6201 = vsub.f32 %v6187, %v6199
    %v6202 = vsub.f32 %v6188, %v6200
    %v6203 = vmul.f32 %v6201, %v6201
    %v6204 = vmul.f32 %v6202, %v6202
    %v6205 = vsel %vm126, %v6203, 0.0
    %6206 = vadd.xlane.f32.xlu0 %v6205
    %v6207 = vpop.xlane.xlu0 %6206
    %v6208 = vsel %vm126, %v6204, 0.0
    %6209 = vadd.xlane.f32.xlu0 %v6208
    %v6210 = vpop.xlane.xlu0 %6209
    %v6211 = vmul.f32 %v6207, 0.032258064
    %v6212 = vmul.f32 %v6210, 0.032258064
    %v6213 = vrsqrt.pop %v6211
    %v6214 = vmul.f32 %v6211, %v6213
    %vm6215 = vcmp.eq.f32.partialorder %v6211, inf
    %v6216 = vsel %vm6215, %v6211, %v6214
    %vm6217 = vcmp.eq.f32.partialorder %v6211, 0.0
    %v6218 = vand.u32 %v6211, 2147483648
    %v6219 = vsel %vm6217, %v6218, %v6216
    %v6220 = vrsqrt.pop %v6212
    %v6221 = vmul.f32 %v6212, %v6220
    %vm6222 = vcmp.eq.f32.partialorder %v6212, inf
    %v6223 = vsel %vm6222, %v6212, %v6221
    %vm6224 = vcmp.eq.f32.partialorder %v6212, 0.0
    %v6225 = vand.u32 %v6212, 2147483648
    %v6226 = vsel %vm6224, %v6225, %v6223
    %v6227 = vadd.f32 %v6219, 1e-06
    %v6228 = vadd.f32 %v6226, 1e-06
    %v6229 = vrcp.pop %v6227
    %v6230 = vrcp.pop %v6228
    %v6232 = vlaneseq
    %v6233 = vshrl.u32 %v6232, 7
    %v6234 = vsub.s32 0, %v6233
    %v6235 = vrot.slane %v6190, %v6234
    %v6237 = vmul.f32 %v6235, %v6201
    %v6238 = vmul.f32 %v6235, %v6202
    %v6239 = vmul.f32 %v6237, %v6229
    %v6240 = vmul.f32 %v6238, %v6230
    %v6242 = vlaneseq
    %v6243 = vshrl.u32 %v6242, 7
    %v6244 = vsub.s32 0, %v6243
    %v6245 = vrot.slane %v6192, %v6244
    %v6247 = vadd.f32 %v6239, %v6245
    %v6248 = vadd.f32 %v6240, %v6245
    %6249 = vst.msk [vmem:[#allocation11] sm:$0xff] %vm126, %v6247
    %6250 = vst.msk [vmem:[#allocation11 + $0x8] sm:$0xff] %vm126, %v6248
    // Predicated region
    $region74: #{tpu_custom_call.1} parent=1 // pred_check
      _
    $region75: #{tpu_custom_call.1} parent=1 // pred_check_branch
      %6252 = sbr.rel (0) target = $region77
    $region76: #{tpu_custom_call.1} parent=1 // pred_region
      %s6254 = ssub.s32 256, 256
      %6255 = vsyncadd [#allocation4], %s6254
      %s6256 = sshll.u32 [#allocation11], 4
      %s6257 = int_to_ptr.vmem [resolvable:$true] %s6256
      %6262 = dma.vmem_to_hbm [thread:$0]  %s6257, 256, %s13, [#allocation4], 128, 128, 8
    $region77: #{tpu_custom_call.1} parent=1 // pred_fallthru
      _
    // Predicated region
    $region78: #{tpu_custom_call.1} parent=1 // pred_check
      _
    $region79: #{tpu_custom_call.1} parent=1 // pred_check_branch
      %6264 = sbr.rel (0) target = $region81
    $region80: #{tpu_custom_call.1} parent=1 // pred_region
      %6265 = dma.done [#allocation4], 256
    $region81: #{tpu_custom_call.1} parent=1 // pred_fallthru
      _
    %6266 = vsyncpa [#allocation3], 1
    %6267 = vsyncpa [#allocation6], 1
    %6268 = vsyncpa [#allocation9], 1
    %6269 = vsyncpa [#allocation4], 1

</llo_original>
